<compile_context>
chip_gen: v7x
topology: tpu7x:2x2x1
jax: 0.10.0
libtpu: 0.0.40
codegen_flags: <defaults>
</compile_context>

<pallas_src>
import functools

import numpy as np

import jax
import jax.numpy as jnp
from jax import lax
from jax.experimental import pallas as pl
from jax.experimental.pallas import tpu as pltpu


def _round_up(x, m):
    return (x + m - 1) // m * m


# ----------------------------------------------------------------------------
# Fused whole-network kernel.
# ----------------------------------------------------------------------------
def _net_kernel(x_ref, w1_ref, w2_ref, w3_ref, a1_ref, a2_ref, a3_ref, m_ref,
                out_ref, *, N, H, W, C, n_conv, Mp_pad):
    """Activations are (C, Mp_pad) f32: channels on sublanes, flattened padded
    spatial frame coordinates (Mp = N*(H+2)*(W+2), zero-padded to Mp_pad=128k)
    on lanes.  All per-stage work happens on register-resident values."""
    Hp, Wp = H + 2, W + 2
    M = N * H * W

    # Position masks (wrapper-built, zero in the alignment tail [Mp, Mp_pad)):
    interior = m_ref[0:1, :] > 0.5     # real conv-output positions (BN stats)
    top      = m_ref[1:2, :] > 0.5     # per-image top pad row
    bottom   = m_ref[2:3, :] > 0.5     # per-image bottom pad row
    left     = m_ref[3:4, :] > 0.5     # per-image left pad column
    right    = m_ref[4:5, :] > 0.5     # per-image right pad column
    valid    = m_ref[5:6, :] > 0.5     # frame positions < Mp (excludes tail)

    def shifted(x, off):
        # value x[:, m + off] delivered at lane m — pure XLU lane rotation of a
        # register-resident (C, Mp_pad) value (no VMEM traffic, no misaligned
        # slices).  Interior / pad-ring reads never wrap (off <= Wp+1 << Mp).
        if off == 0:
            return x
        return pltpu.roll(x, (-off) % Mp_pad, axis=1)

    def reflect_fill(y):
        # Rebuild the 1-wide reflect-pad ring of each image entirely in
        # registers (PyTorch padding_mode='reflect'): vertical fixup first,
        # then horizontal on the fixed values so corners reflect correctly.
        # Finally zero the alignment tail so garbage never propagates.
        z = jnp.where(top, shifted(y, 2 * Wp),
                      jnp.where(bottom, shifted(y, -2 * Wp), y))
        z = jnp.where(left, shifted(z, 2),
                      jnp.where(right, shifted(z, -2), z))
        return jnp.where(valid, z, 0.0)

    def conv3x3(z, w_tap):
        # 3x3 conv = 9 accumulating (C, C) @ (C, Mp_pad) MXU matmuls whose RHS
        # are lane-rolled views of the frame z (tap order t = dy*3 + dx matches
        # the wrapper's weight packing).  Border/tail output columns are
        # meaningless and are masked / overwritten downstream.
        acc = None
        t = 0
        for dy in (-1, 0, 1):
            for dx in (-1, 0, 1):
                p = jnp.dot(w_tap(t), shifted(z, dy * Wp + dx),
                            preferred_element_type=jnp.float32)
                acc = p if acc is None else acc + p
                t += 1
        return acc

    def bias_relu_bn(y, aff, relu):
        # aff: (3, C, 1) = (conv bias, bn gamma, bn beta).  Training-mode
        # BatchNorm over the M interior positions, biased variance, eps=1e-5,
        # two-pass (mean-subtracted) variance for numerical safety.
        bias, gamma, beta = aff[0], aff[1], aff[2]
        y = y + bias
        if relu:
            y = jnp.maximum(y, 0.0)
        yv = jnp.where(interior, y, 0.0)
        mean = jnp.sum(yv, axis=1, keepdims=True) * (1.0 / M)
        yc = y - mean
        ycv = jnp.where(interior, yc, 0.0)
        var = jnp.sum(ycv * ycv, axis=1, keepdims=True) * (1.0 / M)
        inv = lax.rsqrt(var + 1e-5)
        return yc * (inv * gamma) + beta

    # --- conv1 -> ReLU -> bn1 (wrapper supplies the reflect-padded frame).
    y = bias_relu_bn(conv3x3(x_ref[...], lambda t: w1_ref[t]),
                     a1_ref[...], relu=True)

    # --- conv2[i] -> ReLU -> bn2[i]
    for i in range(n_conv - 1):
        z = reflect_fill(y)
        y = bias_relu_bn(conv3x3(z, lambda t, i=i: w2_ref[i * 9 + t]),
                         a2_ref[i], relu=True)

    # --- conv3 (1x1) -> bn3 (no ReLU)
    y = jnp.dot(w3_ref[...], y, preferred_element_type=jnp.float32)
    y = bias_relu_bn(y, a3_ref[...], relu=False)

    # Plain unmasked lane-dense store; the wrapper slices out the interior.
    out_ref[...] = y


# ----------------------------------------------------------------------------
# Wrapper: layout glue (NCHW <-> frame coordinates) + parameter packing.
# ----------------------------------------------------------------------------
def _prep_conv3x3_weight(w_hwio, C):
    """(3,3,cin,cout) HWIO -> (9, cout, C): per-tap transposed weights with cin
    zero-padded to C; tap order t = dy*3 + dx matches the kernel loop."""
    kh, kw, cin, cout = w_hwio.shape
    w = jnp.pad(w_hwio, ((0, 0), (0, 0), (0, C - cin), (0, 0)))
    return jnp.transpose(w.reshape(kh * kw, C, cout), (0, 2, 1))


def _prep_affine(b, gamma, beta):
    return jnp.stack([b, gamma, beta], axis=0)[:, :, None]   # (3, C, 1)


def _build_masks(N, H, W, Mp_pad):
    """(8, Mp_pad) f32 indicator rows:
    [interior, top, bottom, left, right, valid, 0, 0]."""
    Hp, Wp = H + 2, W + 2
    Mp = N * Hp * Wp
    hp = np.arange(Hp)[None, :, None]
    wp = np.arange(Wp)[None, None, :]
    ones = np.ones((N, Hp, Wp), np.float32)
    rows = [
        ((hp >= 1) & (hp <= H) & (wp >= 1) & (wp <= W)) * ones,   # interior
        (hp == 0) * ones,                                         # top pad
        (hp == Hp - 1) * ones,                                    # bottom pad
        (wp == 0) * ones,                                         # left pad
        (wp == Wp - 1) * ones,                                    # right pad
        ones,                                                     # valid frame
    ]
    m = np.stack(rows, 0).reshape(len(rows), Mp).astype(np.float32)
    out = np.zeros((8, Mp_pad), np.float32)
    out[:len(rows), :Mp] = m
    return out


@functools.partial(jax.jit, static_argnames=("n_conv",))
def net_forward(x_nchw, params, *, n_conv):
    """NCHW in / NCHW out, like the PyTorch module. Entire net = 1 pallas_call."""
    N, Cin0, H, W = x_nchw.shape
    C = params["conv1"][0].shape[-1]                 # nChannel
    assert Cin0 <= C, "this kernel assumes input_dim <= nChannel"
    Hp, Wp = H + 2, W + 2
    Mp = N * Hp * Wp
    Mp_pad = _round_up(Mp, 128)        # lane-aligned frame width (648 -> 768)

    # Input: NCHW -> (C, N, H, W) (zero channel-pad) -> per-image reflect pad
    # -> flatten to frame coordinates -> zero-pad lanes up to Mp_pad.
    xc = jnp.transpose(x_nchw, (1, 0, 2, 3))
    xc = jnp.pad(xc, ((0, C - Cin0), (0, 0), (0, 0), (0, 0)))
    xp = jnp.pad(xc, ((0, 0), (0, 0), (1, 1), (1, 1)), mode="reflect")
    x_frame = jnp.pad(xp.reshape(C, Mp), ((0, 0), (0, Mp_pad - Mp)))

    # Weights / affine params in the kernel's layout.
    w1, b1, g1, be1 = params["conv1"]
    w1_t = _prep_conv3x3_weight(w1, C)               # (9, C, C)
    a1 = _prep_affine(b1, g1, be1)

    if n_conv > 1:
        w2_t = jnp.concatenate([_prep_conv3x3_weight(w, C)
                                for (w, _, _, _) in params["conv2"]], axis=0)
        a2 = jnp.stack([_prep_affine(b, g, be)
                        for (_, b, g, be) in params["conv2"]])
    else:                                            # dummy (unused) stage
        w2_t = jnp.zeros((9, C, C), jnp.float32)
        a2 = jnp.zeros((1, 3, C, 1), jnp.float32)

    w3, b3, g3, be3 = params["conv3"]
    w3_2d = w3.reshape(C, C).T
    a3 = _prep_affine(b3, g3, be3)

    masks = jnp.asarray(_build_masks(N, H, W, Mp_pad))

    kernel = functools.partial(_net_kernel, N=N, H=H, W=W, C=C,
                               n_conv=n_conv, Mp_pad=Mp_pad)
    vmem = pl.BlockSpec(memory_space=pltpu.MemorySpace.VMEM)
    out = pl.pallas_call(
        kernel,
        out_shape=jax.ShapeDtypeStruct((C, Mp_pad), jnp.float32),
        in_specs=[vmem] * 8,
        out_specs=vmem,
        compiler_params=pltpu.CompilerParams(
            vmem_limit_bytes=32 * 1024 * 1024),
    )(x_frame, w1_t, w2_t, w3_2d, a1, a2, a3, masks)

    # Frame coordinates -> NCHW interior (padded ring / alignment tail dropped).
    y = out[:, :Mp].reshape(C, N, Hp, Wp)[:, :, 1:H + 1, 1:W + 1]
    return jnp.transpose(y, (1, 0, 2, 3))


# ----------------------------------------------------------------------------
# Deterministic parameter construction (synthetic weights, no checkpoint).
# ----------------------------------------------------------------------------
def make_params(key, input_dim, n_channel, n_conv):
    def conv_block(key, cin, cout, k):
        k1, k2, k3, k4 = jax.random.split(key, 4)
        fan_in = cin * k * k
        w = jax.random.normal(k1, (k, k, cin, cout), jnp.float32) / jnp.sqrt(fan_in)
        b = 0.1 * jax.random.normal(k2, (cout,), jnp.float32)
        gamma = 1.0 + 0.1 * jax.random.normal(k3, (cout,), jnp.float32)
        beta = 0.1 * jax.random.normal(k4, (cout,), jnp.float32)
        return (w, b, gamma, beta)

    keys = jax.random.split(key, n_conv + 1)
    return {
        "conv1": conv_block(keys[0], input_dim, n_channel, 3),
        "conv2": [conv_block(keys[1 + i], n_channel, n_channel, 3)
                  for i in range(n_conv - 1)],
        "conv3": conv_block(keys[n_conv], n_channel, n_channel, 1),
    }


# ----------------------------------------------------------------------------
# Pure-JAX reference (for a correctness sanity check).
# ----------------------------------------------------------------------------
def _ref_stage(x_nhwc, w, b, gamma, beta, K, apply_relu):
    if K == 3:
        x_nhwc = jnp.pad(x_nhwc, ((0, 0), (1, 1), (1, 1), (0, 0)), mode="reflect")
    y = lax.conv_general_dilated(
        x_nhwc, w, window_strides=(1, 1), padding="VALID",
        dimension_numbers=("NHWC", "HWIO", "NHWC"))
    y = y + b.reshape(1, 1, 1, -1)
    if apply_relu:
        y = jnp.maximum(y, 0.0)
    mean = jnp.mean(y, axis=(0, 1, 2), keepdims=True)
    var = jnp.mean((y - mean) ** 2, axis=(0, 1, 2), keepdims=True)
    y = (y - mean) * lax.rsqrt(var + 1e-5)
    return y * gamma.reshape(1, 1, 1, -1) + beta.reshape(1, 1, 1, -1)


def net_forward_ref(x_nchw, params, n_conv):
    x = jnp.transpose(x_nchw, (0, 2, 3, 1))
    w, b, g, be = params["conv1"]
    x = _ref_stage(x, w, b, g, be, 3, True)
    for i in range(n_conv - 1):
        w, b, g, be = params["conv2"][i]
        x = _ref_stage(x, w, b, g, be, 3, True)
    w, b, g, be = params["conv3"]
    x = _ref_stage(x, w, b, g, be, 1, False)
    return jnp.transpose(x, (0, 3, 1, 2))


if __name__ == "__main__":
    # Small config: input_dim=4, nChannel=8, nConv=3, batch=2, spatial 16x16.
    INPUT_DIM, N_CHANNEL, N_CONV = 4, 8, 3
    N, H, W = 2, 16, 16

    key = jax.random.PRNGKey(0)
    k_x, k_p = jax.random.split(key)
    x = jax.random.normal(k_x, (N, INPUT_DIM, H, W), jnp.float32)   # NCHW input
    params = make_params(k_p, INPUT_DIM, N_CHANNEL, N_CONV)

    out = jax.block_until_ready(net_forward(x, params, n_conv=N_CONV))
    assert out.shape == (N, N_CHANNEL, H, W), out.shape

    ref = jax.block_until_ready(net_forward_ref(x, params, N_CONV))
    err = float(jnp.max(jnp.abs(out - ref)))
    # 2e-3 on BN-normalized (unit-variance) outputs; allows for MXU default
    # precision / accumulation-order differences vs the XLA conv reference.
    assert err < 2e-3, f"max abs error vs reference: {err}"

    print("KERNEL_OK")
</pallas_src>

<mosaic_0001>
module attributes {stable_mosaic.version = 11 : i64} {
  func.func @_net_kernel(%arg0: memref<8x768xf32, #tpu.memory_space<vmem>>, %arg1: memref<9x8x8xf32, #tpu.memory_space<vmem>>, %arg2: memref<18x8x8xf32, #tpu.memory_space<vmem>>, %arg3: memref<8x8xf32, #tpu.memory_space<vmem>>, %arg4: memref<3x8x1xf32, #tpu.memory_space<vmem>>, %arg5: memref<2x3x8x1xf32, #tpu.memory_space<vmem>>, %arg6: memref<3x8x1xf32, #tpu.memory_space<vmem>>, %arg7: memref<8x768xf32, #tpu.memory_space<vmem>>, %arg8: memref<8x768xf32, #tpu.memory_space<vmem>>) attributes {dimension_semantics = [], scalar_prefetch = 0 : i64, scratch_operands = 0 : i64, tpu.core_type = #tpu.core_type<tc>} {
    %c0 = arith.constant 0 : index
    %c0_0 = arith.constant 0 : index
    %0 = vector.load %arg7[%c0, %c0_0] : memref<8x768xf32, #tpu.memory_space<vmem>>, vector<1x768xf32>
    %cst = arith.constant 5.000000e-01 : f32
    %1 = vector.broadcast %cst : f32 to vector<1x768xf32>
    %2 = arith.cmpf ogt, %0, %1 : vector<1x768xf32>
    %c1 = arith.constant 1 : index
    %c0_1 = arith.constant 0 : index
    %3 = vector.load %arg7[%c1, %c0_1] : memref<8x768xf32, #tpu.memory_space<vmem>>, vector<1x768xf32>
    %cst_2 = arith.constant 5.000000e-01 : f32
    %4 = vector.broadcast %cst_2 : f32 to vector<1x768xf32>
    %5 = arith.cmpf ogt, %3, %4 : vector<1x768xf32>
    %c2 = arith.constant 2 : index
    %c0_3 = arith.constant 0 : index
    %6 = vector.load %arg7[%c2, %c0_3] : memref<8x768xf32, #tpu.memory_space<vmem>>, vector<1x768xf32>
    %cst_4 = arith.constant 5.000000e-01 : f32
    %7 = vector.broadcast %cst_4 : f32 to vector<1x768xf32>
    %8 = arith.cmpf ogt, %6, %7 : vector<1x768xf32>
    %c3 = arith.constant 3 : index
    %c0_5 = arith.constant 0 : index
    %9 = vector.load %arg7[%c3, %c0_5] : memref<8x768xf32, #tpu.memory_space<vmem>>, vector<1x768xf32>
    %cst_6 = arith.constant 5.000000e-01 : f32
    %10 = vector.broadcast %cst_6 : f32 to vector<1x768xf32>
    %11 = arith.cmpf ogt, %9, %10 : vector<1x768xf32>
    %c4 = arith.constant 4 : index
    %c0_7 = arith.constant 0 : index
    %12 = vector.load %arg7[%c4, %c0_7] : memref<8x768xf32, #tpu.memory_space<vmem>>, vector<1x768xf32>
    %cst_8 = arith.constant 5.000000e-01 : f32
    %13 = vector.broadcast %cst_8 : f32 to vector<1x768xf32>
    %14 = arith.cmpf ogt, %12, %13 : vector<1x768xf32>
    %c5 = arith.constant 5 : index
    %c0_9 = arith.constant 0 : index
    %15 = vector.load %arg7[%c5, %c0_9] : memref<8x768xf32, #tpu.memory_space<vmem>>, vector<1x768xf32>
    %cst_10 = arith.constant 5.000000e-01 : f32
    %16 = vector.broadcast %cst_10 : f32 to vector<1x768xf32>
    %17 = arith.cmpf ogt, %15, %16 : vector<1x768xf32>
    %c0_11 = arith.constant 0 : index
    %c0_12 = arith.constant 0 : index
    %18 = vector.load %arg0[%c0_11, %c0_12] : memref<8x768xf32, #tpu.memory_space<vmem>>, vector<8x768xf32>
    %c0_13 = arith.constant 0 : index
    %c0_14 = arith.constant 0 : index
    %c0_15 = arith.constant 0 : index
    %19 = vector.load %arg1[%c0_13, %c0_14, %c0_15] : memref<9x8x8xf32, #tpu.memory_space<vmem>>, vector<1x8x8xf32>
    %20 = vector.shape_cast %19 : vector<1x8x8xf32> to vector<8x8xf32>
    %c19_i32 = arith.constant 19 : i32
    %21 = tpu.dynamic_rotate %18 by %c19_i32 dim 1 : vector<8x768xf32>, i32 -> vector<8x768xf32>
    %cst_16 = arith.constant dense<0.000000e+00> : vector<8x768xf32>
    %22 = tpu.matmul %20, %21, %cst_16 {dimension_numbers = #tpu.dot_dimension_numbers<[1], [0], [0], [1], [0, 0, 1, 1], [], []>} : vector<8x8xf32>, vector<8x768xf32>, vector<8x768xf32> -> vector<8x768xf32>
    %c1_17 = arith.constant 1 : index
    %c0_18 = arith.constant 0 : index
    %c0_19 = arith.constant 0 : index
    %23 = vector.load %arg1[%c1_17, %c0_18, %c0_19] : memref<9x8x8xf32, #tpu.memory_space<vmem>>, vector<1x8x8xf32>
    %24 = vector.shape_cast %23 : vector<1x8x8xf32> to vector<8x8xf32>
    %c18_i32 = arith.constant 18 : i32
    %25 = tpu.dynamic_rotate %18 by %c18_i32 dim 1 : vector<8x768xf32>, i32 -> vector<8x768xf32>
    %cst_20 = arith.constant dense<0.000000e+00> : vector<8x768xf32>
    %26 = tpu.matmul %24, %25, %cst_20 {dimension_numbers = #tpu.dot_dimension_numbers<[1], [0], [0], [1], [0, 0, 1, 1], [], []>} : vector<8x8xf32>, vector<8x768xf32>, vector<8x768xf32> -> vector<8x768xf32>
    %27 = arith.addf %22, %26 : vector<8x768xf32>
    %c2_21 = arith.constant 2 : index
    %c0_22 = arith.constant 0 : index
    %c0_23 = arith.constant 0 : index
    %28 = vector.load %arg1[%c2_21, %c0_22, %c0_23] : memref<9x8x8xf32, #tpu.memory_space<vmem>>, vector<1x8x8xf32>
    %29 = vector.shape_cast %28 : vector<1x8x8xf32> to vector<8x8xf32>
    %c17_i32 = arith.constant 17 : i32
    %30 = tpu.dynamic_rotate %18 by %c17_i32 dim 1 : vector<8x768xf32>, i32 -> vector<8x768xf32>
    %cst_24 = arith.constant dense<0.000000e+00> : vector<8x768xf32>
    %31 = tpu.matmul %29, %30, %cst_24 {dimension_numbers = #tpu.dot_dimension_numbers<[1], [0], [0], [1], [0, 0, 1, 1], [], []>} : vector<8x8xf32>, vector<8x768xf32>, vector<8x768xf32> -> vector<8x768xf32>
    %32 = arith.addf %27, %31 : vector<8x768xf32>
    %c3_25 = arith.constant 3 : index
    %c0_26 = arith.constant 0 : index
    %c0_27 = arith.constant 0 : index
    %33 = vector.load %arg1[%c3_25, %c0_26, %c0_27] : memref<9x8x8xf32, #tpu.memory_space<vmem>>, vector<1x8x8xf32>
    %34 = vector.shape_cast %33 : vector<1x8x8xf32> to vector<8x8xf32>
    %c1_i32 = arith.constant 1 : i32
    %35 = tpu.dynamic_rotate %18 by %c1_i32 dim 1 : vector<8x768xf32>, i32 -> vector<8x768xf32>
    %cst_28 = arith.constant dense<0.000000e+00> : vector<8x768xf32>
    %36 = tpu.matmul %34, %35, %cst_28 {dimension_numbers = #tpu.dot_dimension_numbers<[1], [0], [0], [1], [0, 0, 1, 1], [], []>} : vector<8x8xf32>, vector<8x768xf32>, vector<8x768xf32> -> vector<8x768xf32>
    %37 = arith.addf %32, %36 : vector<8x768xf32>
    %c4_29 = arith.constant 4 : index
    %c0_30 = arith.constant 0 : index
    %c0_31 = arith.constant 0 : index
    %38 = vector.load %arg1[%c4_29, %c0_30, %c0_31] : memref<9x8x8xf32, #tpu.memory_space<vmem>>, vector<1x8x8xf32>
    %39 = vector.shape_cast %38 : vector<1x8x8xf32> to vector<8x8xf32>
    %cst_32 = arith.constant dense<0.000000e+00> : vector<8x768xf32>
    %40 = tpu.matmul %39, %18, %cst_32 {dimension_numbers = #tpu.dot_dimension_numbers<[1], [0], [0], [1], [0, 0, 1, 1], [], []>} : vector<8x8xf32>, vector<8x768xf32>, vector<8x768xf32> -> vector<8x768xf32>
    %41 = arith.addf %37, %40 : vector<8x768xf32>
    %c5_33 = arith.constant 5 : index
    %c0_34 = arith.constant 0 : index
    %c0_35 = arith.constant 0 : index
    %42 = vector.load %arg1[%c5_33, %c0_34, %c0_35] : memref<9x8x8xf32, #tpu.memory_space<vmem>>, vector<1x8x8xf32>
    %43 = vector.shape_cast %42 : vector<1x8x8xf32> to vector<8x8xf32>
    %c767_i32 = arith.constant 767 : i32
    %44 = tpu.dynamic_rotate %18 by %c767_i32 dim 1 : vector<8x768xf32>, i32 -> vector<8x768xf32>
    %cst_36 = arith.constant dense<0.000000e+00> : vector<8x768xf32>
    %45 = tpu.matmul %43, %44, %cst_36 {dimension_numbers = #tpu.dot_dimension_numbers<[1], [0], [0], [1], [0, 0, 1, 1], [], []>} : vector<8x8xf32>, vector<8x768xf32>, vector<8x768xf32> -> vector<8x768xf32>
    %46 = arith.addf %41, %45 : vector<8x768xf32>
    %c6 = arith.constant 6 : index
    %c0_37 = arith.constant 0 : index
    %c0_38 = arith.constant 0 : index
    %47 = vector.load %arg1[%c6, %c0_37, %c0_38] : memref<9x8x8xf32, #tpu.memory_space<vmem>>, vector<1x8x8xf32>
    %48 = vector.shape_cast %47 : vector<1x8x8xf32> to vector<8x8xf32>
    %c751_i32 = arith.constant 751 : i32
    %49 = tpu.dynamic_rotate %18 by %c751_i32 dim 1 : vector<8x768xf32>, i32 -> vector<8x768xf32>
    %cst_39 = arith.constant dense<0.000000e+00> : vector<8x768xf32>
    %50 = tpu.matmul %48, %49, %cst_39 {dimension_numbers = #tpu.dot_dimension_numbers<[1], [0], [0], [1], [0, 0, 1, 1], [], []>} : vector<8x8xf32>, vector<8x768xf32>, vector<8x768xf32> -> vector<8x768xf32>
    %51 = arith.addf %46, %50 : vector<8x768xf32>
    %c7 = arith.constant 7 : index
    %c0_40 = arith.constant 0 : index
    %c0_41 = arith.constant 0 : index
    %52 = vector.load %arg1[%c7, %c0_40, %c0_41] : memref<9x8x8xf32, #tpu.memory_space<vmem>>, vector<1x8x8xf32>
    %53 = vector.shape_cast %52 : vector<1x8x8xf32> to vector<8x8xf32>
    %c750_i32 = arith.constant 750 : i32
    %54 = tpu.dynamic_rotate %18 by %c750_i32 dim 1 : vector<8x768xf32>, i32 -> vector<8x768xf32>
    %cst_42 = arith.constant dense<0.000000e+00> : vector<8x768xf32>
    %55 = tpu.matmul %53, %54, %cst_42 {dimension_numbers = #tpu.dot_dimension_numbers<[1], [0], [0], [1], [0, 0, 1, 1], [], []>} : vector<8x8xf32>, vector<8x768xf32>, vector<8x768xf32> -> vector<8x768xf32>
    %56 = arith.addf %51, %55 : vector<8x768xf32>
    %c8 = arith.constant 8 : index
    %c0_43 = arith.constant 0 : index
    %c0_44 = arith.constant 0 : index
    %57 = vector.load %arg1[%c8, %c0_43, %c0_44] : memref<9x8x8xf32, #tpu.memory_space<vmem>>, vector<1x8x8xf32>
    %58 = vector.shape_cast %57 : vector<1x8x8xf32> to vector<8x8xf32>
    %c749_i32 = arith.constant 749 : i32
    %59 = tpu.dynamic_rotate %18 by %c749_i32 dim 1 : vector<8x768xf32>, i32 -> vector<8x768xf32>
    %cst_45 = arith.constant dense<0.000000e+00> : vector<8x768xf32>
    %60 = tpu.matmul %58, %59, %cst_45 {dimension_numbers = #tpu.dot_dimension_numbers<[1], [0], [0], [1], [0, 0, 1, 1], [], []>} : vector<8x8xf32>, vector<8x768xf32>, vector<8x768xf32> -> vector<8x768xf32>
    %61 = arith.addf %56, %60 : vector<8x768xf32>
    %c0_46 = arith.constant 0 : index
    %c0_47 = arith.constant 0 : index
    %c0_48 = arith.constant 0 : index
    %62 = vector.load %arg4[%c0_46, %c0_47, %c0_48] : memref<3x8x1xf32, #tpu.memory_space<vmem>>, vector<3x8x1xf32>
    %63 = vector.extract_strided_slice %62 {offsets = [0, 0, 0], sizes = [1, 8, 1], strides = [1, 1, 1]} : vector<3x8x1xf32> to vector<1x8x1xf32>
    %64 = vector.shape_cast %63 : vector<1x8x1xf32> to vector<8x1xf32>
    %65 = vector.extract_strided_slice %62 {offsets = [1, 0, 0], sizes = [1, 8, 1], strides = [1, 1, 1]} : vector<3x8x1xf32> to vector<1x8x1xf32>
    %66 = vector.shape_cast %65 : vector<1x8x1xf32> to vector<8x1xf32>
    %67 = vector.extract_strided_slice %62 {offsets = [2, 0, 0], sizes = [1, 8, 1], strides = [1, 1, 1]} : vector<3x8x1xf32> to vector<1x8x1xf32>
    %68 = vector.shape_cast %67 : vector<1x8x1xf32> to vector<8x1xf32>
    %69 = vector.broadcast %64 : vector<8x1xf32> to vector<8x768xf32>
    %70 = arith.addf %61, %69 : vector<8x768xf32>
    %cst_49 = arith.constant 0.000000e+00 : f32
    %71 = vector.broadcast %cst_49 : f32 to vector<8x768xf32>
    %72 = arith.maximumf %70, %71 : vector<8x768xf32>
    %cst_50 = arith.constant 0.000000e+00 : f32
    %73 = vector.shape_cast %2 : vector<1x768xi1> to vector<1x768xi1>
    %74 = vector.broadcast %73 : vector<1x768xi1> to vector<8x768xi1>
    %75 = vector.broadcast %cst_50 : f32 to vector<8x768xf32>
    %76 = arith.select %74, %72, %75 : vector<8x768xi1>, vector<8x768xf32>
    %cst_51 = arith.constant dense<0.000000e+00> : vector<8xf32>
    %77 = vector.multi_reduction <add>, %76, %cst_51 [1] : vector<8x768xf32> to vector<8xf32>
    %78 = vector.shape_cast %77 : vector<8xf32> to vector<8x1xf32>
    %cst_52 = arith.constant 0.001953125 : f32
    %79 = vector.broadcast %cst_52 : f32 to vector<8x1xf32>
    %80 = arith.mulf %78, %79 : vector<8x1xf32>
    %81 = vector.broadcast %80 : vector<8x1xf32> to vector<8x768xf32>
    %82 = arith.subf %72, %81 : vector<8x768xf32>
    %cst_53 = arith.constant 0.000000e+00 : f32
    %83 = vector.shape_cast %2 : vector<1x768xi1> to vector<1x768xi1>
    %84 = vector.broadcast %83 : vector<1x768xi1> to vector<8x768xi1>
    %85 = vector.broadcast %cst_53 : f32 to vector<8x768xf32>
    %86 = arith.select %84, %82, %85 : vector<8x768xi1>, vector<8x768xf32>
    %87 = arith.mulf %86, %86 : vector<8x768xf32>
    %cst_54 = arith.constant dense<0.000000e+00> : vector<8xf32>
    %88 = vector.multi_reduction <add>, %87, %cst_54 [1] : vector<8x768xf32> to vector<8xf32>
    %89 = vector.shape_cast %88 : vector<8xf32> to vector<8x1xf32>
    %cst_55 = arith.constant 0.001953125 : f32
    %90 = vector.broadcast %cst_55 : f32 to vector<8x1xf32>
    %91 = arith.mulf %89, %90 : vector<8x1xf32>
    %cst_56 = arith.constant 9.99999974E-6 : f32
    %92 = vector.broadcast %cst_56 : f32 to vector<8x1xf32>
    %93 = arith.addf %91, %92 : vector<8x1xf32>
    %94 = math.rsqrt %93 : vector<8x1xf32>
    %95 = arith.mulf %94, %66 : vector<8x1xf32>
    %96 = vector.broadcast %95 : vector<8x1xf32> to vector<8x768xf32>
    %97 = arith.mulf %82, %96 : vector<8x768xf32>
    %98 = vector.broadcast %68 : vector<8x1xf32> to vector<8x768xf32>
    %99 = arith.addf %97, %98 : vector<8x768xf32>
    %c732_i32 = arith.constant 732 : i32
    %100 = tpu.dynamic_rotate %99 by %c732_i32 dim 1 : vector<8x768xf32>, i32 -> vector<8x768xf32>
    %c36_i32 = arith.constant 36 : i32
    %101 = tpu.dynamic_rotate %99 by %c36_i32 dim 1 : vector<8x768xf32>, i32 -> vector<8x768xf32>
    %102 = vector.shape_cast %8 : vector<1x768xi1> to vector<1x768xi1>
    %103 = vector.broadcast %102 : vector<1x768xi1> to vector<8x768xi1>
    %104 = arith.select %103, %101, %99 : vector<8x768xi1>, vector<8x768xf32>
    %105 = vector.shape_cast %5 : vector<1x768xi1> to vector<1x768xi1>
    %106 = vector.broadcast %105 : vector<1x768xi1> to vector<8x768xi1>
    %107 = arith.select %106, %100, %104 : vector<8x768xi1>, vector<8x768xf32>
    %c766_i32 = arith.constant 766 : i32
    %108 = tpu.dynamic_rotate %107 by %c766_i32 dim 1 : vector<8x768xf32>, i32 -> vector<8x768xf32>
    %c2_i32 = arith.constant 2 : i32
    %109 = tpu.dynamic_rotate %107 by %c2_i32 dim 1 : vector<8x768xf32>, i32 -> vector<8x768xf32>
    %110 = vector.shape_cast %14 : vector<1x768xi1> to vector<1x768xi1>
    %111 = vector.broadcast %110 : vector<1x768xi1> to vector<8x768xi1>
    %112 = arith.select %111, %109, %107 : vector<8x768xi1>, vector<8x768xf32>
    %113 = vector.shape_cast %11 : vector<1x768xi1> to vector<1x768xi1>
    %114 = vector.broadcast %113 : vector<1x768xi1> to vector<8x768xi1>
    %115 = arith.select %114, %108, %112 : vector<8x768xi1>, vector<8x768xf32>
    %cst_57 = arith.constant 0.000000e+00 : f32
    %116 = vector.shape_cast %17 : vector<1x768xi1> to vector<1x768xi1>
    %117 = vector.broadcast %116 : vector<1x768xi1> to vector<8x768xi1>
    %118 = vector.broadcast %cst_57 : f32 to vector<8x768xf32>
    %119 = arith.select %117, %115, %118 : vector<8x768xi1>, vector<8x768xf32>
    %c0_58 = arith.constant 0 : index
    %c0_59 = arith.constant 0 : index
    %c0_60 = arith.constant 0 : index
    %120 = vector.load %arg2[%c0_58, %c0_59, %c0_60] : memref<18x8x8xf32, #tpu.memory_space<vmem>>, vector<1x8x8xf32>
    %121 = vector.shape_cast %120 : vector<1x8x8xf32> to vector<8x8xf32>
    %c19_i32_61 = arith.constant 19 : i32
    %122 = tpu.dynamic_rotate %119 by %c19_i32_61 dim 1 : vector<8x768xf32>, i32 -> vector<8x768xf32>
    %cst_62 = arith.constant dense<0.000000e+00> : vector<8x768xf32>
    %123 = tpu.matmul %121, %122, %cst_62 {dimension_numbers = #tpu.dot_dimension_numbers<[1], [0], [0], [1], [0, 0, 1, 1], [], []>} : vector<8x8xf32>, vector<8x768xf32>, vector<8x768xf32> -> vector<8x768xf32>
    %c1_63 = arith.constant 1 : index
    %c0_64 = arith.constant 0 : index
    %c0_65 = arith.constant 0 : index
    %124 = vector.load %arg2[%c1_63, %c0_64, %c0_65] : memref<18x8x8xf32, #tpu.memory_space<vmem>>, vector<1x8x8xf32>
    %125 = vector.shape_cast %124 : vector<1x8x8xf32> to vector<8x8xf32>
    %c18_i32_66 = arith.constant 18 : i32
    %126 = tpu.dynamic_rotate %119 by %c18_i32_66 dim 1 : vector<8x768xf32>, i32 -> vector<8x768xf32>
    %cst_67 = arith.constant dense<0.000000e+00> : vector<8x768xf32>
    %127 = tpu.matmul %125, %126, %cst_67 {dimension_numbers = #tpu.dot_dimension_numbers<[1], [0], [0], [1], [0, 0, 1, 1], [], []>} : vector<8x8xf32>, vector<8x768xf32>, vector<8x768xf32> -> vector<8x768xf32>
    %128 = arith.addf %123, %127 : vector<8x768xf32>
    %c2_68 = arith.constant 2 : index
    %c0_69 = arith.constant 0 : index
    %c0_70 = arith.constant 0 : index
    %129 = vector.load %arg2[%c2_68, %c0_69, %c0_70] : memref<18x8x8xf32, #tpu.memory_space<vmem>>, vector<1x8x8xf32>
    %130 = vector.shape_cast %129 : vector<1x8x8xf32> to vector<8x8xf32>
    %c17_i32_71 = arith.constant 17 : i32
    %131 = tpu.dynamic_rotate %119 by %c17_i32_71 dim 1 : vector<8x768xf32>, i32 -> vector<8x768xf32>
    %cst_72 = arith.constant dense<0.000000e+00> : vector<8x768xf32>
    %132 = tpu.matmul %130, %131, %cst_72 {dimension_numbers = #tpu.dot_dimension_numbers<[1], [0], [0], [1], [0, 0, 1, 1], [], []>} : vector<8x8xf32>, vector<8x768xf32>, vector<8x768xf32> -> vector<8x768xf32>
    %133 = arith.addf %128, %132 : vector<8x768xf32>
    %c3_73 = arith.constant 3 : index
    %c0_74 = arith.constant 0 : index
    %c0_75 = arith.constant 0 : index
    %134 = vector.load %arg2[%c3_73, %c0_74, %c0_75] : memref<18x8x8xf32, #tpu.memory_space<vmem>>, vector<1x8x8xf32>
    %135 = vector.shape_cast %134 : vector<1x8x8xf32> to vector<8x8xf32>
    %c1_i32_76 = arith.constant 1 : i32
    %136 = tpu.dynamic_rotate %119 by %c1_i32_76 dim 1 : vector<8x768xf32>, i32 -> vector<8x768xf32>
    %cst_77 = arith.constant dense<0.000000e+00> : vector<8x768xf32>
    %137 = tpu.matmul %135, %136, %cst_77 {dimension_numbers = #tpu.dot_dimension_numbers<[1], [0], [0], [1], [0, 0, 1, 1], [], []>} : vector<8x8xf32>, vector<8x768xf32>, vector<8x768xf32> -> vector<8x768xf32>
    %138 = arith.addf %133, %137 : vector<8x768xf32>
    %c4_78 = arith.constant 4 : index
    %c0_79 = arith.constant 0 : index
    %c0_80 = arith.constant 0 : index
    %139 = vector.load %arg2[%c4_78, %c0_79, %c0_80] : memref<18x8x8xf32, #tpu.memory_space<vmem>>, vector<1x8x8xf32>
    %140 = vector.shape_cast %139 : vector<1x8x8xf32> to vector<8x8xf32>
    %cst_81 = arith.constant dense<0.000000e+00> : vector<8x768xf32>
    %141 = tpu.matmul %140, %119, %cst_81 {dimension_numbers = #tpu.dot_dimension_numbers<[1], [0], [0], [1], [0, 0, 1, 1], [], []>} : vector<8x8xf32>, vector<8x768xf32>, vector<8x768xf32> -> vector<8x768xf32>
    %142 = arith.addf %138, %141 : vector<8x768xf32>
    %c5_82 = arith.constant 5 : index
    %c0_83 = arith.constant 0 : index
    %c0_84 = arith.constant 0 : index
    %143 = vector.load %arg2[%c5_82, %c0_83, %c0_84] : memref<18x8x8xf32, #tpu.memory_space<vmem>>, vector<1x8x8xf32>
    %144 = vector.shape_cast %143 : vector<1x8x8xf32> to vector<8x8xf32>
    %c767_i32_85 = arith.constant 767 : i32
    %145 = tpu.dynamic_rotate %119 by %c767_i32_85 dim 1 : vector<8x768xf32>, i32 -> vector<8x768xf32>
    %cst_86 = arith.constant dense<0.000000e+00> : vector<8x768xf32>
    %146 = tpu.matmul %144, %145, %cst_86 {dimension_numbers = #tpu.dot_dimension_numbers<[1], [0], [0], [1], [0, 0, 1, 1], [], []>} : vector<8x8xf32>, vector<8x768xf32>, vector<8x768xf32> -> vector<8x768xf32>
    %147 = arith.addf %142, %146 : vector<8x768xf32>
    %c6_87 = arith.constant 6 : index
    %c0_88 = arith.constant 0 : index
    %c0_89 = arith.constant 0 : index
    %148 = vector.load %arg2[%c6_87, %c0_88, %c0_89] : memref<18x8x8xf32, #tpu.memory_space<vmem>>, vector<1x8x8xf32>
    %149 = vector.shape_cast %148 : vector<1x8x8xf32> to vector<8x8xf32>
    %c751_i32_90 = arith.constant 751 : i32
    %150 = tpu.dynamic_rotate %119 by %c751_i32_90 dim 1 : vector<8x768xf32>, i32 -> vector<8x768xf32>
    %cst_91 = arith.constant dense<0.000000e+00> : vector<8x768xf32>
    %151 = tpu.matmul %149, %150, %cst_91 {dimension_numbers = #tpu.dot_dimension_numbers<[1], [0], [0], [1], [0, 0, 1, 1], [], []>} : vector<8x8xf32>, vector<8x768xf32>, vector<8x768xf32> -> vector<8x768xf32>
    %152 = arith.addf %147, %151 : vector<8x768xf32>
    %c7_92 = arith.constant 7 : index
    %c0_93 = arith.constant 0 : index
    %c0_94 = arith.constant 0 : index
    %153 = vector.load %arg2[%c7_92, %c0_93, %c0_94] : memref<18x8x8xf32, #tpu.memory_space<vmem>>, vector<1x8x8xf32>
    %154 = vector.shape_cast %153 : vector<1x8x8xf32> to vector<8x8xf32>
    %c750_i32_95 = arith.constant 750 : i32
    %155 = tpu.dynamic_rotate %119 by %c750_i32_95 dim 1 : vector<8x768xf32>, i32 -> vector<8x768xf32>
    %cst_96 = arith.constant dense<0.000000e+00> : vector<8x768xf32>
    %156 = tpu.matmul %154, %155, %cst_96 {dimension_numbers = #tpu.dot_dimension_numbers<[1], [0], [0], [1], [0, 0, 1, 1], [], []>} : vector<8x8xf32>, vector<8x768xf32>, vector<8x768xf32> -> vector<8x768xf32>
    %157 = arith.addf %152, %156 : vector<8x768xf32>
    %c8_97 = arith.constant 8 : index
    %c0_98 = arith.constant 0 : index
    %c0_99 = arith.constant 0 : index
    %158 = vector.load %arg2[%c8_97, %c0_98, %c0_99] : memref<18x8x8xf32, #tpu.memory_space<vmem>>, vector<1x8x8xf32>
    %159 = vector.shape_cast %158 : vector<1x8x8xf32> to vector<8x8xf32>
    %c749_i32_100 = arith.constant 749 : i32
    %160 = tpu.dynamic_rotate %119 by %c749_i32_100 dim 1 : vector<8x768xf32>, i32 -> vector<8x768xf32>
    %cst_101 = arith.constant dense<0.000000e+00> : vector<8x768xf32>
    %161 = tpu.matmul %159, %160, %cst_101 {dimension_numbers = #tpu.dot_dimension_numbers<[1], [0], [0], [1], [0, 0, 1, 1], [], []>} : vector<8x8xf32>, vector<8x768xf32>, vector<8x768xf32> -> vector<8x768xf32>
    %162 = arith.addf %157, %161 : vector<8x768xf32>
    %c0_102 = arith.constant 0 : index
    %c0_103 = arith.constant 0 : index
    %c0_104 = arith.constant 0 : index
    %c0_105 = arith.constant 0 : index
    %163 = vector.load %arg5[%c0_102, %c0_103, %c0_104, %c0_105] : memref<2x3x8x1xf32, #tpu.memory_space<vmem>>, vector<1x3x8x1xf32>
    %164 = vector.shape_cast %163 : vector<1x3x8x1xf32> to vector<3x8x1xf32>
    %165 = vector.extract_strided_slice %164 {offsets = [0, 0, 0], sizes = [1, 8, 1], strides = [1, 1, 1]} : vector<3x8x1xf32> to vector<1x8x1xf32>
    %166 = vector.shape_cast %165 : vector<1x8x1xf32> to vector<8x1xf32>
    %167 = vector.extract_strided_slice %164 {offsets = [1, 0, 0], sizes = [1, 8, 1], strides = [1, 1, 1]} : vector<3x8x1xf32> to vector<1x8x1xf32>
    %168 = vector.shape_cast %167 : vector<1x8x1xf32> to vector<8x1xf32>
    %169 = vector.extract_strided_slice %164 {offsets = [2, 0, 0], sizes = [1, 8, 1], strides = [1, 1, 1]} : vector<3x8x1xf32> to vector<1x8x1xf32>
    %170 = vector.shape_cast %169 : vector<1x8x1xf32> to vector<8x1xf32>
    %171 = vector.broadcast %166 : vector<8x1xf32> to vector<8x768xf32>
    %172 = arith.addf %162, %171 : vector<8x768xf32>
    %cst_106 = arith.constant 0.000000e+00 : f32
    %173 = vector.broadcast %cst_106 : f32 to vector<8x768xf32>
    %174 = arith.maximumf %172, %173 : vector<8x768xf32>
    %cst_107 = arith.constant 0.000000e+00 : f32
    %175 = vector.shape_cast %2 : vector<1x768xi1> to vector<1x768xi1>
    %176 = vector.broadcast %175 : vector<1x768xi1> to vector<8x768xi1>
    %177 = vector.broadcast %cst_107 : f32 to vector<8x768xf32>
    %178 = arith.select %176, %174, %177 : vector<8x768xi1>, vector<8x768xf32>
    %cst_108 = arith.constant dense<0.000000e+00> : vector<8xf32>
    %179 = vector.multi_reduction <add>, %178, %cst_108 [1] : vector<8x768xf32> to vector<8xf32>
    %180 = vector.shape_cast %179 : vector<8xf32> to vector<8x1xf32>
    %cst_109 = arith.constant 0.001953125 : f32
    %181 = vector.broadcast %cst_109 : f32 to vector<8x1xf32>
    %182 = arith.mulf %180, %181 : vector<8x1xf32>
    %183 = vector.broadcast %182 : vector<8x1xf32> to vector<8x768xf32>
    %184 = arith.subf %174, %183 : vector<8x768xf32>
    %cst_110 = arith.constant 0.000000e+00 : f32
    %185 = vector.shape_cast %2 : vector<1x768xi1> to vector<1x768xi1>
    %186 = vector.broadcast %185 : vector<1x768xi1> to vector<8x768xi1>
    %187 = vector.broadcast %cst_110 : f32 to vector<8x768xf32>
    %188 = arith.select %186, %184, %187 : vector<8x768xi1>, vector<8x768xf32>
    %189 = arith.mulf %188, %188 : vector<8x768xf32>
    %cst_111 = arith.constant dense<0.000000e+00> : vector<8xf32>
    %190 = vector.multi_reduction <add>, %189, %cst_111 [1] : vector<8x768xf32> to vector<8xf32>
    %191 = vector.shape_cast %190 : vector<8xf32> to vector<8x1xf32>
    %cst_112 = arith.constant 0.001953125 : f32
    %192 = vector.broadcast %cst_112 : f32 to vector<8x1xf32>
    %193 = arith.mulf %191, %192 : vector<8x1xf32>
    %cst_113 = arith.constant 9.99999974E-6 : f32
    %194 = vector.broadcast %cst_113 : f32 to vector<8x1xf32>
    %195 = arith.addf %193, %194 : vector<8x1xf32>
    %196 = math.rsqrt %195 : vector<8x1xf32>
    %197 = arith.mulf %196, %168 : vector<8x1xf32>
    %198 = vector.broadcast %197 : vector<8x1xf32> to vector<8x768xf32>
    %199 = arith.mulf %184, %198 : vector<8x768xf32>
    %200 = vector.broadcast %170 : vector<8x1xf32> to vector<8x768xf32>
    %201 = arith.addf %199, %200 : vector<8x768xf32>
    %c732_i32_114 = arith.constant 732 : i32
    %202 = tpu.dynamic_rotate %201 by %c732_i32_114 dim 1 : vector<8x768xf32>, i32 -> vector<8x768xf32>
    %c36_i32_115 = arith.constant 36 : i32
    %203 = tpu.dynamic_rotate %201 by %c36_i32_115 dim 1 : vector<8x768xf32>, i32 -> vector<8x768xf32>
    %204 = vector.shape_cast %8 : vector<1x768xi1> to vector<1x768xi1>
    %205 = vector.broadcast %204 : vector<1x768xi1> to vector<8x768xi1>
    %206 = arith.select %205, %203, %201 : vector<8x768xi1>, vector<8x768xf32>
    %207 = vector.shape_cast %5 : vector<1x768xi1> to vector<1x768xi1>
    %208 = vector.broadcast %207 : vector<1x768xi1> to vector<8x768xi1>
    %209 = arith.select %208, %202, %206 : vector<8x768xi1>, vector<8x768xf32>
    %c766_i32_116 = arith.constant 766 : i32
    %210 = tpu.dynamic_rotate %209 by %c766_i32_116 dim 1 : vector<8x768xf32>, i32 -> vector<8x768xf32>
    %c2_i32_117 = arith.constant 2 : i32
    %211 = tpu.dynamic_rotate %209 by %c2_i32_117 dim 1 : vector<8x768xf32>, i32 -> vector<8x768xf32>
    %212 = vector.shape_cast %14 : vector<1x768xi1> to vector<1x768xi1>
    %213 = vector.broadcast %212 : vector<1x768xi1> to vector<8x768xi1>
    %214 = arith.select %213, %211, %209 : vector<8x768xi1>, vector<8x768xf32>
    %215 = vector.shape_cast %11 : vector<1x768xi1> to vector<1x768xi1>
    %216 = vector.broadcast %215 : vector<1x768xi1> to vector<8x768xi1>
    %217 = arith.select %216, %210, %214 : vector<8x768xi1>, vector<8x768xf32>
    %cst_118 = arith.constant 0.000000e+00 : f32
    %218 = vector.shape_cast %17 : vector<1x768xi1> to vector<1x768xi1>
    %219 = vector.broadcast %218 : vector<1x768xi1> to vector<8x768xi1>
    %220 = vector.broadcast %cst_118 : f32 to vector<8x768xf32>
    %221 = arith.select %219, %217, %220 : vector<8x768xi1>, vector<8x768xf32>
    %c9 = arith.constant 9 : index
    %c0_119 = arith.constant 0 : index
    %c0_120 = arith.constant 0 : index
    %222 = vector.load %arg2[%c9, %c0_119, %c0_120] : memref<18x8x8xf32, #tpu.memory_space<vmem>>, vector<1x8x8xf32>
    %223 = vector.shape_cast %222 : vector<1x8x8xf32> to vector<8x8xf32>
    %c19_i32_121 = arith.constant 19 : i32
    %224 = tpu.dynamic_rotate %221 by %c19_i32_121 dim 1 : vector<8x768xf32>, i32 -> vector<8x768xf32>
    %cst_122 = arith.constant dense<0.000000e+00> : vector<8x768xf32>
    %225 = tpu.matmul %223, %224, %cst_122 {dimension_numbers = #tpu.dot_dimension_numbers<[1], [0], [0], [1], [0, 0, 1, 1], [], []>} : vector<8x8xf32>, vector<8x768xf32>, vector<8x768xf32> -> vector<8x768xf32>
    %c10 = arith.constant 10 : index
    %c0_123 = arith.constant 0 : index
    %c0_124 = arith.constant 0 : index
    %226 = vector.load %arg2[%c10, %c0_123, %c0_124] : memref<18x8x8xf32, #tpu.memory_space<vmem>>, vector<1x8x8xf32>
    %227 = vector.shape_cast %226 : vector<1x8x8xf32> to vector<8x8xf32>
    %c18_i32_125 = arith.constant 18 : i32
    %228 = tpu.dynamic_rotate %221 by %c18_i32_125 dim 1 : vector<8x768xf32>, i32 -> vector<8x768xf32>
    %cst_126 = arith.constant dense<0.000000e+00> : vector<8x768xf32>
    %229 = tpu.matmul %227, %228, %cst_126 {dimension_numbers = #tpu.dot_dimension_numbers<[1], [0], [0], [1], [0, 0, 1, 1], [], []>} : vector<8x8xf32>, vector<8x768xf32>, vector<8x768xf32> -> vector<8x768xf32>
    %230 = arith.addf %225, %229 : vector<8x768xf32>
    %c11 = arith.constant 11 : index
    %c0_127 = arith.constant 0 : index
    %c0_128 = arith.constant 0 : index
    %231 = vector.load %arg2[%c11, %c0_127, %c0_128] : memref<18x8x8xf32, #tpu.memory_space<vmem>>, vector<1x8x8xf32>
    %232 = vector.shape_cast %231 : vector<1x8x8xf32> to vector<8x8xf32>
    %c17_i32_129 = arith.constant 17 : i32
    %233 = tpu.dynamic_rotate %221 by %c17_i32_129 dim 1 : vector<8x768xf32>, i32 -> vector<8x768xf32>
    %cst_130 = arith.constant dense<0.000000e+00> : vector<8x768xf32>
    %234 = tpu.matmul %232, %233, %cst_130 {dimension_numbers = #tpu.dot_dimension_numbers<[1], [0], [0], [1], [0, 0, 1, 1], [], []>} : vector<8x8xf32>, vector<8x768xf32>, vector<8x768xf32> -> vector<8x768xf32>
    %235 = arith.addf %230, %234 : vector<8x768xf32>
    %c12 = arith.constant 12 : index
    %c0_131 = arith.constant 0 : index
    %c0_132 = arith.constant 0 : index
    %236 = vector.load %arg2[%c12, %c0_131, %c0_132] : memref<18x8x8xf32, #tpu.memory_space<vmem>>, vector<1x8x8xf32>
    %237 = vector.shape_cast %236 : vector<1x8x8xf32> to vector<8x8xf32>
    %c1_i32_133 = arith.constant 1 : i32
    %238 = tpu.dynamic_rotate %221 by %c1_i32_133 dim 1 : vector<8x768xf32>, i32 -> vector<8x768xf32>
    %cst_134 = arith.constant dense<0.000000e+00> : vector<8x768xf32>
    %239 = tpu.matmul %237, %238, %cst_134 {dimension_numbers = #tpu.dot_dimension_numbers<[1], [0], [0], [1], [0, 0, 1, 1], [], []>} : vector<8x8xf32>, vector<8x768xf32>, vector<8x768xf32> -> vector<8x768xf32>
    %240 = arith.addf %235, %239 : vector<8x768xf32>
    %c13 = arith.constant 13 : index
    %c0_135 = arith.constant 0 : index
    %c0_136 = arith.constant 0 : index
    %241 = vector.load %arg2[%c13, %c0_135, %c0_136] : memref<18x8x8xf32, #tpu.memory_space<vmem>>, vector<1x8x8xf32>
    %242 = vector.shape_cast %241 : vector<1x8x8xf32> to vector<8x8xf32>
    %cst_137 = arith.constant dense<0.000000e+00> : vector<8x768xf32>
    %243 = tpu.matmul %242, %221, %cst_137 {dimension_numbers = #tpu.dot_dimension_numbers<[1], [0], [0], [1], [0, 0, 1, 1], [], []>} : vector<8x8xf32>, vector<8x768xf32>, vector<8x768xf32> -> vector<8x768xf32>
    %244 = arith.addf %240, %243 : vector<8x768xf32>
    %c14 = arith.constant 14 : index
    %c0_138 = arith.constant 0 : index
    %c0_139 = arith.constant 0 : index
    %245 = vector.load %arg2[%c14, %c0_138, %c0_139] : memref<18x8x8xf32, #tpu.memory_space<vmem>>, vector<1x8x8xf32>
    %246 = vector.shape_cast %245 : vector<1x8x8xf32> to vector<8x8xf32>
    %c767_i32_140 = arith.constant 767 : i32
    %247 = tpu.dynamic_rotate %221 by %c767_i32_140 dim 1 : vector<8x768xf32>, i32 -> vector<8x768xf32>
    %cst_141 = arith.constant dense<0.000000e+00> : vector<8x768xf32>
    %248 = tpu.matmul %246, %247, %cst_141 {dimension_numbers = #tpu.dot_dimension_numbers<[1], [0], [0], [1], [0, 0, 1, 1], [], []>} : vector<8x8xf32>, vector<8x768xf32>, vector<8x768xf32> -> vector<8x768xf32>
    %249 = arith.addf %244, %248 : vector<8x768xf32>
    %c15 = arith.constant 15 : index
    %c0_142 = arith.constant 0 : index
    %c0_143 = arith.constant 0 : index
    %250 = vector.load %arg2[%c15, %c0_142, %c0_143] : memref<18x8x8xf32, #tpu.memory_space<vmem>>, vector<1x8x8xf32>
    %251 = vector.shape_cast %250 : vector<1x8x8xf32> to vector<8x8xf32>
    %c751_i32_144 = arith.constant 751 : i32
    %252 = tpu.dynamic_rotate %221 by %c751_i32_144 dim 1 : vector<8x768xf32>, i32 -> vector<8x768xf32>
    %cst_145 = arith.constant dense<0.000000e+00> : vector<8x768xf32>
    %253 = tpu.matmul %251, %252, %cst_145 {dimension_numbers = #tpu.dot_dimension_numbers<[1], [0], [0], [1], [0, 0, 1, 1], [], []>} : vector<8x8xf32>, vector<8x768xf32>, vector<8x768xf32> -> vector<8x768xf32>
    %254 = arith.addf %249, %253 : vector<8x768xf32>
    %c16 = arith.constant 16 : index
    %c0_146 = arith.constant 0 : index
    %c0_147 = arith.constant 0 : index
    %255 = vector.load %arg2[%c16, %c0_146, %c0_147] : memref<18x8x8xf32, #tpu.memory_space<vmem>>, vector<1x8x8xf32>
    %256 = vector.shape_cast %255 : vector<1x8x8xf32> to vector<8x8xf32>
    %c750_i32_148 = arith.constant 750 : i32
    %257 = tpu.dynamic_rotate %221 by %c750_i32_148 dim 1 : vector<8x768xf32>, i32 -> vector<8x768xf32>
    %cst_149 = arith.constant dense<0.000000e+00> : vector<8x768xf32>
    %258 = tpu.matmul %256, %257, %cst_149 {dimension_numbers = #tpu.dot_dimension_numbers<[1], [0], [0], [1], [0, 0, 1, 1], [], []>} : vector<8x8xf32>, vector<8x768xf32>, vector<8x768xf32> -> vector<8x768xf32>
    %259 = arith.addf %254, %258 : vector<8x768xf32>
    %c17 = arith.constant 17 : index
    %c0_150 = arith.constant 0 : index
    %c0_151 = arith.constant 0 : index
    %260 = vector.load %arg2[%c17, %c0_150, %c0_151] : memref<18x8x8xf32, #tpu.memory_space<vmem>>, vector<1x8x8xf32>
    %261 = vector.shape_cast %260 : vector<1x8x8xf32> to vector<8x8xf32>
    %c749_i32_152 = arith.constant 749 : i32
    %262 = tpu.dynamic_rotate %221 by %c749_i32_152 dim 1 : vector<8x768xf32>, i32 -> vector<8x768xf32>
    %cst_153 = arith.constant dense<0.000000e+00> : vector<8x768xf32>
    %263 = tpu.matmul %261, %262, %cst_153 {dimension_numbers = #tpu.dot_dimension_numbers<[1], [0], [0], [1], [0, 0, 1, 1], [], []>} : vector<8x8xf32>, vector<8x768xf32>, vector<8x768xf32> -> vector<8x768xf32>
    %264 = arith.addf %259, %263 : vector<8x768xf32>
    %c1_154 = arith.constant 1 : index
    %c0_155 = arith.constant 0 : index
    %c0_156 = arith.constant 0 : index
    %c0_157 = arith.constant 0 : index
    %265 = vector.load %arg5[%c1_154, %c0_155, %c0_156, %c0_157] : memref<2x3x8x1xf32, #tpu.memory_space<vmem>>, vector<1x3x8x1xf32>
    %266 = vector.shape_cast %265 : vector<1x3x8x1xf32> to vector<3x8x1xf32>
    %267 = vector.extract_strided_slice %266 {offsets = [0, 0, 0], sizes = [1, 8, 1], strides = [1, 1, 1]} : vector<3x8x1xf32> to vector<1x8x1xf32>
    %268 = vector.shape_cast %267 : vector<1x8x1xf32> to vector<8x1xf32>
    %269 = vector.extract_strided_slice %266 {offsets = [1, 0, 0], sizes = [1, 8, 1], strides = [1, 1, 1]} : vector<3x8x1xf32> to vector<1x8x1xf32>
    %270 = vector.shape_cast %269 : vector<1x8x1xf32> to vector<8x1xf32>
    %271 = vector.extract_strided_slice %266 {offsets = [2, 0, 0], sizes = [1, 8, 1], strides = [1, 1, 1]} : vector<3x8x1xf32> to vector<1x8x1xf32>
    %272 = vector.shape_cast %271 : vector<1x8x1xf32> to vector<8x1xf32>
    %273 = vector.broadcast %268 : vector<8x1xf32> to vector<8x768xf32>
    %274 = arith.addf %264, %273 : vector<8x768xf32>
    %cst_158 = arith.constant 0.000000e+00 : f32
    %275 = vector.broadcast %cst_158 : f32 to vector<8x768xf32>
    %276 = arith.maximumf %274, %275 : vector<8x768xf32>
    %cst_159 = arith.constant 0.000000e+00 : f32
    %277 = vector.shape_cast %2 : vector<1x768xi1> to vector<1x768xi1>
    %278 = vector.broadcast %277 : vector<1x768xi1> to vector<8x768xi1>
    %279 = vector.broadcast %cst_159 : f32 to vector<8x768xf32>
    %280 = arith.select %278, %276, %279 : vector<8x768xi1>, vector<8x768xf32>
    %cst_160 = arith.constant dense<0.000000e+00> : vector<8xf32>
    %281 = vector.multi_reduction <add>, %280, %cst_160 [1] : vector<8x768xf32> to vector<8xf32>
    %282 = vector.shape_cast %281 : vector<8xf32> to vector<8x1xf32>
    %cst_161 = arith.constant 0.001953125 : f32
    %283 = vector.broadcast %cst_161 : f32 to vector<8x1xf32>
    %284 = arith.mulf %282, %283 : vector<8x1xf32>
    %285 = vector.broadcast %284 : vector<8x1xf32> to vector<8x768xf32>
    %286 = arith.subf %276, %285 : vector<8x768xf32>
    %cst_162 = arith.constant 0.000000e+00 : f32
    %287 = vector.shape_cast %2 : vector<1x768xi1> to vector<1x768xi1>
    %288 = vector.broadcast %287 : vector<1x768xi1> to vector<8x768xi1>
    %289 = vector.broadcast %cst_162 : f32 to vector<8x768xf32>
    %290 = arith.select %288, %286, %289 : vector<8x768xi1>, vector<8x768xf32>
    %291 = arith.mulf %290, %290 : vector<8x768xf32>
    %cst_163 = arith.constant dense<0.000000e+00> : vector<8xf32>
    %292 = vector.multi_reduction <add>, %291, %cst_163 [1] : vector<8x768xf32> to vector<8xf32>
    %293 = vector.shape_cast %292 : vector<8xf32> to vector<8x1xf32>
    %cst_164 = arith.constant 0.001953125 : f32
    %294 = vector.broadcast %cst_164 : f32 to vector<8x1xf32>
    %295 = arith.mulf %293, %294 : vector<8x1xf32>
    %cst_165 = arith.constant 9.99999974E-6 : f32
    %296 = vector.broadcast %cst_165 : f32 to vector<8x1xf32>
    %297 = arith.addf %295, %296 : vector<8x1xf32>
    %298 = math.rsqrt %297 : vector<8x1xf32>
    %299 = arith.mulf %298, %270 : vector<8x1xf32>
    %300 = vector.broadcast %299 : vector<8x1xf32> to vector<8x768xf32>
    %301 = arith.mulf %286, %300 : vector<8x768xf32>
    %302 = vector.broadcast %272 : vector<8x1xf32> to vector<8x768xf32>
    %303 = arith.addf %301, %302 : vector<8x768xf32>
    %c0_166 = arith.constant 0 : index
    %c0_167 = arith.constant 0 : index
    %304 = vector.load %arg3[%c0_166, %c0_167] : memref<8x8xf32, #tpu.memory_space<vmem>>, vector<8x8xf32>
    %cst_168 = arith.constant dense<0.000000e+00> : vector<8x768xf32>
    %305 = tpu.matmul %304, %303, %cst_168 {dimension_numbers = #tpu.dot_dimension_numbers<[1], [0], [0], [1], [0, 0, 1, 1], [], []>} : vector<8x8xf32>, vector<8x768xf32>, vector<8x768xf32> -> vector<8x768xf32>
    %c0_169 = arith.constant 0 : index
    %c0_170 = arith.constant 0 : index
    %c0_171 = arith.constant 0 : index
    %306 = vector.load %arg6[%c0_169, %c0_170, %c0_171] : memref<3x8x1xf32, #tpu.memory_space<vmem>>, vector<3x8x1xf32>
    %307 = vector.extract_strided_slice %306 {offsets = [0, 0, 0], sizes = [1, 8, 1], strides = [1, 1, 1]} : vector<3x8x1xf32> to vector<1x8x1xf32>
    %308 = vector.shape_cast %307 : vector<1x8x1xf32> to vector<8x1xf32>
    %309 = vector.extract_strided_slice %306 {offsets = [1, 0, 0], sizes = [1, 8, 1], strides = [1, 1, 1]} : vector<3x8x1xf32> to vector<1x8x1xf32>
    %310 = vector.shape_cast %309 : vector<1x8x1xf32> to vector<8x1xf32>
    %311 = vector.extract_strided_slice %306 {offsets = [2, 0, 0], sizes = [1, 8, 1], strides = [1, 1, 1]} : vector<3x8x1xf32> to vector<1x8x1xf32>
    %312 = vector.shape_cast %311 : vector<1x8x1xf32> to vector<8x1xf32>
    %313 = vector.broadcast %308 : vector<8x1xf32> to vector<8x768xf32>
    %314 = arith.addf %305, %313 : vector<8x768xf32>
    %cst_172 = arith.constant 0.000000e+00 : f32
    %315 = vector.shape_cast %2 : vector<1x768xi1> to vector<1x768xi1>
    %316 = vector.broadcast %315 : vector<1x768xi1> to vector<8x768xi1>
    %317 = vector.broadcast %cst_172 : f32 to vector<8x768xf32>
    %318 = arith.select %316, %314, %317 : vector<8x768xi1>, vector<8x768xf32>
    %cst_173 = arith.constant dense<0.000000e+00> : vector<8xf32>
    %319 = vector.multi_reduction <add>, %318, %cst_173 [1] : vector<8x768xf32> to vector<8xf32>
    %320 = vector.shape_cast %319 : vector<8xf32> to vector<8x1xf32>
    %cst_174 = arith.constant 0.001953125 : f32
    %321 = vector.broadcast %cst_174 : f32 to vector<8x1xf32>
    %322 = arith.mulf %320, %321 : vector<8x1xf32>
    %323 = vector.broadcast %322 : vector<8x1xf32> to vector<8x768xf32>
    %324 = arith.subf %314, %323 : vector<8x768xf32>
    %cst_175 = arith.constant 0.000000e+00 : f32
    %325 = vector.shape_cast %2 : vector<1x768xi1> to vector<1x768xi1>
    %326 = vector.broadcast %325 : vector<1x768xi1> to vector<8x768xi1>
    %327 = vector.broadcast %cst_175 : f32 to vector<8x768xf32>
    %328 = arith.select %326, %324, %327 : vector<8x768xi1>, vector<8x768xf32>
    %329 = arith.mulf %328, %328 : vector<8x768xf32>
    %cst_176 = arith.constant dense<0.000000e+00> : vector<8xf32>
    %330 = vector.multi_reduction <add>, %329, %cst_176 [1] : vector<8x768xf32> to vector<8xf32>
    %331 = vector.shape_cast %330 : vector<8xf32> to vector<8x1xf32>
    %cst_177 = arith.constant 0.001953125 : f32
    %332 = vector.broadcast %cst_177 : f32 to vector<8x1xf32>
    %333 = arith.mulf %331, %332 : vector<8x1xf32>
    %cst_178 = arith.constant 9.99999974E-6 : f32
    %334 = vector.broadcast %cst_178 : f32 to vector<8x1xf32>
    %335 = arith.addf %333, %334 : vector<8x1xf32>
    %336 = math.rsqrt %335 : vector<8x1xf32>
    %337 = arith.mulf %336, %310 : vector<8x1xf32>
    %338 = vector.broadcast %337 : vector<8x1xf32> to vector<8x768xf32>
    %339 = arith.mulf %324, %338 : vector<8x768xf32>
    %340 = vector.broadcast %312 : vector<8x1xf32> to vector<8x768xf32>
    %341 = arith.addf %339, %340 : vector<8x768xf32>
    %c0_179 = arith.constant 0 : index
    %c0_180 = arith.constant 0 : index
    %342 = vector.load %arg8[%c0_179, %c0_180] : memref<8x768xf32, #tpu.memory_space<vmem>>, vector<8x768xf32>
    tpu.vector_store %arg8[%c0_179, %c0_180], %341 {strides = array<i32>} : memref<8x768xf32, #tpu.memory_space<vmem>>, vector<8x768xf32>,
    return
  }
}

</mosaic_0001>

<llo_original>
// kernel: net_forward.1
$region0: #{net_forward.1}
  #allocation0 [shape = 'u32[]', space=smem, size = 0x4, offset = 0x4, fixed_abs, tag = 'smem constant byte address 0x4 - core index']
  #allocation1 [shape = 'u32[144,128]{1,0:T(1,128)}', space=vmem, size = 0x12000, scoped, tag = 'internal scratch']
  %s0 = inlined_call_operand.vmem [shape: f32[8,768], index: 0, kind: input, shape index: {}]
  %s1 = inlined_call_operand.vmem [shape: f32[9,8,8], index: 1, kind: input, shape index: {}]
  %s2 = inlined_call_operand.vmem [shape: f32[18,8,8], index: 2, kind: input, shape index: {}]
  %s3 = inlined_call_operand.vmem [shape: f32[8,8], index: 3, kind: input, shape index: {}]
  %s4 = inlined_call_operand.vmem [shape: f32[3,8,1], index: 4, kind: input, shape index: {}]
  %s5 = inlined_call_operand.vmem [shape: f32[2,3,8,1], index: 5, kind: input, shape index: {}]
  %s6 = inlined_call_operand.vmem [shape: f32[3,8,1], index: 6, kind: input, shape index: {}]
  %s7 = inlined_call_operand.vmem [shape: f32[8,768], index: 7, kind: input, shape index: {}]
  %s8 = inlined_call_operand.vmem [shape: f32[8,768], index: 8, kind: output, shape index: {}]
  %s9 = sld [smem:[#allocation0]]
  $region42: #{net_forward.1} parent=0
    _
  %s11 = ssub.s32 1, %s9
  %s12 = scalar_select 0, %s11, %s9
  // Predicated region
  $region2: #{net_forward.1} parent=0 // pred_check
    _
  $region3: #{net_forward.1} parent=0 // pred_check_branch
    %14 = sbr.rel (0) target = $region5
  $region4: #{net_forward.1} parent=0 // pred_region
    _
  $region5: #{net_forward.1} parent=0 // pred_fallthru
    _
  // Predicated region
  $region6: #{net_forward.1} parent=0 // pred_check
    _
  $region7: #{net_forward.1} parent=0 // pred_check_branch
    %16 = sbr.rel (0) target = $region9
  $region8: #{net_forward.1} parent=0 // pred_region
    _
  $region9: #{net_forward.1} parent=0 // pred_fallthru
    _
  // Predicated region
  $region10: #{net_forward.1} parent=0 // pred_check
    _
  $region11: #{net_forward.1} parent=0 // pred_check_branch
    %18 = sbr.rel (0) target = $region13
  $region12: #{net_forward.1} parent=0 // pred_region
    _
  $region13: #{net_forward.1} parent=0 // pred_fallthru
    _
  // Predicated region
  $region14: #{net_forward.1} parent=0 // pred_check
    _
  $region15: #{net_forward.1} parent=0 // pred_check_branch
    %20 = sbr.rel (0) target = $region17
  $region16: #{net_forward.1} parent=0 // pred_region
    _
  $region17: #{net_forward.1} parent=0 // pred_fallthru
    _
  // Predicated region
  $region18: #{net_forward.1} parent=0 // pred_check
    _
  $region19: #{net_forward.1} parent=0 // pred_check_branch
    %22 = sbr.rel (0) target = $region21
  $region20: #{net_forward.1} parent=0 // pred_region
    _
  $region21: #{net_forward.1} parent=0 // pred_fallthru
    _
  // Predicated region
  $region22: #{net_forward.1} parent=0 // pred_check
    _
  $region23: #{net_forward.1} parent=0 // pred_check_branch
    %24 = sbr.rel (0) target = $region25
  $region24: #{net_forward.1} parent=0 // pred_region
    _
  $region25: #{net_forward.1} parent=0 // pred_fallthru
    _
  // Predicated region
  $region26: #{net_forward.1} parent=0 // pred_check
    _
  $region27: #{net_forward.1} parent=0 // pred_check_branch
    %26 = sbr.rel (0) target = $region29
  $region28: #{net_forward.1} parent=0 // pred_region
    _
  $region29: #{net_forward.1} parent=0 // pred_fallthru
    _
  // Predicated region
  $region30: #{net_forward.1} parent=0 // pred_check
    _
  $region31: #{net_forward.1} parent=0 // pred_check_branch
    %28 = sbr.rel (0) target = $region33
  $region32: #{net_forward.1} parent=0 // pred_region
    _
  $region33: #{net_forward.1} parent=0 // pred_fallthru
    _
  %v29 = vld [vmem:[%s7] ss:$8 sm:$0xf]
  %v30 = vld [vmem:[%s7] ss:$8 sm:$0x30]
  %v31 = vor.u32 %v29, %v30
  %vm32 = vcmp.gt.f32.partialorder %v31, 0.5
  %s33 = scalar_lea.vmem %s7, 1
  %v34 = vld [vmem:[%s33] ss:$8 sm:$0xf]
  %v35 = vld [vmem:[%s33] ss:$8 sm:$0x30]
  %v36 = vor.u32 %v34, %v35
  %vm37 = vcmp.gt.f32.partialorder %v36, 0.5
  %s38 = scalar_lea.vmem %s7, 2
  %v39 = vld [vmem:[%s38] ss:$8 sm:$0xf]
  %v40 = vld [vmem:[%s38] ss:$8 sm:$0x30]
  %v41 = vor.u32 %v39, %v40
  %vm42 = vcmp.gt.f32.partialorder %v41, 0.5
  %s43 = scalar_lea.vmem %s7, 3
  %v44 = vld [vmem:[%s43] ss:$8 sm:$0xf]
  %v45 = vld [vmem:[%s43] ss:$8 sm:$0x30]
  %v46 = vor.u32 %v44, %v45
  %vm47 = vcmp.gt.f32.partialorder %v46, 0.5
  %s48 = scalar_lea.vmem %s7, 4
  %v49 = vld [vmem:[%s48] ss:$8 sm:$0xf]
  %v50 = vld [vmem:[%s48] ss:$8 sm:$0x30]
  %v51 = vor.u32 %v49, %v50
  %vm52 = vcmp.gt.f32.partialorder %v51, 0.5
  %s53 = scalar_lea.vmem %s7, 5
  %v54 = vld [vmem:[%s53] ss:$8 sm:$0xf]
  %v55 = vld [vmem:[%s53] ss:$8 sm:$0x30]
  %v56 = vor.u32 %v54, %v55
  %vm57 = vcmp.gt.f32.partialorder %v56, 0.5
  %v58 = vld [vmem:[%s0] sm:$0xff]
  %v59 = vld [vmem:[%s0 + $0x8] sm:$0xff]
  %v60 = vld [vmem:[%s0 + $0x10] sm:$0xff]
  %v61 = vld [vmem:[%s0 + $0x18] sm:$0xff]
  %v62 = vld [vmem:[%s0 + $0x20] sm:$0xff]
  %v63 = vld [vmem:[%s0 + $0x28] sm:$0xff]
  %v64 = vld [vmem:[%s1] sm:$0xff]
  %65 = vrot.lane.b32.xlu0 %v58, 19
  %v66 = vpop.permute.xlu0 %65
  %67 = vrot.lane.b32.xlu0 %v59, 19
  %v68 = vpop.permute.xlu0 %67
  %69 = vrot.lane.b32.xlu0 %v60, 19
  %v70 = vpop.permute.xlu0 %69
  %71 = vrot.lane.b32.xlu0 %v61, 19
  %v72 = vpop.permute.xlu0 %71
  %73 = vrot.lane.b32.xlu0 %v62, 19
  %v74 = vpop.permute.xlu0 %73
  %75 = vrot.lane.b32.xlu0 %v63, 19
  %v76 = vpop.permute.xlu0 %75
  %v77 = vlaneseq
  %v78 = vand.u32 %v77, 127
  %vm79 = vcmp.lt.s32.totalorder %v78, 19
  %v80 = vsel %vm79, %v74, %v76
  %v81 = vsel %vm79, %v72, %v74
  %v82 = vsel %vm79, %v70, %v72
  %v83 = vsel %vm79, %v68, %v70
  %v84 = vsel %vm79, %v66, %v68
  %v85 = vsel %vm79, %v76, %v66
  %s86 = scalar_lea.vmem %s1, 8
  %v87 = vld [vmem:[%s86] sm:$0xff]
  %88 = vrot.lane.b32.xlu0 %v58, 18
  %v89 = vpop.permute.xlu0 %88
  %90 = vrot.lane.b32.xlu0 %v59, 18
  %v91 = vpop.permute.xlu0 %90
  %92 = vrot.lane.b32.xlu0 %v60, 18
  %v93 = vpop.permute.xlu0 %92
  %94 = vrot.lane.b32.xlu0 %v61, 18
  %v95 = vpop.permute.xlu0 %94
  %96 = vrot.lane.b32.xlu0 %v62, 18
  %v97 = vpop.permute.xlu0 %96
  %98 = vrot.lane.b32.xlu0 %v63, 18
  %v99 = vpop.permute.xlu0 %98
  %vm100 = vcmp.lt.s32.totalorder %v78, 18
  %v101 = vsel %vm100, %v97, %v99
  %v102 = vsel %vm100, %v95, %v97
  %v103 = vsel %vm100, %v93, %v95
  %v104 = vsel %vm100, %v91, %v93
  %v105 = vsel %vm100, %v89, %v91
  %v106 = vsel %vm100, %v99, %v89
  %vm107 = vcmask 64512
  %v109 = vsel %vm107, %v87, 0
  %111 = vmatprep.subr.mxu0 %v105
  %112 = vmatpush1.msra.mxu0 %v106
  %113 = vmatprep.subr.mxu0 0.0
  %114 = vmatpush1.msra.mxu0 0.0
  %115 = vmatprep.subr.mxu0 0.0
  %116 = vmatpush1.msra.mxu0 0.0
  %117 = vmatprep.subr.mxu0 0.0
  %118 = vmatpush1.msra.mxu0 0.0
  %119 = vmatprep.subr.mxu0 0.0
  %120 = vmatpush1.msra.mxu0 0.0
  %121 = vmatprep.subr.mxu0 0.0
  %122 = vmatpush1.msra.mxu0 0.0
  %123 = vmatprep.subr.mxu0 0.0
  %124 = vmatpush1.msra.mxu0 0.0
  %125 = vmatprep.subr.mxu0 0.0
  %126 = vmatpush1.msra.mxu0 0.0
  %127 = vmatprep.subr.mxu0 0.0
  %128 = vmatpush1.msra.mxu0 0.0
  %129 = vmatprep.subr.mxu0 0.0
  %130 = vmatpush1.msra.mxu0 0.0
  %131 = vmatprep.subr.mxu0 0.0
  %132 = vmatpush1.msra.mxu0 0.0
  %133 = vmatprep.subr.mxu0 0.0
  %134 = vmatpush1.msra.mxu0 0.0
  %135 = vmatprep.subr.mxu0 0.0
  %136 = vmatpush1.msra.mxu0 0.0
  %137 = vmatprep.subr.mxu0 0.0
  %138 = vmatpush1.msra.mxu0 0.0
  %139 = vmatprep.subr.mxu0 0.0
  %140 = vmatpush1.msra.mxu0 0.0
  %141 = vmatprep.subr.mxu0 0.0
  %142 = vmatpush1.msra.mxu0 0.0
  %143 = vmatprep.subr.mxu0 0.0
  %144 = vmatpush1.msra.mxu0 0.0
  %145 = vmatprep.subr.mxu0 0.0
  %146 = vmatpush1.msra.mxu0 0.0
  %147 = vmatprep.subr.mxu0 0.0
  %148 = vmatpush1.msra.mxu0 0.0
  %149 = vmatprep.subr.mxu0 0.0
  %150 = vmatpush1.msra.mxu0 0.0
  %151 = vmatprep.subr.mxu0 0.0
  %152 = vmatpush1.msra.mxu0 0.0
  %153 = vmatprep.subr.mxu0 0.0
  %154 = vmatpush1.msra.mxu0 0.0
  %155 = vmatprep.subr.mxu0 0.0
  %156 = vmatpush1.msra.mxu0 0.0
  %157 = vmatprep.subr.mxu0 0.0
  %158 = vmatpush1.msra.mxu0 0.0
  %159 = vmatprep.subr.mxu0 0.0
  %160 = vmatpush1.msra.mxu0 0.0
  %161 = vmatprep.subr.mxu0 0.0
  %162 = vmatpush1.msra.mxu0 0.0
  %163 = vmatprep.subr.mxu0 0.0
  %164 = vmatpush1.msra.mxu0 0.0
  %165 = vmatprep.subr.mxu0 0.0
  %166 = vmatpush1.msra.mxu0 0.0
  %167 = vmatprep.subr.mxu0 0.0
  %168 = vmatpush1.msra.mxu0 0.0
  %169 = vmatprep.subr.mxu0 0.0
  %170 = vmatpush1.msra.mxu0 0.0
  %171 = vmatprep.subr.mxu0 0.0
  %172 = vmatpush1.msra.mxu0 0.0
  %173 = vmatprep.subr.mxu0 0.0
  %174 = vmatpush1.msra.mxu0 0.0
  %175 = vmatprep.mubr.f32.mxu0 0.0
  %176 = vmatmul.mubr.f32.gmra.mrb[0].mxu0 %v109
  %v177 = vpop.f32.mrb[0].mxu0
  %v178 = vadd.f32 0.0, %v177
  %v179 = vpop.f32.mrb[0].mxu0
  %v180 = vadd.f32 0.0, %v179
  %181 = vdwg.mxu0
  %182 = vmatprep.subr.mxu0 %v103
  %183 = vmatpush1.msra.mxu0 %v104
  %184 = vmatprep.subr.mxu0 0.0
  %185 = vmatpush1.msra.mxu0 0.0
  %186 = vmatprep.subr.mxu0 0.0
  %187 = vmatpush1.msra.mxu0 0.0
  %188 = vmatprep.subr.mxu0 0.0
  %189 = vmatpush1.msra.mxu0 0.0
  %190 = vmatprep.subr.mxu0 0.0
  %191 = vmatpush1.msra.mxu0 0.0
  %192 = vmatprep.subr.mxu0 0.0
  %193 = vmatpush1.msra.mxu0 0.0
  %194 = vmatprep.subr.mxu0 0.0
  %195 = vmatpush1.msra.mxu0 0.0
  %196 = vmatprep.subr.mxu0 0.0
  %197 = vmatpush1.msra.mxu0 0.0
  %198 = vmatprep.subr.mxu0 0.0
  %199 = vmatpush1.msra.mxu0 0.0
  %200 = vmatprep.subr.mxu0 0.0
  %201 = vmatpush1.msra.mxu0 0.0
  %202 = vmatprep.subr.mxu0 0.0
  %203 = vmatpush1.msra.mxu0 0.0
  %204 = vmatprep.subr.mxu0 0.0
  %205 = vmatpush1.msra.mxu0 0.0
  %206 = vmatprep.subr.mxu0 0.0
  %207 = vmatpush1.msra.mxu0 0.0
  %208 = vmatprep.subr.mxu0 0.0
  %209 = vmatpush1.msra.mxu0 0.0
  %210 = vmatprep.subr.mxu0 0.0
  %211 = vmatpush1.msra.mxu0 0.0
  %212 = vmatprep.subr.mxu0 0.0
  %213 = vmatpush1.msra.mxu0 0.0
  %214 = vmatprep.subr.mxu0 0.0
  %215 = vmatpush1.msra.mxu0 0.0
  %216 = vmatprep.subr.mxu0 0.0
  %217 = vmatpush1.msra.mxu0 0.0
  %218 = vmatprep.subr.mxu0 0.0
  %219 = vmatpush1.msra.mxu0 0.0
  %220 = vmatprep.subr.mxu0 0.0
  %221 = vmatpush1.msra.mxu0 0.0
  %222 = vmatprep.subr.mxu0 0.0
  %223 = vmatpush1.msra.mxu0 0.0
  %224 = vmatprep.subr.mxu0 0.0
  %225 = vmatpush1.msra.mxu0 0.0
  %226 = vmatprep.subr.mxu0 0.0
  %227 = vmatpush1.msra.mxu0 0.0
  %228 = vmatprep.subr.mxu0 0.0
  %229 = vmatpush1.msra.mxu0 0.0
  %230 = vmatprep.subr.mxu0 0.0
  %231 = vmatpush1.msra.mxu0 0.0
  %232 = vmatprep.subr.mxu0 0.0
  %233 = vmatpush1.msra.mxu0 0.0
  %234 = vmatprep.subr.mxu0 0.0
  %235 = vmatpush1.msra.mxu0 0.0
  %236 = vmatprep.subr.mxu0 0.0
  %237 = vmatpush1.msra.mxu0 0.0
  %238 = vmatprep.subr.mxu0 0.0
  %239 = vmatpush1.msra.mxu0 0.0
  %240 = vmatprep.subr.mxu0 0.0
  %241 = vmatpush1.msra.mxu0 0.0
  %242 = vmatprep.subr.mxu0 0.0
  %243 = vmatpush1.msra.mxu0 0.0
  %244 = vmatprep.subr.mxu0 0.0
  %245 = vmatpush1.msra.mxu0 0.0
  %246 = vmatprep.mubr.f32.mxu0 0.0
  %247 = vmatmul.mubr.f32.gmra.mrb[0].mxu0 %v109
  %v248 = vpop.f32.mrb[0].mxu0
  %v249 = vadd.f32 0.0, %v248
  %v250 = vpop.f32.mrb[0].mxu0
  %v251 = vadd.f32 0.0, %v250
  %252 = vdwg.mxu0
  %253 = vmatprep.subr.mxu0 %v101
  %254 = vmatpush1.msra.mxu0 %v102
  %255 = vmatprep.subr.mxu0 0.0
  %256 = vmatpush1.msra.mxu0 0.0
  %257 = vmatprep.subr.mxu0 0.0
  %258 = vmatpush1.msra.mxu0 0.0
  %259 = vmatprep.subr.mxu0 0.0
  %260 = vmatpush1.msra.mxu0 0.0
  %261 = vmatprep.subr.mxu0 0.0
  %262 = vmatpush1.msra.mxu0 0.0
  %263 = vmatprep.subr.mxu0 0.0
  %264 = vmatpush1.msra.mxu0 0.0
  %265 = vmatprep.subr.mxu0 0.0
  %266 = vmatpush1.msra.mxu0 0.0
  %267 = vmatprep.subr.mxu0 0.0
  %268 = vmatpush1.msra.mxu0 0.0
  %269 = vmatprep.subr.mxu0 0.0
  %270 = vmatpush1.msra.mxu0 0.0
  %271 = vmatprep.subr.mxu0 0.0
  %272 = vmatpush1.msra.mxu0 0.0
  %273 = vmatprep.subr.mxu0 0.0
  %274 = vmatpush1.msra.mxu0 0.0
  %275 = vmatprep.subr.mxu0 0.0
  %276 = vmatpush1.msra.mxu0 0.0
  %277 = vmatprep.subr.mxu0 0.0
  %278 = vmatpush1.msra.mxu0 0.0
  %279 = vmatprep.subr.mxu0 0.0
  %280 = vmatpush1.msra.mxu0 0.0
  %281 = vmatprep.subr.mxu0 0.0
  %282 = vmatpush1.msra.mxu0 0.0
  %283 = vmatprep.subr.mxu0 0.0
  %284 = vmatpush1.msra.mxu0 0.0
  %285 = vmatprep.subr.mxu0 0.0
  %286 = vmatpush1.msra.mxu0 0.0
  %287 = vmatprep.subr.mxu0 0.0
  %288 = vmatpush1.msra.mxu0 0.0
  %289 = vmatprep.subr.mxu0 0.0
  %290 = vmatpush1.msra.mxu0 0.0
  %291 = vmatprep.subr.mxu0 0.0
  %292 = vmatpush1.msra.mxu0 0.0
  %293 = vmatprep.subr.mxu0 0.0
  %294 = vmatpush1.msra.mxu0 0.0
  %295 = vmatprep.subr.mxu0 0.0
  %296 = vmatpush1.msra.mxu0 0.0
  %297 = vmatprep.subr.mxu0 0.0
  %298 = vmatpush1.msra.mxu0 0.0
  %299 = vmatprep.subr.mxu0 0.0
  %300 = vmatpush1.msra.mxu0 0.0
  %301 = vmatprep.subr.mxu0 0.0
  %302 = vmatpush1.msra.mxu0 0.0
  %303 = vmatprep.subr.mxu0 0.0
  %304 = vmatpush1.msra.mxu0 0.0
  %305 = vmatprep.subr.mxu0 0.0
  %306 = vmatpush1.msra.mxu0 0.0
  %307 = vmatprep.subr.mxu0 0.0
  %308 = vmatpush1.msra.mxu0 0.0
  %309 = vmatprep.subr.mxu0 0.0
  %310 = vmatpush1.msra.mxu0 0.0
  %311 = vmatprep.subr.mxu0 0.0
  %312 = vmatpush1.msra.mxu0 0.0
  %313 = vmatprep.subr.mxu0 0.0
  %314 = vmatpush1.msra.mxu0 0.0
  %315 = vmatprep.subr.mxu0 0.0
  %316 = vmatpush1.msra.mxu0 0.0
  %317 = vmatprep.mubr.f32.mxu0 0.0
  %318 = vmatmul.mubr.f32.gmra.mrb[0].mxu0 %v109
  %v319 = vpop.f32.mrb[0].mxu0
  %v320 = vadd.f32 0.0, %v319
  %v321 = vpop.f32.mrb[0].mxu0
  %v322 = vadd.f32 0.0, %v321
  %323 = vdwg.mxu0
  %v325 = vsel %vm107, %v64, 0
  %327 = vmatprep.subr.mxu0 %v84
  %328 = vmatpush1.msra.mxu0 %v85
  %329 = vmatprep.subr.mxu0 0.0
  %330 = vmatpush1.msra.mxu0 0.0
  %331 = vmatprep.subr.mxu0 0.0
  %332 = vmatpush1.msra.mxu0 0.0
  %333 = vmatprep.subr.mxu0 0.0
  %334 = vmatpush1.msra.mxu0 0.0
  %335 = vmatprep.subr.mxu0 0.0
  %336 = vmatpush1.msra.mxu0 0.0
  %337 = vmatprep.subr.mxu0 0.0
  %338 = vmatpush1.msra.mxu0 0.0
  %339 = vmatprep.subr.mxu0 0.0
  %340 = vmatpush1.msra.mxu0 0.0
  %341 = vmatprep.subr.mxu0 0.0
  %342 = vmatpush1.msra.mxu0 0.0
  %343 = vmatprep.subr.mxu0 0.0
  %344 = vmatpush1.msra.mxu0 0.0
  %345 = vmatprep.subr.mxu0 0.0
  %346 = vmatpush1.msra.mxu0 0.0
  %347 = vmatprep.subr.mxu0 0.0
  %348 = vmatpush1.msra.mxu0 0.0
  %349 = vmatprep.subr.mxu0 0.0
  %350 = vmatpush1.msra.mxu0 0.0
  %351 = vmatprep.subr.mxu0 0.0
  %352 = vmatpush1.msra.mxu0 0.0
  %353 = vmatprep.subr.mxu0 0.0
  %354 = vmatpush1.msra.mxu0 0.0
  %355 = vmatprep.subr.mxu0 0.0
  %356 = vmatpush1.msra.mxu0 0.0
  %357 = vmatprep.subr.mxu0 0.0
  %358 = vmatpush1.msra.mxu0 0.0
  %359 = vmatprep.subr.mxu0 0.0
  %360 = vmatpush1.msra.mxu0 0.0
  %361 = vmatprep.subr.mxu0 0.0
  %362 = vmatpush1.msra.mxu0 0.0
  %363 = vmatprep.subr.mxu0 0.0
  %364 = vmatpush1.msra.mxu0 0.0
  %365 = vmatprep.subr.mxu0 0.0
  %366 = vmatpush1.msra.mxu0 0.0
  %367 = vmatprep.subr.mxu0 0.0
  %368 = vmatpush1.msra.mxu0 0.0
  %369 = vmatprep.subr.mxu0 0.0
  %370 = vmatpush1.msra.mxu0 0.0
  %371 = vmatprep.subr.mxu0 0.0
  %372 = vmatpush1.msra.mxu0 0.0
  %373 = vmatprep.subr.mxu0 0.0
  %374 = vmatpush1.msra.mxu0 0.0
  %375 = vmatprep.subr.mxu0 0.0
  %376 = vmatpush1.msra.mxu0 0.0
  %377 = vmatprep.subr.mxu0 0.0
  %378 = vmatpush1.msra.mxu0 0.0
  %379 = vmatprep.subr.mxu0 0.0
  %380 = vmatpush1.msra.mxu0 0.0
  %381 = vmatprep.subr.mxu0 0.0
  %382 = vmatpush1.msra.mxu0 0.0
  %383 = vmatprep.subr.mxu0 0.0
  %384 = vmatpush1.msra.mxu0 0.0
  %385 = vmatprep.subr.mxu0 0.0
  %386 = vmatpush1.msra.mxu0 0.0
  %387 = vmatprep.subr.mxu0 0.0
  %388 = vmatpush1.msra.mxu0 0.0
  %389 = vmatprep.subr.mxu0 0.0
  %390 = vmatpush1.msra.mxu0 0.0
  %391 = vmatprep.mubr.f32.mxu0 0.0
  %392 = vmatmul.mubr.f32.gmra.mrb[0].mxu0 %v325
  %v393 = vpop.f32.mrb[0].mxu0
  %v394 = vadd.f32 %v178, %v393
  %v395 = vpop.f32.mrb[0].mxu0
  %v396 = vadd.f32 %v180, %v395
  %397 = vdwg.mxu0
  %398 = vmatprep.subr.mxu0 %v82
  %399 = vmatpush1.msra.mxu0 %v83
  %400 = vmatprep.subr.mxu0 0.0
  %401 = vmatpush1.msra.mxu0 0.0
  %402 = vmatprep.subr.mxu0 0.0
  %403 = vmatpush1.msra.mxu0 0.0
  %404 = vmatprep.subr.mxu0 0.0
  %405 = vmatpush1.msra.mxu0 0.0
  %406 = vmatprep.subr.mxu0 0.0
  %407 = vmatpush1.msra.mxu0 0.0
  %408 = vmatprep.subr.mxu0 0.0
  %409 = vmatpush1.msra.mxu0 0.0
  %410 = vmatprep.subr.mxu0 0.0
  %411 = vmatpush1.msra.mxu0 0.0
  %412 = vmatprep.subr.mxu0 0.0
  %413 = vmatpush1.msra.mxu0 0.0
  %414 = vmatprep.subr.mxu0 0.0
  %415 = vmatpush1.msra.mxu0 0.0
  %416 = vmatprep.subr.mxu0 0.0
  %417 = vmatpush1.msra.mxu0 0.0
  %418 = vmatprep.subr.mxu0 0.0
  %419 = vmatpush1.msra.mxu0 0.0
  %420 = vmatprep.subr.mxu0 0.0
  %421 = vmatpush1.msra.mxu0 0.0
  %422 = vmatprep.subr.mxu0 0.0
  %423 = vmatpush1.msra.mxu0 0.0
  %424 = vmatprep.subr.mxu0 0.0
  %425 = vmatpush1.msra.mxu0 0.0
  %426 = vmatprep.subr.mxu0 0.0
  %427 = vmatpush1.msra.mxu0 0.0
  %428 = vmatprep.subr.mxu0 0.0
  %429 = vmatpush1.msra.mxu0 0.0
  %430 = vmatprep.subr.mxu0 0.0
  %431 = vmatpush1.msra.mxu0 0.0
  %432 = vmatprep.subr.mxu0 0.0
  %433 = vmatpush1.msra.mxu0 0.0
  %434 = vmatprep.subr.mxu0 0.0
  %435 = vmatpush1.msra.mxu0 0.0
  %436 = vmatprep.subr.mxu0 0.0
  %437 = vmatpush1.msra.mxu0 0.0
  %438 = vmatprep.subr.mxu0 0.0
  %439 = vmatpush1.msra.mxu0 0.0
  %440 = vmatprep.subr.mxu0 0.0
  %441 = vmatpush1.msra.mxu0 0.0
  %442 = vmatprep.subr.mxu0 0.0
  %443 = vmatpush1.msra.mxu0 0.0
  %444 = vmatprep.subr.mxu0 0.0
  %445 = vmatpush1.msra.mxu0 0.0
  %446 = vmatprep.subr.mxu0 0.0
  %447 = vmatpush1.msra.mxu0 0.0
  %448 = vmatprep.subr.mxu0 0.0
  %449 = vmatpush1.msra.mxu0 0.0
  %450 = vmatprep.subr.mxu0 0.0
  %451 = vmatpush1.msra.mxu0 0.0
  %452 = vmatprep.subr.mxu0 0.0
  %453 = vmatpush1.msra.mxu0 0.0
  %454 = vmatprep.subr.mxu0 0.0
  %455 = vmatpush1.msra.mxu0 0.0
  %456 = vmatprep.subr.mxu0 0.0
  %457 = vmatpush1.msra.mxu0 0.0
  %458 = vmatprep.subr.mxu0 0.0
  %459 = vmatpush1.msra.mxu0 0.0
  %460 = vmatprep.subr.mxu0 0.0
  %461 = vmatpush1.msra.mxu0 0.0
  %462 = vmatprep.mubr.f32.mxu0 0.0
  %463 = vmatmul.mubr.f32.gmra.mrb[0].mxu0 %v325
  %v464 = vpop.f32.mrb[0].mxu0
  %v465 = vadd.f32 %v249, %v464
  %v466 = vpop.f32.mrb[0].mxu0
  %v467 = vadd.f32 %v251, %v466
  %468 = vdwg.mxu0
  %469 = vmatprep.subr.mxu0 %v80
  %470 = vmatpush1.msra.mxu0 %v81
  %471 = vmatprep.subr.mxu0 0.0
  %472 = vmatpush1.msra.mxu0 0.0
  %473 = vmatprep.subr.mxu0 0.0
  %474 = vmatpush1.msra.mxu0 0.0
  %475 = vmatprep.subr.mxu0 0.0
  %476 = vmatpush1.msra.mxu0 0.0
  %477 = vmatprep.subr.mxu0 0.0
  %478 = vmatpush1.msra.mxu0 0.0
  %479 = vmatprep.subr.mxu0 0.0
  %480 = vmatpush1.msra.mxu0 0.0
  %481 = vmatprep.subr.mxu0 0.0
  %482 = vmatpush1.msra.mxu0 0.0
  %483 = vmatprep.subr.mxu0 0.0
  %484 = vmatpush1.msra.mxu0 0.0
  %485 = vmatprep.subr.mxu0 0.0
  %486 = vmatpush1.msra.mxu0 0.0
  %487 = vmatprep.subr.mxu0 0.0
  %488 = vmatpush1.msra.mxu0 0.0
  %489 = vmatprep.subr.mxu0 0.0
  %490 = vmatpush1.msra.mxu0 0.0
  %491 = vmatprep.subr.mxu0 0.0
  %492 = vmatpush1.msra.mxu0 0.0
  %493 = vmatprep.subr.mxu0 0.0
  %494 = vmatpush1.msra.mxu0 0.0
  %495 = vmatprep.subr.mxu0 0.0
  %496 = vmatpush1.msra.mxu0 0.0
  %497 = vmatprep.subr.mxu0 0.0
  %498 = vmatpush1.msra.mxu0 0.0
  %499 = vmatprep.subr.mxu0 0.0
  %500 = vmatpush1.msra.mxu0 0.0
  %501 = vmatprep.subr.mxu0 0.0
  %502 = vmatpush1.msra.mxu0 0.0
  %503 = vmatprep.subr.mxu0 0.0
  %504 = vmatpush1.msra.mxu0 0.0
  %505 = vmatprep.subr.mxu0 0.0
  %506 = vmatpush1.msra.mxu0 0.0
  %507 = vmatprep.subr.mxu0 0.0
  %508 = vmatpush1.msra.mxu0 0.0
  %509 = vmatprep.subr.mxu0 0.0
  %510 = vmatpush1.msra.mxu0 0.0
  %511 = vmatprep.subr.mxu0 0.0
  %512 = vmatpush1.msra.mxu0 0.0
  %513 = vmatprep.subr.mxu0 0.0
  %514 = vmatpush1.msra.mxu0 0.0
  %515 = vmatprep.subr.mxu0 0.0
  %516 = vmatpush1.msra.mxu0 0.0
  %517 = vmatprep.subr.mxu0 0.0
  %518 = vmatpush1.msra.mxu0 0.0
  %519 = vmatprep.subr.mxu0 0.0
  %520 = vmatpush1.msra.mxu0 0.0
  %521 = vmatprep.subr.mxu0 0.0
  %522 = vmatpush1.msra.mxu0 0.0
  %523 = vmatprep.subr.mxu0 0.0
  %524 = vmatpush1.msra.mxu0 0.0
  %525 = vmatprep.subr.mxu0 0.0
  %526 = vmatpush1.msra.mxu0 0.0
  %527 = vmatprep.subr.mxu0 0.0
  %528 = vmatpush1.msra.mxu0 0.0
  %529 = vmatprep.subr.mxu0 0.0
  %530 = vmatpush1.msra.mxu0 0.0
  %531 = vmatprep.subr.mxu0 0.0
  %532 = vmatpush1.msra.mxu0 0.0
  %533 = vmatprep.mubr.f32.mxu0 0.0
  %534 = vmatmul.mubr.f32.gmra.mrb[0].mxu0 %v325
  %v535 = vpop.f32.mrb[0].mxu0
  %v536 = vadd.f32 %v320, %v535
  %v537 = vpop.f32.mrb[0].mxu0
  %v538 = vadd.f32 %v322, %v537
  %539 = vdwg.mxu0
  %s540 = scalar_lea.vmem %s1, 16
  %v541 = vld [vmem:[%s540] sm:$0xff]
  %542 = vrot.lane.b32.xlu0 %v58, 17
  %v543 = vpop.permute.xlu0 %542
  %544 = vrot.lane.b32.xlu0 %v59, 17
  %v545 = vpop.permute.xlu0 %544
  %546 = vrot.lane.b32.xlu0 %v60, 17
  %v547 = vpop.permute.xlu0 %546
  %548 = vrot.lane.b32.xlu0 %v61, 17
  %v549 = vpop.permute.xlu0 %548
  %550 = vrot.lane.b32.xlu0 %v62, 17
  %v551 = vpop.permute.xlu0 %550
  %552 = vrot.lane.b32.xlu0 %v63, 17
  %v553 = vpop.permute.xlu0 %552
  %vm554 = vcmp.lt.s32.totalorder %v78, 17
  %v555 = vsel %vm554, %v551, %v553
  %v556 = vsel %vm554, %v549, %v551
  %v557 = vsel %vm554, %v547, %v549
  %v558 = vsel %vm554, %v545, %v547
  %v559 = vsel %vm554, %v543, %v545
  %v560 = vsel %vm554, %v553, %v543
  %v562 = vsel %vm107, %v541, 0
  %564 = vmatprep.subr.mxu0 %v559
  %565 = vmatpush1.msra.mxu0 %v560
  %566 = vmatprep.subr.mxu0 0.0
  %567 = vmatpush1.msra.mxu0 0.0
  %568 = vmatprep.subr.mxu0 0.0
  %569 = vmatpush1.msra.mxu0 0.0
  %570 = vmatprep.subr.mxu0 0.0
  %571 = vmatpush1.msra.mxu0 0.0
  %572 = vmatprep.subr.mxu0 0.0
  %573 = vmatpush1.msra.mxu0 0.0
  %574 = vmatprep.subr.mxu0 0.0
  %575 = vmatpush1.msra.mxu0 0.0
  %576 = vmatprep.subr.mxu0 0.0
  %577 = vmatpush1.msra.mxu0 0.0
  %578 = vmatprep.subr.mxu0 0.0
  %579 = vmatpush1.msra.mxu0 0.0
  %580 = vmatprep.subr.mxu0 0.0
  %581 = vmatpush1.msra.mxu0 0.0
  %582 = vmatprep.subr.mxu0 0.0
  %583 = vmatpush1.msra.mxu0 0.0
  %584 = vmatprep.subr.mxu0 0.0
  %585 = vmatpush1.msra.mxu0 0.0
  %586 = vmatprep.subr.mxu0 0.0
  %587 = vmatpush1.msra.mxu0 0.0
  %588 = vmatprep.subr.mxu0 0.0
  %589 = vmatpush1.msra.mxu0 0.0
  %590 = vmatprep.subr.mxu0 0.0
  %591 = vmatpush1.msra.mxu0 0.0
  %592 = vmatprep.subr.mxu0 0.0
  %593 = vmatpush1.msra.mxu0 0.0
  %594 = vmatprep.subr.mxu0 0.0
  %595 = vmatpush1.msra.mxu0 0.0
  %596 = vmatprep.subr.mxu0 0.0
  %597 = vmatpush1.msra.mxu0 0.0
  %598 = vmatprep.subr.mxu0 0.0
  %599 = vmatpush1.msra.mxu0 0.0
  %600 = vmatprep.subr.mxu0 0.0
  %601 = vmatpush1.msra.mxu0 0.0
  %602 = vmatprep.subr.mxu0 0.0
  %603 = vmatpush1.msra.mxu0 0.0
  %604 = vmatprep.subr.mxu0 0.0
  %605 = vmatpush1.msra.mxu0 0.0
  %606 = vmatprep.subr.mxu0 0.0
  %607 = vmatpush1.msra.mxu0 0.0
  %608 = vmatprep.subr.mxu0 0.0
  %609 = vmatpush1.msra.mxu0 0.0
  %610 = vmatprep.subr.mxu0 0.0
  %611 = vmatpush1.msra.mxu0 0.0
  %612 = vmatprep.subr.mxu0 0.0
  %613 = vmatpush1.msra.mxu0 0.0
  %614 = vmatprep.subr.mxu0 0.0
  %615 = vmatpush1.msra.mxu0 0.0
  %616 = vmatprep.subr.mxu0 0.0
  %617 = vmatpush1.msra.mxu0 0.0
  %618 = vmatprep.subr.mxu0 0.0
  %619 = vmatpush1.msra.mxu0 0.0
  %620 = vmatprep.subr.mxu0 0.0
  %621 = vmatpush1.msra.mxu0 0.0
  %622 = vmatprep.subr.mxu0 0.0
  %623 = vmatpush1.msra.mxu0 0.0
  %624 = vmatprep.subr.mxu0 0.0
  %625 = vmatpush1.msra.mxu0 0.0
  %626 = vmatprep.subr.mxu0 0.0
  %627 = vmatpush1.msra.mxu0 0.0
  %628 = vmatprep.mubr.f32.mxu0 0.0
  %629 = vmatmul.mubr.f32.gmra.mrb[0].mxu0 %v562
  %v630 = vpop.f32.mrb[0].mxu0
  %v631 = vadd.f32 0.0, %v630
  %v632 = vpop.f32.mrb[0].mxu0
  %v633 = vadd.f32 0.0, %v632
  %634 = vdwg.mxu0
  %635 = vmatprep.subr.mxu0 %v557
  %636 = vmatpush1.msra.mxu0 %v558
  %637 = vmatprep.subr.mxu0 0.0
  %638 = vmatpush1.msra.mxu0 0.0
  %639 = vmatprep.subr.mxu0 0.0
  %640 = vmatpush1.msra.mxu0 0.0
  %641 = vmatprep.subr.mxu0 0.0
  %642 = vmatpush1.msra.mxu0 0.0
  %643 = vmatprep.subr.mxu0 0.0
  %644 = vmatpush1.msra.mxu0 0.0
  %645 = vmatprep.subr.mxu0 0.0
  %646 = vmatpush1.msra.mxu0 0.0
  %647 = vmatprep.subr.mxu0 0.0
  %648 = vmatpush1.msra.mxu0 0.0
  %649 = vmatprep.subr.mxu0 0.0
  %650 = vmatpush1.msra.mxu0 0.0
  %651 = vmatprep.subr.mxu0 0.0
  %652 = vmatpush1.msra.mxu0 0.0
  %653 = vmatprep.subr.mxu0 0.0
  %654 = vmatpush1.msra.mxu0 0.0
  %655 = vmatprep.subr.mxu0 0.0
  %656 = vmatpush1.msra.mxu0 0.0
  %657 = vmatprep.subr.mxu0 0.0
  %658 = vmatpush1.msra.mxu0 0.0
  %659 = vmatprep.subr.mxu0 0.0
  %660 = vmatpush1.msra.mxu0 0.0
  %661 = vmatprep.subr.mxu0 0.0
  %662 = vmatpush1.msra.mxu0 0.0
  %663 = vmatprep.subr.mxu0 0.0
  %664 = vmatpush1.msra.mxu0 0.0
  %665 = vmatprep.subr.mxu0 0.0
  %666 = vmatpush1.msra.mxu0 0.0
  %667 = vmatprep.subr.mxu0 0.0
  %668 = vmatpush1.msra.mxu0 0.0
  %669 = vmatprep.subr.mxu0 0.0
  %670 = vmatpush1.msra.mxu0 0.0
  %671 = vmatprep.subr.mxu0 0.0
  %672 = vmatpush1.msra.mxu0 0.0
  %673 = vmatprep.subr.mxu0 0.0
  %674 = vmatpush1.msra.mxu0 0.0
  %675 = vmatprep.subr.mxu0 0.0
  %676 = vmatpush1.msra.mxu0 0.0
  %677 = vmatprep.subr.mxu0 0.0
  %678 = vmatpush1.msra.mxu0 0.0
  %679 = vmatprep.subr.mxu0 0.0
  %680 = vmatpush1.msra.mxu0 0.0
  %681 = vmatprep.subr.mxu0 0.0
  %682 = vmatpush1.msra.mxu0 0.0
  %683 = vmatprep.subr.mxu0 0.0
  %684 = vmatpush1.msra.mxu0 0.0
  %685 = vmatprep.subr.mxu0 0.0
  %686 = vmatpush1.msra.mxu0 0.0
  %687 = vmatprep.subr.mxu0 0.0
  %688 = vmatpush1.msra.mxu0 0.0
  %689 = vmatprep.subr.mxu0 0.0
  %690 = vmatpush1.msra.mxu0 0.0
  %691 = vmatprep.subr.mxu0 0.0
  %692 = vmatpush1.msra.mxu0 0.0
  %693 = vmatprep.subr.mxu0 0.0
  %694 = vmatpush1.msra.mxu0 0.0
  %695 = vmatprep.subr.mxu0 0.0
  %696 = vmatpush1.msra.mxu0 0.0
  %697 = vmatprep.subr.mxu0 0.0
  %698 = vmatpush1.msra.mxu0 0.0
  %699 = vmatprep.mubr.f32.mxu0 0.0
  %700 = vmatmul.mubr.f32.gmra.mrb[0].mxu0 %v562
  %v701 = vpop.f32.mrb[0].mxu0
  %v702 = vadd.f32 0.0, %v701
  %v703 = vpop.f32.mrb[0].mxu0
  %v704 = vadd.f32 0.0, %v703
  %705 = vdwg.mxu0
  %706 = vmatprep.subr.mxu0 %v555
  %707 = vmatpush1.msra.mxu0 %v556
  %708 = vmatprep.subr.mxu0 0.0
  %709 = vmatpush1.msra.mxu0 0.0
  %710 = vmatprep.subr.mxu0 0.0
  %711 = vmatpush1.msra.mxu0 0.0
  %712 = vmatprep.subr.mxu0 0.0
  %713 = vmatpush1.msra.mxu0 0.0
  %714 = vmatprep.subr.mxu0 0.0
  %715 = vmatpush1.msra.mxu0 0.0
  %716 = vmatprep.subr.mxu0 0.0
  %717 = vmatpush1.msra.mxu0 0.0
  %718 = vmatprep.subr.mxu0 0.0
  %719 = vmatpush1.msra.mxu0 0.0
  %720 = vmatprep.subr.mxu0 0.0
  %721 = vmatpush1.msra.mxu0 0.0
  %722 = vmatprep.subr.mxu0 0.0
  %723 = vmatpush1.msra.mxu0 0.0
  %724 = vmatprep.subr.mxu0 0.0
  %725 = vmatpush1.msra.mxu0 0.0
  %726 = vmatprep.subr.mxu0 0.0
  %727 = vmatpush1.msra.mxu0 0.0
  %728 = vmatprep.subr.mxu0 0.0
  %729 = vmatpush1.msra.mxu0 0.0
  %730 = vmatprep.subr.mxu0 0.0
  %731 = vmatpush1.msra.mxu0 0.0
  %732 = vmatprep.subr.mxu0 0.0
  %733 = vmatpush1.msra.mxu0 0.0
  %734 = vmatprep.subr.mxu0 0.0
  %735 = vmatpush1.msra.mxu0 0.0
  %736 = vmatprep.subr.mxu0 0.0
  %737 = vmatpush1.msra.mxu0 0.0
  %738 = vmatprep.subr.mxu0 0.0
  %739 = vmatpush1.msra.mxu0 0.0
  %740 = vmatprep.subr.mxu0 0.0
  %741 = vmatpush1.msra.mxu0 0.0
  %742 = vmatprep.subr.mxu0 0.0
  %743 = vmatpush1.msra.mxu0 0.0
  %744 = vmatprep.subr.mxu0 0.0
  %745 = vmatpush1.msra.mxu0 0.0
  %746 = vmatprep.subr.mxu0 0.0
  %747 = vmatpush1.msra.mxu0 0.0
  %748 = vmatprep.subr.mxu0 0.0
  %749 = vmatpush1.msra.mxu0 0.0
  %750 = vmatprep.subr.mxu0 0.0
  %751 = vmatpush1.msra.mxu0 0.0
  %752 = vmatprep.subr.mxu0 0.0
  %753 = vmatpush1.msra.mxu0 0.0
  %754 = vmatprep.subr.mxu0 0.0
  %755 = vmatpush1.msra.mxu0 0.0
  %756 = vmatprep.subr.mxu0 0.0
  %757 = vmatpush1.msra.mxu0 0.0
  %758 = vmatprep.subr.mxu0 0.0
  %759 = vmatpush1.msra.mxu0 0.0
  %760 = vmatprep.subr.mxu0 0.0
  %761 = vmatpush1.msra.mxu0 0.0
  %762 = vmatprep.subr.mxu0 0.0
  %763 = vmatpush1.msra.mxu0 0.0
  %764 = vmatprep.subr.mxu0 0.0
  %765 = vmatpush1.msra.mxu0 0.0
  %766 = vmatprep.subr.mxu0 0.0
  %767 = vmatpush1.msra.mxu0 0.0
  %768 = vmatprep.subr.mxu0 0.0
  %769 = vmatpush1.msra.mxu0 0.0
  %770 = vmatprep.mubr.f32.mxu0 0.0
  %771 = vmatmul.mubr.f32.gmra.mrb[0].mxu0 %v562
  %v772 = vpop.f32.mrb[0].mxu0
  %v773 = vadd.f32 0.0, %v772
  %v774 = vpop.f32.mrb[0].mxu0
  %v775 = vadd.f32 0.0, %v774
  %776 = vdwg.mxu0
  %v777 = vadd.f32 %v394, %v631
  %v778 = vadd.f32 %v396, %v633
  %v779 = vadd.f32 %v465, %v702
  %v780 = vadd.f32 %v467, %v704
  %v781 = vadd.f32 %v536, %v773
  %v782 = vadd.f32 %v538, %v775
  %s783 = scalar_lea.vmem %s1, 24
  %v784 = vld [vmem:[%s783] sm:$0xff]
  %785 = vrot.lane.b32.xlu0 %v58, 1
  %v786 = vpop.permute.xlu0 %785
  %787 = vrot.lane.b32.xlu0 %v59, 1
  %v788 = vpop.permute.xlu0 %787
  %789 = vrot.lane.b32.xlu0 %v60, 1
  %v790 = vpop.permute.xlu0 %789
  %791 = vrot.lane.b32.xlu0 %v61, 1
  %v792 = vpop.permute.xlu0 %791
  %793 = vrot.lane.b32.xlu0 %v62, 1
  %v794 = vpop.permute.xlu0 %793
  %795 = vrot.lane.b32.xlu0 %v63, 1
  %v796 = vpop.permute.xlu0 %795
  %vm797 = vcmp.lt.s32.totalorder %v78, 1
  %v798 = vsel %vm797, %v794, %v796
  %v799 = vsel %vm797, %v792, %v794
  %v800 = vsel %vm797, %v790, %v792
  %v801 = vsel %vm797, %v788, %v790
  %v802 = vsel %vm797, %v786, %v788
  %v803 = vsel %vm797, %v796, %v786
  %v805 = vsel %vm107, %v784, 0
  %807 = vmatprep.subr.mxu0 %v802
  %808 = vmatpush1.msra.mxu0 %v803
  %809 = vmatprep.subr.mxu0 0.0
  %810 = vmatpush1.msra.mxu0 0.0
  %811 = vmatprep.subr.mxu0 0.0
  %812 = vmatpush1.msra.mxu0 0.0
  %813 = vmatprep.subr.mxu0 0.0
  %814 = vmatpush1.msra.mxu0 0.0
  %815 = vmatprep.subr.mxu0 0.0
  %816 = vmatpush1.msra.mxu0 0.0
  %817 = vmatprep.subr.mxu0 0.0
  %818 = vmatpush1.msra.mxu0 0.0
  %819 = vmatprep.subr.mxu0 0.0
  %820 = vmatpush1.msra.mxu0 0.0
  %821 = vmatprep.subr.mxu0 0.0
  %822 = vmatpush1.msra.mxu0 0.0
  %823 = vmatprep.subr.mxu0 0.0
  %824 = vmatpush1.msra.mxu0 0.0
  %825 = vmatprep.subr.mxu0 0.0
  %826 = vmatpush1.msra.mxu0 0.0
  %827 = vmatprep.subr.mxu0 0.0
  %828 = vmatpush1.msra.mxu0 0.0
  %829 = vmatprep.subr.mxu0 0.0
  %830 = vmatpush1.msra.mxu0 0.0
  %831 = vmatprep.subr.mxu0 0.0
  %832 = vmatpush1.msra.mxu0 0.0
  %833 = vmatprep.subr.mxu0 0.0
  %834 = vmatpush1.msra.mxu0 0.0
  %835 = vmatprep.subr.mxu0 0.0
  %836 = vmatpush1.msra.mxu0 0.0
  %837 = vmatprep.subr.mxu0 0.0
  %838 = vmatpush1.msra.mxu0 0.0
  %839 = vmatprep.subr.mxu0 0.0
  %840 = vmatpush1.msra.mxu0 0.0
  %841 = vmatprep.subr.mxu0 0.0
  %842 = vmatpush1.msra.mxu0 0.0
  %843 = vmatprep.subr.mxu0 0.0
  %844 = vmatpush1.msra.mxu0 0.0
  %845 = vmatprep.subr.mxu0 0.0
  %846 = vmatpush1.msra.mxu0 0.0
  %847 = vmatprep.subr.mxu0 0.0
  %848 = vmatpush1.msra.mxu0 0.0
  %849 = vmatprep.subr.mxu0 0.0
  %850 = vmatpush1.msra.mxu0 0.0
  %851 = vmatprep.subr.mxu0 0.0
  %852 = vmatpush1.msra.mxu0 0.0
  %853 = vmatprep.subr.mxu0 0.0
  %854 = vmatpush1.msra.mxu0 0.0
  %855 = vmatprep.subr.mxu0 0.0
  %856 = vmatpush1.msra.mxu0 0.0
  %857 = vmatprep.subr.mxu0 0.0
  %858 = vmatpush1.msra.mxu0 0.0
  %859 = vmatprep.subr.mxu0 0.0
  %860 = vmatpush1.msra.mxu0 0.0
  %861 = vmatprep.subr.mxu0 0.0
  %862 = vmatpush1.msra.mxu0 0.0
  %863 = vmatprep.subr.mxu0 0.0
  %864 = vmatpush1.msra.mxu0 0.0
  %865 = vmatprep.subr.mxu0 0.0
  %866 = vmatpush1.msra.mxu0 0.0
  %867 = vmatprep.subr.mxu0 0.0
  %868 = vmatpush1.msra.mxu0 0.0
  %869 = vmatprep.subr.mxu0 0.0
  %870 = vmatpush1.msra.mxu0 0.0
  %871 = vmatprep.mubr.f32.mxu0 0.0
  %872 = vmatmul.mubr.f32.gmra.mrb[0].mxu0 %v805
  %v873 = vpop.f32.mrb[0].mxu0
  %v874 = vadd.f32 0.0, %v873
  %v875 = vpop.f32.mrb[0].mxu0
  %v876 = vadd.f32 0.0, %v875
  %877 = vdwg.mxu0
  %878 = vmatprep.subr.mxu0 %v800
  %879 = vmatpush1.msra.mxu0 %v801
  %880 = vmatprep.subr.mxu0 0.0
  %881 = vmatpush1.msra.mxu0 0.0
  %882 = vmatprep.subr.mxu0 0.0
  %883 = vmatpush1.msra.mxu0 0.0
  %884 = vmatprep.subr.mxu0 0.0
  %885 = vmatpush1.msra.mxu0 0.0
  %886 = vmatprep.subr.mxu0 0.0
  %887 = vmatpush1.msra.mxu0 0.0
  %888 = vmatprep.subr.mxu0 0.0
  %889 = vmatpush1.msra.mxu0 0.0
  %890 = vmatprep.subr.mxu0 0.0
  %891 = vmatpush1.msra.mxu0 0.0
  %892 = vmatprep.subr.mxu0 0.0
  %893 = vmatpush1.msra.mxu0 0.0
  %894 = vmatprep.subr.mxu0 0.0
  %895 = vmatpush1.msra.mxu0 0.0
  %896 = vmatprep.subr.mxu0 0.0
  %897 = vmatpush1.msra.mxu0 0.0
  %898 = vmatprep.subr.mxu0 0.0
  %899 = vmatpush1.msra.mxu0 0.0
  %900 = vmatprep.subr.mxu0 0.0
  %901 = vmatpush1.msra.mxu0 0.0
  %902 = vmatprep.subr.mxu0 0.0
  %903 = vmatpush1.msra.mxu0 0.0
  %904 = vmatprep.subr.mxu0 0.0
  %905 = vmatpush1.msra.mxu0 0.0
  %906 = vmatprep.subr.mxu0 0.0
  %907 = vmatpush1.msra.mxu0 0.0
  %908 = vmatprep.subr.mxu0 0.0
  %909 = vmatpush1.msra.mxu0 0.0
  %910 = vmatprep.subr.mxu0 0.0
  %911 = vmatpush1.msra.mxu0 0.0
  %912 = vmatprep.subr.mxu0 0.0
  %913 = vmatpush1.msra.mxu0 0.0
  %914 = vmatprep.subr.mxu0 0.0
  %915 = vmatpush1.msra.mxu0 0.0
  %916 = vmatprep.subr.mxu0 0.0
  %917 = vmatpush1.msra.mxu0 0.0
  %918 = vmatprep.subr.mxu0 0.0
  %919 = vmatpush1.msra.mxu0 0.0
  %920 = vmatprep.subr.mxu0 0.0
  %921 = vmatpush1.msra.mxu0 0.0
  %922 = vmatprep.subr.mxu0 0.0
  %923 = vmatpush1.msra.mxu0 0.0
  %924 = vmatprep.subr.mxu0 0.0
  %925 = vmatpush1.msra.mxu0 0.0
  %926 = vmatprep.subr.mxu0 0.0
  %927 = vmatpush1.msra.mxu0 0.0
  %928 = vmatprep.subr.mxu0 0.0
  %929 = vmatpush1.msra.mxu0 0.0
  %930 = vmatprep.subr.mxu0 0.0
  %931 = vmatpush1.msra.mxu0 0.0
  %932 = vmatprep.subr.mxu0 0.0
  %933 = vmatpush1.msra.mxu0 0.0
  %934 = vmatprep.subr.mxu0 0.0
  %935 = vmatpush1.msra.mxu0 0.0
  %936 = vmatprep.subr.mxu0 0.0
  %937 = vmatpush1.msra.mxu0 0.0
  %938 = vmatprep.subr.mxu0 0.0
  %939 = vmatpush1.msra.mxu0 0.0
  %940 = vmatprep.subr.mxu0 0.0
  %941 = vmatpush1.msra.mxu0 0.0
  %942 = vmatprep.mubr.f32.mxu0 0.0
  %943 = vmatmul.mubr.f32.gmra.mrb[0].mxu0 %v805
  %v944 = vpop.f32.mrb[0].mxu0
  %v945 = vadd.f32 0.0, %v944
  %v946 = vpop.f32.mrb[0].mxu0
  %v947 = vadd.f32 0.0, %v946
  %948 = vdwg.mxu0
  %949 = vmatprep.subr.mxu0 %v798
  %950 = vmatpush1.msra.mxu0 %v799
  %951 = vmatprep.subr.mxu0 0.0
  %952 = vmatpush1.msra.mxu0 0.0
  %953 = vmatprep.subr.mxu0 0.0
  %954 = vmatpush1.msra.mxu0 0.0
  %955 = vmatprep.subr.mxu0 0.0
  %956 = vmatpush1.msra.mxu0 0.0
  %957 = vmatprep.subr.mxu0 0.0
  %958 = vmatpush1.msra.mxu0 0.0
  %959 = vmatprep.subr.mxu0 0.0
  %960 = vmatpush1.msra.mxu0 0.0
  %961 = vmatprep.subr.mxu0 0.0
  %962 = vmatpush1.msra.mxu0 0.0
  %963 = vmatprep.subr.mxu0 0.0
  %964 = vmatpush1.msra.mxu0 0.0
  %965 = vmatprep.subr.mxu0 0.0
  %966 = vmatpush1.msra.mxu0 0.0
  %967 = vmatprep.subr.mxu0 0.0
  %968 = vmatpush1.msra.mxu0 0.0
  %969 = vmatprep.subr.mxu0 0.0
  %970 = vmatpush1.msra.mxu0 0.0
  %971 = vmatprep.subr.mxu0 0.0
  %972 = vmatpush1.msra.mxu0 0.0
  %973 = vmatprep.subr.mxu0 0.0
  %974 = vmatpush1.msra.mxu0 0.0
  %975 = vmatprep.subr.mxu0 0.0
  %976 = vmatpush1.msra.mxu0 0.0
  %977 = vmatprep.subr.mxu0 0.0
  %978 = vmatpush1.msra.mxu0 0.0
  %979 = vmatprep.subr.mxu0 0.0
  %980 = vmatpush1.msra.mxu0 0.0
  %981 = vmatprep.subr.mxu0 0.0
  %982 = vmatpush1.msra.mxu0 0.0
  %983 = vmatprep.subr.mxu0 0.0
  %984 = vmatpush1.msra.mxu0 0.0
  %985 = vmatprep.subr.mxu0 0.0
  %986 = vmatpush1.msra.mxu0 0.0
  %987 = vmatprep.subr.mxu0 0.0
  %988 = vmatpush1.msra.mxu0 0.0
  %989 = vmatprep.subr.mxu0 0.0
  %990 = vmatpush1.msra.mxu0 0.0
  %991 = vmatprep.subr.mxu0 0.0
  %992 = vmatpush1.msra.mxu0 0.0
  %993 = vmatprep.subr.mxu0 0.0
  %994 = vmatpush1.msra.mxu0 0.0
  %995 = vmatprep.subr.mxu0 0.0
  %996 = vmatpush1.msra.mxu0 0.0
  %997 = vmatprep.subr.mxu0 0.0
  %998 = vmatpush1.msra.mxu0 0.0
  %999 = vmatprep.subr.mxu0 0.0
  %1000 = vmatpush1.msra.mxu0 0.0
  %1001 = vmatprep.subr.mxu0 0.0
  %1002 = vmatpush1.msra.mxu0 0.0
  %1003 = vmatprep.subr.mxu0 0.0
  %1004 = vmatpush1.msra.mxu0 0.0
  %1005 = vmatprep.subr.mxu0 0.0
  %1006 = vmatpush1.msra.mxu0 0.0
  %1007 = vmatprep.subr.mxu0 0.0
  %1008 = vmatpush1.msra.mxu0 0.0
  %1009 = vmatprep.subr.mxu0 0.0
  %1010 = vmatpush1.msra.mxu0 0.0
  %1011 = vmatprep.subr.mxu0 0.0
  %1012 = vmatpush1.msra.mxu0 0.0
  %1013 = vmatprep.mubr.f32.mxu0 0.0
  %1014 = vmatmul.mubr.f32.gmra.mrb[0].mxu0 %v805
  %v1015 = vpop.f32.mrb[0].mxu0
  %v1016 = vadd.f32 0.0, %v1015
  %v1017 = vpop.f32.mrb[0].mxu0
  %v1018 = vadd.f32 0.0, %v1017
  %1019 = vdwg.mxu0
  %v1020 = vadd.f32 %v777, %v874
  %v1021 = vadd.f32 %v778, %v876
  %v1022 = vadd.f32 %v779, %v945
  %v1023 = vadd.f32 %v780, %v947
  %v1024 = vadd.f32 %v781, %v1016
  %v1025 = vadd.f32 %v782, %v1018
  %s1026 = scalar_lea.vmem %s1, 32
  %v1027 = vld [vmem:[%s1026] sm:$0xff]
  %v1029 = vsel %vm107, %v1027, 0
  %1031 = vmatprep.subr.mxu0 %v59
  %1032 = vmatpush1.msra.mxu0 %v58
  %1033 = vmatprep.subr.mxu0 0.0
  %1034 = vmatpush1.msra.mxu0 0.0
  %1035 = vmatprep.subr.mxu0 0.0
  %1036 = vmatpush1.msra.mxu0 0.0
  %1037 = vmatprep.subr.mxu0 0.0
  %1038 = vmatpush1.msra.mxu0 0.0
  %1039 = vmatprep.subr.mxu0 0.0
  %1040 = vmatpush1.msra.mxu0 0.0
  %1041 = vmatprep.subr.mxu0 0.0
  %1042 = vmatpush1.msra.mxu0 0.0
  %1043 = vmatprep.subr.mxu0 0.0
  %1044 = vmatpush1.msra.mxu0 0.0
  %1045 = vmatprep.subr.mxu0 0.0
  %1046 = vmatpush1.msra.mxu0 0.0
  %1047 = vmatprep.subr.mxu0 0.0
  %1048 = vmatpush1.msra.mxu0 0.0
  %1049 = vmatprep.subr.mxu0 0.0
  %1050 = vmatpush1.msra.mxu0 0.0
  %1051 = vmatprep.subr.mxu0 0.0
  %1052 = vmatpush1.msra.mxu0 0.0
  %1053 = vmatprep.subr.mxu0 0.0
  %1054 = vmatpush1.msra.mxu0 0.0
  %1055 = vmatprep.subr.mxu0 0.0
  %1056 = vmatpush1.msra.mxu0 0.0
  %1057 = vmatprep.subr.mxu0 0.0
  %1058 = vmatpush1.msra.mxu0 0.0
  %1059 = vmatprep.subr.mxu0 0.0
  %1060 = vmatpush1.msra.mxu0 0.0
  %1061 = vmatprep.subr.mxu0 0.0
  %1062 = vmatpush1.msra.mxu0 0.0
  %1063 = vmatprep.subr.mxu0 0.0
  %1064 = vmatpush1.msra.mxu0 0.0
  %1065 = vmatprep.subr.mxu0 0.0
  %1066 = vmatpush1.msra.mxu0 0.0
  %1067 = vmatprep.subr.mxu0 0.0
  %1068 = vmatpush1.msra.mxu0 0.0
  %1069 = vmatprep.subr.mxu0 0.0
  %1070 = vmatpush1.msra.mxu0 0.0
  %1071 = vmatprep.subr.mxu0 0.0
  %1072 = vmatpush1.msra.mxu0 0.0
  %1073 = vmatprep.subr.mxu0 0.0
  %1074 = vmatpush1.msra.mxu0 0.0
  %1075 = vmatprep.subr.mxu0 0.0
  %1076 = vmatpush1.msra.mxu0 0.0
  %1077 = vmatprep.subr.mxu0 0.0
  %1078 = vmatpush1.msra.mxu0 0.0
  %1079 = vmatprep.subr.mxu0 0.0
  %1080 = vmatpush1.msra.mxu0 0.0
  %1081 = vmatprep.subr.mxu0 0.0
  %1082 = vmatpush1.msra.mxu0 0.0
  %1083 = vmatprep.subr.mxu0 0.0
  %1084 = vmatpush1.msra.mxu0 0.0
  %1085 = vmatprep.subr.mxu0 0.0
  %1086 = vmatpush1.msra.mxu0 0.0
  %1087 = vmatprep.subr.mxu0 0.0
  %1088 = vmatpush1.msra.mxu0 0.0
  %1089 = vmatprep.subr.mxu0 0.0
  %1090 = vmatpush1.msra.mxu0 0.0
  %1091 = vmatprep.subr.mxu0 0.0
  %1092 = vmatpush1.msra.mxu0 0.0
  %1093 = vmatprep.subr.mxu0 0.0
  %1094 = vmatpush1.msra.mxu0 0.0
  %1095 = vmatprep.mubr.f32.mxu0 0.0
  %1096 = vmatmul.mubr.f32.gmra.mrb[0].mxu0 %v1029
  %v1097 = vpop.f32.mrb[0].mxu0
  %v1098 = vadd.f32 0.0, %v1097
  %v1099 = vpop.f32.mrb[0].mxu0
  %v1100 = vadd.f32 0.0, %v1099
  %1101 = vdwg.mxu0
  %1102 = vmatprep.subr.mxu0 %v61
  %1103 = vmatpush1.msra.mxu0 %v60
  %1104 = vmatprep.subr.mxu0 0.0
  %1105 = vmatpush1.msra.mxu0 0.0
  %1106 = vmatprep.subr.mxu0 0.0
  %1107 = vmatpush1.msra.mxu0 0.0
  %1108 = vmatprep.subr.mxu0 0.0
  %1109 = vmatpush1.msra.mxu0 0.0
  %1110 = vmatprep.subr.mxu0 0.0
  %1111 = vmatpush1.msra.mxu0 0.0
  %1112 = vmatprep.subr.mxu0 0.0
  %1113 = vmatpush1.msra.mxu0 0.0
  %1114 = vmatprep.subr.mxu0 0.0
  %1115 = vmatpush1.msra.mxu0 0.0
  %1116 = vmatprep.subr.mxu0 0.0
  %1117 = vmatpush1.msra.mxu0 0.0
  %1118 = vmatprep.subr.mxu0 0.0
  %1119 = vmatpush1.msra.mxu0 0.0
  %1120 = vmatprep.subr.mxu0 0.0
  %1121 = vmatpush1.msra.mxu0 0.0
  %1122 = vmatprep.subr.mxu0 0.0
  %1123 = vmatpush1.msra.mxu0 0.0
  %1124 = vmatprep.subr.mxu0 0.0
  %1125 = vmatpush1.msra.mxu0 0.0
  %1126 = vmatprep.subr.mxu0 0.0
  %1127 = vmatpush1.msra.mxu0 0.0
  %1128 = vmatprep.subr.mxu0 0.0
  %1129 = vmatpush1.msra.mxu0 0.0
  %1130 = vmatprep.subr.mxu0 0.0
  %1131 = vmatpush1.msra.mxu0 0.0
  %1132 = vmatprep.subr.mxu0 0.0
  %1133 = vmatpush1.msra.mxu0 0.0
  %1134 = vmatprep.subr.mxu0 0.0
  %1135 = vmatpush1.msra.mxu0 0.0
  %1136 = vmatprep.subr.mxu0 0.0
  %1137 = vmatpush1.msra.mxu0 0.0
  %1138 = vmatprep.subr.mxu0 0.0
  %1139 = vmatpush1.msra.mxu0 0.0
  %1140 = vmatprep.subr.mxu0 0.0
  %1141 = vmatpush1.msra.mxu0 0.0
  %1142 = vmatprep.subr.mxu0 0.0
  %1143 = vmatpush1.msra.mxu0 0.0
  %1144 = vmatprep.subr.mxu0 0.0
  %1145 = vmatpush1.msra.mxu0 0.0
  %1146 = vmatprep.subr.mxu0 0.0
  %1147 = vmatpush1.msra.mxu0 0.0
  %1148 = vmatprep.subr.mxu0 0.0
  %1149 = vmatpush1.msra.mxu0 0.0
  %1150 = vmatprep.subr.mxu0 0.0
  %1151 = vmatpush1.msra.mxu0 0.0
  %1152 = vmatprep.subr.mxu0 0.0
  %1153 = vmatpush1.msra.mxu0 0.0
  %1154 = vmatprep.subr.mxu0 0.0
  %1155 = vmatpush1.msra.mxu0 0.0
  %1156 = vmatprep.subr.mxu0 0.0
  %1157 = vmatpush1.msra.mxu0 0.0
  %1158 = vmatprep.subr.mxu0 0.0
  %1159 = vmatpush1.msra.mxu0 0.0
  %1160 = vmatprep.subr.mxu0 0.0
  %1161 = vmatpush1.msra.mxu0 0.0
  %1162 = vmatprep.subr.mxu0 0.0
  %1163 = vmatpush1.msra.mxu0 0.0
  %1164 = vmatprep.subr.mxu0 0.0
  %1165 = vmatpush1.msra.mxu0 0.0
  %1166 = vmatprep.mubr.f32.mxu0 0.0
  %1167 = vmatmul.mubr.f32.gmra.mrb[0].mxu0 %v1029
  %v1168 = vpop.f32.mrb[0].mxu0
  %v1169 = vadd.f32 0.0, %v1168
  %v1170 = vpop.f32.mrb[0].mxu0
  %v1171 = vadd.f32 0.0, %v1170
  %1172 = vdwg.mxu0
  %1173 = vmatprep.subr.mxu0 %v63
  %1174 = vmatpush1.msra.mxu0 %v62
  %1175 = vmatprep.subr.mxu0 0.0
  %1176 = vmatpush1.msra.mxu0 0.0
  %1177 = vmatprep.subr.mxu0 0.0
  %1178 = vmatpush1.msra.mxu0 0.0
  %1179 = vmatprep.subr.mxu0 0.0
  %1180 = vmatpush1.msra.mxu0 0.0
  %1181 = vmatprep.subr.mxu0 0.0
  %1182 = vmatpush1.msra.mxu0 0.0
  %1183 = vmatprep.subr.mxu0 0.0
  %1184 = vmatpush1.msra.mxu0 0.0
  %1185 = vmatprep.subr.mxu0 0.0
  %1186 = vmatpush1.msra.mxu0 0.0
  %1187 = vmatprep.subr.mxu0 0.0
  %1188 = vmatpush1.msra.mxu0 0.0
  %1189 = vmatprep.subr.mxu0 0.0
  %1190 = vmatpush1.msra.mxu0 0.0
  %1191 = vmatprep.subr.mxu0 0.0
  %1192 = vmatpush1.msra.mxu0 0.0
  %1193 = vmatprep.subr.mxu0 0.0
  %1194 = vmatpush1.msra.mxu0 0.0
  %1195 = vmatprep.subr.mxu0 0.0
  %1196 = vmatpush1.msra.mxu0 0.0
  %1197 = vmatprep.subr.mxu0 0.0
  %1198 = vmatpush1.msra.mxu0 0.0
  %1199 = vmatprep.subr.mxu0 0.0
  %1200 = vmatpush1.msra.mxu0 0.0
  %1201 = vmatprep.subr.mxu0 0.0
  %1202 = vmatpush1.msra.mxu0 0.0
  %1203 = vmatprep.subr.mxu0 0.0
  %1204 = vmatpush1.msra.mxu0 0.0
  %1205 = vmatprep.subr.mxu0 0.0
  %1206 = vmatpush1.msra.mxu0 0.0
  %1207 = vmatprep.subr.mxu0 0.0
  %1208 = vmatpush1.msra.mxu0 0.0
  %1209 = vmatprep.subr.mxu0 0.0
  %1210 = vmatpush1.msra.mxu0 0.0
  %1211 = vmatprep.subr.mxu0 0.0
  %1212 = vmatpush1.msra.mxu0 0.0
  %1213 = vmatprep.subr.mxu0 0.0
  %1214 = vmatpush1.msra.mxu0 0.0
  %1215 = vmatprep.subr.mxu0 0.0
  %1216 = vmatpush1.msra.mxu0 0.0
  %1217 = vmatprep.subr.mxu0 0.0
  %1218 = vmatpush1.msra.mxu0 0.0
  %1219 = vmatprep.subr.mxu0 0.0
  %1220 = vmatpush1.msra.mxu0 0.0
  %1221 = vmatprep.subr.mxu0 0.0
  %1222 = vmatpush1.msra.mxu0 0.0
  %1223 = vmatprep.subr.mxu0 0.0
  %1224 = vmatpush1.msra.mxu0 0.0
  %1225 = vmatprep.subr.mxu0 0.0
  %1226 = vmatpush1.msra.mxu0 0.0
  %1227 = vmatprep.subr.mxu0 0.0
  %1228 = vmatpush1.msra.mxu0 0.0
  %1229 = vmatprep.subr.mxu0 0.0
  %1230 = vmatpush1.msra.mxu0 0.0
  %1231 = vmatprep.subr.mxu0 0.0
  %1232 = vmatpush1.msra.mxu0 0.0
  %1233 = vmatprep.subr.mxu0 0.0
  %1234 = vmatpush1.msra.mxu0 0.0
  %1235 = vmatprep.subr.mxu0 0.0
  %1236 = vmatpush1.msra.mxu0 0.0
  %1237 = vmatprep.mubr.f32.mxu0 0.0
  %1238 = vmatmul.mubr.f32.gmra.mrb[0].mxu0 %v1029
  %v1239 = vpop.f32.mrb[0].mxu0
  %v1240 = vadd.f32 0.0, %v1239
  %v1241 = vpop.f32.mrb[0].mxu0
  %v1242 = vadd.f32 0.0, %v1241
  %1243 = vdwg.mxu0
  %v1244 = vadd.f32 %v1020, %v1098
  %v1245 = vadd.f32 %v1021, %v1100
  %v1246 = vadd.f32 %v1022, %v1169
  %v1247 = vadd.f32 %v1023, %v1171
  %v1248 = vadd.f32 %v1024, %v1240
  %v1249 = vadd.f32 %v1025, %v1242
  %s1250 = scalar_lea.vmem %s1, 40
  %v1251 = vld [vmem:[%s1250] sm:$0xff]
  %1252 = vrot.lane.b32.xlu0 %v58, 127
  %v1253 = vpop.permute.xlu0 %1252
  %1254 = vrot.lane.b32.xlu0 %v59, 127
  %v1255 = vpop.permute.xlu0 %1254
  %1256 = vrot.lane.b32.xlu0 %v60, 127
  %v1257 = vpop.permute.xlu0 %1256
  %1258 = vrot.lane.b32.xlu0 %v61, 127
  %v1259 = vpop.permute.xlu0 %1258
  %1260 = vrot.lane.b32.xlu0 %v62, 127
  %v1261 = vpop.permute.xlu0 %1260
  %1262 = vrot.lane.b32.xlu0 %v63, 127
  %v1263 = vpop.permute.xlu0 %1262
  %vm1264 = vcmp.lt.s32.totalorder %v78, 127
  %v1265 = vsel %vm1264, %v1261, %v1263
  %v1266 = vsel %vm1264, %v1259, %v1261
  %v1267 = vsel %vm1264, %v1257, %v1259
  %v1268 = vsel %vm1264, %v1255, %v1257
  %v1269 = vsel %vm1264, %v1253, %v1255
  %v1270 = vsel %vm1264, %v1263, %v1253
  %v1272 = vsel %vm107, %v1251, 0
  %1274 = vmatprep.subr.mxu0 %v1268
  %1275 = vmatpush1.msra.mxu0 %v1269
  %1276 = vmatprep.subr.mxu0 0.0
  %1277 = vmatpush1.msra.mxu0 0.0
  %1278 = vmatprep.subr.mxu0 0.0
  %1279 = vmatpush1.msra.mxu0 0.0
  %1280 = vmatprep.subr.mxu0 0.0
  %1281 = vmatpush1.msra.mxu0 0.0
  %1282 = vmatprep.subr.mxu0 0.0
  %1283 = vmatpush1.msra.mxu0 0.0
  %1284 = vmatprep.subr.mxu0 0.0
  %1285 = vmatpush1.msra.mxu0 0.0
  %1286 = vmatprep.subr.mxu0 0.0
  %1287 = vmatpush1.msra.mxu0 0.0
  %1288 = vmatprep.subr.mxu0 0.0
  %1289 = vmatpush1.msra.mxu0 0.0
  %1290 = vmatprep.subr.mxu0 0.0
  %1291 = vmatpush1.msra.mxu0 0.0
  %1292 = vmatprep.subr.mxu0 0.0
  %1293 = vmatpush1.msra.mxu0 0.0
  %1294 = vmatprep.subr.mxu0 0.0
  %1295 = vmatpush1.msra.mxu0 0.0
  %1296 = vmatprep.subr.mxu0 0.0
  %1297 = vmatpush1.msra.mxu0 0.0
  %1298 = vmatprep.subr.mxu0 0.0
  %1299 = vmatpush1.msra.mxu0 0.0
  %1300 = vmatprep.subr.mxu0 0.0
  %1301 = vmatpush1.msra.mxu0 0.0
  %1302 = vmatprep.subr.mxu0 0.0
  %1303 = vmatpush1.msra.mxu0 0.0
  %1304 = vmatprep.subr.mxu0 0.0
  %1305 = vmatpush1.msra.mxu0 0.0
  %1306 = vmatprep.subr.mxu0 0.0
  %1307 = vmatpush1.msra.mxu0 0.0
  %1308 = vmatprep.subr.mxu0 0.0
  %1309 = vmatpush1.msra.mxu0 0.0
  %1310 = vmatprep.subr.mxu0 0.0
  %1311 = vmatpush1.msra.mxu0 0.0
  %1312 = vmatprep.subr.mxu0 0.0
  %1313 = vmatpush1.msra.mxu0 0.0
  %1314 = vmatprep.subr.mxu0 0.0
  %1315 = vmatpush1.msra.mxu0 0.0
  %1316 = vmatprep.subr.mxu0 0.0
  %1317 = vmatpush1.msra.mxu0 0.0
  %1318 = vmatprep.subr.mxu0 0.0
  %1319 = vmatpush1.msra.mxu0 0.0
  %1320 = vmatprep.subr.mxu0 0.0
  %1321 = vmatpush1.msra.mxu0 0.0
  %1322 = vmatprep.subr.mxu0 0.0
  %1323 = vmatpush1.msra.mxu0 0.0
  %1324 = vmatprep.subr.mxu0 0.0
  %1325 = vmatpush1.msra.mxu0 0.0
  %1326 = vmatprep.subr.mxu0 0.0
  %1327 = vmatpush1.msra.mxu0 0.0
  %1328 = vmatprep.subr.mxu0 0.0
  %1329 = vmatpush1.msra.mxu0 0.0
  %1330 = vmatprep.subr.mxu0 0.0
  %1331 = vmatpush1.msra.mxu0 0.0
  %1332 = vmatprep.subr.mxu0 0.0
  %1333 = vmatpush1.msra.mxu0 0.0
  %1334 = vmatprep.subr.mxu0 0.0
  %1335 = vmatpush1.msra.mxu0 0.0
  %1336 = vmatprep.subr.mxu0 0.0
  %1337 = vmatpush1.msra.mxu0 0.0
  %1338 = vmatprep.mubr.f32.mxu0 0.0
  %1339 = vmatmul.mubr.f32.gmra.mrb[0].mxu0 %v1272
  %v1340 = vpop.f32.mrb[0].mxu0
  %v1341 = vadd.f32 0.0, %v1340
  %v1342 = vpop.f32.mrb[0].mxu0
  %v1343 = vadd.f32 0.0, %v1342
  %1344 = vdwg.mxu0
  %1345 = vmatprep.subr.mxu0 %v1266
  %1346 = vmatpush1.msra.mxu0 %v1267
  %1347 = vmatprep.subr.mxu0 0.0
  %1348 = vmatpush1.msra.mxu0 0.0
  %1349 = vmatprep.subr.mxu0 0.0
  %1350 = vmatpush1.msra.mxu0 0.0
  %1351 = vmatprep.subr.mxu0 0.0
  %1352 = vmatpush1.msra.mxu0 0.0
  %1353 = vmatprep.subr.mxu0 0.0
  %1354 = vmatpush1.msra.mxu0 0.0
  %1355 = vmatprep.subr.mxu0 0.0
  %1356 = vmatpush1.msra.mxu0 0.0
  %1357 = vmatprep.subr.mxu0 0.0
  %1358 = vmatpush1.msra.mxu0 0.0
  %1359 = vmatprep.subr.mxu0 0.0
  %1360 = vmatpush1.msra.mxu0 0.0
  %1361 = vmatprep.subr.mxu0 0.0
  %1362 = vmatpush1.msra.mxu0 0.0
  %1363 = vmatprep.subr.mxu0 0.0
  %1364 = vmatpush1.msra.mxu0 0.0
  %1365 = vmatprep.subr.mxu0 0.0
  %1366 = vmatpush1.msra.mxu0 0.0
  %1367 = vmatprep.subr.mxu0 0.0
  %1368 = vmatpush1.msra.mxu0 0.0
  %1369 = vmatprep.subr.mxu0 0.0
  %1370 = vmatpush1.msra.mxu0 0.0
  %1371 = vmatprep.subr.mxu0 0.0
  %1372 = vmatpush1.msra.mxu0 0.0
  %1373 = vmatprep.subr.mxu0 0.0
  %1374 = vmatpush1.msra.mxu0 0.0
  %1375 = vmatprep.subr.mxu0 0.0
  %1376 = vmatpush1.msra.mxu0 0.0
  %1377 = vmatprep.subr.mxu0 0.0
  %1378 = vmatpush1.msra.mxu0 0.0
  %1379 = vmatprep.subr.mxu0 0.0
  %1380 = vmatpush1.msra.mxu0 0.0
  %1381 = vmatprep.subr.mxu0 0.0
  %1382 = vmatpush1.msra.mxu0 0.0
  %1383 = vmatprep.subr.mxu0 0.0
  %1384 = vmatpush1.msra.mxu0 0.0
  %1385 = vmatprep.subr.mxu0 0.0
  %1386 = vmatpush1.msra.mxu0 0.0
  %1387 = vmatprep.subr.mxu0 0.0
  %1388 = vmatpush1.msra.mxu0 0.0
  %1389 = vmatprep.subr.mxu0 0.0
  %1390 = vmatpush1.msra.mxu0 0.0
  %1391 = vmatprep.subr.mxu0 0.0
  %1392 = vmatpush1.msra.mxu0 0.0
  %1393 = vmatprep.subr.mxu0 0.0
  %1394 = vmatpush1.msra.mxu0 0.0
  %1395 = vmatprep.subr.mxu0 0.0
  %1396 = vmatpush1.msra.mxu0 0.0
  %1397 = vmatprep.subr.mxu0 0.0
  %1398 = vmatpush1.msra.mxu0 0.0
  %1399 = vmatprep.subr.mxu0 0.0
  %1400 = vmatpush1.msra.mxu0 0.0
  %1401 = vmatprep.subr.mxu0 0.0
  %1402 = vmatpush1.msra.mxu0 0.0
  %1403 = vmatprep.subr.mxu0 0.0
  %1404 = vmatpush1.msra.mxu0 0.0
  %1405 = vmatprep.subr.mxu0 0.0
  %1406 = vmatpush1.msra.mxu0 0.0
  %1407 = vmatprep.subr.mxu0 0.0
  %1408 = vmatpush1.msra.mxu0 0.0
  %1409 = vmatprep.mubr.f32.mxu0 0.0
  %1410 = vmatmul.mubr.f32.gmra.mrb[0].mxu0 %v1272
  %v1411 = vpop.f32.mrb[0].mxu0
  %v1412 = vadd.f32 0.0, %v1411
  %v1413 = vpop.f32.mrb[0].mxu0
  %v1414 = vadd.f32 0.0, %v1413
  %1415 = vdwg.mxu0
  %1416 = vmatprep.subr.mxu0 %v1270
  %1417 = vmatpush1.msra.mxu0 %v1265
  %1418 = vmatprep.subr.mxu0 0.0
  %1419 = vmatpush1.msra.mxu0 0.0
  %1420 = vmatprep.subr.mxu0 0.0
  %1421 = vmatpush1.msra.mxu0 0.0
  %1422 = vmatprep.subr.mxu0 0.0
  %1423 = vmatpush1.msra.mxu0 0.0
  %1424 = vmatprep.subr.mxu0 0.0
  %1425 = vmatpush1.msra.mxu0 0.0
  %1426 = vmatprep.subr.mxu0 0.0
  %1427 = vmatpush1.msra.mxu0 0.0
  %1428 = vmatprep.subr.mxu0 0.0
  %1429 = vmatpush1.msra.mxu0 0.0
  %1430 = vmatprep.subr.mxu0 0.0
  %1431 = vmatpush1.msra.mxu0 0.0
  %1432 = vmatprep.subr.mxu0 0.0
  %1433 = vmatpush1.msra.mxu0 0.0
  %1434 = vmatprep.subr.mxu0 0.0
  %1435 = vmatpush1.msra.mxu0 0.0
  %1436 = vmatprep.subr.mxu0 0.0
  %1437 = vmatpush1.msra.mxu0 0.0
  %1438 = vmatprep.subr.mxu0 0.0
  %1439 = vmatpush1.msra.mxu0 0.0
  %1440 = vmatprep.subr.mxu0 0.0
  %1441 = vmatpush1.msra.mxu0 0.0
  %1442 = vmatprep.subr.mxu0 0.0
  %1443 = vmatpush1.msra.mxu0 0.0
  %1444 = vmatprep.subr.mxu0 0.0
  %1445 = vmatpush1.msra.mxu0 0.0
  %1446 = vmatprep.subr.mxu0 0.0
  %1447 = vmatpush1.msra.mxu0 0.0
  %1448 = vmatprep.subr.mxu0 0.0
  %1449 = vmatpush1.msra.mxu0 0.0
  %1450 = vmatprep.subr.mxu0 0.0
  %1451 = vmatpush1.msra.mxu0 0.0
  %1452 = vmatprep.subr.mxu0 0.0
  %1453 = vmatpush1.msra.mxu0 0.0
  %1454 = vmatprep.subr.mxu0 0.0
  %1455 = vmatpush1.msra.mxu0 0.0
  %1456 = vmatprep.subr.mxu0 0.0
  %1457 = vmatpush1.msra.mxu0 0.0
  %1458 = vmatprep.subr.mxu0 0.0
  %1459 = vmatpush1.msra.mxu0 0.0
  %1460 = vmatprep.subr.mxu0 0.0
  %1461 = vmatpush1.msra.mxu0 0.0
  %1462 = vmatprep.subr.mxu0 0.0
  %1463 = vmatpush1.msra.mxu0 0.0
  %1464 = vmatprep.subr.mxu0 0.0
  %1465 = vmatpush1.msra.mxu0 0.0
  %1466 = vmatprep.subr.mxu0 0.0
  %1467 = vmatpush1.msra.mxu0 0.0
  %1468 = vmatprep.subr.mxu0 0.0
  %1469 = vmatpush1.msra.mxu0 0.0
  %1470 = vmatprep.subr.mxu0 0.0
  %1471 = vmatpush1.msra.mxu0 0.0
  %1472 = vmatprep.subr.mxu0 0.0
  %1473 = vmatpush1.msra.mxu0 0.0
  %1474 = vmatprep.subr.mxu0 0.0
  %1475 = vmatpush1.msra.mxu0 0.0
  %1476 = vmatprep.subr.mxu0 0.0
  %1477 = vmatpush1.msra.mxu0 0.0
  %1478 = vmatprep.subr.mxu0 0.0
  %1479 = vmatpush1.msra.mxu0 0.0
  %1480 = vmatprep.mubr.f32.mxu0 0.0
  %1481 = vmatmul.mubr.f32.gmra.mrb[0].mxu0 %v1272
  %v1482 = vpop.f32.mrb[0].mxu0
  %v1483 = vadd.f32 0.0, %v1482
  %v1484 = vpop.f32.mrb[0].mxu0
  %v1485 = vadd.f32 0.0, %v1484
  %1486 = vdwg.mxu0
  %v1487 = vadd.f32 %v1244, %v1341
  %v1488 = vadd.f32 %v1245, %v1343
  %v1489 = vadd.f32 %v1246, %v1412
  %v1490 = vadd.f32 %v1247, %v1414
  %v1491 = vadd.f32 %v1248, %v1483
  %v1492 = vadd.f32 %v1249, %v1485
  %s1493 = scalar_lea.vmem %s1, 48
  %v1494 = vld [vmem:[%s1493] sm:$0xff]
  %1495 = vrot.lane.b32.xlu0 %v58, 111
  %v1496 = vpop.permute.xlu0 %1495
  %1497 = vrot.lane.b32.xlu0 %v59, 111
  %v1498 = vpop.permute.xlu0 %1497
  %1499 = vrot.lane.b32.xlu0 %v60, 111
  %v1500 = vpop.permute.xlu0 %1499
  %1501 = vrot.lane.b32.xlu0 %v61, 111
  %v1502 = vpop.permute.xlu0 %1501
  %1503 = vrot.lane.b32.xlu0 %v62, 111
  %v1504 = vpop.permute.xlu0 %1503
  %1505 = vrot.lane.b32.xlu0 %v63, 111
  %v1506 = vpop.permute.xlu0 %1505
  %vm1507 = vcmp.lt.s32.totalorder %v78, 111
  %v1508 = vsel %vm1507, %v1504, %v1506
  %v1509 = vsel %vm1507, %v1502, %v1504
  %v1510 = vsel %vm1507, %v1500, %v1502
  %v1511 = vsel %vm1507, %v1498, %v1500
  %v1512 = vsel %vm1507, %v1496, %v1498
  %v1513 = vsel %vm1507, %v1506, %v1496
  %v1515 = vsel %vm107, %v1494, 0
  %1517 = vmatprep.subr.mxu0 %v1511
  %1518 = vmatpush1.msra.mxu0 %v1512
  %1519 = vmatprep.subr.mxu0 0.0
  %1520 = vmatpush1.msra.mxu0 0.0
  %1521 = vmatprep.subr.mxu0 0.0
  %1522 = vmatpush1.msra.mxu0 0.0
  %1523 = vmatprep.subr.mxu0 0.0
  %1524 = vmatpush1.msra.mxu0 0.0
  %1525 = vmatprep.subr.mxu0 0.0
  %1526 = vmatpush1.msra.mxu0 0.0
  %1527 = vmatprep.subr.mxu0 0.0
  %1528 = vmatpush1.msra.mxu0 0.0
  %1529 = vmatprep.subr.mxu0 0.0
  %1530 = vmatpush1.msra.mxu0 0.0
  %1531 = vmatprep.subr.mxu0 0.0
  %1532 = vmatpush1.msra.mxu0 0.0
  %1533 = vmatprep.subr.mxu0 0.0
  %1534 = vmatpush1.msra.mxu0 0.0
  %1535 = vmatprep.subr.mxu0 0.0
  %1536 = vmatpush1.msra.mxu0 0.0
  %1537 = vmatprep.subr.mxu0 0.0
  %1538 = vmatpush1.msra.mxu0 0.0
  %1539 = vmatprep.subr.mxu0 0.0
  %1540 = vmatpush1.msra.mxu0 0.0
  %1541 = vmatprep.subr.mxu0 0.0
  %1542 = vmatpush1.msra.mxu0 0.0
  %1543 = vmatprep.subr.mxu0 0.0
  %1544 = vmatpush1.msra.mxu0 0.0
  %1545 = vmatprep.subr.mxu0 0.0
  %1546 = vmatpush1.msra.mxu0 0.0
  %1547 = vmatprep.subr.mxu0 0.0
  %1548 = vmatpush1.msra.mxu0 0.0
  %1549 = vmatprep.subr.mxu0 0.0
  %1550 = vmatpush1.msra.mxu0 0.0
  %1551 = vmatprep.subr.mxu0 0.0
  %1552 = vmatpush1.msra.mxu0 0.0
  %1553 = vmatprep.subr.mxu0 0.0
  %1554 = vmatpush1.msra.mxu0 0.0
  %1555 = vmatprep.subr.mxu0 0.0
  %1556 = vmatpush1.msra.mxu0 0.0
  %1557 = vmatprep.subr.mxu0 0.0
  %1558 = vmatpush1.msra.mxu0 0.0
  %1559 = vmatprep.subr.mxu0 0.0
  %1560 = vmatpush1.msra.mxu0 0.0
  %1561 = vmatprep.subr.mxu0 0.0
  %1562 = vmatpush1.msra.mxu0 0.0
  %1563 = vmatprep.subr.mxu0 0.0
  %1564 = vmatpush1.msra.mxu0 0.0
  %1565 = vmatprep.subr.mxu0 0.0
  %1566 = vmatpush1.msra.mxu0 0.0
  %1567 = vmatprep.subr.mxu0 0.0
  %1568 = vmatpush1.msra.mxu0 0.0
  %1569 = vmatprep.subr.mxu0 0.0
  %1570 = vmatpush1.msra.mxu0 0.0
  %1571 = vmatprep.subr.mxu0 0.0
  %1572 = vmatpush1.msra.mxu0 0.0
  %1573 = vmatprep.subr.mxu0 0.0
  %1574 = vmatpush1.msra.mxu0 0.0
  %1575 = vmatprep.subr.mxu0 0.0
  %1576 = vmatpush1.msra.mxu0 0.0
  %1577 = vmatprep.subr.mxu0 0.0
  %1578 = vmatpush1.msra.mxu0 0.0
  %1579 = vmatprep.subr.mxu0 0.0
  %1580 = vmatpush1.msra.mxu0 0.0
  %1581 = vmatprep.mubr.f32.mxu0 0.0
  %1582 = vmatmul.mubr.f32.gmra.mrb[0].mxu0 %v1515
  %v1583 = vpop.f32.mrb[0].mxu0
  %v1584 = vadd.f32 0.0, %v1583
  %v1585 = vpop.f32.mrb[0].mxu0
  %v1586 = vadd.f32 0.0, %v1585
  %1587 = vdwg.mxu0
  %1588 = vmatprep.subr.mxu0 %v1509
  %1589 = vmatpush1.msra.mxu0 %v1510
  %1590 = vmatprep.subr.mxu0 0.0
  %1591 = vmatpush1.msra.mxu0 0.0
  %1592 = vmatprep.subr.mxu0 0.0
  %1593 = vmatpush1.msra.mxu0 0.0
  %1594 = vmatprep.subr.mxu0 0.0
  %1595 = vmatpush1.msra.mxu0 0.0
  %1596 = vmatprep.subr.mxu0 0.0
  %1597 = vmatpush1.msra.mxu0 0.0
  %1598 = vmatprep.subr.mxu0 0.0
  %1599 = vmatpush1.msra.mxu0 0.0
  %1600 = vmatprep.subr.mxu0 0.0
  %1601 = vmatpush1.msra.mxu0 0.0
  %1602 = vmatprep.subr.mxu0 0.0
  %1603 = vmatpush1.msra.mxu0 0.0
  %1604 = vmatprep.subr.mxu0 0.0
  %1605 = vmatpush1.msra.mxu0 0.0
  %1606 = vmatprep.subr.mxu0 0.0
  %1607 = vmatpush1.msra.mxu0 0.0
  %1608 = vmatprep.subr.mxu0 0.0
  %1609 = vmatpush1.msra.mxu0 0.0
  %1610 = vmatprep.subr.mxu0 0.0
  %1611 = vmatpush1.msra.mxu0 0.0
  %1612 = vmatprep.subr.mxu0 0.0
  %1613 = vmatpush1.msra.mxu0 0.0
  %1614 = vmatprep.subr.mxu0 0.0
  %1615 = vmatpush1.msra.mxu0 0.0
  %1616 = vmatprep.subr.mxu0 0.0
  %1617 = vmatpush1.msra.mxu0 0.0
  %1618 = vmatprep.subr.mxu0 0.0
  %1619 = vmatpush1.msra.mxu0 0.0
  %1620 = vmatprep.subr.mxu0 0.0
  %1621 = vmatpush1.msra.mxu0 0.0
  %1622 = vmatprep.subr.mxu0 0.0
  %1623 = vmatpush1.msra.mxu0 0.0
  %1624 = vmatprep.subr.mxu0 0.0
  %1625 = vmatpush1.msra.mxu0 0.0
  %1626 = vmatprep.subr.mxu0 0.0
  %1627 = vmatpush1.msra.mxu0 0.0
  %1628 = vmatprep.subr.mxu0 0.0
  %1629 = vmatpush1.msra.mxu0 0.0
  %1630 = vmatprep.subr.mxu0 0.0
  %1631 = vmatpush1.msra.mxu0 0.0
  %1632 = vmatprep.subr.mxu0 0.0
  %1633 = vmatpush1.msra.mxu0 0.0
  %1634 = vmatprep.subr.mxu0 0.0
  %1635 = vmatpush1.msra.mxu0 0.0
  %1636 = vmatprep.subr.mxu0 0.0
  %1637 = vmatpush1.msra.mxu0 0.0
  %1638 = vmatprep.subr.mxu0 0.0
  %1639 = vmatpush1.msra.mxu0 0.0
  %1640 = vmatprep.subr.mxu0 0.0
  %1641 = vmatpush1.msra.mxu0 0.0
  %1642 = vmatprep.subr.mxu0 0.0
  %1643 = vmatpush1.msra.mxu0 0.0
  %1644 = vmatprep.subr.mxu0 0.0
  %1645 = vmatpush1.msra.mxu0 0.0
  %1646 = vmatprep.subr.mxu0 0.0
  %1647 = vmatpush1.msra.mxu0 0.0
  %1648 = vmatprep.subr.mxu0 0.0
  %1649 = vmatpush1.msra.mxu0 0.0
  %1650 = vmatprep.subr.mxu0 0.0
  %1651 = vmatpush1.msra.mxu0 0.0
  %1652 = vmatprep.mubr.f32.mxu0 0.0
  %1653 = vmatmul.mubr.f32.gmra.mrb[0].mxu0 %v1515
  %v1654 = vpop.f32.mrb[0].mxu0
  %v1655 = vadd.f32 0.0, %v1654
  %v1656 = vpop.f32.mrb[0].mxu0
  %v1657 = vadd.f32 0.0, %v1656
  %1658 = vdwg.mxu0
  %1659 = vmatprep.subr.mxu0 %v1513
  %1660 = vmatpush1.msra.mxu0 %v1508
  %1661 = vmatprep.subr.mxu0 0.0
  %1662 = vmatpush1.msra.mxu0 0.0
  %1663 = vmatprep.subr.mxu0 0.0
  %1664 = vmatpush1.msra.mxu0 0.0
  %1665 = vmatprep.subr.mxu0 0.0
  %1666 = vmatpush1.msra.mxu0 0.0
  %1667 = vmatprep.subr.mxu0 0.0
  %1668 = vmatpush1.msra.mxu0 0.0
  %1669 = vmatprep.subr.mxu0 0.0
  %1670 = vmatpush1.msra.mxu0 0.0
  %1671 = vmatprep.subr.mxu0 0.0
  %1672 = vmatpush1.msra.mxu0 0.0
  %1673 = vmatprep.subr.mxu0 0.0
  %1674 = vmatpush1.msra.mxu0 0.0
  %1675 = vmatprep.subr.mxu0 0.0
  %1676 = vmatpush1.msra.mxu0 0.0
  %1677 = vmatprep.subr.mxu0 0.0
  %1678 = vmatpush1.msra.mxu0 0.0
  %1679 = vmatprep.subr.mxu0 0.0
  %1680 = vmatpush1.msra.mxu0 0.0
  %1681 = vmatprep.subr.mxu0 0.0
  %1682 = vmatpush1.msra.mxu0 0.0
  %1683 = vmatprep.subr.mxu0 0.0
  %1684 = vmatpush1.msra.mxu0 0.0
  %1685 = vmatprep.subr.mxu0 0.0
  %1686 = vmatpush1.msra.mxu0 0.0
  %1687 = vmatprep.subr.mxu0 0.0
  %1688 = vmatpush1.msra.mxu0 0.0
  %1689 = vmatprep.subr.mxu0 0.0
  %1690 = vmatpush1.msra.mxu0 0.0
  %1691 = vmatprep.subr.mxu0 0.0
  %1692 = vmatpush1.msra.mxu0 0.0
  %1693 = vmatprep.subr.mxu0 0.0
  %1694 = vmatpush1.msra.mxu0 0.0
  %1695 = vmatprep.subr.mxu0 0.0
  %1696 = vmatpush1.msra.mxu0 0.0
  %1697 = vmatprep.subr.mxu0 0.0
  %1698 = vmatpush1.msra.mxu0 0.0
  %1699 = vmatprep.subr.mxu0 0.0
  %1700 = vmatpush1.msra.mxu0 0.0
  %1701 = vmatprep.subr.mxu0 0.0
  %1702 = vmatpush1.msra.mxu0 0.0
  %1703 = vmatprep.subr.mxu0 0.0
  %1704 = vmatpush1.msra.mxu0 0.0
  %1705 = vmatprep.subr.mxu0 0.0
  %1706 = vmatpush1.msra.mxu0 0.0
  %1707 = vmatprep.subr.mxu0 0.0
  %1708 = vmatpush1.msra.mxu0 0.0
  %1709 = vmatprep.subr.mxu0 0.0
  %1710 = vmatpush1.msra.mxu0 0.0
  %1711 = vmatprep.subr.mxu0 0.0
  %1712 = vmatpush1.msra.mxu0 0.0
  %1713 = vmatprep.subr.mxu0 0.0
  %1714 = vmatpush1.msra.mxu0 0.0
  %1715 = vmatprep.subr.mxu0 0.0
  %1716 = vmatpush1.msra.mxu0 0.0
  %1717 = vmatprep.subr.mxu0 0.0
  %1718 = vmatpush1.msra.mxu0 0.0
  %1719 = vmatprep.subr.mxu0 0.0
  %1720 = vmatpush1.msra.mxu0 0.0
  %1721 = vmatprep.subr.mxu0 0.0
  %1722 = vmatpush1.msra.mxu0 0.0
  %1723 = vmatprep.mubr.f32.mxu0 0.0
  %1724 = vmatmul.mubr.f32.gmra.mrb[0].mxu0 %v1515
  %v1725 = vpop.f32.mrb[0].mxu0
  %v1726 = vadd.f32 0.0, %v1725
  %v1727 = vpop.f32.mrb[0].mxu0
  %v1728 = vadd.f32 0.0, %v1727
  %1729 = vdwg.mxu0
  %v1730 = vadd.f32 %v1487, %v1584
  %v1731 = vadd.f32 %v1488, %v1586
  %v1732 = vadd.f32 %v1489, %v1655
  %v1733 = vadd.f32 %v1490, %v1657
  %v1734 = vadd.f32 %v1491, %v1726
  %v1735 = vadd.f32 %v1492, %v1728
  %s1736 = scalar_lea.vmem %s1, 56
  %v1737 = vld [vmem:[%s1736] sm:$0xff]
  %1738 = vrot.lane.b32.xlu0 %v58, 110
  %v1739 = vpop.permute.xlu0 %1738
  %1740 = vrot.lane.b32.xlu0 %v59, 110
  %v1741 = vpop.permute.xlu0 %1740
  %1742 = vrot.lane.b32.xlu0 %v60, 110
  %v1743 = vpop.permute.xlu0 %1742
  %1744 = vrot.lane.b32.xlu0 %v61, 110
  %v1745 = vpop.permute.xlu0 %1744
  %1746 = vrot.lane.b32.xlu0 %v62, 110
  %v1747 = vpop.permute.xlu0 %1746
  %1748 = vrot.lane.b32.xlu0 %v63, 110
  %v1749 = vpop.permute.xlu0 %1748
  %vm1750 = vcmp.lt.s32.totalorder %v78, 110
  %v1751 = vsel %vm1750, %v1747, %v1749
  %v1752 = vsel %vm1750, %v1745, %v1747
  %v1753 = vsel %vm1750, %v1743, %v1745
  %v1754 = vsel %vm1750, %v1741, %v1743
  %v1755 = vsel %vm1750, %v1739, %v1741
  %v1756 = vsel %vm1750, %v1749, %v1739
  %v1758 = vsel %vm107, %v1737, 0
  %1760 = vmatprep.subr.mxu0 %v1754
  %1761 = vmatpush1.msra.mxu0 %v1755
  %1762 = vmatprep.subr.mxu0 0.0
  %1763 = vmatpush1.msra.mxu0 0.0
  %1764 = vmatprep.subr.mxu0 0.0
  %1765 = vmatpush1.msra.mxu0 0.0
  %1766 = vmatprep.subr.mxu0 0.0
  %1767 = vmatpush1.msra.mxu0 0.0
  %1768 = vmatprep.subr.mxu0 0.0
  %1769 = vmatpush1.msra.mxu0 0.0
  %1770 = vmatprep.subr.mxu0 0.0
  %1771 = vmatpush1.msra.mxu0 0.0
  %1772 = vmatprep.subr.mxu0 0.0
  %1773 = vmatpush1.msra.mxu0 0.0
  %1774 = vmatprep.subr.mxu0 0.0
  %1775 = vmatpush1.msra.mxu0 0.0
  %1776 = vmatprep.subr.mxu0 0.0
  %1777 = vmatpush1.msra.mxu0 0.0
  %1778 = vmatprep.subr.mxu0 0.0
  %1779 = vmatpush1.msra.mxu0 0.0
  %1780 = vmatprep.subr.mxu0 0.0
  %1781 = vmatpush1.msra.mxu0 0.0
  %1782 = vmatprep.subr.mxu0 0.0
  %1783 = vmatpush1.msra.mxu0 0.0
  %1784 = vmatprep.subr.mxu0 0.0
  %1785 = vmatpush1.msra.mxu0 0.0
  %1786 = vmatprep.subr.mxu0 0.0
  %1787 = vmatpush1.msra.mxu0 0.0
  %1788 = vmatprep.subr.mxu0 0.0
  %1789 = vmatpush1.msra.mxu0 0.0
  %1790 = vmatprep.subr.mxu0 0.0
  %1791 = vmatpush1.msra.mxu0 0.0
  %1792 = vmatprep.subr.mxu0 0.0
  %1793 = vmatpush1.msra.mxu0 0.0
  %1794 = vmatprep.subr.mxu0 0.0
  %1795 = vmatpush1.msra.mxu0 0.0
  %1796 = vmatprep.subr.mxu0 0.0
  %1797 = vmatpush1.msra.mxu0 0.0
  %1798 = vmatprep.subr.mxu0 0.0
  %1799 = vmatpush1.msra.mxu0 0.0
  %1800 = vmatprep.subr.mxu0 0.0
  %1801 = vmatpush1.msra.mxu0 0.0
  %1802 = vmatprep.subr.mxu0 0.0
  %1803 = vmatpush1.msra.mxu0 0.0
  %1804 = vmatprep.subr.mxu0 0.0
  %1805 = vmatpush1.msra.mxu0 0.0
  %1806 = vmatprep.subr.mxu0 0.0
  %1807 = vmatpush1.msra.mxu0 0.0
  %1808 = vmatprep.subr.mxu0 0.0
  %1809 = vmatpush1.msra.mxu0 0.0
  %1810 = vmatprep.subr.mxu0 0.0
  %1811 = vmatpush1.msra.mxu0 0.0
  %1812 = vmatprep.subr.mxu0 0.0
  %1813 = vmatpush1.msra.mxu0 0.0
  %1814 = vmatprep.subr.mxu0 0.0
  %1815 = vmatpush1.msra.mxu0 0.0
  %1816 = vmatprep.subr.mxu0 0.0
  %1817 = vmatpush1.msra.mxu0 0.0
  %1818 = vmatprep.subr.mxu0 0.0
  %1819 = vmatpush1.msra.mxu0 0.0
  %1820 = vmatprep.subr.mxu0 0.0
  %1821 = vmatpush1.msra.mxu0 0.0
  %1822 = vmatprep.subr.mxu0 0.0
  %1823 = vmatpush1.msra.mxu0 0.0
  %1824 = vmatprep.mubr.f32.mxu0 0.0
  %1825 = vmatmul.mubr.f32.gmra.mrb[0].mxu0 %v1758
  %v1826 = vpop.f32.mrb[0].mxu0
  %v1827 = vadd.f32 0.0, %v1826
  %v1828 = vpop.f32.mrb[0].mxu0
  %v1829 = vadd.f32 0.0, %v1828
  %1830 = vdwg.mxu0
  %1831 = vmatprep.subr.mxu0 %v1752
  %1832 = vmatpush1.msra.mxu0 %v1753
  %1833 = vmatprep.subr.mxu0 0.0
  %1834 = vmatpush1.msra.mxu0 0.0
  %1835 = vmatprep.subr.mxu0 0.0
  %1836 = vmatpush1.msra.mxu0 0.0
  %1837 = vmatprep.subr.mxu0 0.0
  %1838 = vmatpush1.msra.mxu0 0.0
  %1839 = vmatprep.subr.mxu0 0.0
  %1840 = vmatpush1.msra.mxu0 0.0
  %1841 = vmatprep.subr.mxu0 0.0
  %1842 = vmatpush1.msra.mxu0 0.0
  %1843 = vmatprep.subr.mxu0 0.0
  %1844 = vmatpush1.msra.mxu0 0.0
  %1845 = vmatprep.subr.mxu0 0.0
  %1846 = vmatpush1.msra.mxu0 0.0
  %1847 = vmatprep.subr.mxu0 0.0
  %1848 = vmatpush1.msra.mxu0 0.0
  %1849 = vmatprep.subr.mxu0 0.0
  %1850 = vmatpush1.msra.mxu0 0.0
  %1851 = vmatprep.subr.mxu0 0.0
  %1852 = vmatpush1.msra.mxu0 0.0
  %1853 = vmatprep.subr.mxu0 0.0
  %1854 = vmatpush1.msra.mxu0 0.0
  %1855 = vmatprep.subr.mxu0 0.0
  %1856 = vmatpush1.msra.mxu0 0.0
  %1857 = vmatprep.subr.mxu0 0.0
  %1858 = vmatpush1.msra.mxu0 0.0
  %1859 = vmatprep.subr.mxu0 0.0
  %1860 = vmatpush1.msra.mxu0 0.0
  %1861 = vmatprep.subr.mxu0 0.0
  %1862 = vmatpush1.msra.mxu0 0.0
  %1863 = vmatprep.subr.mxu0 0.0
  %1864 = vmatpush1.msra.mxu0 0.0
  %1865 = vmatprep.subr.mxu0 0.0
  %1866 = vmatpush1.msra.mxu0 0.0
  %1867 = vmatprep.subr.mxu0 0.0
  %1868 = vmatpush1.msra.mxu0 0.0
  %1869 = vmatprep.subr.mxu0 0.0
  %1870 = vmatpush1.msra.mxu0 0.0
  %1871 = vmatprep.subr.mxu0 0.0
  %1872 = vmatpush1.msra.mxu0 0.0
  %1873 = vmatprep.subr.mxu0 0.0
  %1874 = vmatpush1.msra.mxu0 0.0
  %1875 = vmatprep.subr.mxu0 0.0
  %1876 = vmatpush1.msra.mxu0 0.0
  %1877 = vmatprep.subr.mxu0 0.0
  %1878 = vmatpush1.msra.mxu0 0.0
  %1879 = vmatprep.subr.mxu0 0.0
  %1880 = vmatpush1.msra.mxu0 0.0
  %1881 = vmatprep.subr.mxu0 0.0
  %1882 = vmatpush1.msra.mxu0 0.0
  %1883 = vmatprep.subr.mxu0 0.0
  %1884 = vmatpush1.msra.mxu0 0.0
  %1885 = vmatprep.subr.mxu0 0.0
  %1886 = vmatpush1.msra.mxu0 0.0
  %1887 = vmatprep.subr.mxu0 0.0
  %1888 = vmatpush1.msra.mxu0 0.0
  %1889 = vmatprep.subr.mxu0 0.0
  %1890 = vmatpush1.msra.mxu0 0.0
  %1891 = vmatprep.subr.mxu0 0.0
  %1892 = vmatpush1.msra.mxu0 0.0
  %1893 = vmatprep.subr.mxu0 0.0
  %1894 = vmatpush1.msra.mxu0 0.0
  %1895 = vmatprep.mubr.f32.mxu0 0.0
  %1896 = vmatmul.mubr.f32.gmra.mrb[0].mxu0 %v1758
  %v1897 = vpop.f32.mrb[0].mxu0
  %v1898 = vadd.f32 0.0, %v1897
  %v1899 = vpop.f32.mrb[0].mxu0
  %v1900 = vadd.f32 0.0, %v1899
  %1901 = vdwg.mxu0
  %1902 = vmatprep.subr.mxu0 %v1756
  %1903 = vmatpush1.msra.mxu0 %v1751
  %1904 = vmatprep.subr.mxu0 0.0
  %1905 = vmatpush1.msra.mxu0 0.0
  %1906 = vmatprep.subr.mxu0 0.0
  %1907 = vmatpush1.msra.mxu0 0.0
  %1908 = vmatprep.subr.mxu0 0.0
  %1909 = vmatpush1.msra.mxu0 0.0
  %1910 = vmatprep.subr.mxu0 0.0
  %1911 = vmatpush1.msra.mxu0 0.0
  %1912 = vmatprep.subr.mxu0 0.0
  %1913 = vmatpush1.msra.mxu0 0.0
  %1914 = vmatprep.subr.mxu0 0.0
  %1915 = vmatpush1.msra.mxu0 0.0
  %1916 = vmatprep.subr.mxu0 0.0
  %1917 = vmatpush1.msra.mxu0 0.0
  %1918 = vmatprep.subr.mxu0 0.0
  %1919 = vmatpush1.msra.mxu0 0.0
  %1920 = vmatprep.subr.mxu0 0.0
  %1921 = vmatpush1.msra.mxu0 0.0
  %1922 = vmatprep.subr.mxu0 0.0
  %1923 = vmatpush1.msra.mxu0 0.0
  %1924 = vmatprep.subr.mxu0 0.0
  %1925 = vmatpush1.msra.mxu0 0.0
  %1926 = vmatprep.subr.mxu0 0.0
  %1927 = vmatpush1.msra.mxu0 0.0
  %1928 = vmatprep.subr.mxu0 0.0
  %1929 = vmatpush1.msra.mxu0 0.0
  %1930 = vmatprep.subr.mxu0 0.0
  %1931 = vmatpush1.msra.mxu0 0.0
  %1932 = vmatprep.subr.mxu0 0.0
  %1933 = vmatpush1.msra.mxu0 0.0
  %1934 = vmatprep.subr.mxu0 0.0
  %1935 = vmatpush1.msra.mxu0 0.0
  %1936 = vmatprep.subr.mxu0 0.0
  %1937 = vmatpush1.msra.mxu0 0.0
  %1938 = vmatprep.subr.mxu0 0.0
  %1939 = vmatpush1.msra.mxu0 0.0
  %1940 = vmatprep.subr.mxu0 0.0
  %1941 = vmatpush1.msra.mxu0 0.0
  %1942 = vmatprep.subr.mxu0 0.0
  %1943 = vmatpush1.msra.mxu0 0.0
  %1944 = vmatprep.subr.mxu0 0.0
  %1945 = vmatpush1.msra.mxu0 0.0
  %1946 = vmatprep.subr.mxu0 0.0
  %1947 = vmatpush1.msra.mxu0 0.0
  %1948 = vmatprep.subr.mxu0 0.0
  %1949 = vmatpush1.msra.mxu0 0.0
  %1950 = vmatprep.subr.mxu0 0.0
  %1951 = vmatpush1.msra.mxu0 0.0
  %1952 = vmatprep.subr.mxu0 0.0
  %1953 = vmatpush1.msra.mxu0 0.0
  %1954 = vmatprep.subr.mxu0 0.0
  %1955 = vmatpush1.msra.mxu0 0.0
  %1956 = vmatprep.subr.mxu0 0.0
  %1957 = vmatpush1.msra.mxu0 0.0
  %1958 = vmatprep.subr.mxu0 0.0
  %1959 = vmatpush1.msra.mxu0 0.0
  %1960 = vmatprep.subr.mxu0 0.0
  %1961 = vmatpush1.msra.mxu0 0.0
  %1962 = vmatprep.subr.mxu0 0.0
  %1963 = vmatpush1.msra.mxu0 0.0
  %1964 = vmatprep.subr.mxu0 0.0
  %1965 = vmatpush1.msra.mxu0 0.0
  %1966 = vmatprep.mubr.f32.mxu0 0.0
  %1967 = vmatmul.mubr.f32.gmra.mrb[0].mxu0 %v1758
  %v1968 = vpop.f32.mrb[0].mxu0
  %v1969 = vadd.f32 0.0, %v1968
  %v1970 = vpop.f32.mrb[0].mxu0
  %v1971 = vadd.f32 0.0, %v1970
  %1972 = vdwg.mxu0
  %v1973 = vadd.f32 %v1730, %v1827
  %v1974 = vadd.f32 %v1731, %v1829
  %v1975 = vadd.f32 %v1732, %v1898
  %v1976 = vadd.f32 %v1733, %v1900
  %v1977 = vadd.f32 %v1734, %v1969
  %v1978 = vadd.f32 %v1735, %v1971
  %s1979 = scalar_lea.vmem %s1, 64
  %v1980 = vld [vmem:[%s1979] sm:$0xff]
  %1981 = vrot.lane.b32.xlu0 %v58, 109
  %v1982 = vpop.permute.xlu0 %1981
  %1983 = vrot.lane.b32.xlu0 %v59, 109
  %v1984 = vpop.permute.xlu0 %1983
  %1985 = vrot.lane.b32.xlu0 %v60, 109
  %v1986 = vpop.permute.xlu0 %1985
  %1987 = vrot.lane.b32.xlu0 %v61, 109
  %v1988 = vpop.permute.xlu0 %1987
  %1989 = vrot.lane.b32.xlu0 %v62, 109
  %v1990 = vpop.permute.xlu0 %1989
  %1991 = vrot.lane.b32.xlu0 %v63, 109
  %v1992 = vpop.permute.xlu0 %1991
  %vm1993 = vcmp.lt.s32.totalorder %v78, 109
  %v1994 = vsel %vm1993, %v1990, %v1992
  %v1995 = vsel %vm1993, %v1988, %v1990
  %v1996 = vsel %vm1993, %v1986, %v1988
  %v1997 = vsel %vm1993, %v1984, %v1986
  %v1998 = vsel %vm1993, %v1982, %v1984
  %v1999 = vsel %vm1993, %v1992, %v1982
  %v2001 = vsel %vm107, %v1980, 0
  %2003 = vmatprep.subr.mxu0 %v1997
  %2004 = vmatpush1.msra.mxu0 %v1998
  %2005 = vmatprep.subr.mxu0 0.0
  %2006 = vmatpush1.msra.mxu0 0.0
  %2007 = vmatprep.subr.mxu0 0.0
  %2008 = vmatpush1.msra.mxu0 0.0
  %2009 = vmatprep.subr.mxu0 0.0
  %2010 = vmatpush1.msra.mxu0 0.0
  %2011 = vmatprep.subr.mxu0 0.0
  %2012 = vmatpush1.msra.mxu0 0.0
  %2013 = vmatprep.subr.mxu0 0.0
  %2014 = vmatpush1.msra.mxu0 0.0
  %2015 = vmatprep.subr.mxu0 0.0
  %2016 = vmatpush1.msra.mxu0 0.0
  %2017 = vmatprep.subr.mxu0 0.0
  %2018 = vmatpush1.msra.mxu0 0.0
  %2019 = vmatprep.subr.mxu0 0.0
  %2020 = vmatpush1.msra.mxu0 0.0
  %2021 = vmatprep.subr.mxu0 0.0
  %2022 = vmatpush1.msra.mxu0 0.0
  %2023 = vmatprep.subr.mxu0 0.0
  %2024 = vmatpush1.msra.mxu0 0.0
  %2025 = vmatprep.subr.mxu0 0.0
  %2026 = vmatpush1.msra.mxu0 0.0
  %2027 = vmatprep.subr.mxu0 0.0
  %2028 = vmatpush1.msra.mxu0 0.0
  %2029 = vmatprep.subr.mxu0 0.0
  %2030 = vmatpush1.msra.mxu0 0.0
  %2031 = vmatprep.subr.mxu0 0.0
  %2032 = vmatpush1.msra.mxu0 0.0
  %2033 = vmatprep.subr.mxu0 0.0
  %2034 = vmatpush1.msra.mxu0 0.0
  %2035 = vmatprep.subr.mxu0 0.0
  %2036 = vmatpush1.msra.mxu0 0.0
  %2037 = vmatprep.subr.mxu0 0.0
  %2038 = vmatpush1.msra.mxu0 0.0
  %2039 = vmatprep.subr.mxu0 0.0
  %2040 = vmatpush1.msra.mxu0 0.0
  %2041 = vmatprep.subr.mxu0 0.0
  %2042 = vmatpush1.msra.mxu0 0.0
  %2043 = vmatprep.subr.mxu0 0.0
  %2044 = vmatpush1.msra.mxu0 0.0
  %2045 = vmatprep.subr.mxu0 0.0
  %2046 = vmatpush1.msra.mxu0 0.0
  %2047 = vmatprep.subr.mxu0 0.0
  %2048 = vmatpush1.msra.mxu0 0.0
  %2049 = vmatprep.subr.mxu0 0.0
  %2050 = vmatpush1.msra.mxu0 0.0
  %2051 = vmatprep.subr.mxu0 0.0
  %2052 = vmatpush1.msra.mxu0 0.0
  %2053 = vmatprep.subr.mxu0 0.0
  %2054 = vmatpush1.msra.mxu0 0.0
  %2055 = vmatprep.subr.mxu0 0.0
  %2056 = vmatpush1.msra.mxu0 0.0
  %2057 = vmatprep.subr.mxu0 0.0
  %2058 = vmatpush1.msra.mxu0 0.0
  %2059 = vmatprep.subr.mxu0 0.0
  %2060 = vmatpush1.msra.mxu0 0.0
  %2061 = vmatprep.subr.mxu0 0.0
  %2062 = vmatpush1.msra.mxu0 0.0
  %2063 = vmatprep.subr.mxu0 0.0
  %2064 = vmatpush1.msra.mxu0 0.0
  %2065 = vmatprep.subr.mxu0 0.0
  %2066 = vmatpush1.msra.mxu0 0.0
  %2067 = vmatprep.mubr.f32.mxu0 0.0
  %2068 = vmatmul.mubr.f32.gmra.mrb[0].mxu0 %v2001
  %v2069 = vpop.f32.mrb[0].mxu0
  %v2070 = vadd.f32 0.0, %v2069
  %v2071 = vpop.f32.mrb[0].mxu0
  %v2072 = vadd.f32 0.0, %v2071
  %2073 = vdwg.mxu0
  %2074 = vmatprep.subr.mxu0 %v1995
  %2075 = vmatpush1.msra.mxu0 %v1996
  %2076 = vmatprep.subr.mxu0 0.0
  %2077 = vmatpush1.msra.mxu0 0.0
  %2078 = vmatprep.subr.mxu0 0.0
  %2079 = vmatpush1.msra.mxu0 0.0
  %2080 = vmatprep.subr.mxu0 0.0
  %2081 = vmatpush1.msra.mxu0 0.0
  %2082 = vmatprep.subr.mxu0 0.0
  %2083 = vmatpush1.msra.mxu0 0.0
  %2084 = vmatprep.subr.mxu0 0.0
  %2085 = vmatpush1.msra.mxu0 0.0
  %2086 = vmatprep.subr.mxu0 0.0
  %2087 = vmatpush1.msra.mxu0 0.0
  %2088 = vmatprep.subr.mxu0 0.0
  %2089 = vmatpush1.msra.mxu0 0.0
  %2090 = vmatprep.subr.mxu0 0.0
  %2091 = vmatpush1.msra.mxu0 0.0
  %2092 = vmatprep.subr.mxu0 0.0
  %2093 = vmatpush1.msra.mxu0 0.0
  %2094 = vmatprep.subr.mxu0 0.0
  %2095 = vmatpush1.msra.mxu0 0.0
  %2096 = vmatprep.subr.mxu0 0.0
  %2097 = vmatpush1.msra.mxu0 0.0
  %2098 = vmatprep.subr.mxu0 0.0
  %2099 = vmatpush1.msra.mxu0 0.0
  %2100 = vmatprep.subr.mxu0 0.0
  %2101 = vmatpush1.msra.mxu0 0.0
  %2102 = vmatprep.subr.mxu0 0.0
  %2103 = vmatpush1.msra.mxu0 0.0
  %2104 = vmatprep.subr.mxu0 0.0
  %2105 = vmatpush1.msra.mxu0 0.0
  %2106 = vmatprep.subr.mxu0 0.0
  %2107 = vmatpush1.msra.mxu0 0.0
  %2108 = vmatprep.subr.mxu0 0.0
  %2109 = vmatpush1.msra.mxu0 0.0
  %2110 = vmatprep.subr.mxu0 0.0
  %2111 = vmatpush1.msra.mxu0 0.0
  %2112 = vmatprep.subr.mxu0 0.0
  %2113 = vmatpush1.msra.mxu0 0.0
  %2114 = vmatprep.subr.mxu0 0.0
  %2115 = vmatpush1.msra.mxu0 0.0
  %2116 = vmatprep.subr.mxu0 0.0
  %2117 = vmatpush1.msra.mxu0 0.0
  %2118 = vmatprep.subr.mxu0 0.0
  %2119 = vmatpush1.msra.mxu0 0.0
  %2120 = vmatprep.subr.mxu0 0.0
  %2121 = vmatpush1.msra.mxu0 0.0
  %2122 = vmatprep.subr.mxu0 0.0
  %2123 = vmatpush1.msra.mxu0 0.0
  %2124 = vmatprep.subr.mxu0 0.0
  %2125 = vmatpush1.msra.mxu0 0.0
  %2126 = vmatprep.subr.mxu0 0.0
  %2127 = vmatpush1.msra.mxu0 0.0
  %2128 = vmatprep.subr.mxu0 0.0
  %2129 = vmatpush1.msra.mxu0 0.0
  %2130 = vmatprep.subr.mxu0 0.0
  %2131 = vmatpush1.msra.mxu0 0.0
  %2132 = vmatprep.subr.mxu0 0.0
  %2133 = vmatpush1.msra.mxu0 0.0
  %2134 = vmatprep.subr.mxu0 0.0
  %2135 = vmatpush1.msra.mxu0 0.0
  %2136 = vmatprep.subr.mxu0 0.0
  %2137 = vmatpush1.msra.mxu0 0.0
  %2138 = vmatprep.mubr.f32.mxu0 0.0
  %2139 = vmatmul.mubr.f32.gmra.mrb[0].mxu0 %v2001
  %v2140 = vpop.f32.mrb[0].mxu0
  %v2141 = vadd.f32 0.0, %v2140
  %v2142 = vpop.f32.mrb[0].mxu0
  %v2143 = vadd.f32 0.0, %v2142
  %2144 = vdwg.mxu0
  %2145 = vmatprep.subr.mxu0 %v1999
  %2146 = vmatpush1.msra.mxu0 %v1994
  %2147 = vmatprep.subr.mxu0 0.0
  %2148 = vmatpush1.msra.mxu0 0.0
  %2149 = vmatprep.subr.mxu0 0.0
  %2150 = vmatpush1.msra.mxu0 0.0
  %2151 = vmatprep.subr.mxu0 0.0
  %2152 = vmatpush1.msra.mxu0 0.0
  %2153 = vmatprep.subr.mxu0 0.0
  %2154 = vmatpush1.msra.mxu0 0.0
  %2155 = vmatprep.subr.mxu0 0.0
  %2156 = vmatpush1.msra.mxu0 0.0
  %2157 = vmatprep.subr.mxu0 0.0
  %2158 = vmatpush1.msra.mxu0 0.0
  %2159 = vmatprep.subr.mxu0 0.0
  %2160 = vmatpush1.msra.mxu0 0.0
  %2161 = vmatprep.subr.mxu0 0.0
  %2162 = vmatpush1.msra.mxu0 0.0
  %2163 = vmatprep.subr.mxu0 0.0
  %2164 = vmatpush1.msra.mxu0 0.0
  %2165 = vmatprep.subr.mxu0 0.0
  %2166 = vmatpush1.msra.mxu0 0.0
  %2167 = vmatprep.subr.mxu0 0.0
  %2168 = vmatpush1.msra.mxu0 0.0
  %2169 = vmatprep.subr.mxu0 0.0
  %2170 = vmatpush1.msra.mxu0 0.0
  %2171 = vmatprep.subr.mxu0 0.0
  %2172 = vmatpush1.msra.mxu0 0.0
  %2173 = vmatprep.subr.mxu0 0.0
  %2174 = vmatpush1.msra.mxu0 0.0
  %2175 = vmatprep.subr.mxu0 0.0
  %2176 = vmatpush1.msra.mxu0 0.0
  %2177 = vmatprep.subr.mxu0 0.0
  %2178 = vmatpush1.msra.mxu0 0.0
  %2179 = vmatprep.subr.mxu0 0.0
  %2180 = vmatpush1.msra.mxu0 0.0
  %2181 = vmatprep.subr.mxu0 0.0
  %2182 = vmatpush1.msra.mxu0 0.0
  %2183 = vmatprep.subr.mxu0 0.0
  %2184 = vmatpush1.msra.mxu0 0.0
  %2185 = vmatprep.subr.mxu0 0.0
  %2186 = vmatpush1.msra.mxu0 0.0
  %2187 = vmatprep.subr.mxu0 0.0
  %2188 = vmatpush1.msra.mxu0 0.0
  %2189 = vmatprep.subr.mxu0 0.0
  %2190 = vmatpush1.msra.mxu0 0.0
  %2191 = vmatprep.subr.mxu0 0.0
  %2192 = vmatpush1.msra.mxu0 0.0
  %2193 = vmatprep.subr.mxu0 0.0
  %2194 = vmatpush1.msra.mxu0 0.0
  %2195 = vmatprep.subr.mxu0 0.0
  %2196 = vmatpush1.msra.mxu0 0.0
  %2197 = vmatprep.subr.mxu0 0.0
  %2198 = vmatpush1.msra.mxu0 0.0
  %2199 = vmatprep.subr.mxu0 0.0
  %2200 = vmatpush1.msra.mxu0 0.0
  %2201 = vmatprep.subr.mxu0 0.0
  %2202 = vmatpush1.msra.mxu0 0.0
  %2203 = vmatprep.subr.mxu0 0.0
  %2204 = vmatpush1.msra.mxu0 0.0
  %2205 = vmatprep.subr.mxu0 0.0
  %2206 = vmatpush1.msra.mxu0 0.0
  %2207 = vmatprep.subr.mxu0 0.0
  %2208 = vmatpush1.msra.mxu0 0.0
  %2209 = vmatprep.mubr.f32.mxu0 0.0
  %2210 = vmatmul.mubr.f32.gmra.mrb[0].mxu0 %v2001
  %v2211 = vpop.f32.mrb[0].mxu0
  %v2212 = vadd.f32 0.0, %v2211
  %v2213 = vpop.f32.mrb[0].mxu0
  %v2214 = vadd.f32 0.0, %v2213
  %2215 = vdwg.mxu0
  %v2216 = vadd.f32 %v1973, %v2070
  %v2217 = vadd.f32 %v1974, %v2072
  %v2218 = vadd.f32 %v1975, %v2141
  %v2219 = vadd.f32 %v1976, %v2143
  %v2220 = vadd.f32 %v1977, %v2212
  %v2221 = vadd.f32 %v1978, %v2214
  %v2222 = vld [vmem:[%s4] sm:$0xff]
  %v2223 = vld [vmem:[%s4 + $0x8] sm:$0xff]
  %v2224 = vld [vmem:[%s4 + $0x10] sm:$0xff]
  %2226 = vset.pattern.permute.xlu0 0
  %2227 = vperm.xlu0 %2226, %v2222
  %v2228 = vpop.permute.xlu0 %2227
  %v2230 = vadd.f32 %v2216, %v2228
  %v2231 = vadd.f32 %v2217, %v2228
  %v2232 = vadd.f32 %v2218, %v2228
  %v2233 = vadd.f32 %v2219, %v2228
  %v2234 = vadd.f32 %v2220, %v2228
  %v2235 = vadd.f32 %v2221, %v2228
  %v2236 = vmax.f32 %v2230, 0.0
  %v2237 = vmax.f32 %v2231, 0.0
  %v2238 = vmax.f32 %v2232, 0.0
  %v2239 = vmax.f32 %v2233, 0.0
  %v2240 = vmax.f32 %v2234, 0.0
  %v2241 = vmax.f32 %v2235, 0.0
  %v2242 = vsel %vm32, 1, 0
  %v2243 = vlaneseq
  %v2244 = vshrl.u32 %v2243, 7
  %v2245 = vsub.s32 0, %v2244
  %v2246 = vrot.slane %v2242, %v2245
  %v2247 = vlaneseq
  %v2248 = vshrl.u32 %v2247, 7
  %v2249 = vsub.s32 1, %v2248
  %v2250 = vrot.slane %v2242, %v2249
  %v2251 = vlaneseq
  %v2252 = vshrl.u32 %v2251, 7
  %v2253 = vsub.s32 2, %v2252
  %v2254 = vrot.slane %v2242, %v2253
  %v2255 = vlaneseq
  %v2256 = vshrl.u32 %v2255, 7
  %v2257 = vsub.s32 3, %v2256
  %v2258 = vrot.slane %v2242, %v2257
  %v2259 = vlaneseq
  %v2260 = vshrl.u32 %v2259, 7
  %v2261 = vsub.s32 4, %v2260
  %v2262 = vrot.slane %v2242, %v2261
  %v2263 = vlaneseq
  %v2264 = vshrl.u32 %v2263, 7
  %v2265 = vsub.s32 5, %v2264
  %v2266 = vrot.slane %v2242, %v2265
  %vm2267 = vcmp.eq.s32.totalorder %v2246, 1
  %vm2268 = vcmp.eq.s32.totalorder %v2250, 1
  %vm2269 = vcmp.eq.s32.totalorder %v2254, 1
  %vm2270 = vcmp.eq.s32.totalorder %v2258, 1
  %vm2271 = vcmp.eq.s32.totalorder %v2262, 1
  %vm2272 = vcmp.eq.s32.totalorder %v2266, 1
  %v2273 = vsel %vm2267, %v2236, 0.0
  %v2274 = vsel %vm2268, %v2237, 0.0
  %v2275 = vsel %vm2269, %v2238, 0.0
  %v2276 = vsel %vm2270, %v2239, 0.0
  %v2277 = vsel %vm2271, %v2240, 0.0
  %v2278 = vsel %vm2272, %v2241, 0.0
  %v2279 = vadd.f32 %v2273, %v2274
  %v2280 = vadd.f32 %v2279, %v2275
  %v2281 = vadd.f32 %v2280, %v2276
  %v2282 = vadd.f32 %v2281, %v2277
  %v2283 = vadd.f32 %v2282, %v2278
  %2284 = vadd.xlane.f32.xlu0 %v2283
  %v2285 = vpop.xlane.xlu0 %2284
  %v2286 = vmul.f32 %v2285, 0.001953125
  %v2287 = vsub.f32 %v2236, %v2286
  %v2288 = vsub.f32 %v2237, %v2286
  %v2289 = vsub.f32 %v2238, %v2286
  %v2290 = vsub.f32 %v2239, %v2286
  %v2291 = vsub.f32 %v2240, %v2286
  %v2292 = vsub.f32 %v2241, %v2286
  %v2293 = vsel %vm2267, %v2287, 0.0
  %v2294 = vsel %vm2268, %v2288, 0.0
  %v2295 = vsel %vm2269, %v2289, 0.0
  %v2296 = vsel %vm2270, %v2290, 0.0
  %v2297 = vsel %vm2271, %v2291, 0.0
  %v2298 = vsel %vm2272, %v2292, 0.0
  %v2299 = vmul.f32 %v2293, %v2293
  %v2300 = vmul.f32 %v2294, %v2294
  %v2301 = vmul.f32 %v2295, %v2295
  %v2302 = vmul.f32 %v2296, %v2296
  %v2303 = vmul.f32 %v2297, %v2297
  %v2304 = vmul.f32 %v2298, %v2298
  %v2305 = vadd.f32 %v2299, %v2300
  %v2306 = vadd.f32 %v2305, %v2301
  %v2307 = vadd.f32 %v2306, %v2302
  %v2308 = vadd.f32 %v2307, %v2303
  %v2309 = vadd.f32 %v2308, %v2304
  %2310 = vadd.xlane.f32.xlu0 %v2309
  %v2311 = vpop.xlane.xlu0 %2310
  %v2312 = vmul.f32 %v2311, 0.001953125
  %v2313 = vadd.f32 %v2312, 1e-05
  %v2314 = vrsqrt.pop %v2313
  %v2315 = vmul.f32 %v2314, %v2223
  %2317 = vset.pattern.permute.xlu0 0
  %2318 = vperm.xlu0 %2317, %v2315
  %v2319 = vpop.permute.xlu0 %2318
  %v2321 = vmul.f32 %v2287, %v2319
  %v2322 = vmul.f32 %v2288, %v2319
  %v2323 = vmul.f32 %v2289, %v2319
  %v2324 = vmul.f32 %v2290, %v2319
  %v2325 = vmul.f32 %v2291, %v2319
  %v2326 = vmul.f32 %v2292, %v2319
  %2328 = vset.pattern.permute.xlu0 0
  %2329 = vperm.xlu0 %2328, %v2224
  %v2330 = vpop.permute.xlu0 %2329
  %v2332 = vadd.f32 %v2321, %v2330
  %v2333 = vadd.f32 %v2322, %v2330
  %v2334 = vadd.f32 %v2323, %v2330
  %v2335 = vadd.f32 %v2324, %v2330
  %v2336 = vadd.f32 %v2325, %v2330
  %v2337 = vadd.f32 %v2326, %v2330
  %2338 = vrot.lane.b32.xlu0 %v2332, 92
  %v2339 = vpop.permute.xlu0 %2338
  %2340 = vrot.lane.b32.xlu0 %v2333, 92
  %v2341 = vpop.permute.xlu0 %2340
  %2342 = vrot.lane.b32.xlu0 %v2334, 92
  %v2343 = vpop.permute.xlu0 %2342
  %2344 = vrot.lane.b32.xlu0 %v2335, 92
  %v2345 = vpop.permute.xlu0 %2344
  %2346 = vrot.lane.b32.xlu0 %v2336, 92
  %v2347 = vpop.permute.xlu0 %2346
  %2348 = vrot.lane.b32.xlu0 %v2337, 92
  %v2349 = vpop.permute.xlu0 %2348
  %vm2350 = vcmp.lt.s32.totalorder %v78, 92
  %v2351 = vsel %vm2350, %v2347, %v2349
  %v2352 = vsel %vm2350, %v2345, %v2347
  %v2353 = vsel %vm2350, %v2343, %v2345
  %v2354 = vsel %vm2350, %v2341, %v2343
  %v2355 = vsel %vm2350, %v2339, %v2341
  %v2356 = vsel %vm2350, %v2349, %v2339
  %2357 = vrot.lane.b32.xlu0 %v2332, 36
  %v2358 = vpop.permute.xlu0 %2357
  %2359 = vrot.lane.b32.xlu0 %v2333, 36
  %v2360 = vpop.permute.xlu0 %2359
  %2361 = vrot.lane.b32.xlu0 %v2334, 36
  %v2362 = vpop.permute.xlu0 %2361
  %2363 = vrot.lane.b32.xlu0 %v2335, 36
  %v2364 = vpop.permute.xlu0 %2363
  %2365 = vrot.lane.b32.xlu0 %v2336, 36
  %v2366 = vpop.permute.xlu0 %2365
  %2367 = vrot.lane.b32.xlu0 %v2337, 36
  %v2368 = vpop.permute.xlu0 %2367
  %vm2369 = vcmp.lt.s32.totalorder %v78, 36
  %v2370 = vsel %vm2369, %v2366, %v2368
  %v2371 = vsel %vm2369, %v2364, %v2366
  %v2372 = vsel %vm2369, %v2362, %v2364
  %v2373 = vsel %vm2369, %v2360, %v2362
  %v2374 = vsel %vm2369, %v2358, %v2360
  %v2375 = vsel %vm2369, %v2368, %v2358
  %v2376 = vsel %vm42, 1, 0
  %v2377 = vlaneseq
  %v2378 = vshrl.u32 %v2377, 7
  %v2379 = vsub.s32 0, %v2378
  %v2380 = vrot.slane %v2376, %v2379
  %v2381 = vlaneseq
  %v2382 = vshrl.u32 %v2381, 7
  %v2383 = vsub.s32 1, %v2382
  %v2384 = vrot.slane %v2376, %v2383
  %v2385 = vlaneseq
  %v2386 = vshrl.u32 %v2385, 7
  %v2387 = vsub.s32 2, %v2386
  %v2388 = vrot.slane %v2376, %v2387
  %v2389 = vlaneseq
  %v2390 = vshrl.u32 %v2389, 7
  %v2391 = vsub.s32 3, %v2390
  %v2392 = vrot.slane %v2376, %v2391
  %v2393 = vlaneseq
  %v2394 = vshrl.u32 %v2393, 7
  %v2395 = vsub.s32 4, %v2394
  %v2396 = vrot.slane %v2376, %v2395
  %v2397 = vlaneseq
  %v2398 = vshrl.u32 %v2397, 7
  %v2399 = vsub.s32 5, %v2398
  %v2400 = vrot.slane %v2376, %v2399
  %vm2401 = vcmp.eq.s32.totalorder %v2380, 1
  %vm2402 = vcmp.eq.s32.totalorder %v2384, 1
  %vm2403 = vcmp.eq.s32.totalorder %v2388, 1
  %vm2404 = vcmp.eq.s32.totalorder %v2392, 1
  %vm2405 = vcmp.eq.s32.totalorder %v2396, 1
  %vm2406 = vcmp.eq.s32.totalorder %v2400, 1
  %v2407 = vsel %vm2401, %v2375, %v2332
  %v2408 = vsel %vm2402, %v2374, %v2333
  %v2409 = vsel %vm2403, %v2373, %v2334
  %v2410 = vsel %vm2404, %v2372, %v2335
  %v2411 = vsel %vm2405, %v2371, %v2336
  %v2412 = vsel %vm2406, %v2370, %v2337
  %v2413 = vsel %vm37, 1, 0
  %v2414 = vlaneseq
  %v2415 = vshrl.u32 %v2414, 7
  %v2416 = vsub.s32 0, %v2415
  %v2417 = vrot.slane %v2413, %v2416
  %v2418 = vlaneseq
  %v2419 = vshrl.u32 %v2418, 7
  %v2420 = vsub.s32 1, %v2419
  %v2421 = vrot.slane %v2413, %v2420
  %v2422 = vlaneseq
  %v2423 = vshrl.u32 %v2422, 7
  %v2424 = vsub.s32 2, %v2423
  %v2425 = vrot.slane %v2413, %v2424
  %v2426 = vlaneseq
  %v2427 = vshrl.u32 %v2426, 7
  %v2428 = vsub.s32 3, %v2427
  %v2429 = vrot.slane %v2413, %v2428
  %v2430 = vlaneseq
  %v2431 = vshrl.u32 %v2430, 7
  %v2432 = vsub.s32 4, %v2431
  %v2433 = vrot.slane %v2413, %v2432
  %v2434 = vlaneseq
  %v2435 = vshrl.u32 %v2434, 7
  %v2436 = vsub.s32 5, %v2435
  %v2437 = vrot.slane %v2413, %v2436
  %vm2438 = vcmp.eq.s32.totalorder %v2417, 1
  %vm2439 = vcmp.eq.s32.totalorder %v2421, 1
  %vm2440 = vcmp.eq.s32.totalorder %v2425, 1
  %vm2441 = vcmp.eq.s32.totalorder %v2429, 1
  %vm2442 = vcmp.eq.s32.totalorder %v2433, 1
  %vm2443 = vcmp.eq.s32.totalorder %v2437, 1
  %v2444 = vsel %vm2438, %v2355, %v2407
  %v2445 = vsel %vm2439, %v2354, %v2408
  %v2446 = vsel %vm2440, %v2353, %v2409
  %v2447 = vsel %vm2441, %v2352, %v2410
  %v2448 = vsel %vm2442, %v2351, %v2411
  %v2449 = vsel %vm2443, %v2356, %v2412
  %2450 = vrot.lane.b32.xlu0 %v2444, 126
  %v2451 = vpop.permute.xlu0 %2450
  %2452 = vrot.lane.b32.xlu0 %v2445, 126
  %v2453 = vpop.permute.xlu0 %2452
  %2454 = vrot.lane.b32.xlu0 %v2446, 126
  %v2455 = vpop.permute.xlu0 %2454
  %2456 = vrot.lane.b32.xlu0 %v2447, 126
  %v2457 = vpop.permute.xlu0 %2456
  %2458 = vrot.lane.b32.xlu0 %v2448, 126
  %v2459 = vpop.permute.xlu0 %2458
  %2460 = vrot.lane.b32.xlu0 %v2449, 126
  %v2461 = vpop.permute.xlu0 %2460
  %vm2462 = vcmp.lt.s32.totalorder %v78, 126
  %v2463 = vsel %vm2462, %v2459, %v2461
  %v2464 = vsel %vm2462, %v2457, %v2459
  %v2465 = vsel %vm2462, %v2455, %v2457
  %v2466 = vsel %vm2462, %v2453, %v2455
  %v2467 = vsel %vm2462, %v2451, %v2453
  %v2468 = vsel %vm2462, %v2461, %v2451
  %2469 = vrot.lane.b32.xlu0 %v2444, 2
  %v2470 = vpop.permute.xlu0 %2469
  %2471 = vrot.lane.b32.xlu0 %v2445, 2
  %v2472 = vpop.permute.xlu0 %2471
  %2473 = vrot.lane.b32.xlu0 %v2446, 2
  %v2474 = vpop.permute.xlu0 %2473
  %2475 = vrot.lane.b32.xlu0 %v2447, 2
  %v2476 = vpop.permute.xlu0 %2475
  %2477 = vrot.lane.b32.xlu0 %v2448, 2
  %v2478 = vpop.permute.xlu0 %2477
  %2479 = vrot.lane.b32.xlu0 %v2449, 2
  %v2480 = vpop.permute.xlu0 %2479
  %vm2481 = vcmp.lt.s32.totalorder %v78, 2
  %v2482 = vsel %vm2481, %v2478, %v2480
  %v2483 = vsel %vm2481, %v2476, %v2478
  %v2484 = vsel %vm2481, %v2474, %v2476
  %v2485 = vsel %vm2481, %v2472, %v2474
  %v2486 = vsel %vm2481, %v2470, %v2472
  %v2487 = vsel %vm2481, %v2480, %v2470
  %v2488 = vsel %vm52, 1, 0
  %v2489 = vlaneseq
  %v2490 = vshrl.u32 %v2489, 7
  %v2491 = vsub.s32 0, %v2490
  %v2492 = vrot.slane %v2488, %v2491
  %v2493 = vlaneseq
  %v2494 = vshrl.u32 %v2493, 7
  %v2495 = vsub.s32 1, %v2494
  %v2496 = vrot.slane %v2488, %v2495
  %v2497 = vlaneseq
  %v2498 = vshrl.u32 %v2497, 7
  %v2499 = vsub.s32 2, %v2498
  %v2500 = vrot.slane %v2488, %v2499
  %v2501 = vlaneseq
  %v2502 = vshrl.u32 %v2501, 7
  %v2503 = vsub.s32 3, %v2502
  %v2504 = vrot.slane %v2488, %v2503
  %v2505 = vlaneseq
  %v2506 = vshrl.u32 %v2505, 7
  %v2507 = vsub.s32 4, %v2506
  %v2508 = vrot.slane %v2488, %v2507
  %v2509 = vlaneseq
  %v2510 = vshrl.u32 %v2509, 7
  %v2511 = vsub.s32 5, %v2510
  %v2512 = vrot.slane %v2488, %v2511
  %vm2513 = vcmp.eq.s32.totalorder %v2492, 1
  %vm2514 = vcmp.eq.s32.totalorder %v2496, 1
  %vm2515 = vcmp.eq.s32.totalorder %v2500, 1
  %vm2516 = vcmp.eq.s32.totalorder %v2504, 1
  %vm2517 = vcmp.eq.s32.totalorder %v2508, 1
  %vm2518 = vcmp.eq.s32.totalorder %v2512, 1
  %v2519 = vsel %vm2513, %v2487, %v2444
  %v2520 = vsel %vm2514, %v2486, %v2445
  %v2521 = vsel %vm2515, %v2485, %v2446
  %v2522 = vsel %vm2516, %v2484, %v2447
  %v2523 = vsel %vm2517, %v2483, %v2448
  %v2524 = vsel %vm2518, %v2482, %v2449
  %v2525 = vsel %vm47, 1, 0
  %v2526 = vlaneseq
  %v2527 = vshrl.u32 %v2526, 7
  %v2528 = vsub.s32 0, %v2527
  %v2529 = vrot.slane %v2525, %v2528
  %v2530 = vlaneseq
  %v2531 = vshrl.u32 %v2530, 7
  %v2532 = vsub.s32 1, %v2531
  %v2533 = vrot.slane %v2525, %v2532
  %v2534 = vlaneseq
  %v2535 = vshrl.u32 %v2534, 7
  %v2536 = vsub.s32 2, %v2535
  %v2537 = vrot.slane %v2525, %v2536
  %v2538 = vlaneseq
  %v2539 = vshrl.u32 %v2538, 7
  %v2540 = vsub.s32 3, %v2539
  %v2541 = vrot.slane %v2525, %v2540
  %v2542 = vlaneseq
  %v2543 = vshrl.u32 %v2542, 7
  %v2544 = vsub.s32 4, %v2543
  %v2545 = vrot.slane %v2525, %v2544
  %v2546 = vlaneseq
  %v2547 = vshrl.u32 %v2546, 7
  %v2548 = vsub.s32 5, %v2547
  %v2549 = vrot.slane %v2525, %v2548
  %vm2550 = vcmp.eq.s32.totalorder %v2529, 1
  %vm2551 = vcmp.eq.s32.totalorder %v2533, 1
  %vm2552 = vcmp.eq.s32.totalorder %v2537, 1
  %vm2553 = vcmp.eq.s32.totalorder %v2541, 1
  %vm2554 = vcmp.eq.s32.totalorder %v2545, 1
  %vm2555 = vcmp.eq.s32.totalorder %v2549, 1
  %v2556 = vsel %vm2550, %v2467, %v2519
  %v2557 = vsel %vm2551, %v2466, %v2520
  %v2558 = vsel %vm2552, %v2465, %v2521
  %v2559 = vsel %vm2553, %v2464, %v2522
  %v2560 = vsel %vm2554, %v2463, %v2523
  %v2561 = vsel %vm2555, %v2468, %v2524
  %v2562 = vsel %vm57, 1, 0
  %v2563 = vlaneseq
  %v2564 = vshrl.u32 %v2563, 7
  %v2565 = vsub.s32 0, %v2564
  %v2566 = vrot.slane %v2562, %v2565
  %v2567 = vlaneseq
  %v2568 = vshrl.u32 %v2567, 7
  %v2569 = vsub.s32 1, %v2568
  %v2570 = vrot.slane %v2562, %v2569
  %v2571 = vlaneseq
  %v2572 = vshrl.u32 %v2571, 7
  %v2573 = vsub.s32 2, %v2572
  %v2574 = vrot.slane %v2562, %v2573
  %v2575 = vlaneseq
  %v2576 = vshrl.u32 %v2575, 7
  %v2577 = vsub.s32 3, %v2576
  %v2578 = vrot.slane %v2562, %v2577
  %v2579 = vlaneseq
  %v2580 = vshrl.u32 %v2579, 7
  %v2581 = vsub.s32 4, %v2580
  %v2582 = vrot.slane %v2562, %v2581
  %v2583 = vlaneseq
  %v2584 = vshrl.u32 %v2583, 7
  %v2585 = vsub.s32 5, %v2584
  %v2586 = vrot.slane %v2562, %v2585
  %vm2587 = vcmp.eq.s32.totalorder %v2566, 1
  %vm2588 = vcmp.eq.s32.totalorder %v2570, 1
  %vm2589 = vcmp.eq.s32.totalorder %v2574, 1
  %vm2590 = vcmp.eq.s32.totalorder %v2578, 1
  %vm2591 = vcmp.eq.s32.totalorder %v2582, 1
  %vm2592 = vcmp.eq.s32.totalorder %v2586, 1
  %v2593 = vsel %vm2587, %v2556, 0.0
  %v2594 = vsel %vm2588, %v2557, 0.0
  %v2595 = vsel %vm2589, %v2558, 0.0
  %v2596 = vsel %vm2590, %v2559, 0.0
  %v2597 = vsel %vm2591, %v2560, 0.0
  %v2598 = vsel %vm2592, %v2561, 0.0
  %v2599 = vld [vmem:[%s2] sm:$0xff]
  %2600 = vrot.lane.b32.xlu0 %v2593, 19
  %v2601 = vpop.permute.xlu0 %2600
  %2602 = vrot.lane.b32.xlu0 %v2594, 19
  %v2603 = vpop.permute.xlu0 %2602
  %2604 = vrot.lane.b32.xlu0 %v2595, 19
  %v2605 = vpop.permute.xlu0 %2604
  %2606 = vrot.lane.b32.xlu0 %v2596, 19
  %v2607 = vpop.permute.xlu0 %2606
  %2608 = vrot.lane.b32.xlu0 %v2597, 19
  %v2609 = vpop.permute.xlu0 %2608
  %2610 = vrot.lane.b32.xlu0 %v2598, 19
  %v2611 = vpop.permute.xlu0 %2610
  %v2612 = vsel %vm79, %v2609, %v2611
  %v2613 = vsel %vm79, %v2607, %v2609
  %v2614 = vsel %vm79, %v2605, %v2607
  %v2615 = vsel %vm79, %v2603, %v2605
  %v2616 = vsel %vm79, %v2601, %v2603
  %v2617 = vsel %vm79, %v2611, %v2601
  %s2618 = scalar_lea.vmem %s2, 8
  %v2619 = vld [vmem:[%s2618] sm:$0xff]
  %2620 = vrot.lane.b32.xlu0 %v2593, 18
  %v2621 = vpop.permute.xlu0 %2620
  %2622 = vrot.lane.b32.xlu0 %v2594, 18
  %v2623 = vpop.permute.xlu0 %2622
  %2624 = vrot.lane.b32.xlu0 %v2595, 18
  %v2625 = vpop.permute.xlu0 %2624
  %2626 = vrot.lane.b32.xlu0 %v2596, 18
  %v2627 = vpop.permute.xlu0 %2626
  %2628 = vrot.lane.b32.xlu0 %v2597, 18
  %v2629 = vpop.permute.xlu0 %2628
  %2630 = vrot.lane.b32.xlu0 %v2598, 18
  %v2631 = vpop.permute.xlu0 %2630
  %v2632 = vsel %vm100, %v2629, %v2631
  %v2633 = vsel %vm100, %v2627, %v2629
  %v2634 = vsel %vm100, %v2625, %v2627
  %v2635 = vsel %vm100, %v2623, %v2625
  %v2636 = vsel %vm100, %v2621, %v2623
  %v2637 = vsel %vm100, %v2631, %v2621
  %v2639 = vsel %vm107, %v2619, 0
  %2641 = vmatprep.subr.mxu0 %v2636
  %2642 = vmatpush1.msra.mxu0 %v2637
  %2643 = vmatprep.subr.mxu0 0.0
  %2644 = vmatpush1.msra.mxu0 0.0
  %2645 = vmatprep.subr.mxu0 0.0
  %2646 = vmatpush1.msra.mxu0 0.0
  %2647 = vmatprep.subr.mxu0 0.0
  %2648 = vmatpush1.msra.mxu0 0.0
  %2649 = vmatprep.subr.mxu0 0.0
  %2650 = vmatpush1.msra.mxu0 0.0
  %2651 = vmatprep.subr.mxu0 0.0
  %2652 = vmatpush1.msra.mxu0 0.0
  %2653 = vmatprep.subr.mxu0 0.0
  %2654 = vmatpush1.msra.mxu0 0.0
  %2655 = vmatprep.subr.mxu0 0.0
  %2656 = vmatpush1.msra.mxu0 0.0
  %2657 = vmatprep.subr.mxu0 0.0
  %2658 = vmatpush1.msra.mxu0 0.0
  %2659 = vmatprep.subr.mxu0 0.0
  %2660 = vmatpush1.msra.mxu0 0.0
  %2661 = vmatprep.subr.mxu0 0.0
  %2662 = vmatpush1.msra.mxu0 0.0
  %2663 = vmatprep.subr.mxu0 0.0
  %2664 = vmatpush1.msra.mxu0 0.0
  %2665 = vmatprep.subr.mxu0 0.0
  %2666 = vmatpush1.msra.mxu0 0.0
  %2667 = vmatprep.subr.mxu0 0.0
  %2668 = vmatpush1.msra.mxu0 0.0
  %2669 = vmatprep.subr.mxu0 0.0
  %2670 = vmatpush1.msra.mxu0 0.0
  %2671 = vmatprep.subr.mxu0 0.0
  %2672 = vmatpush1.msra.mxu0 0.0
  %2673 = vmatprep.subr.mxu0 0.0
  %2674 = vmatpush1.msra.mxu0 0.0
  %2675 = vmatprep.subr.mxu0 0.0
  %2676 = vmatpush1.msra.mxu0 0.0
  %2677 = vmatprep.subr.mxu0 0.0
  %2678 = vmatpush1.msra.mxu0 0.0
  %2679 = vmatprep.subr.mxu0 0.0
  %2680 = vmatpush1.msra.mxu0 0.0
  %2681 = vmatprep.subr.mxu0 0.0
  %2682 = vmatpush1.msra.mxu0 0.0
  %2683 = vmatprep.subr.mxu0 0.0
  %2684 = vmatpush1.msra.mxu0 0.0
  %2685 = vmatprep.subr.mxu0 0.0
  %2686 = vmatpush1.msra.mxu0 0.0
  %2687 = vmatprep.subr.mxu0 0.0
  %2688 = vmatpush1.msra.mxu0 0.0
  %2689 = vmatprep.subr.mxu0 0.0
  %2690 = vmatpush1.msra.mxu0 0.0
  %2691 = vmatprep.subr.mxu0 0.0
  %2692 = vmatpush1.msra.mxu0 0.0
  %2693 = vmatprep.subr.mxu0 0.0
  %2694 = vmatpush1.msra.mxu0 0.0
  %2695 = vmatprep.subr.mxu0 0.0
  %2696 = vmatpush1.msra.mxu0 0.0
  %2697 = vmatprep.subr.mxu0 0.0
  %2698 = vmatpush1.msra.mxu0 0.0
  %2699 = vmatprep.subr.mxu0 0.0
  %2700 = vmatpush1.msra.mxu0 0.0
  %2701 = vmatprep.subr.mxu0 0.0
  %2702 = vmatpush1.msra.mxu0 0.0
  %2703 = vmatprep.subr.mxu0 0.0
  %2704 = vmatpush1.msra.mxu0 0.0
  %2705 = vmatprep.mubr.f32.mxu0 0.0
  %2706 = vmatmul.mubr.f32.gmra.mrb[0].mxu0 %v2639
  %v2707 = vpop.f32.mrb[0].mxu0
  %v2708 = vadd.f32 0.0, %v2707
  %v2709 = vpop.f32.mrb[0].mxu0
  %v2710 = vadd.f32 0.0, %v2709
  %2711 = vdwg.mxu0
  %2712 = vmatprep.subr.mxu0 %v2634
  %2713 = vmatpush1.msra.mxu0 %v2635
  %2714 = vmatprep.subr.mxu0 0.0
  %2715 = vmatpush1.msra.mxu0 0.0
  %2716 = vmatprep.subr.mxu0 0.0
  %2717 = vmatpush1.msra.mxu0 0.0
  %2718 = vmatprep.subr.mxu0 0.0
  %2719 = vmatpush1.msra.mxu0 0.0
  %2720 = vmatprep.subr.mxu0 0.0
  %2721 = vmatpush1.msra.mxu0 0.0
  %2722 = vmatprep.subr.mxu0 0.0
  %2723 = vmatpush1.msra.mxu0 0.0
  %2724 = vmatprep.subr.mxu0 0.0
  %2725 = vmatpush1.msra.mxu0 0.0
  %2726 = vmatprep.subr.mxu0 0.0
  %2727 = vmatpush1.msra.mxu0 0.0
  %2728 = vmatprep.subr.mxu0 0.0
  %2729 = vmatpush1.msra.mxu0 0.0
  %2730 = vmatprep.subr.mxu0 0.0
  %2731 = vmatpush1.msra.mxu0 0.0
  %2732 = vmatprep.subr.mxu0 0.0
  %2733 = vmatpush1.msra.mxu0 0.0
  %2734 = vmatprep.subr.mxu0 0.0
  %2735 = vmatpush1.msra.mxu0 0.0
  %2736 = vmatprep.subr.mxu0 0.0
  %2737 = vmatpush1.msra.mxu0 0.0
  %2738 = vmatprep.subr.mxu0 0.0
  %2739 = vmatpush1.msra.mxu0 0.0
  %2740 = vmatprep.subr.mxu0 0.0
  %2741 = vmatpush1.msra.mxu0 0.0
  %2742 = vmatprep.subr.mxu0 0.0
  %2743 = vmatpush1.msra.mxu0 0.0
  %2744 = vmatprep.subr.mxu0 0.0
  %2745 = vmatpush1.msra.mxu0 0.0
  %2746 = vmatprep.subr.mxu0 0.0
  %2747 = vmatpush1.msra.mxu0 0.0
  %2748 = vmatprep.subr.mxu0 0.0
  %2749 = vmatpush1.msra.mxu0 0.0
  %2750 = vmatprep.subr.mxu0 0.0
  %2751 = vmatpush1.msra.mxu0 0.0
  %2752 = vmatprep.subr.mxu0 0.0
  %2753 = vmatpush1.msra.mxu0 0.0
  %2754 = vmatprep.subr.mxu0 0.0
  %2755 = vmatpush1.msra.mxu0 0.0
  %2756 = vmatprep.subr.mxu0 0.0
  %2757 = vmatpush1.msra.mxu0 0.0
  %2758 = vmatprep.subr.mxu0 0.0
  %2759 = vmatpush1.msra.mxu0 0.0
  %2760 = vmatprep.subr.mxu0 0.0
  %2761 = vmatpush1.msra.mxu0 0.0
  %2762 = vmatprep.subr.mxu0 0.0
  %2763 = vmatpush1.msra.mxu0 0.0
  %2764 = vmatprep.subr.mxu0 0.0
  %2765 = vmatpush1.msra.mxu0 0.0
  %2766 = vmatprep.subr.mxu0 0.0
  %2767 = vmatpush1.msra.mxu0 0.0
  %2768 = vmatprep.subr.mxu0 0.0
  %2769 = vmatpush1.msra.mxu0 0.0
  %2770 = vmatprep.subr.mxu0 0.0
  %2771 = vmatpush1.msra.mxu0 0.0
  %2772 = vmatprep.subr.mxu0 0.0
  %2773 = vmatpush1.msra.mxu0 0.0
  %2774 = vmatprep.subr.mxu0 0.0
  %2775 = vmatpush1.msra.mxu0 0.0
  %2776 = vmatprep.mubr.f32.mxu0 0.0
  %2777 = vmatmul.mubr.f32.gmra.mrb[0].mxu0 %v2639
  %v2778 = vpop.f32.mrb[0].mxu0
  %v2779 = vadd.f32 0.0, %v2778
  %v2780 = vpop.f32.mrb[0].mxu0
  %v2781 = vadd.f32 0.0, %v2780
  %2782 = vdwg.mxu0
  %2783 = vmatprep.subr.mxu0 %v2632
  %2784 = vmatpush1.msra.mxu0 %v2633
  %2785 = vmatprep.subr.mxu0 0.0
  %2786 = vmatpush1.msra.mxu0 0.0
  %2787 = vmatprep.subr.mxu0 0.0
  %2788 = vmatpush1.msra.mxu0 0.0
  %2789 = vmatprep.subr.mxu0 0.0
  %2790 = vmatpush1.msra.mxu0 0.0
  %2791 = vmatprep.subr.mxu0 0.0
  %2792 = vmatpush1.msra.mxu0 0.0
  %2793 = vmatprep.subr.mxu0 0.0
  %2794 = vmatpush1.msra.mxu0 0.0
  %2795 = vmatprep.subr.mxu0 0.0
  %2796 = vmatpush1.msra.mxu0 0.0
  %2797 = vmatprep.subr.mxu0 0.0
  %2798 = vmatpush1.msra.mxu0 0.0
  %2799 = vmatprep.subr.mxu0 0.0
  %2800 = vmatpush1.msra.mxu0 0.0
  %2801 = vmatprep.subr.mxu0 0.0
  %2802 = vmatpush1.msra.mxu0 0.0
  %2803 = vmatprep.subr.mxu0 0.0
  %2804 = vmatpush1.msra.mxu0 0.0
  %2805 = vmatprep.subr.mxu0 0.0
  %2806 = vmatpush1.msra.mxu0 0.0
  %2807 = vmatprep.subr.mxu0 0.0
  %2808 = vmatpush1.msra.mxu0 0.0
  %2809 = vmatprep.subr.mxu0 0.0
  %2810 = vmatpush1.msra.mxu0 0.0
  %2811 = vmatprep.subr.mxu0 0.0
  %2812 = vmatpush1.msra.mxu0 0.0
  %2813 = vmatprep.subr.mxu0 0.0
  %2814 = vmatpush1.msra.mxu0 0.0
  %2815 = vmatprep.subr.mxu0 0.0
  %2816 = vmatpush1.msra.mxu0 0.0
  %2817 = vmatprep.subr.mxu0 0.0
  %2818 = vmatpush1.msra.mxu0 0.0
  %2819 = vmatprep.subr.mxu0 0.0
  %2820 = vmatpush1.msra.mxu0 0.0
  %2821 = vmatprep.subr.mxu0 0.0
  %2822 = vmatpush1.msra.mxu0 0.0
  %2823 = vmatprep.subr.mxu0 0.0
  %2824 = vmatpush1.msra.mxu0 0.0
  %2825 = vmatprep.subr.mxu0 0.0
  %2826 = vmatpush1.msra.mxu0 0.0
  %2827 = vmatprep.subr.mxu0 0.0
  %2828 = vmatpush1.msra.mxu0 0.0
  %2829 = vmatprep.subr.mxu0 0.0
  %2830 = vmatpush1.msra.mxu0 0.0
  %2831 = vmatprep.subr.mxu0 0.0
  %2832 = vmatpush1.msra.mxu0 0.0
  %2833 = vmatprep.subr.mxu0 0.0
  %2834 = vmatpush1.msra.mxu0 0.0
  %2835 = vmatprep.subr.mxu0 0.0
  %2836 = vmatpush1.msra.mxu0 0.0
  %2837 = vmatprep.subr.mxu0 0.0
  %2838 = vmatpush1.msra.mxu0 0.0
  %2839 = vmatprep.subr.mxu0 0.0
  %2840 = vmatpush1.msra.mxu0 0.0
  %2841 = vmatprep.subr.mxu0 0.0
  %2842 = vmatpush1.msra.mxu0 0.0
  %2843 = vmatprep.subr.mxu0 0.0
  %2844 = vmatpush1.msra.mxu0 0.0
  %2845 = vmatprep.subr.mxu0 0.0
  %2846 = vmatpush1.msra.mxu0 0.0
  %2847 = vmatprep.mubr.f32.mxu0 0.0
  %2848 = vmatmul.mubr.f32.gmra.mrb[0].mxu0 %v2639
  %v2849 = vpop.f32.mrb[0].mxu0
  %v2850 = vadd.f32 0.0, %v2849
  %v2851 = vpop.f32.mrb[0].mxu0
  %v2852 = vadd.f32 0.0, %v2851
  %2853 = vdwg.mxu0
  %v2855 = vsel %vm107, %v2599, 0
  %2857 = vmatprep.subr.mxu0 %v2616
  %2858 = vmatpush1.msra.mxu0 %v2617
  %2859 = vmatprep.subr.mxu0 0.0
  %2860 = vmatpush1.msra.mxu0 0.0
  %2861 = vmatprep.subr.mxu0 0.0
  %2862 = vmatpush1.msra.mxu0 0.0
  %2863 = vmatprep.subr.mxu0 0.0
  %2864 = vmatpush1.msra.mxu0 0.0
  %2865 = vmatprep.subr.mxu0 0.0
  %2866 = vmatpush1.msra.mxu0 0.0
  %2867 = vmatprep.subr.mxu0 0.0
  %2868 = vmatpush1.msra.mxu0 0.0
  %2869 = vmatprep.subr.mxu0 0.0
  %2870 = vmatpush1.msra.mxu0 0.0
  %2871 = vmatprep.subr.mxu0 0.0
  %2872 = vmatpush1.msra.mxu0 0.0
  %2873 = vmatprep.subr.mxu0 0.0
  %2874 = vmatpush1.msra.mxu0 0.0
  %2875 = vmatprep.subr.mxu0 0.0
  %2876 = vmatpush1.msra.mxu0 0.0
  %2877 = vmatprep.subr.mxu0 0.0
  %2878 = vmatpush1.msra.mxu0 0.0
  %2879 = vmatprep.subr.mxu0 0.0
  %2880 = vmatpush1.msra.mxu0 0.0
  %2881 = vmatprep.subr.mxu0 0.0
  %2882 = vmatpush1.msra.mxu0 0.0
  %2883 = vmatprep.subr.mxu0 0.0
  %2884 = vmatpush1.msra.mxu0 0.0
  %2885 = vmatprep.subr.mxu0 0.0
  %2886 = vmatpush1.msra.mxu0 0.0
  %2887 = vmatprep.subr.mxu0 0.0
  %2888 = vmatpush1.msra.mxu0 0.0
  %2889 = vmatprep.subr.mxu0 0.0
  %2890 = vmatpush1.msra.mxu0 0.0
  %2891 = vmatprep.subr.mxu0 0.0
  %2892 = vmatpush1.msra.mxu0 0.0
  %2893 = vmatprep.subr.mxu0 0.0
  %2894 = vmatpush1.msra.mxu0 0.0
  %2895 = vmatprep.subr.mxu0 0.0
  %2896 = vmatpush1.msra.mxu0 0.0
  %2897 = vmatprep.subr.mxu0 0.0
  %2898 = vmatpush1.msra.mxu0 0.0
  %2899 = vmatprep.subr.mxu0 0.0
  %2900 = vmatpush1.msra.mxu0 0.0
  %2901 = vmatprep.subr.mxu0 0.0
  %2902 = vmatpush1.msra.mxu0 0.0
  %2903 = vmatprep.subr.mxu0 0.0
  %2904 = vmatpush1.msra.mxu0 0.0
  %2905 = vmatprep.subr.mxu0 0.0
  %2906 = vmatpush1.msra.mxu0 0.0
  %2907 = vmatprep.subr.mxu0 0.0
  %2908 = vmatpush1.msra.mxu0 0.0
  %2909 = vmatprep.subr.mxu0 0.0
  %2910 = vmatpush1.msra.mxu0 0.0
  %2911 = vmatprep.subr.mxu0 0.0
  %2912 = vmatpush1.msra.mxu0 0.0
  %2913 = vmatprep.subr.mxu0 0.0
  %2914 = vmatpush1.msra.mxu0 0.0
  %2915 = vmatprep.subr.mxu0 0.0
  %2916 = vmatpush1.msra.mxu0 0.0
  %2917 = vmatprep.subr.mxu0 0.0
  %2918 = vmatpush1.msra.mxu0 0.0
  %2919 = vmatprep.subr.mxu0 0.0
  %2920 = vmatpush1.msra.mxu0 0.0
  %2921 = vmatprep.mubr.f32.mxu0 0.0
  %2922 = vmatmul.mubr.f32.gmra.mrb[0].mxu0 %v2855
  %v2923 = vpop.f32.mrb[0].mxu0
  %v2924 = vadd.f32 %v2708, %v2923
  %v2925 = vpop.f32.mrb[0].mxu0
  %v2926 = vadd.f32 %v2710, %v2925
  %2927 = vdwg.mxu0
  %2928 = vmatprep.subr.mxu0 %v2614
  %2929 = vmatpush1.msra.mxu0 %v2615
  %2930 = vmatprep.subr.mxu0 0.0
  %2931 = vmatpush1.msra.mxu0 0.0
  %2932 = vmatprep.subr.mxu0 0.0
  %2933 = vmatpush1.msra.mxu0 0.0
  %2934 = vmatprep.subr.mxu0 0.0
  %2935 = vmatpush1.msra.mxu0 0.0
  %2936 = vmatprep.subr.mxu0 0.0
  %2937 = vmatpush1.msra.mxu0 0.0
  %2938 = vmatprep.subr.mxu0 0.0
  %2939 = vmatpush1.msra.mxu0 0.0
  %2940 = vmatprep.subr.mxu0 0.0
  %2941 = vmatpush1.msra.mxu0 0.0
  %2942 = vmatprep.subr.mxu0 0.0
  %2943 = vmatpush1.msra.mxu0 0.0
  %2944 = vmatprep.subr.mxu0 0.0
  %2945 = vmatpush1.msra.mxu0 0.0
  %2946 = vmatprep.subr.mxu0 0.0
  %2947 = vmatpush1.msra.mxu0 0.0
  %2948 = vmatprep.subr.mxu0 0.0
  %2949 = vmatpush1.msra.mxu0 0.0
  %2950 = vmatprep.subr.mxu0 0.0
  %2951 = vmatpush1.msra.mxu0 0.0
  %2952 = vmatprep.subr.mxu0 0.0
  %2953 = vmatpush1.msra.mxu0 0.0
  %2954 = vmatprep.subr.mxu0 0.0
  %2955 = vmatpush1.msra.mxu0 0.0
  %2956 = vmatprep.subr.mxu0 0.0
  %2957 = vmatpush1.msra.mxu0 0.0
  %2958 = vmatprep.subr.mxu0 0.0
  %2959 = vmatpush1.msra.mxu0 0.0
  %2960 = vmatprep.subr.mxu0 0.0
  %2961 = vmatpush1.msra.mxu0 0.0
  %2962 = vmatprep.subr.mxu0 0.0
  %2963 = vmatpush1.msra.mxu0 0.0
  %2964 = vmatprep.subr.mxu0 0.0
  %2965 = vmatpush1.msra.mxu0 0.0
  %2966 = vmatprep.subr.mxu0 0.0
  %2967 = vmatpush1.msra.mxu0 0.0
  %2968 = vmatprep.subr.mxu0 0.0
  %2969 = vmatpush1.msra.mxu0 0.0
  %2970 = vmatprep.subr.mxu0 0.0
  %2971 = vmatpush1.msra.mxu0 0.0
  %2972 = vmatprep.subr.mxu0 0.0
  %2973 = vmatpush1.msra.mxu0 0.0
  %2974 = vmatprep.subr.mxu0 0.0
  %2975 = vmatpush1.msra.mxu0 0.0
  %2976 = vmatprep.subr.mxu0 0.0
  %2977 = vmatpush1.msra.mxu0 0.0
  %2978 = vmatprep.subr.mxu0 0.0
  %2979 = vmatpush1.msra.mxu0 0.0
  %2980 = vmatprep.subr.mxu0 0.0
  %2981 = vmatpush1.msra.mxu0 0.0
  %2982 = vmatprep.subr.mxu0 0.0
  %2983 = vmatpush1.msra.mxu0 0.0
  %2984 = vmatprep.subr.mxu0 0.0
  %2985 = vmatpush1.msra.mxu0 0.0
  %2986 = vmatprep.subr.mxu0 0.0
  %2987 = vmatpush1.msra.mxu0 0.0
  %2988 = vmatprep.subr.mxu0 0.0
  %2989 = vmatpush1.msra.mxu0 0.0
  %2990 = vmatprep.subr.mxu0 0.0
  %2991 = vmatpush1.msra.mxu0 0.0
  %2992 = vmatprep.mubr.f32.mxu0 0.0
  %2993 = vmatmul.mubr.f32.gmra.mrb[0].mxu0 %v2855
  %v2994 = vpop.f32.mrb[0].mxu0
  %v2995 = vadd.f32 %v2779, %v2994
  %v2996 = vpop.f32.mrb[0].mxu0
  %v2997 = vadd.f32 %v2781, %v2996
  %2998 = vdwg.mxu0
  %2999 = vmatprep.subr.mxu0 %v2612
  %3000 = vmatpush1.msra.mxu0 %v2613
  %3001 = vmatprep.subr.mxu0 0.0
  %3002 = vmatpush1.msra.mxu0 0.0
  %3003 = vmatprep.subr.mxu0 0.0
  %3004 = vmatpush1.msra.mxu0 0.0
  %3005 = vmatprep.subr.mxu0 0.0
  %3006 = vmatpush1.msra.mxu0 0.0
  %3007 = vmatprep.subr.mxu0 0.0
  %3008 = vmatpush1.msra.mxu0 0.0
  %3009 = vmatprep.subr.mxu0 0.0
  %3010 = vmatpush1.msra.mxu0 0.0
  %3011 = vmatprep.subr.mxu0 0.0
  %3012 = vmatpush1.msra.mxu0 0.0
  %3013 = vmatprep.subr.mxu0 0.0
  %3014 = vmatpush1.msra.mxu0 0.0
  %3015 = vmatprep.subr.mxu0 0.0
  %3016 = vmatpush1.msra.mxu0 0.0
  %3017 = vmatprep.subr.mxu0 0.0
  %3018 = vmatpush1.msra.mxu0 0.0
  %3019 = vmatprep.subr.mxu0 0.0
  %3020 = vmatpush1.msra.mxu0 0.0
  %3021 = vmatprep.subr.mxu0 0.0
  %3022 = vmatpush1.msra.mxu0 0.0
  %3023 = vmatprep.subr.mxu0 0.0
  %3024 = vmatpush1.msra.mxu0 0.0
  %3025 = vmatprep.subr.mxu0 0.0
  %3026 = vmatpush1.msra.mxu0 0.0
  %3027 = vmatprep.subr.mxu0 0.0
  %3028 = vmatpush1.msra.mxu0 0.0
  %3029 = vmatprep.subr.mxu0 0.0
  %3030 = vmatpush1.msra.mxu0 0.0
  %3031 = vmatprep.subr.mxu0 0.0
  %3032 = vmatpush1.msra.mxu0 0.0
  %3033 = vmatprep.subr.mxu0 0.0
  %3034 = vmatpush1.msra.mxu0 0.0
  %3035 = vmatprep.subr.mxu0 0.0
  %3036 = vmatpush1.msra.mxu0 0.0
  %3037 = vmatprep.subr.mxu0 0.0
  %3038 = vmatpush1.msra.mxu0 0.0
  %3039 = vmatprep.subr.mxu0 0.0
  %3040 = vmatpush1.msra.mxu0 0.0
  %3041 = vmatprep.subr.mxu0 0.0
  %3042 = vmatpush1.msra.mxu0 0.0
  %3043 = vmatprep.subr.mxu0 0.0
  %3044 = vmatpush1.msra.mxu0 0.0
  %3045 = vmatprep.subr.mxu0 0.0
  %3046 = vmatpush1.msra.mxu0 0.0
  %3047 = vmatprep.subr.mxu0 0.0
  %3048 = vmatpush1.msra.mxu0 0.0
  %3049 = vmatprep.subr.mxu0 0.0
  %3050 = vmatpush1.msra.mxu0 0.0
  %3051 = vmatprep.subr.mxu0 0.0
  %3052 = vmatpush1.msra.mxu0 0.0
  %3053 = vmatprep.subr.mxu0 0.0
  %3054 = vmatpush1.msra.mxu0 0.0
  %3055 = vmatprep.subr.mxu0 0.0
  %3056 = vmatpush1.msra.mxu0 0.0
  %3057 = vmatprep.subr.mxu0 0.0
  %3058 = vmatpush1.msra.mxu0 0.0
  %3059 = vmatprep.subr.mxu0 0.0
  %3060 = vmatpush1.msra.mxu0 0.0
  %3061 = vmatprep.subr.mxu0 0.0
  %3062 = vmatpush1.msra.mxu0 0.0
  %3063 = vmatprep.mubr.f32.mxu0 0.0
  %3064 = vmatmul.mubr.f32.gmra.mrb[0].mxu0 %v2855
  %v3065 = vpop.f32.mrb[0].mxu0
  %v3066 = vadd.f32 %v2850, %v3065
  %v3067 = vpop.f32.mrb[0].mxu0
  %v3068 = vadd.f32 %v2852, %v3067
  %3069 = vdwg.mxu0
  %s3070 = scalar_lea.vmem %s2, 16
  %v3071 = vld [vmem:[%s3070] sm:$0xff]
  %3072 = vrot.lane.b32.xlu0 %v2593, 17
  %v3073 = vpop.permute.xlu0 %3072
  %3074 = vrot.lane.b32.xlu0 %v2594, 17
  %v3075 = vpop.permute.xlu0 %3074
  %3076 = vrot.lane.b32.xlu0 %v2595, 17
  %v3077 = vpop.permute.xlu0 %3076
  %3078 = vrot.lane.b32.xlu0 %v2596, 17
  %v3079 = vpop.permute.xlu0 %3078
  %3080 = vrot.lane.b32.xlu0 %v2597, 17
  %v3081 = vpop.permute.xlu0 %3080
  %3082 = vrot.lane.b32.xlu0 %v2598, 17
  %v3083 = vpop.permute.xlu0 %3082
  %v3084 = vsel %vm554, %v3081, %v3083
  %v3085 = vsel %vm554, %v3079, %v3081
  %v3086 = vsel %vm554, %v3077, %v3079
  %v3087 = vsel %vm554, %v3075, %v3077
  %v3088 = vsel %vm554, %v3073, %v3075
  %v3089 = vsel %vm554, %v3083, %v3073
  %v3091 = vsel %vm107, %v3071, 0
  %3093 = vmatprep.subr.mxu0 %v3088
  %3094 = vmatpush1.msra.mxu0 %v3089
  %3095 = vmatprep.subr.mxu0 0.0
  %3096 = vmatpush1.msra.mxu0 0.0
  %3097 = vmatprep.subr.mxu0 0.0
  %3098 = vmatpush1.msra.mxu0 0.0
  %3099 = vmatprep.subr.mxu0 0.0
  %3100 = vmatpush1.msra.mxu0 0.0
  %3101 = vmatprep.subr.mxu0 0.0
  %3102 = vmatpush1.msra.mxu0 0.0
  %3103 = vmatprep.subr.mxu0 0.0
  %3104 = vmatpush1.msra.mxu0 0.0
  %3105 = vmatprep.subr.mxu0 0.0
  %3106 = vmatpush1.msra.mxu0 0.0
  %3107 = vmatprep.subr.mxu0 0.0
  %3108 = vmatpush1.msra.mxu0 0.0
  %3109 = vmatprep.subr.mxu0 0.0
  %3110 = vmatpush1.msra.mxu0 0.0
  %3111 = vmatprep.subr.mxu0 0.0
  %3112 = vmatpush1.msra.mxu0 0.0
  %3113 = vmatprep.subr.mxu0 0.0
  %3114 = vmatpush1.msra.mxu0 0.0
  %3115 = vmatprep.subr.mxu0 0.0
  %3116 = vmatpush1.msra.mxu0 0.0
  %3117 = vmatprep.subr.mxu0 0.0
  %3118 = vmatpush1.msra.mxu0 0.0
  %3119 = vmatprep.subr.mxu0 0.0
  %3120 = vmatpush1.msra.mxu0 0.0
  %3121 = vmatprep.subr.mxu0 0.0
  %3122 = vmatpush1.msra.mxu0 0.0
  %3123 = vmatprep.subr.mxu0 0.0
  %3124 = vmatpush1.msra.mxu0 0.0
  %3125 = vmatprep.subr.mxu0 0.0
  %3126 = vmatpush1.msra.mxu0 0.0
  %3127 = vmatprep.subr.mxu0 0.0
  %3128 = vmatpush1.msra.mxu0 0.0
  %3129 = vmatprep.subr.mxu0 0.0
  %3130 = vmatpush1.msra.mxu0 0.0
  %3131 = vmatprep.subr.mxu0 0.0
  %3132 = vmatpush1.msra.mxu0 0.0
  %3133 = vmatprep.subr.mxu0 0.0
  %3134 = vmatpush1.msra.mxu0 0.0
  %3135 = vmatprep.subr.mxu0 0.0
  %3136 = vmatpush1.msra.mxu0 0.0
  %3137 = vmatprep.subr.mxu0 0.0
  %3138 = vmatpush1.msra.mxu0 0.0
  %3139 = vmatprep.subr.mxu0 0.0
  %3140 = vmatpush1.msra.mxu0 0.0
  %3141 = vmatprep.subr.mxu0 0.0
  %3142 = vmatpush1.msra.mxu0 0.0
  %3143 = vmatprep.subr.mxu0 0.0
  %3144 = vmatpush1.msra.mxu0 0.0
  %3145 = vmatprep.subr.mxu0 0.0
  %3146 = vmatpush1.msra.mxu0 0.0
  %3147 = vmatprep.subr.mxu0 0.0
  %3148 = vmatpush1.msra.mxu0 0.0
  %3149 = vmatprep.subr.mxu0 0.0
  %3150 = vmatpush1.msra.mxu0 0.0
  %3151 = vmatprep.subr.mxu0 0.0
  %3152 = vmatpush1.msra.mxu0 0.0
  %3153 = vmatprep.subr.mxu0 0.0
  %3154 = vmatpush1.msra.mxu0 0.0
  %3155 = vmatprep.subr.mxu0 0.0
  %3156 = vmatpush1.msra.mxu0 0.0
  %3157 = vmatprep.mubr.f32.mxu0 0.0
  %3158 = vmatmul.mubr.f32.gmra.mrb[0].mxu0 %v3091
  %v3159 = vpop.f32.mrb[0].mxu0
  %v3160 = vadd.f32 0.0, %v3159
  %v3161 = vpop.f32.mrb[0].mxu0
  %v3162 = vadd.f32 0.0, %v3161
  %3163 = vdwg.mxu0
  %3164 = vmatprep.subr.mxu0 %v3086
  %3165 = vmatpush1.msra.mxu0 %v3087
  %3166 = vmatprep.subr.mxu0 0.0
  %3167 = vmatpush1.msra.mxu0 0.0
  %3168 = vmatprep.subr.mxu0 0.0
  %3169 = vmatpush1.msra.mxu0 0.0
  %3170 = vmatprep.subr.mxu0 0.0
  %3171 = vmatpush1.msra.mxu0 0.0
  %3172 = vmatprep.subr.mxu0 0.0
  %3173 = vmatpush1.msra.mxu0 0.0
  %3174 = vmatprep.subr.mxu0 0.0
  %3175 = vmatpush1.msra.mxu0 0.0
  %3176 = vmatprep.subr.mxu0 0.0
  %3177 = vmatpush1.msra.mxu0 0.0
  %3178 = vmatprep.subr.mxu0 0.0
  %3179 = vmatpush1.msra.mxu0 0.0
  %3180 = vmatprep.subr.mxu0 0.0
  %3181 = vmatpush1.msra.mxu0 0.0
  %3182 = vmatprep.subr.mxu0 0.0
  %3183 = vmatpush1.msra.mxu0 0.0
  %3184 = vmatprep.subr.mxu0 0.0
  %3185 = vmatpush1.msra.mxu0 0.0
  %3186 = vmatprep.subr.mxu0 0.0
  %3187 = vmatpush1.msra.mxu0 0.0
  %3188 = vmatprep.subr.mxu0 0.0
  %3189 = vmatpush1.msra.mxu0 0.0
  %3190 = vmatprep.subr.mxu0 0.0
  %3191 = vmatpush1.msra.mxu0 0.0
  %3192 = vmatprep.subr.mxu0 0.0
  %3193 = vmatpush1.msra.mxu0 0.0
  %3194 = vmatprep.subr.mxu0 0.0
  %3195 = vmatpush1.msra.mxu0 0.0
  %3196 = vmatprep.subr.mxu0 0.0
  %3197 = vmatpush1.msra.mxu0 0.0
  %3198 = vmatprep.subr.mxu0 0.0
  %3199 = vmatpush1.msra.mxu0 0.0
  %3200 = vmatprep.subr.mxu0 0.0
  %3201 = vmatpush1.msra.mxu0 0.0
  %3202 = vmatprep.subr.mxu0 0.0
  %3203 = vmatpush1.msra.mxu0 0.0
  %3204 = vmatprep.subr.mxu0 0.0
  %3205 = vmatpush1.msra.mxu0 0.0
  %3206 = vmatprep.subr.mxu0 0.0
  %3207 = vmatpush1.msra.mxu0 0.0
  %3208 = vmatprep.subr.mxu0 0.0
  %3209 = vmatpush1.msra.mxu0 0.0
  %3210 = vmatprep.subr.mxu0 0.0
  %3211 = vmatpush1.msra.mxu0 0.0
  %3212 = vmatprep.subr.mxu0 0.0
  %3213 = vmatpush1.msra.mxu0 0.0
  %3214 = vmatprep.subr.mxu0 0.0
  %3215 = vmatpush1.msra.mxu0 0.0
  %3216 = vmatprep.subr.mxu0 0.0
  %3217 = vmatpush1.msra.mxu0 0.0
  %3218 = vmatprep.subr.mxu0 0.0
  %3219 = vmatpush1.msra.mxu0 0.0
  %3220 = vmatprep.subr.mxu0 0.0
  %3221 = vmatpush1.msra.mxu0 0.0
  %3222 = vmatprep.subr.mxu0 0.0
  %3223 = vmatpush1.msra.mxu0 0.0
  %3224 = vmatprep.subr.mxu0 0.0
  %3225 = vmatpush1.msra.mxu0 0.0
  %3226 = vmatprep.subr.mxu0 0.0
  %3227 = vmatpush1.msra.mxu0 0.0
  %3228 = vmatprep.mubr.f32.mxu0 0.0
  %3229 = vmatmul.mubr.f32.gmra.mrb[0].mxu0 %v3091
  %v3230 = vpop.f32.mrb[0].mxu0
  %v3231 = vadd.f32 0.0, %v3230
  %v3232 = vpop.f32.mrb[0].mxu0
  %v3233 = vadd.f32 0.0, %v3232
  %3234 = vdwg.mxu0
  %3235 = vmatprep.subr.mxu0 %v3084
  %3236 = vmatpush1.msra.mxu0 %v3085
  %3237 = vmatprep.subr.mxu0 0.0
  %3238 = vmatpush1.msra.mxu0 0.0
  %3239 = vmatprep.subr.mxu0 0.0
  %3240 = vmatpush1.msra.mxu0 0.0
  %3241 = vmatprep.subr.mxu0 0.0
  %3242 = vmatpush1.msra.mxu0 0.0
  %3243 = vmatprep.subr.mxu0 0.0
  %3244 = vmatpush1.msra.mxu0 0.0
  %3245 = vmatprep.subr.mxu0 0.0
  %3246 = vmatpush1.msra.mxu0 0.0
  %3247 = vmatprep.subr.mxu0 0.0
  %3248 = vmatpush1.msra.mxu0 0.0
  %3249 = vmatprep.subr.mxu0 0.0
  %3250 = vmatpush1.msra.mxu0 0.0
  %3251 = vmatprep.subr.mxu0 0.0
  %3252 = vmatpush1.msra.mxu0 0.0
  %3253 = vmatprep.subr.mxu0 0.0
  %3254 = vmatpush1.msra.mxu0 0.0
  %3255 = vmatprep.subr.mxu0 0.0
  %3256 = vmatpush1.msra.mxu0 0.0
  %3257 = vmatprep.subr.mxu0 0.0
  %3258 = vmatpush1.msra.mxu0 0.0
  %3259 = vmatprep.subr.mxu0 0.0
  %3260 = vmatpush1.msra.mxu0 0.0
  %3261 = vmatprep.subr.mxu0 0.0
  %3262 = vmatpush1.msra.mxu0 0.0
  %3263 = vmatprep.subr.mxu0 0.0
  %3264 = vmatpush1.msra.mxu0 0.0
  %3265 = vmatprep.subr.mxu0 0.0
  %3266 = vmatpush1.msra.mxu0 0.0
  %3267 = vmatprep.subr.mxu0 0.0
  %3268 = vmatpush1.msra.mxu0 0.0
  %3269 = vmatprep.subr.mxu0 0.0
  %3270 = vmatpush1.msra.mxu0 0.0
  %3271 = vmatprep.subr.mxu0 0.0
  %3272 = vmatpush1.msra.mxu0 0.0
  %3273 = vmatprep.subr.mxu0 0.0
  %3274 = vmatpush1.msra.mxu0 0.0
  %3275 = vmatprep.subr.mxu0 0.0
  %3276 = vmatpush1.msra.mxu0 0.0
  %3277 = vmatprep.subr.mxu0 0.0
  %3278 = vmatpush1.msra.mxu0 0.0
  %3279 = vmatprep.subr.mxu0 0.0
  %3280 = vmatpush1.msra.mxu0 0.0
  %3281 = vmatprep.subr.mxu0 0.0
  %3282 = vmatpush1.msra.mxu0 0.0
  %3283 = vmatprep.subr.mxu0 0.0
  %3284 = vmatpush1.msra.mxu0 0.0
  %3285 = vmatprep.subr.mxu0 0.0
  %3286 = vmatpush1.msra.mxu0 0.0
  %3287 = vmatprep.subr.mxu0 0.0
  %3288 = vmatpush1.msra.mxu0 0.0
  %3289 = vmatprep.subr.mxu0 0.0
  %3290 = vmatpush1.msra.mxu0 0.0
  %3291 = vmatprep.subr.mxu0 0.0
  %3292 = vmatpush1.msra.mxu0 0.0
  %3293 = vmatprep.subr.mxu0 0.0
  %3294 = vmatpush1.msra.mxu0 0.0
  %3295 = vmatprep.subr.mxu0 0.0
  %3296 = vmatpush1.msra.mxu0 0.0
  %3297 = vmatprep.subr.mxu0 0.0
  %3298 = vmatpush1.msra.mxu0 0.0
  %3299 = vmatprep.mubr.f32.mxu0 0.0
  %3300 = vmatmul.mubr.f32.gmra.mrb[0].mxu0 %v3091
  %v3301 = vpop.f32.mrb[0].mxu0
  %v3302 = vadd.f32 0.0, %v3301
  %v3303 = vpop.f32.mrb[0].mxu0
  %v3304 = vadd.f32 0.0, %v3303
  %3305 = vdwg.mxu0
  %v3306 = vadd.f32 %v2924, %v3160
  %v3307 = vadd.f32 %v2926, %v3162
  %v3308 = vadd.f32 %v2995, %v3231
  %v3309 = vadd.f32 %v2997, %v3233
  %v3310 = vadd.f32 %v3066, %v3302
  %v3311 = vadd.f32 %v3068, %v3304
  %s3312 = scalar_lea.vmem %s2, 24
  %v3313 = vld [vmem:[%s3312] sm:$0xff]
  %3314 = vrot.lane.b32.xlu0 %v2593, 1
  %v3315 = vpop.permute.xlu0 %3314
  %3316 = vrot.lane.b32.xlu0 %v2594, 1
  %v3317 = vpop.permute.xlu0 %3316
  %3318 = vrot.lane.b32.xlu0 %v2595, 1
  %v3319 = vpop.permute.xlu0 %3318
  %3320 = vrot.lane.b32.xlu0 %v2596, 1
  %v3321 = vpop.permute.xlu0 %3320
  %3322 = vrot.lane.b32.xlu0 %v2597, 1
  %v3323 = vpop.permute.xlu0 %3322
  %3324 = vrot.lane.b32.xlu0 %v2598, 1
  %v3325 = vpop.permute.xlu0 %3324
  %v3326 = vsel %vm797, %v3323, %v3325
  %v3327 = vsel %vm797, %v3321, %v3323
  %v3328 = vsel %vm797, %v3319, %v3321
  %v3329 = vsel %vm797, %v3317, %v3319
  %v3330 = vsel %vm797, %v3315, %v3317
  %v3331 = vsel %vm797, %v3325, %v3315
  %v3333 = vsel %vm107, %v3313, 0
  %3335 = vmatprep.subr.mxu0 %v3330
  %3336 = vmatpush1.msra.mxu0 %v3331
  %3337 = vmatprep.subr.mxu0 0.0
  %3338 = vmatpush1.msra.mxu0 0.0
  %3339 = vmatprep.subr.mxu0 0.0
  %3340 = vmatpush1.msra.mxu0 0.0
  %3341 = vmatprep.subr.mxu0 0.0
  %3342 = vmatpush1.msra.mxu0 0.0
  %3343 = vmatprep.subr.mxu0 0.0
  %3344 = vmatpush1.msra.mxu0 0.0
  %3345 = vmatprep.subr.mxu0 0.0
  %3346 = vmatpush1.msra.mxu0 0.0
  %3347 = vmatprep.subr.mxu0 0.0
  %3348 = vmatpush1.msra.mxu0 0.0
  %3349 = vmatprep.subr.mxu0 0.0
  %3350 = vmatpush1.msra.mxu0 0.0
  %3351 = vmatprep.subr.mxu0 0.0
  %3352 = vmatpush1.msra.mxu0 0.0
  %3353 = vmatprep.subr.mxu0 0.0
  %3354 = vmatpush1.msra.mxu0 0.0
  %3355 = vmatprep.subr.mxu0 0.0
  %3356 = vmatpush1.msra.mxu0 0.0
  %3357 = vmatprep.subr.mxu0 0.0
  %3358 = vmatpush1.msra.mxu0 0.0
  %3359 = vmatprep.subr.mxu0 0.0
  %3360 = vmatpush1.msra.mxu0 0.0
  %3361 = vmatprep.subr.mxu0 0.0
  %3362 = vmatpush1.msra.mxu0 0.0
  %3363 = vmatprep.subr.mxu0 0.0
  %3364 = vmatpush1.msra.mxu0 0.0
  %3365 = vmatprep.subr.mxu0 0.0
  %3366 = vmatpush1.msra.mxu0 0.0
  %3367 = vmatprep.subr.mxu0 0.0
  %3368 = vmatpush1.msra.mxu0 0.0
  %3369 = vmatprep.subr.mxu0 0.0
  %3370 = vmatpush1.msra.mxu0 0.0
  %3371 = vmatprep.subr.mxu0 0.0
  %3372 = vmatpush1.msra.mxu0 0.0
  %3373 = vmatprep.subr.mxu0 0.0
  %3374 = vmatpush1.msra.mxu0 0.0
  %3375 = vmatprep.subr.mxu0 0.0
  %3376 = vmatpush1.msra.mxu0 0.0
  %3377 = vmatprep.subr.mxu0 0.0
  %3378 = vmatpush1.msra.mxu0 0.0
  %3379 = vmatprep.subr.mxu0 0.0
  %3380 = vmatpush1.msra.mxu0 0.0
  %3381 = vmatprep.subr.mxu0 0.0
  %3382 = vmatpush1.msra.mxu0 0.0
  %3383 = vmatprep.subr.mxu0 0.0
  %3384 = vmatpush1.msra.mxu0 0.0
  %3385 = vmatprep.subr.mxu0 0.0
  %3386 = vmatpush1.msra.mxu0 0.0
  %3387 = vmatprep.subr.mxu0 0.0
  %3388 = vmatpush1.msra.mxu0 0.0
  %3389 = vmatprep.subr.mxu0 0.0
  %3390 = vmatpush1.msra.mxu0 0.0
  %3391 = vmatprep.subr.mxu0 0.0
  %3392 = vmatpush1.msra.mxu0 0.0
  %3393 = vmatprep.subr.mxu0 0.0
  %3394 = vmatpush1.msra.mxu0 0.0
  %3395 = vmatprep.subr.mxu0 0.0
  %3396 = vmatpush1.msra.mxu0 0.0
  %3397 = vmatprep.subr.mxu0 0.0
  %3398 = vmatpush1.msra.mxu0 0.0
  %3399 = vmatprep.mubr.f32.mxu0 0.0
  %3400 = vmatmul.mubr.f32.gmra.mrb[0].mxu0 %v3333
  %v3401 = vpop.f32.mrb[0].mxu0
  %v3402 = vadd.f32 0.0, %v3401
  %v3403 = vpop.f32.mrb[0].mxu0
  %v3404 = vadd.f32 0.0, %v3403
  %3405 = vdwg.mxu0
  %3406 = vmatprep.subr.mxu0 %v3328
  %3407 = vmatpush1.msra.mxu0 %v3329
  %3408 = vmatprep.subr.mxu0 0.0
  %3409 = vmatpush1.msra.mxu0 0.0
  %3410 = vmatprep.subr.mxu0 0.0
  %3411 = vmatpush1.msra.mxu0 0.0
  %3412 = vmatprep.subr.mxu0 0.0
  %3413 = vmatpush1.msra.mxu0 0.0
  %3414 = vmatprep.subr.mxu0 0.0
  %3415 = vmatpush1.msra.mxu0 0.0
  %3416 = vmatprep.subr.mxu0 0.0
  %3417 = vmatpush1.msra.mxu0 0.0
  %3418 = vmatprep.subr.mxu0 0.0
  %3419 = vmatpush1.msra.mxu0 0.0
  %3420 = vmatprep.subr.mxu0 0.0
  %3421 = vmatpush1.msra.mxu0 0.0
  %3422 = vmatprep.subr.mxu0 0.0
  %3423 = vmatpush1.msra.mxu0 0.0
  %3424 = vmatprep.subr.mxu0 0.0
  %3425 = vmatpush1.msra.mxu0 0.0
  %3426 = vmatprep.subr.mxu0 0.0
  %3427 = vmatpush1.msra.mxu0 0.0
  %3428 = vmatprep.subr.mxu0 0.0
  %3429 = vmatpush1.msra.mxu0 0.0
  %3430 = vmatprep.subr.mxu0 0.0
  %3431 = vmatpush1.msra.mxu0 0.0
  %3432 = vmatprep.subr.mxu0 0.0
  %3433 = vmatpush1.msra.mxu0 0.0
  %3434 = vmatprep.subr.mxu0 0.0
  %3435 = vmatpush1.msra.mxu0 0.0
  %3436 = vmatprep.subr.mxu0 0.0
  %3437 = vmatpush1.msra.mxu0 0.0
  %3438 = vmatprep.subr.mxu0 0.0
  %3439 = vmatpush1.msra.mxu0 0.0
  %3440 = vmatprep.subr.mxu0 0.0
  %3441 = vmatpush1.msra.mxu0 0.0
  %3442 = vmatprep.subr.mxu0 0.0
  %3443 = vmatpush1.msra.mxu0 0.0
  %3444 = vmatprep.subr.mxu0 0.0
  %3445 = vmatpush1.msra.mxu0 0.0
  %3446 = vmatprep.subr.mxu0 0.0
  %3447 = vmatpush1.msra.mxu0 0.0
  %3448 = vmatprep.subr.mxu0 0.0
  %3449 = vmatpush1.msra.mxu0 0.0
  %3450 = vmatprep.subr.mxu0 0.0
  %3451 = vmatpush1.msra.mxu0 0.0
  %3452 = vmatprep.subr.mxu0 0.0
  %3453 = vmatpush1.msra.mxu0 0.0
  %3454 = vmatprep.subr.mxu0 0.0
  %3455 = vmatpush1.msra.mxu0 0.0
  %3456 = vmatprep.subr.mxu0 0.0
  %3457 = vmatpush1.msra.mxu0 0.0
  %3458 = vmatprep.subr.mxu0 0.0
  %3459 = vmatpush1.msra.mxu0 0.0
  %3460 = vmatprep.subr.mxu0 0.0
  %3461 = vmatpush1.msra.mxu0 0.0
  %3462 = vmatprep.subr.mxu0 0.0
  %3463 = vmatpush1.msra.mxu0 0.0
  %3464 = vmatprep.subr.mxu0 0.0
  %3465 = vmatpush1.msra.mxu0 0.0
  %3466 = vmatprep.subr.mxu0 0.0
  %3467 = vmatpush1.msra.mxu0 0.0
  %3468 = vmatprep.subr.mxu0 0.0
  %3469 = vmatpush1.msra.mxu0 0.0
  %3470 = vmatprep.mubr.f32.mxu0 0.0
  %3471 = vmatmul.mubr.f32.gmra.mrb[0].mxu0 %v3333
  %v3472 = vpop.f32.mrb[0].mxu0
  %v3473 = vadd.f32 0.0, %v3472
  %v3474 = vpop.f32.mrb[0].mxu0
  %v3475 = vadd.f32 0.0, %v3474
  %3476 = vdwg.mxu0
  %3477 = vmatprep.subr.mxu0 %v3326
  %3478 = vmatpush1.msra.mxu0 %v3327
  %3479 = vmatprep.subr.mxu0 0.0
  %3480 = vmatpush1.msra.mxu0 0.0
  %3481 = vmatprep.subr.mxu0 0.0
  %3482 = vmatpush1.msra.mxu0 0.0
  %3483 = vmatprep.subr.mxu0 0.0
  %3484 = vmatpush1.msra.mxu0 0.0
  %3485 = vmatprep.subr.mxu0 0.0
  %3486 = vmatpush1.msra.mxu0 0.0
  %3487 = vmatprep.subr.mxu0 0.0
  %3488 = vmatpush1.msra.mxu0 0.0
  %3489 = vmatprep.subr.mxu0 0.0
  %3490 = vmatpush1.msra.mxu0 0.0
  %3491 = vmatprep.subr.mxu0 0.0
  %3492 = vmatpush1.msra.mxu0 0.0
  %3493 = vmatprep.subr.mxu0 0.0
  %3494 = vmatpush1.msra.mxu0 0.0
  %3495 = vmatprep.subr.mxu0 0.0
  %3496 = vmatpush1.msra.mxu0 0.0
  %3497 = vmatprep.subr.mxu0 0.0
  %3498 = vmatpush1.msra.mxu0 0.0
  %3499 = vmatprep.subr.mxu0 0.0
  %3500 = vmatpush1.msra.mxu0 0.0
  %3501 = vmatprep.subr.mxu0 0.0
  %3502 = vmatpush1.msra.mxu0 0.0
  %3503 = vmatprep.subr.mxu0 0.0
  %3504 = vmatpush1.msra.mxu0 0.0
  %3505 = vmatprep.subr.mxu0 0.0
  %3506 = vmatpush1.msra.mxu0 0.0
  %3507 = vmatprep.subr.mxu0 0.0
  %3508 = vmatpush1.msra.mxu0 0.0
  %3509 = vmatprep.subr.mxu0 0.0
  %3510 = vmatpush1.msra.mxu0 0.0
  %3511 = vmatprep.subr.mxu0 0.0
  %3512 = vmatpush1.msra.mxu0 0.0
  %3513 = vmatprep.subr.mxu0 0.0
  %3514 = vmatpush1.msra.mxu0 0.0
  %3515 = vmatprep.subr.mxu0 0.0
  %3516 = vmatpush1.msra.mxu0 0.0
  %3517 = vmatprep.subr.mxu0 0.0
  %3518 = vmatpush1.msra.mxu0 0.0
  %3519 = vmatprep.subr.mxu0 0.0
  %3520 = vmatpush1.msra.mxu0 0.0
  %3521 = vmatprep.subr.mxu0 0.0
  %3522 = vmatpush1.msra.mxu0 0.0
  %3523 = vmatprep.subr.mxu0 0.0
  %3524 = vmatpush1.msra.mxu0 0.0
  %3525 = vmatprep.subr.mxu0 0.0
  %3526 = vmatpush1.msra.mxu0 0.0
  %3527 = vmatprep.subr.mxu0 0.0
  %3528 = vmatpush1.msra.mxu0 0.0
  %3529 = vmatprep.subr.mxu0 0.0
  %3530 = vmatpush1.msra.mxu0 0.0
  %3531 = vmatprep.subr.mxu0 0.0
  %3532 = vmatpush1.msra.mxu0 0.0
  %3533 = vmatprep.subr.mxu0 0.0
  %3534 = vmatpush1.msra.mxu0 0.0
  %3535 = vmatprep.subr.mxu0 0.0
  %3536 = vmatpush1.msra.mxu0 0.0
  %3537 = vmatprep.subr.mxu0 0.0
  %3538 = vmatpush1.msra.mxu0 0.0
  %3539 = vmatprep.subr.mxu0 0.0
  %3540 = vmatpush1.msra.mxu0 0.0
  %3541 = vmatprep.mubr.f32.mxu0 0.0
  %3542 = vmatmul.mubr.f32.gmra.mrb[0].mxu0 %v3333
  %v3543 = vpop.f32.mrb[0].mxu0
  %v3544 = vadd.f32 0.0, %v3543
  %v3545 = vpop.f32.mrb[0].mxu0
  %v3546 = vadd.f32 0.0, %v3545
  %3547 = vdwg.mxu0
  %v3548 = vadd.f32 %v3306, %v3402
  %v3549 = vadd.f32 %v3307, %v3404
  %v3550 = vadd.f32 %v3308, %v3473
  %v3551 = vadd.f32 %v3309, %v3475
  %v3552 = vadd.f32 %v3310, %v3544
  %v3553 = vadd.f32 %v3311, %v3546
  %s3554 = scalar_lea.vmem %s2, 32
  %v3555 = vld [vmem:[%s3554] sm:$0xff]
  %v3557 = vsel %vm107, %v3555, 0
  %3559 = vmatprep.subr.mxu0 %v2594
  %3560 = vmatpush1.msra.mxu0 %v2593
  %3561 = vmatprep.subr.mxu0 0.0
  %3562 = vmatpush1.msra.mxu0 0.0
  %3563 = vmatprep.subr.mxu0 0.0
  %3564 = vmatpush1.msra.mxu0 0.0
  %3565 = vmatprep.subr.mxu0 0.0
  %3566 = vmatpush1.msra.mxu0 0.0
  %3567 = vmatprep.subr.mxu0 0.0
  %3568 = vmatpush1.msra.mxu0 0.0
  %3569 = vmatprep.subr.mxu0 0.0
  %3570 = vmatpush1.msra.mxu0 0.0
  %3571 = vmatprep.subr.mxu0 0.0
  %3572 = vmatpush1.msra.mxu0 0.0
  %3573 = vmatprep.subr.mxu0 0.0
  %3574 = vmatpush1.msra.mxu0 0.0
  %3575 = vmatprep.subr.mxu0 0.0
  %3576 = vmatpush1.msra.mxu0 0.0
  %3577 = vmatprep.subr.mxu0 0.0
  %3578 = vmatpush1.msra.mxu0 0.0
  %3579 = vmatprep.subr.mxu0 0.0
  %3580 = vmatpush1.msra.mxu0 0.0
  %3581 = vmatprep.subr.mxu0 0.0
  %3582 = vmatpush1.msra.mxu0 0.0
  %3583 = vmatprep.subr.mxu0 0.0
  %3584 = vmatpush1.msra.mxu0 0.0
  %3585 = vmatprep.subr.mxu0 0.0
  %3586 = vmatpush1.msra.mxu0 0.0
  %3587 = vmatprep.subr.mxu0 0.0
  %3588 = vmatpush1.msra.mxu0 0.0
  %3589 = vmatprep.subr.mxu0 0.0
  %3590 = vmatpush1.msra.mxu0 0.0
  %3591 = vmatprep.subr.mxu0 0.0
  %3592 = vmatpush1.msra.mxu0 0.0
  %3593 = vmatprep.subr.mxu0 0.0
  %3594 = vmatpush1.msra.mxu0 0.0
  %3595 = vmatprep.subr.mxu0 0.0
  %3596 = vmatpush1.msra.mxu0 0.0
  %3597 = vmatprep.subr.mxu0 0.0
  %3598 = vmatpush1.msra.mxu0 0.0
  %3599 = vmatprep.subr.mxu0 0.0
  %3600 = vmatpush1.msra.mxu0 0.0
  %3601 = vmatprep.subr.mxu0 0.0
  %3602 = vmatpush1.msra.mxu0 0.0
  %3603 = vmatprep.subr.mxu0 0.0
  %3604 = vmatpush1.msra.mxu0 0.0
  %3605 = vmatprep.subr.mxu0 0.0
  %3606 = vmatpush1.msra.mxu0 0.0
  %3607 = vmatprep.subr.mxu0 0.0
  %3608 = vmatpush1.msra.mxu0 0.0
  %3609 = vmatprep.subr.mxu0 0.0
  %3610 = vmatpush1.msra.mxu0 0.0
  %3611 = vmatprep.subr.mxu0 0.0
  %3612 = vmatpush1.msra.mxu0 0.0
  %3613 = vmatprep.subr.mxu0 0.0
  %3614 = vmatpush1.msra.mxu0 0.0
  %3615 = vmatprep.subr.mxu0 0.0
  %3616 = vmatpush1.msra.mxu0 0.0
  %3617 = vmatprep.subr.mxu0 0.0
  %3618 = vmatpush1.msra.mxu0 0.0
  %3619 = vmatprep.subr.mxu0 0.0
  %3620 = vmatpush1.msra.mxu0 0.0
  %3621 = vmatprep.subr.mxu0 0.0
  %3622 = vmatpush1.msra.mxu0 0.0
  %3623 = vmatprep.mubr.f32.mxu0 0.0
  %3624 = vmatmul.mubr.f32.gmra.mrb[0].mxu0 %v3557
  %v3625 = vpop.f32.mrb[0].mxu0
  %v3626 = vadd.f32 0.0, %v3625
  %v3627 = vpop.f32.mrb[0].mxu0
  %v3628 = vadd.f32 0.0, %v3627
  %3629 = vdwg.mxu0
  %3630 = vmatprep.subr.mxu0 %v2596
  %3631 = vmatpush1.msra.mxu0 %v2595
  %3632 = vmatprep.subr.mxu0 0.0
  %3633 = vmatpush1.msra.mxu0 0.0
  %3634 = vmatprep.subr.mxu0 0.0
  %3635 = vmatpush1.msra.mxu0 0.0
  %3636 = vmatprep.subr.mxu0 0.0
  %3637 = vmatpush1.msra.mxu0 0.0
  %3638 = vmatprep.subr.mxu0 0.0
  %3639 = vmatpush1.msra.mxu0 0.0
  %3640 = vmatprep.subr.mxu0 0.0
  %3641 = vmatpush1.msra.mxu0 0.0
  %3642 = vmatprep.subr.mxu0 0.0
  %3643 = vmatpush1.msra.mxu0 0.0
  %3644 = vmatprep.subr.mxu0 0.0
  %3645 = vmatpush1.msra.mxu0 0.0
  %3646 = vmatprep.subr.mxu0 0.0
  %3647 = vmatpush1.msra.mxu0 0.0
  %3648 = vmatprep.subr.mxu0 0.0
  %3649 = vmatpush1.msra.mxu0 0.0
  %3650 = vmatprep.subr.mxu0 0.0
  %3651 = vmatpush1.msra.mxu0 0.0
  %3652 = vmatprep.subr.mxu0 0.0
  %3653 = vmatpush1.msra.mxu0 0.0
  %3654 = vmatprep.subr.mxu0 0.0
  %3655 = vmatpush1.msra.mxu0 0.0
  %3656 = vmatprep.subr.mxu0 0.0
  %3657 = vmatpush1.msra.mxu0 0.0
  %3658 = vmatprep.subr.mxu0 0.0
  %3659 = vmatpush1.msra.mxu0 0.0
  %3660 = vmatprep.subr.mxu0 0.0
  %3661 = vmatpush1.msra.mxu0 0.0
  %3662 = vmatprep.subr.mxu0 0.0
  %3663 = vmatpush1.msra.mxu0 0.0
  %3664 = vmatprep.subr.mxu0 0.0
  %3665 = vmatpush1.msra.mxu0 0.0
  %3666 = vmatprep.subr.mxu0 0.0
  %3667 = vmatpush1.msra.mxu0 0.0
  %3668 = vmatprep.subr.mxu0 0.0
  %3669 = vmatpush1.msra.mxu0 0.0
  %3670 = vmatprep.subr.mxu0 0.0
  %3671 = vmatpush1.msra.mxu0 0.0
  %3672 = vmatprep.subr.mxu0 0.0
  %3673 = vmatpush1.msra.mxu0 0.0
  %3674 = vmatprep.subr.mxu0 0.0
  %3675 = vmatpush1.msra.mxu0 0.0
  %3676 = vmatprep.subr.mxu0 0.0
  %3677 = vmatpush1.msra.mxu0 0.0
  %3678 = vmatprep.subr.mxu0 0.0
  %3679 = vmatpush1.msra.mxu0 0.0
  %3680 = vmatprep.subr.mxu0 0.0
  %3681 = vmatpush1.msra.mxu0 0.0
  %3682 = vmatprep.subr.mxu0 0.0
  %3683 = vmatpush1.msra.mxu0 0.0
  %3684 = vmatprep.subr.mxu0 0.0
  %3685 = vmatpush1.msra.mxu0 0.0
  %3686 = vmatprep.subr.mxu0 0.0
  %3687 = vmatpush1.msra.mxu0 0.0
  %3688 = vmatprep.subr.mxu0 0.0
  %3689 = vmatpush1.msra.mxu0 0.0
  %3690 = vmatprep.subr.mxu0 0.0
  %3691 = vmatpush1.msra.mxu0 0.0
  %3692 = vmatprep.subr.mxu0 0.0
  %3693 = vmatpush1.msra.mxu0 0.0
  %3694 = vmatprep.mubr.f32.mxu0 0.0
  %3695 = vmatmul.mubr.f32.gmra.mrb[0].mxu0 %v3557
  %v3696 = vpop.f32.mrb[0].mxu0
  %v3697 = vadd.f32 0.0, %v3696
  %v3698 = vpop.f32.mrb[0].mxu0
  %v3699 = vadd.f32 0.0, %v3698
  %3700 = vdwg.mxu0
  %3701 = vmatprep.subr.mxu0 %v2598
  %3702 = vmatpush1.msra.mxu0 %v2597
  %3703 = vmatprep.subr.mxu0 0.0
  %3704 = vmatpush1.msra.mxu0 0.0
  %3705 = vmatprep.subr.mxu0 0.0
  %3706 = vmatpush1.msra.mxu0 0.0
  %3707 = vmatprep.subr.mxu0 0.0
  %3708 = vmatpush1.msra.mxu0 0.0
  %3709 = vmatprep.subr.mxu0 0.0
  %3710 = vmatpush1.msra.mxu0 0.0
  %3711 = vmatprep.subr.mxu0 0.0
  %3712 = vmatpush1.msra.mxu0 0.0
  %3713 = vmatprep.subr.mxu0 0.0
  %3714 = vmatpush1.msra.mxu0 0.0
  %3715 = vmatprep.subr.mxu0 0.0
  %3716 = vmatpush1.msra.mxu0 0.0
  %3717 = vmatprep.subr.mxu0 0.0
  %3718 = vmatpush1.msra.mxu0 0.0
  %3719 = vmatprep.subr.mxu0 0.0
  %3720 = vmatpush1.msra.mxu0 0.0
  %3721 = vmatprep.subr.mxu0 0.0
  %3722 = vmatpush1.msra.mxu0 0.0
  %3723 = vmatprep.subr.mxu0 0.0
  %3724 = vmatpush1.msra.mxu0 0.0
  %3725 = vmatprep.subr.mxu0 0.0
  %3726 = vmatpush1.msra.mxu0 0.0
  %3727 = vmatprep.subr.mxu0 0.0
  %3728 = vmatpush1.msra.mxu0 0.0
  %3729 = vmatprep.subr.mxu0 0.0
  %3730 = vmatpush1.msra.mxu0 0.0
  %3731 = vmatprep.subr.mxu0 0.0
  %3732 = vmatpush1.msra.mxu0 0.0
  %3733 = vmatprep.subr.mxu0 0.0
  %3734 = vmatpush1.msra.mxu0 0.0
  %3735 = vmatprep.subr.mxu0 0.0
  %3736 = vmatpush1.msra.mxu0 0.0
  %3737 = vmatprep.subr.mxu0 0.0
  %3738 = vmatpush1.msra.mxu0 0.0
  %3739 = vmatprep.subr.mxu0 0.0
  %3740 = vmatpush1.msra.mxu0 0.0
  %3741 = vmatprep.subr.mxu0 0.0
  %3742 = vmatpush1.msra.mxu0 0.0
  %3743 = vmatprep.subr.mxu0 0.0
  %3744 = vmatpush1.msra.mxu0 0.0
  %3745 = vmatprep.subr.mxu0 0.0
  %3746 = vmatpush1.msra.mxu0 0.0
  %3747 = vmatprep.subr.mxu0 0.0
  %3748 = vmatpush1.msra.mxu0 0.0
  %3749 = vmatprep.subr.mxu0 0.0
  %3750 = vmatpush1.msra.mxu0 0.0
  %3751 = vmatprep.subr.mxu0 0.0
  %3752 = vmatpush1.msra.mxu0 0.0
  %3753 = vmatprep.subr.mxu0 0.0
  %3754 = vmatpush1.msra.mxu0 0.0
  %3755 = vmatprep.subr.mxu0 0.0
  %3756 = vmatpush1.msra.mxu0 0.0
  %3757 = vmatprep.subr.mxu0 0.0
  %3758 = vmatpush1.msra.mxu0 0.0
  %3759 = vmatprep.subr.mxu0 0.0
  %3760 = vmatpush1.msra.mxu0 0.0
  %3761 = vmatprep.subr.mxu0 0.0
  %3762 = vmatpush1.msra.mxu0 0.0
  %3763 = vmatprep.subr.mxu0 0.0
  %3764 = vmatpush1.msra.mxu0 0.0
  %3765 = vmatprep.mubr.f32.mxu0 0.0
  %3766 = vmatmul.mubr.f32.gmra.mrb[0].mxu0 %v3557
  %v3767 = vpop.f32.mrb[0].mxu0
  %v3768 = vadd.f32 0.0, %v3767
  %v3769 = vpop.f32.mrb[0].mxu0
  %v3770 = vadd.f32 0.0, %v3769
  %3771 = vdwg.mxu0
  %v3772 = vadd.f32 %v3548, %v3626
  %v3773 = vadd.f32 %v3549, %v3628
  %v3774 = vadd.f32 %v3550, %v3697
  %v3775 = vadd.f32 %v3551, %v3699
  %v3776 = vadd.f32 %v3552, %v3768
  %v3777 = vadd.f32 %v3553, %v3770
  %s3778 = scalar_lea.vmem %s2, 40
  %v3779 = vld [vmem:[%s3778] sm:$0xff]
  %3780 = vrot.lane.b32.xlu0 %v2593, 127
  %v3781 = vpop.permute.xlu0 %3780
  %3782 = vrot.lane.b32.xlu0 %v2594, 127
  %v3783 = vpop.permute.xlu0 %3782
  %3784 = vrot.lane.b32.xlu0 %v2595, 127
  %v3785 = vpop.permute.xlu0 %3784
  %3786 = vrot.lane.b32.xlu0 %v2596, 127
  %v3787 = vpop.permute.xlu0 %3786
  %3788 = vrot.lane.b32.xlu0 %v2597, 127
  %v3789 = vpop.permute.xlu0 %3788
  %3790 = vrot.lane.b32.xlu0 %v2598, 127
  %v3791 = vpop.permute.xlu0 %3790
  %v3792 = vsel %vm1264, %v3789, %v3791
  %v3793 = vsel %vm1264, %v3787, %v3789
  %v3794 = vsel %vm1264, %v3785, %v3787
  %v3795 = vsel %vm1264, %v3783, %v3785
  %v3796 = vsel %vm1264, %v3781, %v3783
  %v3797 = vsel %vm1264, %v3791, %v3781
  %v3799 = vsel %vm107, %v3779, 0
  %3801 = vmatprep.subr.mxu0 %v3795
  %3802 = vmatpush1.msra.mxu0 %v3796
  %3803 = vmatprep.subr.mxu0 0.0
  %3804 = vmatpush1.msra.mxu0 0.0
  %3805 = vmatprep.subr.mxu0 0.0
  %3806 = vmatpush1.msra.mxu0 0.0
  %3807 = vmatprep.subr.mxu0 0.0
  %3808 = vmatpush1.msra.mxu0 0.0
  %3809 = vmatprep.subr.mxu0 0.0
  %3810 = vmatpush1.msra.mxu0 0.0
  %3811 = vmatprep.subr.mxu0 0.0
  %3812 = vmatpush1.msra.mxu0 0.0
  %3813 = vmatprep.subr.mxu0 0.0
  %3814 = vmatpush1.msra.mxu0 0.0
  %3815 = vmatprep.subr.mxu0 0.0
  %3816 = vmatpush1.msra.mxu0 0.0
  %3817 = vmatprep.subr.mxu0 0.0
  %3818 = vmatpush1.msra.mxu0 0.0
  %3819 = vmatprep.subr.mxu0 0.0
  %3820 = vmatpush1.msra.mxu0 0.0
  %3821 = vmatprep.subr.mxu0 0.0
  %3822 = vmatpush1.msra.mxu0 0.0
  %3823 = vmatprep.subr.mxu0 0.0
  %3824 = vmatpush1.msra.mxu0 0.0
  %3825 = vmatprep.subr.mxu0 0.0
  %3826 = vmatpush1.msra.mxu0 0.0
  %3827 = vmatprep.subr.mxu0 0.0
  %3828 = vmatpush1.msra.mxu0 0.0
  %3829 = vmatprep.subr.mxu0 0.0
  %3830 = vmatpush1.msra.mxu0 0.0
  %3831 = vmatprep.subr.mxu0 0.0
  %3832 = vmatpush1.msra.mxu0 0.0
  %3833 = vmatprep.subr.mxu0 0.0
  %3834 = vmatpush1.msra.mxu0 0.0
  %3835 = vmatprep.subr.mxu0 0.0
  %3836 = vmatpush1.msra.mxu0 0.0
  %3837 = vmatprep.subr.mxu0 0.0
  %3838 = vmatpush1.msra.mxu0 0.0
  %3839 = vmatprep.subr.mxu0 0.0
  %3840 = vmatpush1.msra.mxu0 0.0
  %3841 = vmatprep.subr.mxu0 0.0
  %3842 = vmatpush1.msra.mxu0 0.0
  %3843 = vmatprep.subr.mxu0 0.0
  %3844 = vmatpush1.msra.mxu0 0.0
  %3845 = vmatprep.subr.mxu0 0.0
  %3846 = vmatpush1.msra.mxu0 0.0
  %3847 = vmatprep.subr.mxu0 0.0
  %3848 = vmatpush1.msra.mxu0 0.0
  %3849 = vmatprep.subr.mxu0 0.0
  %3850 = vmatpush1.msra.mxu0 0.0
  %3851 = vmatprep.subr.mxu0 0.0
  %3852 = vmatpush1.msra.mxu0 0.0
  %3853 = vmatprep.subr.mxu0 0.0
  %3854 = vmatpush1.msra.mxu0 0.0
  %3855 = vmatprep.subr.mxu0 0.0
  %3856 = vmatpush1.msra.mxu0 0.0
  %3857 = vmatprep.subr.mxu0 0.0
  %3858 = vmatpush1.msra.mxu0 0.0
  %3859 = vmatprep.subr.mxu0 0.0
  %3860 = vmatpush1.msra.mxu0 0.0
  %3861 = vmatprep.subr.mxu0 0.0
  %3862 = vmatpush1.msra.mxu0 0.0
  %3863 = vmatprep.subr.mxu0 0.0
  %3864 = vmatpush1.msra.mxu0 0.0
  %3865 = vmatprep.mubr.f32.mxu0 0.0
  %3866 = vmatmul.mubr.f32.gmra.mrb[0].mxu0 %v3799
  %v3867 = vpop.f32.mrb[0].mxu0
  %v3868 = vadd.f32 0.0, %v3867
  %v3869 = vpop.f32.mrb[0].mxu0
  %v3870 = vadd.f32 0.0, %v3869
  %3871 = vdwg.mxu0
  %3872 = vmatprep.subr.mxu0 %v3793
  %3873 = vmatpush1.msra.mxu0 %v3794
  %3874 = vmatprep.subr.mxu0 0.0
  %3875 = vmatpush1.msra.mxu0 0.0
  %3876 = vmatprep.subr.mxu0 0.0
  %3877 = vmatpush1.msra.mxu0 0.0
  %3878 = vmatprep.subr.mxu0 0.0
  %3879 = vmatpush1.msra.mxu0 0.0
  %3880 = vmatprep.subr.mxu0 0.0
  %3881 = vmatpush1.msra.mxu0 0.0
  %3882 = vmatprep.subr.mxu0 0.0
  %3883 = vmatpush1.msra.mxu0 0.0
  %3884 = vmatprep.subr.mxu0 0.0
  %3885 = vmatpush1.msra.mxu0 0.0
  %3886 = vmatprep.subr.mxu0 0.0
  %3887 = vmatpush1.msra.mxu0 0.0
  %3888 = vmatprep.subr.mxu0 0.0
  %3889 = vmatpush1.msra.mxu0 0.0
  %3890 = vmatprep.subr.mxu0 0.0
  %3891 = vmatpush1.msra.mxu0 0.0
  %3892 = vmatprep.subr.mxu0 0.0
  %3893 = vmatpush1.msra.mxu0 0.0
  %3894 = vmatprep.subr.mxu0 0.0
  %3895 = vmatpush1.msra.mxu0 0.0
  %3896 = vmatprep.subr.mxu0 0.0
  %3897 = vmatpush1.msra.mxu0 0.0
  %3898 = vmatprep.subr.mxu0 0.0
  %3899 = vmatpush1.msra.mxu0 0.0
  %3900 = vmatprep.subr.mxu0 0.0
  %3901 = vmatpush1.msra.mxu0 0.0
  %3902 = vmatprep.subr.mxu0 0.0
  %3903 = vmatpush1.msra.mxu0 0.0
  %3904 = vmatprep.subr.mxu0 0.0
  %3905 = vmatpush1.msra.mxu0 0.0
  %3906 = vmatprep.subr.mxu0 0.0
  %3907 = vmatpush1.msra.mxu0 0.0
  %3908 = vmatprep.subr.mxu0 0.0
  %3909 = vmatpush1.msra.mxu0 0.0
  %3910 = vmatprep.subr.mxu0 0.0
  %3911 = vmatpush1.msra.mxu0 0.0
  %3912 = vmatprep.subr.mxu0 0.0
  %3913 = vmatpush1.msra.mxu0 0.0
  %3914 = vmatprep.subr.mxu0 0.0
  %3915 = vmatpush1.msra.mxu0 0.0
  %3916 = vmatprep.subr.mxu0 0.0
  %3917 = vmatpush1.msra.mxu0 0.0
  %3918 = vmatprep.subr.mxu0 0.0
  %3919 = vmatpush1.msra.mxu0 0.0
  %3920 = vmatprep.subr.mxu0 0.0
  %3921 = vmatpush1.msra.mxu0 0.0
  %3922 = vmatprep.subr.mxu0 0.0
  %3923 = vmatpush1.msra.mxu0 0.0
  %3924 = vmatprep.subr.mxu0 0.0
  %3925 = vmatpush1.msra.mxu0 0.0
  %3926 = vmatprep.subr.mxu0 0.0
  %3927 = vmatpush1.msra.mxu0 0.0
  %3928 = vmatprep.subr.mxu0 0.0
  %3929 = vmatpush1.msra.mxu0 0.0
  %3930 = vmatprep.subr.mxu0 0.0
  %3931 = vmatpush1.msra.mxu0 0.0
  %3932 = vmatprep.subr.mxu0 0.0
  %3933 = vmatpush1.msra.mxu0 0.0
  %3934 = vmatprep.subr.mxu0 0.0
  %3935 = vmatpush1.msra.mxu0 0.0
  %3936 = vmatprep.mubr.f32.mxu0 0.0
  %3937 = vmatmul.mubr.f32.gmra.mrb[0].mxu0 %v3799
  %v3938 = vpop.f32.mrb[0].mxu0
  %v3939 = vadd.f32 0.0, %v3938
  %v3940 = vpop.f32.mrb[0].mxu0
  %v3941 = vadd.f32 0.0, %v3940
  %3942 = vdwg.mxu0
  %3943 = vmatprep.subr.mxu0 %v3797
  %3944 = vmatpush1.msra.mxu0 %v3792
  %3945 = vmatprep.subr.mxu0 0.0
  %3946 = vmatpush1.msra.mxu0 0.0
  %3947 = vmatprep.subr.mxu0 0.0
  %3948 = vmatpush1.msra.mxu0 0.0
  %3949 = vmatprep.subr.mxu0 0.0
  %3950 = vmatpush1.msra.mxu0 0.0
  %3951 = vmatprep.subr.mxu0 0.0
  %3952 = vmatpush1.msra.mxu0 0.0
  %3953 = vmatprep.subr.mxu0 0.0
  %3954 = vmatpush1.msra.mxu0 0.0
  %3955 = vmatprep.subr.mxu0 0.0
  %3956 = vmatpush1.msra.mxu0 0.0
  %3957 = vmatprep.subr.mxu0 0.0
  %3958 = vmatpush1.msra.mxu0 0.0
  %3959 = vmatprep.subr.mxu0 0.0
  %3960 = vmatpush1.msra.mxu0 0.0
  %3961 = vmatprep.subr.mxu0 0.0
  %3962 = vmatpush1.msra.mxu0 0.0
  %3963 = vmatprep.subr.mxu0 0.0
  %3964 = vmatpush1.msra.mxu0 0.0
  %3965 = vmatprep.subr.mxu0 0.0
  %3966 = vmatpush1.msra.mxu0 0.0
  %3967 = vmatprep.subr.mxu0 0.0
  %3968 = vmatpush1.msra.mxu0 0.0
  %3969 = vmatprep.subr.mxu0 0.0
  %3970 = vmatpush1.msra.mxu0 0.0
  %3971 = vmatprep.subr.mxu0 0.0
  %3972 = vmatpush1.msra.mxu0 0.0
  %3973 = vmatprep.subr.mxu0 0.0
  %3974 = vmatpush1.msra.mxu0 0.0
  %3975 = vmatprep.subr.mxu0 0.0
  %3976 = vmatpush1.msra.mxu0 0.0
  %3977 = vmatprep.subr.mxu0 0.0
  %3978 = vmatpush1.msra.mxu0 0.0
  %3979 = vmatprep.subr.mxu0 0.0
  %3980 = vmatpush1.msra.mxu0 0.0
  %3981 = vmatprep.subr.mxu0 0.0
  %3982 = vmatpush1.msra.mxu0 0.0
  %3983 = vmatprep.subr.mxu0 0.0
  %3984 = vmatpush1.msra.mxu0 0.0
  %3985 = vmatprep.subr.mxu0 0.0
  %3986 = vmatpush1.msra.mxu0 0.0
  %3987 = vmatprep.subr.mxu0 0.0
  %3988 = vmatpush1.msra.mxu0 0.0
  %3989 = vmatprep.subr.mxu0 0.0
  %3990 = vmatpush1.msra.mxu0 0.0
  %3991 = vmatprep.subr.mxu0 0.0
  %3992 = vmatpush1.msra.mxu0 0.0
  %3993 = vmatprep.subr.mxu0 0.0
  %3994 = vmatpush1.msra.mxu0 0.0
  %3995 = vmatprep.subr.mxu0 0.0
  %3996 = vmatpush1.msra.mxu0 0.0
  %3997 = vmatprep.subr.mxu0 0.0
  %3998 = vmatpush1.msra.mxu0 0.0
  %3999 = vmatprep.subr.mxu0 0.0
  %4000 = vmatpush1.msra.mxu0 0.0
  %4001 = vmatprep.subr.mxu0 0.0
  %4002 = vmatpush1.msra.mxu0 0.0
  %4003 = vmatprep.subr.mxu0 0.0
  %4004 = vmatpush1.msra.mxu0 0.0
  %4005 = vmatprep.subr.mxu0 0.0
  %4006 = vmatpush1.msra.mxu0 0.0
  %4007 = vmatprep.mubr.f32.mxu0 0.0
  %4008 = vmatmul.mubr.f32.gmra.mrb[0].mxu0 %v3799
  %v4009 = vpop.f32.mrb[0].mxu0
  %v4010 = vadd.f32 0.0, %v4009
  %v4011 = vpop.f32.mrb[0].mxu0
  %v4012 = vadd.f32 0.0, %v4011
  %4013 = vdwg.mxu0
  %v4014 = vadd.f32 %v3772, %v3868
  %v4015 = vadd.f32 %v3773, %v3870
  %v4016 = vadd.f32 %v3774, %v3939
  %v4017 = vadd.f32 %v3775, %v3941
  %v4018 = vadd.f32 %v3776, %v4010
  %v4019 = vadd.f32 %v3777, %v4012
  %s4020 = scalar_lea.vmem %s2, 48
  %v4021 = vld [vmem:[%s4020] sm:$0xff]
  %4022 = vrot.lane.b32.xlu0 %v2593, 111
  %v4023 = vpop.permute.xlu0 %4022
  %4024 = vrot.lane.b32.xlu0 %v2594, 111
  %v4025 = vpop.permute.xlu0 %4024
  %4026 = vrot.lane.b32.xlu0 %v2595, 111
  %v4027 = vpop.permute.xlu0 %4026
  %4028 = vrot.lane.b32.xlu0 %v2596, 111
  %v4029 = vpop.permute.xlu0 %4028
  %4030 = vrot.lane.b32.xlu0 %v2597, 111
  %v4031 = vpop.permute.xlu0 %4030
  %4032 = vrot.lane.b32.xlu0 %v2598, 111
  %v4033 = vpop.permute.xlu0 %4032
  %v4034 = vsel %vm1507, %v4031, %v4033
  %v4035 = vsel %vm1507, %v4029, %v4031
  %v4036 = vsel %vm1507, %v4027, %v4029
  %v4037 = vsel %vm1507, %v4025, %v4027
  %v4038 = vsel %vm1507, %v4023, %v4025
  %v4039 = vsel %vm1507, %v4033, %v4023
  %v4041 = vsel %vm107, %v4021, 0
  %4043 = vmatprep.subr.mxu0 %v4037
  %4044 = vmatpush1.msra.mxu0 %v4038
  %4045 = vmatprep.subr.mxu0 0.0
  %4046 = vmatpush1.msra.mxu0 0.0
  %4047 = vmatprep.subr.mxu0 0.0
  %4048 = vmatpush1.msra.mxu0 0.0
  %4049 = vmatprep.subr.mxu0 0.0
  %4050 = vmatpush1.msra.mxu0 0.0
  %4051 = vmatprep.subr.mxu0 0.0
  %4052 = vmatpush1.msra.mxu0 0.0
  %4053 = vmatprep.subr.mxu0 0.0
  %4054 = vmatpush1.msra.mxu0 0.0
  %4055 = vmatprep.subr.mxu0 0.0
  %4056 = vmatpush1.msra.mxu0 0.0
  %4057 = vmatprep.subr.mxu0 0.0
  %4058 = vmatpush1.msra.mxu0 0.0
  %4059 = vmatprep.subr.mxu0 0.0
  %4060 = vmatpush1.msra.mxu0 0.0
  %4061 = vmatprep.subr.mxu0 0.0
  %4062 = vmatpush1.msra.mxu0 0.0
  %4063 = vmatprep.subr.mxu0 0.0
  %4064 = vmatpush1.msra.mxu0 0.0
  %4065 = vmatprep.subr.mxu0 0.0
  %4066 = vmatpush1.msra.mxu0 0.0
  %4067 = vmatprep.subr.mxu0 0.0
  %4068 = vmatpush1.msra.mxu0 0.0
  %4069 = vmatprep.subr.mxu0 0.0
  %4070 = vmatpush1.msra.mxu0 0.0
  %4071 = vmatprep.subr.mxu0 0.0
  %4072 = vmatpush1.msra.mxu0 0.0
  %4073 = vmatprep.subr.mxu0 0.0
  %4074 = vmatpush1.msra.mxu0 0.0
  %4075 = vmatprep.subr.mxu0 0.0
  %4076 = vmatpush1.msra.mxu0 0.0
  %4077 = vmatprep.subr.mxu0 0.0
  %4078 = vmatpush1.msra.mxu0 0.0
  %4079 = vmatprep.subr.mxu0 0.0
  %4080 = vmatpush1.msra.mxu0 0.0
  %4081 = vmatprep.subr.mxu0 0.0
  %4082 = vmatpush1.msra.mxu0 0.0
  %4083 = vmatprep.subr.mxu0 0.0
  %4084 = vmatpush1.msra.mxu0 0.0
  %4085 = vmatprep.subr.mxu0 0.0
  %4086 = vmatpush1.msra.mxu0 0.0
  %4087 = vmatprep.subr.mxu0 0.0
  %4088 = vmatpush1.msra.mxu0 0.0
  %4089 = vmatprep.subr.mxu0 0.0
  %4090 = vmatpush1.msra.mxu0 0.0
  %4091 = vmatprep.subr.mxu0 0.0
  %4092 = vmatpush1.msra.mxu0 0.0
  %4093 = vmatprep.subr.mxu0 0.0
  %4094 = vmatpush1.msra.mxu0 0.0
  %4095 = vmatprep.subr.mxu0 0.0
  %4096 = vmatpush1.msra.mxu0 0.0
  %4097 = vmatprep.subr.mxu0 0.0
  %4098 = vmatpush1.msra.mxu0 0.0
  %4099 = vmatprep.subr.mxu0 0.0
  %4100 = vmatpush1.msra.mxu0 0.0
  %4101 = vmatprep.subr.mxu0 0.0
  %4102 = vmatpush1.msra.mxu0 0.0
  %4103 = vmatprep.subr.mxu0 0.0
  %4104 = vmatpush1.msra.mxu0 0.0
  %4105 = vmatprep.subr.mxu0 0.0
  %4106 = vmatpush1.msra.mxu0 0.0
  %4107 = vmatprep.mubr.f32.mxu0 0.0
  %4108 = vmatmul.mubr.f32.gmra.mrb[0].mxu0 %v4041
  %v4109 = vpop.f32.mrb[0].mxu0
  %v4110 = vadd.f32 0.0, %v4109
  %v4111 = vpop.f32.mrb[0].mxu0
  %v4112 = vadd.f32 0.0, %v4111
  %4113 = vdwg.mxu0
  %4114 = vmatprep.subr.mxu0 %v4035
  %4115 = vmatpush1.msra.mxu0 %v4036
  %4116 = vmatprep.subr.mxu0 0.0
  %4117 = vmatpush1.msra.mxu0 0.0
  %4118 = vmatprep.subr.mxu0 0.0
  %4119 = vmatpush1.msra.mxu0 0.0
  %4120 = vmatprep.subr.mxu0 0.0
  %4121 = vmatpush1.msra.mxu0 0.0
  %4122 = vmatprep.subr.mxu0 0.0
  %4123 = vmatpush1.msra.mxu0 0.0
  %4124 = vmatprep.subr.mxu0 0.0
  %4125 = vmatpush1.msra.mxu0 0.0
  %4126 = vmatprep.subr.mxu0 0.0
  %4127 = vmatpush1.msra.mxu0 0.0
  %4128 = vmatprep.subr.mxu0 0.0
  %4129 = vmatpush1.msra.mxu0 0.0
  %4130 = vmatprep.subr.mxu0 0.0
  %4131 = vmatpush1.msra.mxu0 0.0
  %4132 = vmatprep.subr.mxu0 0.0
  %4133 = vmatpush1.msra.mxu0 0.0
  %4134 = vmatprep.subr.mxu0 0.0
  %4135 = vmatpush1.msra.mxu0 0.0
  %4136 = vmatprep.subr.mxu0 0.0
  %4137 = vmatpush1.msra.mxu0 0.0
  %4138 = vmatprep.subr.mxu0 0.0
  %4139 = vmatpush1.msra.mxu0 0.0
  %4140 = vmatprep.subr.mxu0 0.0
  %4141 = vmatpush1.msra.mxu0 0.0
  %4142 = vmatprep.subr.mxu0 0.0
  %4143 = vmatpush1.msra.mxu0 0.0
  %4144 = vmatprep.subr.mxu0 0.0
  %4145 = vmatpush1.msra.mxu0 0.0
  %4146 = vmatprep.subr.mxu0 0.0
  %4147 = vmatpush1.msra.mxu0 0.0
  %4148 = vmatprep.subr.mxu0 0.0
  %4149 = vmatpush1.msra.mxu0 0.0
  %4150 = vmatprep.subr.mxu0 0.0
  %4151 = vmatpush1.msra.mxu0 0.0
  %4152 = vmatprep.subr.mxu0 0.0
  %4153 = vmatpush1.msra.mxu0 0.0
  %4154 = vmatprep.subr.mxu0 0.0
  %4155 = vmatpush1.msra.mxu0 0.0
  %4156 = vmatprep.subr.mxu0 0.0
  %4157 = vmatpush1.msra.mxu0 0.0
  %4158 = vmatprep.subr.mxu0 0.0
  %4159 = vmatpush1.msra.mxu0 0.0
  %4160 = vmatprep.subr.mxu0 0.0
  %4161 = vmatpush1.msra.mxu0 0.0
  %4162 = vmatprep.subr.mxu0 0.0
  %4163 = vmatpush1.msra.mxu0 0.0
  %4164 = vmatprep.subr.mxu0 0.0
  %4165 = vmatpush1.msra.mxu0 0.0
  %4166 = vmatprep.subr.mxu0 0.0
  %4167 = vmatpush1.msra.mxu0 0.0
  %4168 = vmatprep.subr.mxu0 0.0
  %4169 = vmatpush1.msra.mxu0 0.0
  %4170 = vmatprep.subr.mxu0 0.0
  %4171 = vmatpush1.msra.mxu0 0.0
  %4172 = vmatprep.subr.mxu0 0.0
  %4173 = vmatpush1.msra.mxu0 0.0
  %4174 = vmatprep.subr.mxu0 0.0
  %4175 = vmatpush1.msra.mxu0 0.0
  %4176 = vmatprep.subr.mxu0 0.0
  %4177 = vmatpush1.msra.mxu0 0.0
  %4178 = vmatprep.mubr.f32.mxu0 0.0
  %4179 = vmatmul.mubr.f32.gmra.mrb[0].mxu0 %v4041
  %v4180 = vpop.f32.mrb[0].mxu0
  %v4181 = vadd.f32 0.0, %v4180
  %v4182 = vpop.f32.mrb[0].mxu0
  %v4183 = vadd.f32 0.0, %v4182
  %4184 = vdwg.mxu0
  %4185 = vmatprep.subr.mxu0 %v4039
  %4186 = vmatpush1.msra.mxu0 %v4034
  %4187 = vmatprep.subr.mxu0 0.0
  %4188 = vmatpush1.msra.mxu0 0.0
  %4189 = vmatprep.subr.mxu0 0.0
  %4190 = vmatpush1.msra.mxu0 0.0
  %4191 = vmatprep.subr.mxu0 0.0
  %4192 = vmatpush1.msra.mxu0 0.0
  %4193 = vmatprep.subr.mxu0 0.0
  %4194 = vmatpush1.msra.mxu0 0.0
  %4195 = vmatprep.subr.mxu0 0.0
  %4196 = vmatpush1.msra.mxu0 0.0
  %4197 = vmatprep.subr.mxu0 0.0
  %4198 = vmatpush1.msra.mxu0 0.0
  %4199 = vmatprep.subr.mxu0 0.0
  %4200 = vmatpush1.msra.mxu0 0.0
  %4201 = vmatprep.subr.mxu0 0.0
  %4202 = vmatpush1.msra.mxu0 0.0
  %4203 = vmatprep.subr.mxu0 0.0
  %4204 = vmatpush1.msra.mxu0 0.0
  %4205 = vmatprep.subr.mxu0 0.0
  %4206 = vmatpush1.msra.mxu0 0.0
  %4207 = vmatprep.subr.mxu0 0.0
  %4208 = vmatpush1.msra.mxu0 0.0
  %4209 = vmatprep.subr.mxu0 0.0
  %4210 = vmatpush1.msra.mxu0 0.0
  %4211 = vmatprep.subr.mxu0 0.0
  %4212 = vmatpush1.msra.mxu0 0.0
  %4213 = vmatprep.subr.mxu0 0.0
  %4214 = vmatpush1.msra.mxu0 0.0
  %4215 = vmatprep.subr.mxu0 0.0
  %4216 = vmatpush1.msra.mxu0 0.0
  %4217 = vmatprep.subr.mxu0 0.0
  %4218 = vmatpush1.msra.mxu0 0.0
  %4219 = vmatprep.subr.mxu0 0.0
  %4220 = vmatpush1.msra.mxu0 0.0
  %4221 = vmatprep.subr.mxu0 0.0
  %4222 = vmatpush1.msra.mxu0 0.0
  %4223 = vmatprep.subr.mxu0 0.0
  %4224 = vmatpush1.msra.mxu0 0.0
  %4225 = vmatprep.subr.mxu0 0.0
  %4226 = vmatpush1.msra.mxu0 0.0
  %4227 = vmatprep.subr.mxu0 0.0
  %4228 = vmatpush1.msra.mxu0 0.0
  %4229 = vmatprep.subr.mxu0 0.0
  %4230 = vmatpush1.msra.mxu0 0.0
  %4231 = vmatprep.subr.mxu0 0.0
  %4232 = vmatpush1.msra.mxu0 0.0
  %4233 = vmatprep.subr.mxu0 0.0
  %4234 = vmatpush1.msra.mxu0 0.0
  %4235 = vmatprep.subr.mxu0 0.0
  %4236 = vmatpush1.msra.mxu0 0.0
  %4237 = vmatprep.subr.mxu0 0.0
  %4238 = vmatpush1.msra.mxu0 0.0
  %4239 = vmatprep.subr.mxu0 0.0
  %4240 = vmatpush1.msra.mxu0 0.0
  %4241 = vmatprep.subr.mxu0 0.0
  %4242 = vmatpush1.msra.mxu0 0.0
  %4243 = vmatprep.subr.mxu0 0.0
  %4244 = vmatpush1.msra.mxu0 0.0
  %4245 = vmatprep.subr.mxu0 0.0
  %4246 = vmatpush1.msra.mxu0 0.0
  %4247 = vmatprep.subr.mxu0 0.0
  %4248 = vmatpush1.msra.mxu0 0.0
  %4249 = vmatprep.mubr.f32.mxu0 0.0
  %4250 = vmatmul.mubr.f32.gmra.mrb[0].mxu0 %v4041
  %v4251 = vpop.f32.mrb[0].mxu0
  %v4252 = vadd.f32 0.0, %v4251
  %v4253 = vpop.f32.mrb[0].mxu0
  %v4254 = vadd.f32 0.0, %v4253
  %4255 = vdwg.mxu0
  %v4256 = vadd.f32 %v4014, %v4110
  %v4257 = vadd.f32 %v4015, %v4112
  %v4258 = vadd.f32 %v4016, %v4181
  %v4259 = vadd.f32 %v4017, %v4183
  %v4260 = vadd.f32 %v4018, %v4252
  %v4261 = vadd.f32 %v4019, %v4254
  %s4262 = scalar_lea.vmem %s2, 56
  %v4263 = vld [vmem:[%s4262] sm:$0xff]
  %4264 = vrot.lane.b32.xlu0 %v2593, 110
  %v4265 = vpop.permute.xlu0 %4264
  %4266 = vrot.lane.b32.xlu0 %v2594, 110
  %v4267 = vpop.permute.xlu0 %4266
  %4268 = vrot.lane.b32.xlu0 %v2595, 110
  %v4269 = vpop.permute.xlu0 %4268
  %4270 = vrot.lane.b32.xlu0 %v2596, 110
  %v4271 = vpop.permute.xlu0 %4270
  %4272 = vrot.lane.b32.xlu0 %v2597, 110
  %v4273 = vpop.permute.xlu0 %4272
  %4274 = vrot.lane.b32.xlu0 %v2598, 110
  %v4275 = vpop.permute.xlu0 %4274
  %v4276 = vsel %vm1750, %v4273, %v4275
  %v4277 = vsel %vm1750, %v4271, %v4273
  %v4278 = vsel %vm1750, %v4269, %v4271
  %v4279 = vsel %vm1750, %v4267, %v4269
  %v4280 = vsel %vm1750, %v4265, %v4267
  %v4281 = vsel %vm1750, %v4275, %v4265
  %v4283 = vsel %vm107, %v4263, 0
  %4285 = vmatprep.subr.mxu0 %v4279
  %4286 = vmatpush1.msra.mxu0 %v4280
  %4287 = vmatprep.subr.mxu0 0.0
  %4288 = vmatpush1.msra.mxu0 0.0
  %4289 = vmatprep.subr.mxu0 0.0
  %4290 = vmatpush1.msra.mxu0 0.0
  %4291 = vmatprep.subr.mxu0 0.0
  %4292 = vmatpush1.msra.mxu0 0.0
  %4293 = vmatprep.subr.mxu0 0.0
  %4294 = vmatpush1.msra.mxu0 0.0
  %4295 = vmatprep.subr.mxu0 0.0
  %4296 = vmatpush1.msra.mxu0 0.0
  %4297 = vmatprep.subr.mxu0 0.0
  %4298 = vmatpush1.msra.mxu0 0.0
  %4299 = vmatprep.subr.mxu0 0.0
  %4300 = vmatpush1.msra.mxu0 0.0
  %4301 = vmatprep.subr.mxu0 0.0
  %4302 = vmatpush1.msra.mxu0 0.0
  %4303 = vmatprep.subr.mxu0 0.0
  %4304 = vmatpush1.msra.mxu0 0.0
  %4305 = vmatprep.subr.mxu0 0.0
  %4306 = vmatpush1.msra.mxu0 0.0
  %4307 = vmatprep.subr.mxu0 0.0
  %4308 = vmatpush1.msra.mxu0 0.0
  %4309 = vmatprep.subr.mxu0 0.0
  %4310 = vmatpush1.msra.mxu0 0.0
  %4311 = vmatprep.subr.mxu0 0.0
  %4312 = vmatpush1.msra.mxu0 0.0
  %4313 = vmatprep.subr.mxu0 0.0
  %4314 = vmatpush1.msra.mxu0 0.0
  %4315 = vmatprep.subr.mxu0 0.0
  %4316 = vmatpush1.msra.mxu0 0.0
  %4317 = vmatprep.subr.mxu0 0.0
  %4318 = vmatpush1.msra.mxu0 0.0
  %4319 = vmatprep.subr.mxu0 0.0
  %4320 = vmatpush1.msra.mxu0 0.0
  %4321 = vmatprep.subr.mxu0 0.0
  %4322 = vmatpush1.msra.mxu0 0.0
  %4323 = vmatprep.subr.mxu0 0.0
  %4324 = vmatpush1.msra.mxu0 0.0
  %4325 = vmatprep.subr.mxu0 0.0
  %4326 = vmatpush1.msra.mxu0 0.0
  %4327 = vmatprep.subr.mxu0 0.0
  %4328 = vmatpush1.msra.mxu0 0.0
  %4329 = vmatprep.subr.mxu0 0.0
  %4330 = vmatpush1.msra.mxu0 0.0
  %4331 = vmatprep.subr.mxu0 0.0
  %4332 = vmatpush1.msra.mxu0 0.0
  %4333 = vmatprep.subr.mxu0 0.0
  %4334 = vmatpush1.msra.mxu0 0.0
  %4335 = vmatprep.subr.mxu0 0.0
  %4336 = vmatpush1.msra.mxu0 0.0
  %4337 = vmatprep.subr.mxu0 0.0
  %4338 = vmatpush1.msra.mxu0 0.0
  %4339 = vmatprep.subr.mxu0 0.0
  %4340 = vmatpush1.msra.mxu0 0.0
  %4341 = vmatprep.subr.mxu0 0.0
  %4342 = vmatpush1.msra.mxu0 0.0
  %4343 = vmatprep.subr.mxu0 0.0
  %4344 = vmatpush1.msra.mxu0 0.0
  %4345 = vmatprep.subr.mxu0 0.0
  %4346 = vmatpush1.msra.mxu0 0.0
  %4347 = vmatprep.subr.mxu0 0.0
  %4348 = vmatpush1.msra.mxu0 0.0
  %4349 = vmatprep.mubr.f32.mxu0 0.0
  %4350 = vmatmul.mubr.f32.gmra.mrb[0].mxu0 %v4283
  %v4351 = vpop.f32.mrb[0].mxu0
  %v4352 = vadd.f32 0.0, %v4351
  %v4353 = vpop.f32.mrb[0].mxu0
  %v4354 = vadd.f32 0.0, %v4353
  %4355 = vdwg.mxu0
  %4356 = vmatprep.subr.mxu0 %v4277
  %4357 = vmatpush1.msra.mxu0 %v4278
  %4358 = vmatprep.subr.mxu0 0.0
  %4359 = vmatpush1.msra.mxu0 0.0
  %4360 = vmatprep.subr.mxu0 0.0
  %4361 = vmatpush1.msra.mxu0 0.0
  %4362 = vmatprep.subr.mxu0 0.0
  %4363 = vmatpush1.msra.mxu0 0.0
  %4364 = vmatprep.subr.mxu0 0.0
  %4365 = vmatpush1.msra.mxu0 0.0
  %4366 = vmatprep.subr.mxu0 0.0
  %4367 = vmatpush1.msra.mxu0 0.0
  %4368 = vmatprep.subr.mxu0 0.0
  %4369 = vmatpush1.msra.mxu0 0.0
  %4370 = vmatprep.subr.mxu0 0.0
  %4371 = vmatpush1.msra.mxu0 0.0
  %4372 = vmatprep.subr.mxu0 0.0
  %4373 = vmatpush1.msra.mxu0 0.0
  %4374 = vmatprep.subr.mxu0 0.0
  %4375 = vmatpush1.msra.mxu0 0.0
  %4376 = vmatprep.subr.mxu0 0.0
  %4377 = vmatpush1.msra.mxu0 0.0
  %4378 = vmatprep.subr.mxu0 0.0
  %4379 = vmatpush1.msra.mxu0 0.0
  %4380 = vmatprep.subr.mxu0 0.0
  %4381 = vmatpush1.msra.mxu0 0.0
  %4382 = vmatprep.subr.mxu0 0.0
  %4383 = vmatpush1.msra.mxu0 0.0
  %4384 = vmatprep.subr.mxu0 0.0
  %4385 = vmatpush1.msra.mxu0 0.0
  %4386 = vmatprep.subr.mxu0 0.0
  %4387 = vmatpush1.msra.mxu0 0.0
  %4388 = vmatprep.subr.mxu0 0.0
  %4389 = vmatpush1.msra.mxu0 0.0
  %4390 = vmatprep.subr.mxu0 0.0
  %4391 = vmatpush1.msra.mxu0 0.0
  %4392 = vmatprep.subr.mxu0 0.0
  %4393 = vmatpush1.msra.mxu0 0.0
  %4394 = vmatprep.subr.mxu0 0.0
  %4395 = vmatpush1.msra.mxu0 0.0
  %4396 = vmatprep.subr.mxu0 0.0
  %4397 = vmatpush1.msra.mxu0 0.0
  %4398 = vmatprep.subr.mxu0 0.0
  %4399 = vmatpush1.msra.mxu0 0.0
  %4400 = vmatprep.subr.mxu0 0.0
  %4401 = vmatpush1.msra.mxu0 0.0
  %4402 = vmatprep.subr.mxu0 0.0
  %4403 = vmatpush1.msra.mxu0 0.0
  %4404 = vmatprep.subr.mxu0 0.0
  %4405 = vmatpush1.msra.mxu0 0.0
  %4406 = vmatprep.subr.mxu0 0.0
  %4407 = vmatpush1.msra.mxu0 0.0
  %4408 = vmatprep.subr.mxu0 0.0
  %4409 = vmatpush1.msra.mxu0 0.0
  %4410 = vmatprep.subr.mxu0 0.0
  %4411 = vmatpush1.msra.mxu0 0.0
  %4412 = vmatprep.subr.mxu0 0.0
  %4413 = vmatpush1.msra.mxu0 0.0
  %4414 = vmatprep.subr.mxu0 0.0
  %4415 = vmatpush1.msra.mxu0 0.0
  %4416 = vmatprep.subr.mxu0 0.0
  %4417 = vmatpush1.msra.mxu0 0.0
  %4418 = vmatprep.subr.mxu0 0.0
  %4419 = vmatpush1.msra.mxu0 0.0
  %4420 = vmatprep.mubr.f32.mxu0 0.0
  %4421 = vmatmul.mubr.f32.gmra.mrb[0].mxu0 %v4283
  %v4422 = vpop.f32.mrb[0].mxu0
  %v4423 = vadd.f32 0.0, %v4422
  %v4424 = vpop.f32.mrb[0].mxu0
  %v4425 = vadd.f32 0.0, %v4424
  %4426 = vdwg.mxu0
  %4427 = vmatprep.subr.mxu0 %v4281
  %4428 = vmatpush1.msra.mxu0 %v4276
  %4429 = vmatprep.subr.mxu0 0.0
  %4430 = vmatpush1.msra.mxu0 0.0
  %4431 = vmatprep.subr.mxu0 0.0
  %4432 = vmatpush1.msra.mxu0 0.0
  %4433 = vmatprep.subr.mxu0 0.0
  %4434 = vmatpush1.msra.mxu0 0.0
  %4435 = vmatprep.subr.mxu0 0.0
  %4436 = vmatpush1.msra.mxu0 0.0
  %4437 = vmatprep.subr.mxu0 0.0
  %4438 = vmatpush1.msra.mxu0 0.0
  %4439 = vmatprep.subr.mxu0 0.0
  %4440 = vmatpush1.msra.mxu0 0.0
  %4441 = vmatprep.subr.mxu0 0.0
  %4442 = vmatpush1.msra.mxu0 0.0
  %4443 = vmatprep.subr.mxu0 0.0
  %4444 = vmatpush1.msra.mxu0 0.0
  %4445 = vmatprep.subr.mxu0 0.0
  %4446 = vmatpush1.msra.mxu0 0.0
  %4447 = vmatprep.subr.mxu0 0.0
  %4448 = vmatpush1.msra.mxu0 0.0
  %4449 = vmatprep.subr.mxu0 0.0
  %4450 = vmatpush1.msra.mxu0 0.0
  %4451 = vmatprep.subr.mxu0 0.0
  %4452 = vmatpush1.msra.mxu0 0.0
  %4453 = vmatprep.subr.mxu0 0.0
  %4454 = vmatpush1.msra.mxu0 0.0
  %4455 = vmatprep.subr.mxu0 0.0
  %4456 = vmatpush1.msra.mxu0 0.0
  %4457 = vmatprep.subr.mxu0 0.0
  %4458 = vmatpush1.msra.mxu0 0.0
  %4459 = vmatprep.subr.mxu0 0.0
  %4460 = vmatpush1.msra.mxu0 0.0
  %4461 = vmatprep.subr.mxu0 0.0
  %4462 = vmatpush1.msra.mxu0 0.0
  %4463 = vmatprep.subr.mxu0 0.0
  %4464 = vmatpush1.msra.mxu0 0.0
  %4465 = vmatprep.subr.mxu0 0.0
  %4466 = vmatpush1.msra.mxu0 0.0
  %4467 = vmatprep.subr.mxu0 0.0
  %4468 = vmatpush1.msra.mxu0 0.0
  %4469 = vmatprep.subr.mxu0 0.0
  %4470 = vmatpush1.msra.mxu0 0.0
  %4471 = vmatprep.subr.mxu0 0.0
  %4472 = vmatpush1.msra.mxu0 0.0
  %4473 = vmatprep.subr.mxu0 0.0
  %4474 = vmatpush1.msra.mxu0 0.0
  %4475 = vmatprep.subr.mxu0 0.0
  %4476 = vmatpush1.msra.mxu0 0.0
  %4477 = vmatprep.subr.mxu0 0.0
  %4478 = vmatpush1.msra.mxu0 0.0
  %4479 = vmatprep.subr.mxu0 0.0
  %4480 = vmatpush1.msra.mxu0 0.0
  %4481 = vmatprep.subr.mxu0 0.0
  %4482 = vmatpush1.msra.mxu0 0.0
  %4483 = vmatprep.subr.mxu0 0.0
  %4484 = vmatpush1.msra.mxu0 0.0
  %4485 = vmatprep.subr.mxu0 0.0
  %4486 = vmatpush1.msra.mxu0 0.0
  %4487 = vmatprep.subr.mxu0 0.0
  %4488 = vmatpush1.msra.mxu0 0.0
  %4489 = vmatprep.subr.mxu0 0.0
  %4490 = vmatpush1.msra.mxu0 0.0
  %4491 = vmatprep.mubr.f32.mxu0 0.0
  %4492 = vmatmul.mubr.f32.gmra.mrb[0].mxu0 %v4283
  %v4493 = vpop.f32.mrb[0].mxu0
  %v4494 = vadd.f32 0.0, %v4493
  %v4495 = vpop.f32.mrb[0].mxu0
  %v4496 = vadd.f32 0.0, %v4495
  %4497 = vdwg.mxu0
  %v4498 = vadd.f32 %v4256, %v4352
  %v4499 = vadd.f32 %v4257, %v4354
  %v4500 = vadd.f32 %v4258, %v4423
  %v4501 = vadd.f32 %v4259, %v4425
  %v4502 = vadd.f32 %v4260, %v4494
  %v4503 = vadd.f32 %v4261, %v4496
  %s4504 = scalar_lea.vmem %s2, 64
  %v4505 = vld [vmem:[%s4504] sm:$0xff]
  %4506 = vrot.lane.b32.xlu0 %v2593, 109
  %v4507 = vpop.permute.xlu0 %4506
  %4508 = vrot.lane.b32.xlu0 %v2594, 109
  %v4509 = vpop.permute.xlu0 %4508
  %4510 = vrot.lane.b32.xlu0 %v2595, 109
  %v4511 = vpop.permute.xlu0 %4510
  %4512 = vrot.lane.b32.xlu0 %v2596, 109
  %v4513 = vpop.permute.xlu0 %4512
  %4514 = vrot.lane.b32.xlu0 %v2597, 109
  %v4515 = vpop.permute.xlu0 %4514
  %4516 = vrot.lane.b32.xlu0 %v2598, 109
  %v4517 = vpop.permute.xlu0 %4516
  %v4518 = vsel %vm1993, %v4515, %v4517
  %v4519 = vsel %vm1993, %v4513, %v4515
  %v4520 = vsel %vm1993, %v4511, %v4513
  %v4521 = vsel %vm1993, %v4509, %v4511
  %v4522 = vsel %vm1993, %v4507, %v4509
  %v4523 = vsel %vm1993, %v4517, %v4507
  %v4525 = vsel %vm107, %v4505, 0
  %4527 = vmatprep.subr.mxu0 %v4521
  %4528 = vmatpush1.msra.mxu0 %v4522
  %4529 = vmatprep.subr.mxu0 0.0
  %4530 = vmatpush1.msra.mxu0 0.0
  %4531 = vmatprep.subr.mxu0 0.0
  %4532 = vmatpush1.msra.mxu0 0.0
  %4533 = vmatprep.subr.mxu0 0.0
  %4534 = vmatpush1.msra.mxu0 0.0
  %4535 = vmatprep.subr.mxu0 0.0
  %4536 = vmatpush1.msra.mxu0 0.0
  %4537 = vmatprep.subr.mxu0 0.0
  %4538 = vmatpush1.msra.mxu0 0.0
  %4539 = vmatprep.subr.mxu0 0.0
  %4540 = vmatpush1.msra.mxu0 0.0
  %4541 = vmatprep.subr.mxu0 0.0
  %4542 = vmatpush1.msra.mxu0 0.0
  %4543 = vmatprep.subr.mxu0 0.0
  %4544 = vmatpush1.msra.mxu0 0.0
  %4545 = vmatprep.subr.mxu0 0.0
  %4546 = vmatpush1.msra.mxu0 0.0
  %4547 = vmatprep.subr.mxu0 0.0
  %4548 = vmatpush1.msra.mxu0 0.0
  %4549 = vmatprep.subr.mxu0 0.0
  %4550 = vmatpush1.msra.mxu0 0.0
  %4551 = vmatprep.subr.mxu0 0.0
  %4552 = vmatpush1.msra.mxu0 0.0
  %4553 = vmatprep.subr.mxu0 0.0
  %4554 = vmatpush1.msra.mxu0 0.0
  %4555 = vmatprep.subr.mxu0 0.0
  %4556 = vmatpush1.msra.mxu0 0.0
  %4557 = vmatprep.subr.mxu0 0.0
  %4558 = vmatpush1.msra.mxu0 0.0
  %4559 = vmatprep.subr.mxu0 0.0
  %4560 = vmatpush1.msra.mxu0 0.0
  %4561 = vmatprep.subr.mxu0 0.0
  %4562 = vmatpush1.msra.mxu0 0.0
  %4563 = vmatprep.subr.mxu0 0.0
  %4564 = vmatpush1.msra.mxu0 0.0
  %4565 = vmatprep.subr.mxu0 0.0
  %4566 = vmatpush1.msra.mxu0 0.0
  %4567 = vmatprep.subr.mxu0 0.0
  %4568 = vmatpush1.msra.mxu0 0.0
  %4569 = vmatprep.subr.mxu0 0.0
  %4570 = vmatpush1.msra.mxu0 0.0
  %4571 = vmatprep.subr.mxu0 0.0
  %4572 = vmatpush1.msra.mxu0 0.0
  %4573 = vmatprep.subr.mxu0 0.0
  %4574 = vmatpush1.msra.mxu0 0.0
  %4575 = vmatprep.subr.mxu0 0.0
  %4576 = vmatpush1.msra.mxu0 0.0
  %4577 = vmatprep.subr.mxu0 0.0
  %4578 = vmatpush1.msra.mxu0 0.0
  %4579 = vmatprep.subr.mxu0 0.0
  %4580 = vmatpush1.msra.mxu0 0.0
  %4581 = vmatprep.subr.mxu0 0.0
  %4582 = vmatpush1.msra.mxu0 0.0
  %4583 = vmatprep.subr.mxu0 0.0
  %4584 = vmatpush1.msra.mxu0 0.0
  %4585 = vmatprep.subr.mxu0 0.0
  %4586 = vmatpush1.msra.mxu0 0.0
  %4587 = vmatprep.subr.mxu0 0.0
  %4588 = vmatpush1.msra.mxu0 0.0
  %4589 = vmatprep.subr.mxu0 0.0
  %4590 = vmatpush1.msra.mxu0 0.0
  %4591 = vmatprep.mubr.f32.mxu0 0.0
  %4592 = vmatmul.mubr.f32.gmra.mrb[0].mxu0 %v4525
  %v4593 = vpop.f32.mrb[0].mxu0
  %v4594 = vadd.f32 0.0, %v4593
  %v4595 = vpop.f32.mrb[0].mxu0
  %v4596 = vadd.f32 0.0, %v4595
  %4597 = vdwg.mxu0
  %4598 = vmatprep.subr.mxu0 %v4519
  %4599 = vmatpush1.msra.mxu0 %v4520
  %4600 = vmatprep.subr.mxu0 0.0
  %4601 = vmatpush1.msra.mxu0 0.0
  %4602 = vmatprep.subr.mxu0 0.0
  %4603 = vmatpush1.msra.mxu0 0.0
  %4604 = vmatprep.subr.mxu0 0.0
  %4605 = vmatpush1.msra.mxu0 0.0
  %4606 = vmatprep.subr.mxu0 0.0
  %4607 = vmatpush1.msra.mxu0 0.0
  %4608 = vmatprep.subr.mxu0 0.0
  %4609 = vmatpush1.msra.mxu0 0.0
  %4610 = vmatprep.subr.mxu0 0.0
  %4611 = vmatpush1.msra.mxu0 0.0
  %4612 = vmatprep.subr.mxu0 0.0
  %4613 = vmatpush1.msra.mxu0 0.0
  %4614 = vmatprep.subr.mxu0 0.0
  %4615 = vmatpush1.msra.mxu0 0.0
  %4616 = vmatprep.subr.mxu0 0.0
  %4617 = vmatpush1.msra.mxu0 0.0
  %4618 = vmatprep.subr.mxu0 0.0
  %4619 = vmatpush1.msra.mxu0 0.0
  %4620 = vmatprep.subr.mxu0 0.0
  %4621 = vmatpush1.msra.mxu0 0.0
  %4622 = vmatprep.subr.mxu0 0.0
  %4623 = vmatpush1.msra.mxu0 0.0
  %4624 = vmatprep.subr.mxu0 0.0
  %4625 = vmatpush1.msra.mxu0 0.0
  %4626 = vmatprep.subr.mxu0 0.0
  %4627 = vmatpush1.msra.mxu0 0.0
  %4628 = vmatprep.subr.mxu0 0.0
  %4629 = vmatpush1.msra.mxu0 0.0
  %4630 = vmatprep.subr.mxu0 0.0
  %4631 = vmatpush1.msra.mxu0 0.0
  %4632 = vmatprep.subr.mxu0 0.0
  %4633 = vmatpush1.msra.mxu0 0.0
  %4634 = vmatprep.subr.mxu0 0.0
  %4635 = vmatpush1.msra.mxu0 0.0
  %4636 = vmatprep.subr.mxu0 0.0
  %4637 = vmatpush1.msra.mxu0 0.0
  %4638 = vmatprep.subr.mxu0 0.0
  %4639 = vmatpush1.msra.mxu0 0.0
  %4640 = vmatprep.subr.mxu0 0.0
  %4641 = vmatpush1.msra.mxu0 0.0
  %4642 = vmatprep.subr.mxu0 0.0
  %4643 = vmatpush1.msra.mxu0 0.0
  %4644 = vmatprep.subr.mxu0 0.0
  %4645 = vmatpush1.msra.mxu0 0.0
  %4646 = vmatprep.subr.mxu0 0.0
  %4647 = vmatpush1.msra.mxu0 0.0
  %4648 = vmatprep.subr.mxu0 0.0
  %4649 = vmatpush1.msra.mxu0 0.0
  %4650 = vmatprep.subr.mxu0 0.0
  %4651 = vmatpush1.msra.mxu0 0.0
  %4652 = vmatprep.subr.mxu0 0.0
  %4653 = vmatpush1.msra.mxu0 0.0
  %4654 = vmatprep.subr.mxu0 0.0
  %4655 = vmatpush1.msra.mxu0 0.0
  %4656 = vmatprep.subr.mxu0 0.0
  %4657 = vmatpush1.msra.mxu0 0.0
  %4658 = vmatprep.subr.mxu0 0.0
  %4659 = vmatpush1.msra.mxu0 0.0
  %4660 = vmatprep.subr.mxu0 0.0
  %4661 = vmatpush1.msra.mxu0 0.0
  %4662 = vmatprep.mubr.f32.mxu0 0.0
  %4663 = vmatmul.mubr.f32.gmra.mrb[0].mxu0 %v4525
  %v4664 = vpop.f32.mrb[0].mxu0
  %v4665 = vadd.f32 0.0, %v4664
  %v4666 = vpop.f32.mrb[0].mxu0
  %v4667 = vadd.f32 0.0, %v4666
  %4668 = vdwg.mxu0
  %4669 = vmatprep.subr.mxu0 %v4523
  %4670 = vmatpush1.msra.mxu0 %v4518
  %4671 = vmatprep.subr.mxu0 0.0
  %4672 = vmatpush1.msra.mxu0 0.0
  %4673 = vmatprep.subr.mxu0 0.0
  %4674 = vmatpush1.msra.mxu0 0.0
  %4675 = vmatprep.subr.mxu0 0.0
  %4676 = vmatpush1.msra.mxu0 0.0
  %4677 = vmatprep.subr.mxu0 0.0
  %4678 = vmatpush1.msra.mxu0 0.0
  %4679 = vmatprep.subr.mxu0 0.0
  %4680 = vmatpush1.msra.mxu0 0.0
  %4681 = vmatprep.subr.mxu0 0.0
  %4682 = vmatpush1.msra.mxu0 0.0
  %4683 = vmatprep.subr.mxu0 0.0
  %4684 = vmatpush1.msra.mxu0 0.0
  %4685 = vmatprep.subr.mxu0 0.0
  %4686 = vmatpush1.msra.mxu0 0.0
  %4687 = vmatprep.subr.mxu0 0.0
  %4688 = vmatpush1.msra.mxu0 0.0
  %4689 = vmatprep.subr.mxu0 0.0
  %4690 = vmatpush1.msra.mxu0 0.0
  %4691 = vmatprep.subr.mxu0 0.0
  %4692 = vmatpush1.msra.mxu0 0.0
  %4693 = vmatprep.subr.mxu0 0.0
  %4694 = vmatpush1.msra.mxu0 0.0
  %4695 = vmatprep.subr.mxu0 0.0
  %4696 = vmatpush1.msra.mxu0 0.0
  %4697 = vmatprep.subr.mxu0 0.0
  %4698 = vmatpush1.msra.mxu0 0.0
  %4699 = vmatprep.subr.mxu0 0.0
  %4700 = vmatpush1.msra.mxu0 0.0
  %4701 = vmatprep.subr.mxu0 0.0
  %4702 = vmatpush1.msra.mxu0 0.0
  %4703 = vmatprep.subr.mxu0 0.0
  %4704 = vmatpush1.msra.mxu0 0.0
  %4705 = vmatprep.subr.mxu0 0.0
  %4706 = vmatpush1.msra.mxu0 0.0
  %4707 = vmatprep.subr.mxu0 0.0
  %4708 = vmatpush1.msra.mxu0 0.0
  %4709 = vmatprep.subr.mxu0 0.0
  %4710 = vmatpush1.msra.mxu0 0.0
  %4711 = vmatprep.subr.mxu0 0.0
  %4712 = vmatpush1.msra.mxu0 0.0
  %4713 = vmatprep.subr.mxu0 0.0
  %4714 = vmatpush1.msra.mxu0 0.0
  %4715 = vmatprep.subr.mxu0 0.0
  %4716 = vmatpush1.msra.mxu0 0.0
  %4717 = vmatprep.subr.mxu0 0.0
  %4718 = vmatpush1.msra.mxu0 0.0
  %4719 = vmatprep.subr.mxu0 0.0
  %4720 = vmatpush1.msra.mxu0 0.0
  %4721 = vmatprep.subr.mxu0 0.0
  %4722 = vmatpush1.msra.mxu0 0.0
  %4723 = vmatprep.subr.mxu0 0.0
  %4724 = vmatpush1.msra.mxu0 0.0
  %4725 = vmatprep.subr.mxu0 0.0
  %4726 = vmatpush1.msra.mxu0 0.0
  %4727 = vmatprep.subr.mxu0 0.0
  %4728 = vmatpush1.msra.mxu0 0.0
  %4729 = vmatprep.subr.mxu0 0.0
  %4730 = vmatpush1.msra.mxu0 0.0
  %4731 = vmatprep.subr.mxu0 0.0
  %4732 = vmatpush1.msra.mxu0 0.0
  %4733 = vmatprep.mubr.f32.mxu0 0.0
  %4734 = vmatmul.mubr.f32.gmra.mrb[0].mxu0 %v4525
  %v4735 = vpop.f32.mrb[0].mxu0
  %v4736 = vadd.f32 0.0, %v4735
  %v4737 = vpop.f32.mrb[0].mxu0
  %v4738 = vadd.f32 0.0, %v4737
  %4739 = vdwg.mxu0
  %v4740 = vadd.f32 %v4498, %v4594
  %v4741 = vadd.f32 %v4499, %v4596
  %v4742 = vadd.f32 %v4500, %v4665
  %v4743 = vadd.f32 %v4501, %v4667
  %v4744 = vadd.f32 %v4502, %v4736
  %v4745 = vadd.f32 %v4503, %v4738
  %v4746 = vld [vmem:[%s5] sm:$0xff]
  %v4747 = vld [vmem:[%s5 + $0x8] sm:$0xff]
  %v4748 = vld [vmem:[%s5 + $0x10] sm:$0xff]
  %4750 = vset.pattern.permute.xlu0 0
  %4751 = vperm.xlu0 %4750, %v4746
  %v4752 = vpop.permute.xlu0 %4751
  %v4754 = vadd.f32 %v4740, %v4752
  %v4755 = vadd.f32 %v4741, %v4752
  %v4756 = vadd.f32 %v4742, %v4752
  %v4757 = vadd.f32 %v4743, %v4752
  %v4758 = vadd.f32 %v4744, %v4752
  %v4759 = vadd.f32 %v4745, %v4752
  %v4760 = vmax.f32 %v4754, 0.0
  %v4761 = vmax.f32 %v4755, 0.0
  %v4762 = vmax.f32 %v4756, 0.0
  %v4763 = vmax.f32 %v4757, 0.0
  %v4764 = vmax.f32 %v4758, 0.0
  %v4765 = vmax.f32 %v4759, 0.0
  %v4766 = vsel %vm2267, %v4760, 0.0
  %v4767 = vsel %vm2268, %v4761, 0.0
  %v4768 = vsel %vm2269, %v4762, 0.0
  %v4769 = vsel %vm2270, %v4763, 0.0
  %v4770 = vsel %vm2271, %v4764, 0.0
  %v4771 = vsel %vm2272, %v4765, 0.0
  %v4772 = vadd.f32 %v4766, %v4767
  %v4773 = vadd.f32 %v4772, %v4768
  %v4774 = vadd.f32 %v4773, %v4769
  %v4775 = vadd.f32 %v4774, %v4770
  %v4776 = vadd.f32 %v4775, %v4771
  %4777 = vadd.xlane.f32.xlu0 %v4776
  %v4778 = vpop.xlane.xlu0 %4777
  %v4779 = vmul.f32 %v4778, 0.001953125
  %v4780 = vsub.f32 %v4760, %v4779
  %v4781 = vsub.f32 %v4761, %v4779
  %v4782 = vsub.f32 %v4762, %v4779
  %v4783 = vsub.f32 %v4763, %v4779
  %v4784 = vsub.f32 %v4764, %v4779
  %v4785 = vsub.f32 %v4765, %v4779
  %v4786 = vsel %vm2267, %v4780, 0.0
  %v4787 = vsel %vm2268, %v4781, 0.0
  %v4788 = vsel %vm2269, %v4782, 0.0
  %v4789 = vsel %vm2270, %v4783, 0.0
  %v4790 = vsel %vm2271, %v4784, 0.0
  %v4791 = vsel %vm2272, %v4785, 0.0
  %v4792 = vmul.f32 %v4786, %v4786
  %v4793 = vmul.f32 %v4787, %v4787
  %v4794 = vmul.f32 %v4788, %v4788
  %v4795 = vmul.f32 %v4789, %v4789
  %v4796 = vmul.f32 %v4790, %v4790
  %v4797 = vmul.f32 %v4791, %v4791
  %v4798 = vadd.f32 %v4792, %v4793
  %v4799 = vadd.f32 %v4798, %v4794
  %v4800 = vadd.f32 %v4799, %v4795
  %v4801 = vadd.f32 %v4800, %v4796
  %v4802 = vadd.f32 %v4801, %v4797
  %4803 = vadd.xlane.f32.xlu0 %v4802
  %v4804 = vpop.xlane.xlu0 %4803
  %v4805 = vmul.f32 %v4804, 0.001953125
  %v4806 = vadd.f32 %v4805, 1e-05
  %v4807 = vrsqrt.pop %v4806
  %v4808 = vmul.f32 %v4807, %v4747
  %4810 = vset.pattern.permute.xlu0 0
  %4811 = vperm.xlu0 %4810, %v4808
  %v4812 = vpop.permute.xlu0 %4811
  %v4814 = vmul.f32 %v4780, %v4812
  %v4815 = vmul.f32 %v4781, %v4812
  %v4816 = vmul.f32 %v4782, %v4812
  %v4817 = vmul.f32 %v4783, %v4812
  %v4818 = vmul.f32 %v4784, %v4812
  %v4819 = vmul.f32 %v4785, %v4812
  %4821 = vset.pattern.permute.xlu0 0
  %4822 = vperm.xlu0 %4821, %v4748
  %v4823 = vpop.permute.xlu0 %4822
  %v4825 = vadd.f32 %v4814, %v4823
  %v4826 = vadd.f32 %v4815, %v4823
  %v4827 = vadd.f32 %v4816, %v4823
  %v4828 = vadd.f32 %v4817, %v4823
  %v4829 = vadd.f32 %v4818, %v4823
  %v4830 = vadd.f32 %v4819, %v4823
  %4831 = vrot.lane.b32.xlu0 %v4825, 92
  %v4832 = vpop.permute.xlu0 %4831
  %4833 = vrot.lane.b32.xlu0 %v4826, 92
  %v4834 = vpop.permute.xlu0 %4833
  %4835 = vrot.lane.b32.xlu0 %v4827, 92
  %v4836 = vpop.permute.xlu0 %4835
  %4837 = vrot.lane.b32.xlu0 %v4828, 92
  %v4838 = vpop.permute.xlu0 %4837
  %4839 = vrot.lane.b32.xlu0 %v4829, 92
  %v4840 = vpop.permute.xlu0 %4839
  %4841 = vrot.lane.b32.xlu0 %v4830, 92
  %v4842 = vpop.permute.xlu0 %4841
  %v4843 = vsel %vm2350, %v4840, %v4842
  %v4844 = vsel %vm2350, %v4838, %v4840
  %v4845 = vsel %vm2350, %v4836, %v4838
  %v4846 = vsel %vm2350, %v4834, %v4836
  %v4847 = vsel %vm2350, %v4832, %v4834
  %v4848 = vsel %vm2350, %v4842, %v4832
  %4849 = vrot.lane.b32.xlu0 %v4825, 36
  %v4850 = vpop.permute.xlu0 %4849
  %4851 = vrot.lane.b32.xlu0 %v4826, 36
  %v4852 = vpop.permute.xlu0 %4851
  %4853 = vrot.lane.b32.xlu0 %v4827, 36
  %v4854 = vpop.permute.xlu0 %4853
  %4855 = vrot.lane.b32.xlu0 %v4828, 36
  %v4856 = vpop.permute.xlu0 %4855
  %4857 = vrot.lane.b32.xlu0 %v4829, 36
  %v4858 = vpop.permute.xlu0 %4857
  %4859 = vrot.lane.b32.xlu0 %v4830, 36
  %v4860 = vpop.permute.xlu0 %4859
  %v4861 = vsel %vm2369, %v4858, %v4860
  %v4862 = vsel %vm2369, %v4856, %v4858
  %v4863 = vsel %vm2369, %v4854, %v4856
  %v4864 = vsel %vm2369, %v4852, %v4854
  %v4865 = vsel %vm2369, %v4850, %v4852
  %v4866 = vsel %vm2369, %v4860, %v4850
  %v4867 = vsel %vm2401, %v4866, %v4825
  %v4868 = vsel %vm2402, %v4865, %v4826
  %v4869 = vsel %vm2403, %v4864, %v4827
  %v4870 = vsel %vm2404, %v4863, %v4828
  %v4871 = vsel %vm2405, %v4862, %v4829
  %v4872 = vsel %vm2406, %v4861, %v4830
  %v4873 = vsel %vm2438, %v4847, %v4867
  %v4874 = vsel %vm2439, %v4846, %v4868
  %v4875 = vsel %vm2440, %v4845, %v4869
  %v4876 = vsel %vm2441, %v4844, %v4870
  %v4877 = vsel %vm2442, %v4843, %v4871
  %v4878 = vsel %vm2443, %v4848, %v4872
  %4879 = vrot.lane.b32.xlu0 %v4873, 126
  %v4880 = vpop.permute.xlu0 %4879
  %4881 = vrot.lane.b32.xlu0 %v4874, 126
  %v4882 = vpop.permute.xlu0 %4881
  %4883 = vrot.lane.b32.xlu0 %v4875, 126
  %v4884 = vpop.permute.xlu0 %4883
  %4885 = vrot.lane.b32.xlu0 %v4876, 126
  %v4886 = vpop.permute.xlu0 %4885
  %4887 = vrot.lane.b32.xlu0 %v4877, 126
  %v4888 = vpop.permute.xlu0 %4887
  %4889 = vrot.lane.b32.xlu0 %v4878, 126
  %v4890 = vpop.permute.xlu0 %4889
  %v4891 = vsel %vm2462, %v4888, %v4890
  %v4892 = vsel %vm2462, %v4886, %v4888
  %v4893 = vsel %vm2462, %v4884, %v4886
  %v4894 = vsel %vm2462, %v4882, %v4884
  %v4895 = vsel %vm2462, %v4880, %v4882
  %v4896 = vsel %vm2462, %v4890, %v4880
  %4897 = vrot.lane.b32.xlu0 %v4873, 2
  %v4898 = vpop.permute.xlu0 %4897
  %4899 = vrot.lane.b32.xlu0 %v4874, 2
  %v4900 = vpop.permute.xlu0 %4899
  %4901 = vrot.lane.b32.xlu0 %v4875, 2
  %v4902 = vpop.permute.xlu0 %4901
  %4903 = vrot.lane.b32.xlu0 %v4876, 2
  %v4904 = vpop.permute.xlu0 %4903
  %4905 = vrot.lane.b32.xlu0 %v4877, 2
  %v4906 = vpop.permute.xlu0 %4905
  %4907 = vrot.lane.b32.xlu0 %v4878, 2
  %v4908 = vpop.permute.xlu0 %4907
  %v4909 = vsel %vm2481, %v4906, %v4908
  %v4910 = vsel %vm2481, %v4904, %v4906
  %v4911 = vsel %vm2481, %v4902, %v4904
  %v4912 = vsel %vm2481, %v4900, %v4902
  %v4913 = vsel %vm2481, %v4898, %v4900
  %v4914 = vsel %vm2481, %v4908, %v4898
  %v4915 = vsel %vm2513, %v4914, %v4873
  %v4916 = vsel %vm2514, %v4913, %v4874
  %v4917 = vsel %vm2515, %v4912, %v4875
  %v4918 = vsel %vm2516, %v4911, %v4876
  %v4919 = vsel %vm2517, %v4910, %v4877
  %v4920 = vsel %vm2518, %v4909, %v4878
  %v4921 = vsel %vm2550, %v4895, %v4915
  %v4922 = vsel %vm2551, %v4894, %v4916
  %v4923 = vsel %vm2552, %v4893, %v4917
  %v4924 = vsel %vm2553, %v4892, %v4918
  %v4925 = vsel %vm2554, %v4891, %v4919
  %v4926 = vsel %vm2555, %v4896, %v4920
  %v4927 = vsel %vm2587, %v4921, 0.0
  %v4928 = vsel %vm2588, %v4922, 0.0
  %v4929 = vsel %vm2589, %v4923, 0.0
  %v4930 = vsel %vm2590, %v4924, 0.0
  %v4931 = vsel %vm2591, %v4925, 0.0
  %v4932 = vsel %vm2592, %v4926, 0.0
  %s4933 = scalar_lea.vmem %s2, 72
  %v4934 = vld [vmem:[%s4933] sm:$0xff]
  %4935 = vrot.lane.b32.xlu0 %v4927, 19
  %v4936 = vpop.permute.xlu0 %4935
  %4937 = vrot.lane.b32.xlu0 %v4928, 19
  %v4938 = vpop.permute.xlu0 %4937
  %4939 = vrot.lane.b32.xlu0 %v4929, 19
  %v4940 = vpop.permute.xlu0 %4939
  %4941 = vrot.lane.b32.xlu0 %v4930, 19
  %v4942 = vpop.permute.xlu0 %4941
  %4943 = vrot.lane.b32.xlu0 %v4931, 19
  %v4944 = vpop.permute.xlu0 %4943
  %4945 = vrot.lane.b32.xlu0 %v4932, 19
  %v4946 = vpop.permute.xlu0 %4945
  %v4947 = vsel %vm79, %v4944, %v4946
  %v4948 = vsel %vm79, %v4942, %v4944
  %v4949 = vsel %vm79, %v4940, %v4942
  %v4950 = vsel %vm79, %v4938, %v4940
  %v4951 = vsel %vm79, %v4936, %v4938
  %v4952 = vsel %vm79, %v4946, %v4936
  %s4953 = scalar_lea.vmem %s2, 80
  %v4954 = vld [vmem:[%s4953] sm:$0xff]
  %4955 = vrot.lane.b32.xlu0 %v4927, 18
  %v4956 = vpop.permute.xlu0 %4955
  %4957 = vrot.lane.b32.xlu0 %v4928, 18
  %v4958 = vpop.permute.xlu0 %4957
  %4959 = vrot.lane.b32.xlu0 %v4929, 18
  %v4960 = vpop.permute.xlu0 %4959
  %4961 = vrot.lane.b32.xlu0 %v4930, 18
  %v4962 = vpop.permute.xlu0 %4961
  %4963 = vrot.lane.b32.xlu0 %v4931, 18
  %v4964 = vpop.permute.xlu0 %4963
  %4965 = vrot.lane.b32.xlu0 %v4932, 18
  %v4966 = vpop.permute.xlu0 %4965
  %v4967 = vsel %vm100, %v4964, %v4966
  %v4968 = vsel %vm100, %v4962, %v4964
  %v4969 = vsel %vm100, %v4960, %v4962
  %v4970 = vsel %vm100, %v4958, %v4960
  %v4971 = vsel %vm100, %v4956, %v4958
  %v4972 = vsel %vm100, %v4966, %v4956
  %v4974 = vsel %vm107, %v4954, 0
  %4976 = vmatprep.subr.mxu0 %v4971
  %4977 = vmatpush1.msra.mxu0 %v4972
  %4978 = vmatprep.subr.mxu0 0.0
  %4979 = vmatpush1.msra.mxu0 0.0
  %4980 = vmatprep.subr.mxu0 0.0
  %4981 = vmatpush1.msra.mxu0 0.0
  %4982 = vmatprep.subr.mxu0 0.0
  %4983 = vmatpush1.msra.mxu0 0.0
  %4984 = vmatprep.subr.mxu0 0.0
  %4985 = vmatpush1.msra.mxu0 0.0
  %4986 = vmatprep.subr.mxu0 0.0
  %4987 = vmatpush1.msra.mxu0 0.0
  %4988 = vmatprep.subr.mxu0 0.0
  %4989 = vmatpush1.msra.mxu0 0.0
  %4990 = vmatprep.subr.mxu0 0.0
  %4991 = vmatpush1.msra.mxu0 0.0
  %4992 = vmatprep.subr.mxu0 0.0
  %4993 = vmatpush1.msra.mxu0 0.0
  %4994 = vmatprep.subr.mxu0 0.0
  %4995 = vmatpush1.msra.mxu0 0.0
  %4996 = vmatprep.subr.mxu0 0.0
  %4997 = vmatpush1.msra.mxu0 0.0
  %4998 = vmatprep.subr.mxu0 0.0
  %4999 = vmatpush1.msra.mxu0 0.0
  %5000 = vmatprep.subr.mxu0 0.0
  %5001 = vmatpush1.msra.mxu0 0.0
  %5002 = vmatprep.subr.mxu0 0.0
  %5003 = vmatpush1.msra.mxu0 0.0
  %5004 = vmatprep.subr.mxu0 0.0
  %5005 = vmatpush1.msra.mxu0 0.0
  %5006 = vmatprep.subr.mxu0 0.0
  %5007 = vmatpush1.msra.mxu0 0.0
  %5008 = vmatprep.subr.mxu0 0.0
  %5009 = vmatpush1.msra.mxu0 0.0
  %5010 = vmatprep.subr.mxu0 0.0
  %5011 = vmatpush1.msra.mxu0 0.0
  %5012 = vmatprep.subr.mxu0 0.0
  %5013 = vmatpush1.msra.mxu0 0.0
  %5014 = vmatprep.subr.mxu0 0.0
  %5015 = vmatpush1.msra.mxu0 0.0
  %5016 = vmatprep.subr.mxu0 0.0
  %5017 = vmatpush1.msra.mxu0 0.0
  %5018 = vmatprep.subr.mxu0 0.0
  %5019 = vmatpush1.msra.mxu0 0.0
  %5020 = vmatprep.subr.mxu0 0.0
  %5021 = vmatpush1.msra.mxu0 0.0
  %5022 = vmatprep.subr.mxu0 0.0
  %5023 = vmatpush1.msra.mxu0 0.0
  %5024 = vmatprep.subr.mxu0 0.0
  %5025 = vmatpush1.msra.mxu0 0.0
  %5026 = vmatprep.subr.mxu0 0.0
  %5027 = vmatpush1.msra.mxu0 0.0
  %5028 = vmatprep.subr.mxu0 0.0
  %5029 = vmatpush1.msra.mxu0 0.0
  %5030 = vmatprep.subr.mxu0 0.0
  %5031 = vmatpush1.msra.mxu0 0.0
  %5032 = vmatprep.subr.mxu0 0.0
  %5033 = vmatpush1.msra.mxu0 0.0
  %5034 = vmatprep.subr.mxu0 0.0
  %5035 = vmatpush1.msra.mxu0 0.0
  %5036 = vmatprep.subr.mxu0 0.0
  %5037 = vmatpush1.msra.mxu0 0.0
  %5038 = vmatprep.subr.mxu0 0.0
  %5039 = vmatpush1.msra.mxu0 0.0
  %5040 = vmatprep.mubr.f32.mxu0 0.0
  %5041 = vmatmul.mubr.f32.gmra.mrb[0].mxu0 %v4974
  %v5042 = vpop.f32.mrb[0].mxu0
  %v5043 = vadd.f32 0.0, %v5042
  %v5044 = vpop.f32.mrb[0].mxu0
  %v5045 = vadd.f32 0.0, %v5044
  %5046 = vdwg.mxu0
  %5047 = vmatprep.subr.mxu0 %v4969
  %5048 = vmatpush1.msra.mxu0 %v4970
  %5049 = vmatprep.subr.mxu0 0.0
  %5050 = vmatpush1.msra.mxu0 0.0
  %5051 = vmatprep.subr.mxu0 0.0
  %5052 = vmatpush1.msra.mxu0 0.0
  %5053 = vmatprep.subr.mxu0 0.0
  %5054 = vmatpush1.msra.mxu0 0.0
  %5055 = vmatprep.subr.mxu0 0.0
  %5056 = vmatpush1.msra.mxu0 0.0
  %5057 = vmatprep.subr.mxu0 0.0
  %5058 = vmatpush1.msra.mxu0 0.0
  %5059 = vmatprep.subr.mxu0 0.0
  %5060 = vmatpush1.msra.mxu0 0.0
  %5061 = vmatprep.subr.mxu0 0.0
  %5062 = vmatpush1.msra.mxu0 0.0
  %5063 = vmatprep.subr.mxu0 0.0
  %5064 = vmatpush1.msra.mxu0 0.0
  %5065 = vmatprep.subr.mxu0 0.0
  %5066 = vmatpush1.msra.mxu0 0.0
  %5067 = vmatprep.subr.mxu0 0.0
  %5068 = vmatpush1.msra.mxu0 0.0
  %5069 = vmatprep.subr.mxu0 0.0
  %5070 = vmatpush1.msra.mxu0 0.0
  %5071 = vmatprep.subr.mxu0 0.0
  %5072 = vmatpush1.msra.mxu0 0.0
  %5073 = vmatprep.subr.mxu0 0.0
  %5074 = vmatpush1.msra.mxu0 0.0
  %5075 = vmatprep.subr.mxu0 0.0
  %5076 = vmatpush1.msra.mxu0 0.0
  %5077 = vmatprep.subr.mxu0 0.0
  %5078 = vmatpush1.msra.mxu0 0.0
  %5079 = vmatprep.subr.mxu0 0.0
  %5080 = vmatpush1.msra.mxu0 0.0
  %5081 = vmatprep.subr.mxu0 0.0
  %5082 = vmatpush1.msra.mxu0 0.0
  %5083 = vmatprep.subr.mxu0 0.0
  %5084 = vmatpush1.msra.mxu0 0.0
  %5085 = vmatprep.subr.mxu0 0.0
  %5086 = vmatpush1.msra.mxu0 0.0
  %5087 = vmatprep.subr.mxu0 0.0
  %5088 = vmatpush1.msra.mxu0 0.0
  %5089 = vmatprep.subr.mxu0 0.0
  %5090 = vmatpush1.msra.mxu0 0.0
  %5091 = vmatprep.subr.mxu0 0.0
  %5092 = vmatpush1.msra.mxu0 0.0
  %5093 = vmatprep.subr.mxu0 0.0
  %5094 = vmatpush1.msra.mxu0 0.0
  %5095 = vmatprep.subr.mxu0 0.0
  %5096 = vmatpush1.msra.mxu0 0.0
  %5097 = vmatprep.subr.mxu0 0.0
  %5098 = vmatpush1.msra.mxu0 0.0
  %5099 = vmatprep.subr.mxu0 0.0
  %5100 = vmatpush1.msra.mxu0 0.0
  %5101 = vmatprep.subr.mxu0 0.0
  %5102 = vmatpush1.msra.mxu0 0.0
  %5103 = vmatprep.subr.mxu0 0.0
  %5104 = vmatpush1.msra.mxu0 0.0
  %5105 = vmatprep.subr.mxu0 0.0
  %5106 = vmatpush1.msra.mxu0 0.0
  %5107 = vmatprep.subr.mxu0 0.0
  %5108 = vmatpush1.msra.mxu0 0.0
  %5109 = vmatprep.subr.mxu0 0.0
  %5110 = vmatpush1.msra.mxu0 0.0
  %5111 = vmatprep.mubr.f32.mxu0 0.0
  %5112 = vmatmul.mubr.f32.gmra.mrb[0].mxu0 %v4974
  %v5113 = vpop.f32.mrb[0].mxu0
  %v5114 = vadd.f32 0.0, %v5113
  %v5115 = vpop.f32.mrb[0].mxu0
  %v5116 = vadd.f32 0.0, %v5115
  %5117 = vdwg.mxu0
  %5118 = vmatprep.subr.mxu0 %v4967
  %5119 = vmatpush1.msra.mxu0 %v4968
  %5120 = vmatprep.subr.mxu0 0.0
  %5121 = vmatpush1.msra.mxu0 0.0
  %5122 = vmatprep.subr.mxu0 0.0
  %5123 = vmatpush1.msra.mxu0 0.0
  %5124 = vmatprep.subr.mxu0 0.0
  %5125 = vmatpush1.msra.mxu0 0.0
  %5126 = vmatprep.subr.mxu0 0.0
  %5127 = vmatpush1.msra.mxu0 0.0
  %5128 = vmatprep.subr.mxu0 0.0
  %5129 = vmatpush1.msra.mxu0 0.0
  %5130 = vmatprep.subr.mxu0 0.0
  %5131 = vmatpush1.msra.mxu0 0.0
  %5132 = vmatprep.subr.mxu0 0.0
  %5133 = vmatpush1.msra.mxu0 0.0
  %5134 = vmatprep.subr.mxu0 0.0
  %5135 = vmatpush1.msra.mxu0 0.0
  %5136 = vmatprep.subr.mxu0 0.0
  %5137 = vmatpush1.msra.mxu0 0.0
  %5138 = vmatprep.subr.mxu0 0.0
  %5139 = vmatpush1.msra.mxu0 0.0
  %5140 = vmatprep.subr.mxu0 0.0
  %5141 = vmatpush1.msra.mxu0 0.0
  %5142 = vmatprep.subr.mxu0 0.0
  %5143 = vmatpush1.msra.mxu0 0.0
  %5144 = vmatprep.subr.mxu0 0.0
  %5145 = vmatpush1.msra.mxu0 0.0
  %5146 = vmatprep.subr.mxu0 0.0
  %5147 = vmatpush1.msra.mxu0 0.0
  %5148 = vmatprep.subr.mxu0 0.0
  %5149 = vmatpush1.msra.mxu0 0.0
  %5150 = vmatprep.subr.mxu0 0.0
  %5151 = vmatpush1.msra.mxu0 0.0
  %5152 = vmatprep.subr.mxu0 0.0
  %5153 = vmatpush1.msra.mxu0 0.0
  %5154 = vmatprep.subr.mxu0 0.0
  %5155 = vmatpush1.msra.mxu0 0.0
  %5156 = vmatprep.subr.mxu0 0.0
  %5157 = vmatpush1.msra.mxu0 0.0
  %5158 = vmatprep.subr.mxu0 0.0
  %5159 = vmatpush1.msra.mxu0 0.0
  %5160 = vmatprep.subr.mxu0 0.0
  %5161 = vmatpush1.msra.mxu0 0.0
  %5162 = vmatprep.subr.mxu0 0.0
  %5163 = vmatpush1.msra.mxu0 0.0
  %5164 = vmatprep.subr.mxu0 0.0
  %5165 = vmatpush1.msra.mxu0 0.0
  %5166 = vmatprep.subr.mxu0 0.0
  %5167 = vmatpush1.msra.mxu0 0.0
  %5168 = vmatprep.subr.mxu0 0.0
  %5169 = vmatpush1.msra.mxu0 0.0
  %5170 = vmatprep.subr.mxu0 0.0
  %5171 = vmatpush1.msra.mxu0 0.0
  %5172 = vmatprep.subr.mxu0 0.0
  %5173 = vmatpush1.msra.mxu0 0.0
  %5174 = vmatprep.subr.mxu0 0.0
  %5175 = vmatpush1.msra.mxu0 0.0
  %5176 = vmatprep.subr.mxu0 0.0
  %5177 = vmatpush1.msra.mxu0 0.0
  %5178 = vmatprep.subr.mxu0 0.0
  %5179 = vmatpush1.msra.mxu0 0.0
  %5180 = vmatprep.subr.mxu0 0.0
  %5181 = vmatpush1.msra.mxu0 0.0
  %5182 = vmatprep.mubr.f32.mxu0 0.0
  %5183 = vmatmul.mubr.f32.gmra.mrb[0].mxu0 %v4974
  %v5184 = vpop.f32.mrb[0].mxu0
  %v5185 = vadd.f32 0.0, %v5184
  %v5186 = vpop.f32.mrb[0].mxu0
  %v5187 = vadd.f32 0.0, %v5186
  %5188 = vdwg.mxu0
  %v5190 = vsel %vm107, %v4934, 0
  %5192 = vmatprep.subr.mxu0 %v4951
  %5193 = vmatpush1.msra.mxu0 %v4952
  %5194 = vmatprep.subr.mxu0 0.0
  %5195 = vmatpush1.msra.mxu0 0.0
  %5196 = vmatprep.subr.mxu0 0.0
  %5197 = vmatpush1.msra.mxu0 0.0
  %5198 = vmatprep.subr.mxu0 0.0
  %5199 = vmatpush1.msra.mxu0 0.0
  %5200 = vmatprep.subr.mxu0 0.0
  %5201 = vmatpush1.msra.mxu0 0.0
  %5202 = vmatprep.subr.mxu0 0.0
  %5203 = vmatpush1.msra.mxu0 0.0
  %5204 = vmatprep.subr.mxu0 0.0
  %5205 = vmatpush1.msra.mxu0 0.0
  %5206 = vmatprep.subr.mxu0 0.0
  %5207 = vmatpush1.msra.mxu0 0.0
  %5208 = vmatprep.subr.mxu0 0.0
  %5209 = vmatpush1.msra.mxu0 0.0
  %5210 = vmatprep.subr.mxu0 0.0
  %5211 = vmatpush1.msra.mxu0 0.0
  %5212 = vmatprep.subr.mxu0 0.0
  %5213 = vmatpush1.msra.mxu0 0.0
  %5214 = vmatprep.subr.mxu0 0.0
  %5215 = vmatpush1.msra.mxu0 0.0
  %5216 = vmatprep.subr.mxu0 0.0
  %5217 = vmatpush1.msra.mxu0 0.0
  %5218 = vmatprep.subr.mxu0 0.0
  %5219 = vmatpush1.msra.mxu0 0.0
  %5220 = vmatprep.subr.mxu0 0.0
  %5221 = vmatpush1.msra.mxu0 0.0
  %5222 = vmatprep.subr.mxu0 0.0
  %5223 = vmatpush1.msra.mxu0 0.0
  %5224 = vmatprep.subr.mxu0 0.0
  %5225 = vmatpush1.msra.mxu0 0.0
  %5226 = vmatprep.subr.mxu0 0.0
  %5227 = vmatpush1.msra.mxu0 0.0
  %5228 = vmatprep.subr.mxu0 0.0
  %5229 = vmatpush1.msra.mxu0 0.0
  %5230 = vmatprep.subr.mxu0 0.0
  %5231 = vmatpush1.msra.mxu0 0.0
  %5232 = vmatprep.subr.mxu0 0.0
  %5233 = vmatpush1.msra.mxu0 0.0
  %5234 = vmatprep.subr.mxu0 0.0
  %5235 = vmatpush1.msra.mxu0 0.0
  %5236 = vmatprep.subr.mxu0 0.0
  %5237 = vmatpush1.msra.mxu0 0.0
  %5238 = vmatprep.subr.mxu0 0.0
  %5239 = vmatpush1.msra.mxu0 0.0
  %5240 = vmatprep.subr.mxu0 0.0
  %5241 = vmatpush1.msra.mxu0 0.0
  %5242 = vmatprep.subr.mxu0 0.0
  %5243 = vmatpush1.msra.mxu0 0.0
  %5244 = vmatprep.subr.mxu0 0.0
  %5245 = vmatpush1.msra.mxu0 0.0
  %5246 = vmatprep.subr.mxu0 0.0
  %5247 = vmatpush1.msra.mxu0 0.0
  %5248 = vmatprep.subr.mxu0 0.0
  %5249 = vmatpush1.msra.mxu0 0.0
  %5250 = vmatprep.subr.mxu0 0.0
  %5251 = vmatpush1.msra.mxu0 0.0
  %5252 = vmatprep.subr.mxu0 0.0
  %5253 = vmatpush1.msra.mxu0 0.0
  %5254 = vmatprep.subr.mxu0 0.0
  %5255 = vmatpush1.msra.mxu0 0.0
  %5256 = vmatprep.mubr.f32.mxu0 0.0
  %5257 = vmatmul.mubr.f32.gmra.mrb[0].mxu0 %v5190
  %v5258 = vpop.f32.mrb[0].mxu0
  %v5259 = vadd.f32 %v5043, %v5258
  %v5260 = vpop.f32.mrb[0].mxu0
  %v5261 = vadd.f32 %v5045, %v5260
  %5262 = vdwg.mxu0
  %5263 = vmatprep.subr.mxu0 %v4949
  %5264 = vmatpush1.msra.mxu0 %v4950
  %5265 = vmatprep.subr.mxu0 0.0
  %5266 = vmatpush1.msra.mxu0 0.0
  %5267 = vmatprep.subr.mxu0 0.0
  %5268 = vmatpush1.msra.mxu0 0.0
  %5269 = vmatprep.subr.mxu0 0.0
  %5270 = vmatpush1.msra.mxu0 0.0
  %5271 = vmatprep.subr.mxu0 0.0
  %5272 = vmatpush1.msra.mxu0 0.0
  %5273 = vmatprep.subr.mxu0 0.0
  %5274 = vmatpush1.msra.mxu0 0.0
  %5275 = vmatprep.subr.mxu0 0.0
  %5276 = vmatpush1.msra.mxu0 0.0
  %5277 = vmatprep.subr.mxu0 0.0
  %5278 = vmatpush1.msra.mxu0 0.0
  %5279 = vmatprep.subr.mxu0 0.0
  %5280 = vmatpush1.msra.mxu0 0.0
  %5281 = vmatprep.subr.mxu0 0.0
  %5282 = vmatpush1.msra.mxu0 0.0
  %5283 = vmatprep.subr.mxu0 0.0
  %5284 = vmatpush1.msra.mxu0 0.0
  %5285 = vmatprep.subr.mxu0 0.0
  %5286 = vmatpush1.msra.mxu0 0.0
  %5287 = vmatprep.subr.mxu0 0.0
  %5288 = vmatpush1.msra.mxu0 0.0
  %5289 = vmatprep.subr.mxu0 0.0
  %5290 = vmatpush1.msra.mxu0 0.0
  %5291 = vmatprep.subr.mxu0 0.0
  %5292 = vmatpush1.msra.mxu0 0.0
  %5293 = vmatprep.subr.mxu0 0.0
  %5294 = vmatpush1.msra.mxu0 0.0
  %5295 = vmatprep.subr.mxu0 0.0
  %5296 = vmatpush1.msra.mxu0 0.0
  %5297 = vmatprep.subr.mxu0 0.0
  %5298 = vmatpush1.msra.mxu0 0.0
  %5299 = vmatprep.subr.mxu0 0.0
  %5300 = vmatpush1.msra.mxu0 0.0
  %5301 = vmatprep.subr.mxu0 0.0
  %5302 = vmatpush1.msra.mxu0 0.0
  %5303 = vmatprep.subr.mxu0 0.0
  %5304 = vmatpush1.msra.mxu0 0.0
  %5305 = vmatprep.subr.mxu0 0.0
  %5306 = vmatpush1.msra.mxu0 0.0
  %5307 = vmatprep.subr.mxu0 0.0
  %5308 = vmatpush1.msra.mxu0 0.0
  %5309 = vmatprep.subr.mxu0 0.0
  %5310 = vmatpush1.msra.mxu0 0.0
  %5311 = vmatprep.subr.mxu0 0.0
  %5312 = vmatpush1.msra.mxu0 0.0
  %5313 = vmatprep.subr.mxu0 0.0
  %5314 = vmatpush1.msra.mxu0 0.0
  %5315 = vmatprep.subr.mxu0 0.0
  %5316 = vmatpush1.msra.mxu0 0.0
  %5317 = vmatprep.subr.mxu0 0.0
  %5318 = vmatpush1.msra.mxu0 0.0
  %5319 = vmatprep.subr.mxu0 0.0
  %5320 = vmatpush1.msra.mxu0 0.0
  %5321 = vmatprep.subr.mxu0 0.0
  %5322 = vmatpush1.msra.mxu0 0.0
  %5323 = vmatprep.subr.mxu0 0.0
  %5324 = vmatpush1.msra.mxu0 0.0
  %5325 = vmatprep.subr.mxu0 0.0
  %5326 = vmatpush1.msra.mxu0 0.0
  %5327 = vmatprep.mubr.f32.mxu0 0.0
  %5328 = vmatmul.mubr.f32.gmra.mrb[0].mxu0 %v5190
  %v5329 = vpop.f32.mrb[0].mxu0
  %v5330 = vadd.f32 %v5114, %v5329
  %v5331 = vpop.f32.mrb[0].mxu0
  %v5332 = vadd.f32 %v5116, %v5331
  %5333 = vdwg.mxu0
  %5334 = vmatprep.subr.mxu0 %v4947
  %5335 = vmatpush1.msra.mxu0 %v4948
  %5336 = vmatprep.subr.mxu0 0.0
  %5337 = vmatpush1.msra.mxu0 0.0
  %5338 = vmatprep.subr.mxu0 0.0
  %5339 = vmatpush1.msra.mxu0 0.0
  %5340 = vmatprep.subr.mxu0 0.0
  %5341 = vmatpush1.msra.mxu0 0.0
  %5342 = vmatprep.subr.mxu0 0.0
  %5343 = vmatpush1.msra.mxu0 0.0
  %5344 = vmatprep.subr.mxu0 0.0
  %5345 = vmatpush1.msra.mxu0 0.0
  %5346 = vmatprep.subr.mxu0 0.0
  %5347 = vmatpush1.msra.mxu0 0.0
  %5348 = vmatprep.subr.mxu0 0.0
  %5349 = vmatpush1.msra.mxu0 0.0
  %5350 = vmatprep.subr.mxu0 0.0
  %5351 = vmatpush1.msra.mxu0 0.0
  %5352 = vmatprep.subr.mxu0 0.0
  %5353 = vmatpush1.msra.mxu0 0.0
  %5354 = vmatprep.subr.mxu0 0.0
  %5355 = vmatpush1.msra.mxu0 0.0
  %5356 = vmatprep.subr.mxu0 0.0
  %5357 = vmatpush1.msra.mxu0 0.0
  %5358 = vmatprep.subr.mxu0 0.0
  %5359 = vmatpush1.msra.mxu0 0.0
  %5360 = vmatprep.subr.mxu0 0.0
  %5361 = vmatpush1.msra.mxu0 0.0
  %5362 = vmatprep.subr.mxu0 0.0
  %5363 = vmatpush1.msra.mxu0 0.0
  %5364 = vmatprep.subr.mxu0 0.0
  %5365 = vmatpush1.msra.mxu0 0.0
  %5366 = vmatprep.subr.mxu0 0.0
  %5367 = vmatpush1.msra.mxu0 0.0
  %5368 = vmatprep.subr.mxu0 0.0
  %5369 = vmatpush1.msra.mxu0 0.0
  %5370 = vmatprep.subr.mxu0 0.0
  %5371 = vmatpush1.msra.mxu0 0.0
  %5372 = vmatprep.subr.mxu0 0.0
  %5373 = vmatpush1.msra.mxu0 0.0
  %5374 = vmatprep.subr.mxu0 0.0
  %5375 = vmatpush1.msra.mxu0 0.0
  %5376 = vmatprep.subr.mxu0 0.0
  %5377 = vmatpush1.msra.mxu0 0.0
  %5378 = vmatprep.subr.mxu0 0.0
  %5379 = vmatpush1.msra.mxu0 0.0
  %5380 = vmatprep.subr.mxu0 0.0
  %5381 = vmatpush1.msra.mxu0 0.0
  %5382 = vmatprep.subr.mxu0 0.0
  %5383 = vmatpush1.msra.mxu0 0.0
  %5384 = vmatprep.subr.mxu0 0.0
  %5385 = vmatpush1.msra.mxu0 0.0
  %5386 = vmatprep.subr.mxu0 0.0
  %5387 = vmatpush1.msra.mxu0 0.0
  %5388 = vmatprep.subr.mxu0 0.0
  %5389 = vmatpush1.msra.mxu0 0.0
  %5390 = vmatprep.subr.mxu0 0.0
  %5391 = vmatpush1.msra.mxu0 0.0
  %5392 = vmatprep.subr.mxu0 0.0
  %5393 = vmatpush1.msra.mxu0 0.0
  %5394 = vmatprep.subr.mxu0 0.0
  %5395 = vmatpush1.msra.mxu0 0.0
  %5396 = vmatprep.subr.mxu0 0.0
  %5397 = vmatpush1.msra.mxu0 0.0
  %5398 = vmatprep.mubr.f32.mxu0 0.0
  %5399 = vmatmul.mubr.f32.gmra.mrb[0].mxu0 %v5190
  %v5400 = vpop.f32.mrb[0].mxu0
  %v5401 = vadd.f32 %v5185, %v5400
  %v5402 = vpop.f32.mrb[0].mxu0
  %v5403 = vadd.f32 %v5187, %v5402
  %5404 = vdwg.mxu0
  %s5405 = scalar_lea.vmem %s2, 88
  %v5406 = vld [vmem:[%s5405] sm:$0xff]
  %5407 = vrot.lane.b32.xlu0 %v4927, 17
  %v5408 = vpop.permute.xlu0 %5407
  %5409 = vrot.lane.b32.xlu0 %v4928, 17
  %v5410 = vpop.permute.xlu0 %5409
  %5411 = vrot.lane.b32.xlu0 %v4929, 17
  %v5412 = vpop.permute.xlu0 %5411
  %5413 = vrot.lane.b32.xlu0 %v4930, 17
  %v5414 = vpop.permute.xlu0 %5413
  %5415 = vrot.lane.b32.xlu0 %v4931, 17
  %v5416 = vpop.permute.xlu0 %5415
  %5417 = vrot.lane.b32.xlu0 %v4932, 17
  %v5418 = vpop.permute.xlu0 %5417
  %v5419 = vsel %vm554, %v5416, %v5418
  %v5420 = vsel %vm554, %v5414, %v5416
  %v5421 = vsel %vm554, %v5412, %v5414
  %v5422 = vsel %vm554, %v5410, %v5412
  %v5423 = vsel %vm554, %v5408, %v5410
  %v5424 = vsel %vm554, %v5418, %v5408
  %v5426 = vsel %vm107, %v5406, 0
  %5428 = vmatprep.subr.mxu0 %v5423
  %5429 = vmatpush1.msra.mxu0 %v5424
  %5430 = vmatprep.subr.mxu0 0.0
  %5431 = vmatpush1.msra.mxu0 0.0
  %5432 = vmatprep.subr.mxu0 0.0
  %5433 = vmatpush1.msra.mxu0 0.0
  %5434 = vmatprep.subr.mxu0 0.0
  %5435 = vmatpush1.msra.mxu0 0.0
  %5436 = vmatprep.subr.mxu0 0.0
  %5437 = vmatpush1.msra.mxu0 0.0
  %5438 = vmatprep.subr.mxu0 0.0
  %5439 = vmatpush1.msra.mxu0 0.0
  %5440 = vmatprep.subr.mxu0 0.0
  %5441 = vmatpush1.msra.mxu0 0.0
  %5442 = vmatprep.subr.mxu0 0.0
  %5443 = vmatpush1.msra.mxu0 0.0
  %5444 = vmatprep.subr.mxu0 0.0
  %5445 = vmatpush1.msra.mxu0 0.0
  %5446 = vmatprep.subr.mxu0 0.0
  %5447 = vmatpush1.msra.mxu0 0.0
  %5448 = vmatprep.subr.mxu0 0.0
  %5449 = vmatpush1.msra.mxu0 0.0
  %5450 = vmatprep.subr.mxu0 0.0
  %5451 = vmatpush1.msra.mxu0 0.0
  %5452 = vmatprep.subr.mxu0 0.0
  %5453 = vmatpush1.msra.mxu0 0.0
  %5454 = vmatprep.subr.mxu0 0.0
  %5455 = vmatpush1.msra.mxu0 0.0
  %5456 = vmatprep.subr.mxu0 0.0
  %5457 = vmatpush1.msra.mxu0 0.0
  %5458 = vmatprep.subr.mxu0 0.0
  %5459 = vmatpush1.msra.mxu0 0.0
  %5460 = vmatprep.subr.mxu0 0.0
  %5461 = vmatpush1.msra.mxu0 0.0
  %5462 = vmatprep.subr.mxu0 0.0
  %5463 = vmatpush1.msra.mxu0 0.0
  %5464 = vmatprep.subr.mxu0 0.0
  %5465 = vmatpush1.msra.mxu0 0.0
  %5466 = vmatprep.subr.mxu0 0.0
  %5467 = vmatpush1.msra.mxu0 0.0
  %5468 = vmatprep.subr.mxu0 0.0
  %5469 = vmatpush1.msra.mxu0 0.0
  %5470 = vmatprep.subr.mxu0 0.0
  %5471 = vmatpush1.msra.mxu0 0.0
  %5472 = vmatprep.subr.mxu0 0.0
  %5473 = vmatpush1.msra.mxu0 0.0
  %5474 = vmatprep.subr.mxu0 0.0
  %5475 = vmatpush1.msra.mxu0 0.0
  %5476 = vmatprep.subr.mxu0 0.0
  %5477 = vmatpush1.msra.mxu0 0.0
  %5478 = vmatprep.subr.mxu0 0.0
  %5479 = vmatpush1.msra.mxu0 0.0
  %5480 = vmatprep.subr.mxu0 0.0
  %5481 = vmatpush1.msra.mxu0 0.0
  %5482 = vmatprep.subr.mxu0 0.0
  %5483 = vmatpush1.msra.mxu0 0.0
  %5484 = vmatprep.subr.mxu0 0.0
  %5485 = vmatpush1.msra.mxu0 0.0
  %5486 = vmatprep.subr.mxu0 0.0
  %5487 = vmatpush1.msra.mxu0 0.0
  %5488 = vmatprep.subr.mxu0 0.0
  %5489 = vmatpush1.msra.mxu0 0.0
  %5490 = vmatprep.subr.mxu0 0.0
  %5491 = vmatpush1.msra.mxu0 0.0
  %5492 = vmatprep.mubr.f32.mxu0 0.0
  %5493 = vmatmul.mubr.f32.gmra.mrb[0].mxu0 %v5426
  %v5494 = vpop.f32.mrb[0].mxu0
  %v5495 = vadd.f32 0.0, %v5494
  %v5496 = vpop.f32.mrb[0].mxu0
  %v5497 = vadd.f32 0.0, %v5496
  %5498 = vdwg.mxu0
  %5499 = vmatprep.subr.mxu0 %v5421
  %5500 = vmatpush1.msra.mxu0 %v5422
  %5501 = vmatprep.subr.mxu0 0.0
  %5502 = vmatpush1.msra.mxu0 0.0
  %5503 = vmatprep.subr.mxu0 0.0
  %5504 = vmatpush1.msra.mxu0 0.0
  %5505 = vmatprep.subr.mxu0 0.0
  %5506 = vmatpush1.msra.mxu0 0.0
  %5507 = vmatprep.subr.mxu0 0.0
  %5508 = vmatpush1.msra.mxu0 0.0
  %5509 = vmatprep.subr.mxu0 0.0
  %5510 = vmatpush1.msra.mxu0 0.0
  %5511 = vmatprep.subr.mxu0 0.0
  %5512 = vmatpush1.msra.mxu0 0.0
  %5513 = vmatprep.subr.mxu0 0.0
  %5514 = vmatpush1.msra.mxu0 0.0
  %5515 = vmatprep.subr.mxu0 0.0
  %5516 = vmatpush1.msra.mxu0 0.0
  %5517 = vmatprep.subr.mxu0 0.0
  %5518 = vmatpush1.msra.mxu0 0.0
  %5519 = vmatprep.subr.mxu0 0.0
  %5520 = vmatpush1.msra.mxu0 0.0
  %5521 = vmatprep.subr.mxu0 0.0
  %5522 = vmatpush1.msra.mxu0 0.0
  %5523 = vmatprep.subr.mxu0 0.0
  %5524 = vmatpush1.msra.mxu0 0.0
  %5525 = vmatprep.subr.mxu0 0.0
  %5526 = vmatpush1.msra.mxu0 0.0
  %5527 = vmatprep.subr.mxu0 0.0
  %5528 = vmatpush1.msra.mxu0 0.0
  %5529 = vmatprep.subr.mxu0 0.0
  %5530 = vmatpush1.msra.mxu0 0.0
  %5531 = vmatprep.subr.mxu0 0.0
  %5532 = vmatpush1.msra.mxu0 0.0
  %5533 = vmatprep.subr.mxu0 0.0
  %5534 = vmatpush1.msra.mxu0 0.0
  %5535 = vmatprep.subr.mxu0 0.0
  %5536 = vmatpush1.msra.mxu0 0.0
  %5537 = vmatprep.subr.mxu0 0.0
  %5538 = vmatpush1.msra.mxu0 0.0
  %5539 = vmatprep.subr.mxu0 0.0
  %5540 = vmatpush1.msra.mxu0 0.0
  %5541 = vmatprep.subr.mxu0 0.0
  %5542 = vmatpush1.msra.mxu0 0.0
  %5543 = vmatprep.subr.mxu0 0.0
  %5544 = vmatpush1.msra.mxu0 0.0
  %5545 = vmatprep.subr.mxu0 0.0
  %5546 = vmatpush1.msra.mxu0 0.0
  %5547 = vmatprep.subr.mxu0 0.0
  %5548 = vmatpush1.msra.mxu0 0.0
  %5549 = vmatprep.subr.mxu0 0.0
  %5550 = vmatpush1.msra.mxu0 0.0
  %5551 = vmatprep.subr.mxu0 0.0
  %5552 = vmatpush1.msra.mxu0 0.0
  %5553 = vmatprep.subr.mxu0 0.0
  %5554 = vmatpush1.msra.mxu0 0.0
  %5555 = vmatprep.subr.mxu0 0.0
  %5556 = vmatpush1.msra.mxu0 0.0
  %5557 = vmatprep.subr.mxu0 0.0
  %5558 = vmatpush1.msra.mxu0 0.0
  %5559 = vmatprep.subr.mxu0 0.0
  %5560 = vmatpush1.msra.mxu0 0.0
  %5561 = vmatprep.subr.mxu0 0.0
  %5562 = vmatpush1.msra.mxu0 0.0
  %5563 = vmatprep.mubr.f32.mxu0 0.0
  %5564 = vmatmul.mubr.f32.gmra.mrb[0].mxu0 %v5426
  %v5565 = vpop.f32.mrb[0].mxu0
  %v5566 = vadd.f32 0.0, %v5565
  %v5567 = vpop.f32.mrb[0].mxu0
  %v5568 = vadd.f32 0.0, %v5567
  %5569 = vdwg.mxu0
  %5570 = vmatprep.subr.mxu0 %v5419
  %5571 = vmatpush1.msra.mxu0 %v5420
  %5572 = vmatprep.subr.mxu0 0.0
  %5573 = vmatpush1.msra.mxu0 0.0
  %5574 = vmatprep.subr.mxu0 0.0
  %5575 = vmatpush1.msra.mxu0 0.0
  %5576 = vmatprep.subr.mxu0 0.0
  %5577 = vmatpush1.msra.mxu0 0.0
  %5578 = vmatprep.subr.mxu0 0.0
  %5579 = vmatpush1.msra.mxu0 0.0
  %5580 = vmatprep.subr.mxu0 0.0
  %5581 = vmatpush1.msra.mxu0 0.0
  %5582 = vmatprep.subr.mxu0 0.0
  %5583 = vmatpush1.msra.mxu0 0.0
  %5584 = vmatprep.subr.mxu0 0.0
  %5585 = vmatpush1.msra.mxu0 0.0
  %5586 = vmatprep.subr.mxu0 0.0
  %5587 = vmatpush1.msra.mxu0 0.0
  %5588 = vmatprep.subr.mxu0 0.0
  %5589 = vmatpush1.msra.mxu0 0.0
  %5590 = vmatprep.subr.mxu0 0.0
  %5591 = vmatpush1.msra.mxu0 0.0
  %5592 = vmatprep.subr.mxu0 0.0
  %5593 = vmatpush1.msra.mxu0 0.0
  %5594 = vmatprep.subr.mxu0 0.0
  %5595 = vmatpush1.msra.mxu0 0.0
  %5596 = vmatprep.subr.mxu0 0.0
  %5597 = vmatpush1.msra.mxu0 0.0
  %5598 = vmatprep.subr.mxu0 0.0
  %5599 = vmatpush1.msra.mxu0 0.0
  %5600 = vmatprep.subr.mxu0 0.0
  %5601 = vmatpush1.msra.mxu0 0.0
  %5602 = vmatprep.subr.mxu0 0.0
  %5603 = vmatpush1.msra.mxu0 0.0
  %5604 = vmatprep.subr.mxu0 0.0
  %5605 = vmatpush1.msra.mxu0 0.0
  %5606 = vmatprep.subr.mxu0 0.0
  %5607 = vmatpush1.msra.mxu0 0.0
  %5608 = vmatprep.subr.mxu0 0.0
  %5609 = vmatpush1.msra.mxu0 0.0
  %5610 = vmatprep.subr.mxu0 0.0
  %5611 = vmatpush1.msra.mxu0 0.0
  %5612 = vmatprep.subr.mxu0 0.0
  %5613 = vmatpush1.msra.mxu0 0.0
  %5614 = vmatprep.subr.mxu0 0.0
  %5615 = vmatpush1.msra.mxu0 0.0
  %5616 = vmatprep.subr.mxu0 0.0
  %5617 = vmatpush1.msra.mxu0 0.0
  %5618 = vmatprep.subr.mxu0 0.0
  %5619 = vmatpush1.msra.mxu0 0.0
  %5620 = vmatprep.subr.mxu0 0.0
  %5621 = vmatpush1.msra.mxu0 0.0
  %5622 = vmatprep.subr.mxu0 0.0
  %5623 = vmatpush1.msra.mxu0 0.0
  %5624 = vmatprep.subr.mxu0 0.0
  %5625 = vmatpush1.msra.mxu0 0.0
  %5626 = vmatprep.subr.mxu0 0.0
  %5627 = vmatpush1.msra.mxu0 0.0
  %5628 = vmatprep.subr.mxu0 0.0
  %5629 = vmatpush1.msra.mxu0 0.0
  %5630 = vmatprep.subr.mxu0 0.0
  %5631 = vmatpush1.msra.mxu0 0.0
  %5632 = vmatprep.subr.mxu0 0.0
  %5633 = vmatpush1.msra.mxu0 0.0
  %5634 = vmatprep.mubr.f32.mxu0 0.0
  %5635 = vmatmul.mubr.f32.gmra.mrb[0].mxu0 %v5426
  %v5636 = vpop.f32.mrb[0].mxu0
  %v5637 = vadd.f32 0.0, %v5636
  %v5638 = vpop.f32.mrb[0].mxu0
  %v5639 = vadd.f32 0.0, %v5638
  %5640 = vdwg.mxu0
  %v5641 = vadd.f32 %v5259, %v5495
  %v5642 = vadd.f32 %v5261, %v5497
  %v5643 = vadd.f32 %v5330, %v5566
  %v5644 = vadd.f32 %v5332, %v5568
  %v5645 = vadd.f32 %v5401, %v5637
  %v5646 = vadd.f32 %v5403, %v5639
  %s5647 = scalar_lea.vmem %s2, 96
  %v5648 = vld [vmem:[%s5647] sm:$0xff]
  %5649 = vrot.lane.b32.xlu0 %v4927, 1
  %v5650 = vpop.permute.xlu0 %5649
  %5651 = vrot.lane.b32.xlu0 %v4928, 1
  %v5652 = vpop.permute.xlu0 %5651
  %5653 = vrot.lane.b32.xlu0 %v4929, 1
  %v5654 = vpop.permute.xlu0 %5653
  %5655 = vrot.lane.b32.xlu0 %v4930, 1
  %v5656 = vpop.permute.xlu0 %5655
  %5657 = vrot.lane.b32.xlu0 %v4931, 1
  %v5658 = vpop.permute.xlu0 %5657
  %5659 = vrot.lane.b32.xlu0 %v4932, 1
  %v5660 = vpop.permute.xlu0 %5659
  %v5661 = vsel %vm797, %v5658, %v5660
  %v5662 = vsel %vm797, %v5656, %v5658
  %v5663 = vsel %vm797, %v5654, %v5656
  %v5664 = vsel %vm797, %v5652, %v5654
  %v5665 = vsel %vm797, %v5650, %v5652
  %v5666 = vsel %vm797, %v5660, %v5650
  %v5668 = vsel %vm107, %v5648, 0
  %5670 = vmatprep.subr.mxu0 %v5665
  %5671 = vmatpush1.msra.mxu0 %v5666
  %5672 = vmatprep.subr.mxu0 0.0
  %5673 = vmatpush1.msra.mxu0 0.0
  %5674 = vmatprep.subr.mxu0 0.0
  %5675 = vmatpush1.msra.mxu0 0.0
  %5676 = vmatprep.subr.mxu0 0.0
  %5677 = vmatpush1.msra.mxu0 0.0
  %5678 = vmatprep.subr.mxu0 0.0
  %5679 = vmatpush1.msra.mxu0 0.0
  %5680 = vmatprep.subr.mxu0 0.0
  %5681 = vmatpush1.msra.mxu0 0.0
  %5682 = vmatprep.subr.mxu0 0.0
  %5683 = vmatpush1.msra.mxu0 0.0
  %5684 = vmatprep.subr.mxu0 0.0
  %5685 = vmatpush1.msra.mxu0 0.0
  %5686 = vmatprep.subr.mxu0 0.0
  %5687 = vmatpush1.msra.mxu0 0.0
  %5688 = vmatprep.subr.mxu0 0.0
  %5689 = vmatpush1.msra.mxu0 0.0
  %5690 = vmatprep.subr.mxu0 0.0
  %5691 = vmatpush1.msra.mxu0 0.0
  %5692 = vmatprep.subr.mxu0 0.0
  %5693 = vmatpush1.msra.mxu0 0.0
  %5694 = vmatprep.subr.mxu0 0.0
  %5695 = vmatpush1.msra.mxu0 0.0
  %5696 = vmatprep.subr.mxu0 0.0
  %5697 = vmatpush1.msra.mxu0 0.0
  %5698 = vmatprep.subr.mxu0 0.0
  %5699 = vmatpush1.msra.mxu0 0.0
  %5700 = vmatprep.subr.mxu0 0.0
  %5701 = vmatpush1.msra.mxu0 0.0
  %5702 = vmatprep.subr.mxu0 0.0
  %5703 = vmatpush1.msra.mxu0 0.0
  %5704 = vmatprep.subr.mxu0 0.0
  %5705 = vmatpush1.msra.mxu0 0.0
  %5706 = vmatprep.subr.mxu0 0.0
  %5707 = vmatpush1.msra.mxu0 0.0
  %5708 = vmatprep.subr.mxu0 0.0
  %5709 = vmatpush1.msra.mxu0 0.0
  %5710 = vmatprep.subr.mxu0 0.0
  %5711 = vmatpush1.msra.mxu0 0.0
  %5712 = vmatprep.subr.mxu0 0.0
  %5713 = vmatpush1.msra.mxu0 0.0
  %5714 = vmatprep.subr.mxu0 0.0
  %5715 = vmatpush1.msra.mxu0 0.0
  %5716 = vmatprep.subr.mxu0 0.0
  %5717 = vmatpush1.msra.mxu0 0.0
  %5718 = vmatprep.subr.mxu0 0.0
  %5719 = vmatpush1.msra.mxu0 0.0
  %5720 = vmatprep.subr.mxu0 0.0
  %5721 = vmatpush1.msra.mxu0 0.0
  %5722 = vmatprep.subr.mxu0 0.0
  %5723 = vmatpush1.msra.mxu0 0.0
  %5724 = vmatprep.subr.mxu0 0.0
  %5725 = vmatpush1.msra.mxu0 0.0
  %5726 = vmatprep.subr.mxu0 0.0
  %5727 = vmatpush1.msra.mxu0 0.0
  %5728 = vmatprep.subr.mxu0 0.0
  %5729 = vmatpush1.msra.mxu0 0.0
  %5730 = vmatprep.subr.mxu0 0.0
  %5731 = vmatpush1.msra.mxu0 0.0
  %5732 = vmatprep.subr.mxu0 0.0
  %5733 = vmatpush1.msra.mxu0 0.0
  %5734 = vmatprep.mubr.f32.mxu0 0.0
  %5735 = vmatmul.mubr.f32.gmra.mrb[0].mxu0 %v5668
  %v5736 = vpop.f32.mrb[0].mxu0
  %v5737 = vadd.f32 0.0, %v5736
  %v5738 = vpop.f32.mrb[0].mxu0
  %v5739 = vadd.f32 0.0, %v5738
  %5740 = vdwg.mxu0
  %5741 = vmatprep.subr.mxu0 %v5663
  %5742 = vmatpush1.msra.mxu0 %v5664
  %5743 = vmatprep.subr.mxu0 0.0
  %5744 = vmatpush1.msra.mxu0 0.0
  %5745 = vmatprep.subr.mxu0 0.0
  %5746 = vmatpush1.msra.mxu0 0.0
  %5747 = vmatprep.subr.mxu0 0.0
  %5748 = vmatpush1.msra.mxu0 0.0
  %5749 = vmatprep.subr.mxu0 0.0
  %5750 = vmatpush1.msra.mxu0 0.0
  %5751 = vmatprep.subr.mxu0 0.0
  %5752 = vmatpush1.msra.mxu0 0.0
  %5753 = vmatprep.subr.mxu0 0.0
  %5754 = vmatpush1.msra.mxu0 0.0
  %5755 = vmatprep.subr.mxu0 0.0
  %5756 = vmatpush1.msra.mxu0 0.0
  %5757 = vmatprep.subr.mxu0 0.0
  %5758 = vmatpush1.msra.mxu0 0.0
  %5759 = vmatprep.subr.mxu0 0.0
  %5760 = vmatpush1.msra.mxu0 0.0
  %5761 = vmatprep.subr.mxu0 0.0
  %5762 = vmatpush1.msra.mxu0 0.0
  %5763 = vmatprep.subr.mxu0 0.0
  %5764 = vmatpush1.msra.mxu0 0.0
  %5765 = vmatprep.subr.mxu0 0.0
  %5766 = vmatpush1.msra.mxu0 0.0
  %5767 = vmatprep.subr.mxu0 0.0
  %5768 = vmatpush1.msra.mxu0 0.0
  %5769 = vmatprep.subr.mxu0 0.0
  %5770 = vmatpush1.msra.mxu0 0.0
  %5771 = vmatprep.subr.mxu0 0.0
  %5772 = vmatpush1.msra.mxu0 0.0
  %5773 = vmatprep.subr.mxu0 0.0
  %5774 = vmatpush1.msra.mxu0 0.0
  %5775 = vmatprep.subr.mxu0 0.0
  %5776 = vmatpush1.msra.mxu0 0.0
  %5777 = vmatprep.subr.mxu0 0.0
  %5778 = vmatpush1.msra.mxu0 0.0
  %5779 = vmatprep.subr.mxu0 0.0
  %5780 = vmatpush1.msra.mxu0 0.0
  %5781 = vmatprep.subr.mxu0 0.0
  %5782 = vmatpush1.msra.mxu0 0.0
  %5783 = vmatprep.subr.mxu0 0.0
  %5784 = vmatpush1.msra.mxu0 0.0
  %5785 = vmatprep.subr.mxu0 0.0
  %5786 = vmatpush1.msra.mxu0 0.0
  %5787 = vmatprep.subr.mxu0 0.0
  %5788 = vmatpush1.msra.mxu0 0.0
  %5789 = vmatprep.subr.mxu0 0.0
  %5790 = vmatpush1.msra.mxu0 0.0
  %5791 = vmatprep.subr.mxu0 0.0
  %5792 = vmatpush1.msra.mxu0 0.0
  %5793 = vmatprep.subr.mxu0 0.0
  %5794 = vmatpush1.msra.mxu0 0.0
  %5795 = vmatprep.subr.mxu0 0.0
  %5796 = vmatpush1.msra.mxu0 0.0
  %5797 = vmatprep.subr.mxu0 0.0
  %5798 = vmatpush1.msra.mxu0 0.0
  %5799 = vmatprep.subr.mxu0 0.0
  %5800 = vmatpush1.msra.mxu0 0.0
  %5801 = vmatprep.subr.mxu0 0.0
  %5802 = vmatpush1.msra.mxu0 0.0
  %5803 = vmatprep.subr.mxu0 0.0
  %5804 = vmatpush1.msra.mxu0 0.0
  %5805 = vmatprep.mubr.f32.mxu0 0.0
  %5806 = vmatmul.mubr.f32.gmra.mrb[0].mxu0 %v5668
  %v5807 = vpop.f32.mrb[0].mxu0
  %v5808 = vadd.f32 0.0, %v5807
  %v5809 = vpop.f32.mrb[0].mxu0
  %v5810 = vadd.f32 0.0, %v5809
  %5811 = vdwg.mxu0
  %5812 = vmatprep.subr.mxu0 %v5661
  %5813 = vmatpush1.msra.mxu0 %v5662
  %5814 = vmatprep.subr.mxu0 0.0
  %5815 = vmatpush1.msra.mxu0 0.0
  %5816 = vmatprep.subr.mxu0 0.0
  %5817 = vmatpush1.msra.mxu0 0.0
  %5818 = vmatprep.subr.mxu0 0.0
  %5819 = vmatpush1.msra.mxu0 0.0
  %5820 = vmatprep.subr.mxu0 0.0
  %5821 = vmatpush1.msra.mxu0 0.0
  %5822 = vmatprep.subr.mxu0 0.0
  %5823 = vmatpush1.msra.mxu0 0.0
  %5824 = vmatprep.subr.mxu0 0.0
  %5825 = vmatpush1.msra.mxu0 0.0
  %5826 = vmatprep.subr.mxu0 0.0
  %5827 = vmatpush1.msra.mxu0 0.0
  %5828 = vmatprep.subr.mxu0 0.0
  %5829 = vmatpush1.msra.mxu0 0.0
  %5830 = vmatprep.subr.mxu0 0.0
  %5831 = vmatpush1.msra.mxu0 0.0
  %5832 = vmatprep.subr.mxu0 0.0
  %5833 = vmatpush1.msra.mxu0 0.0
  %5834 = vmatprep.subr.mxu0 0.0
  %5835 = vmatpush1.msra.mxu0 0.0
  %5836 = vmatprep.subr.mxu0 0.0
  %5837 = vmatpush1.msra.mxu0 0.0
  %5838 = vmatprep.subr.mxu0 0.0
  %5839 = vmatpush1.msra.mxu0 0.0
  %5840 = vmatprep.subr.mxu0 0.0
  %5841 = vmatpush1.msra.mxu0 0.0
  %5842 = vmatprep.subr.mxu0 0.0
  %5843 = vmatpush1.msra.mxu0 0.0
  %5844 = vmatprep.subr.mxu0 0.0
  %5845 = vmatpush1.msra.mxu0 0.0
  %5846 = vmatprep.subr.mxu0 0.0
  %5847 = vmatpush1.msra.mxu0 0.0
  %5848 = vmatprep.subr.mxu0 0.0
  %5849 = vmatpush1.msra.mxu0 0.0
  %5850 = vmatprep.subr.mxu0 0.0
  %5851 = vmatpush1.msra.mxu0 0.0
  %5852 = vmatprep.subr.mxu0 0.0
  %5853 = vmatpush1.msra.mxu0 0.0
  %5854 = vmatprep.subr.mxu0 0.0
  %5855 = vmatpush1.msra.mxu0 0.0
  %5856 = vmatprep.subr.mxu0 0.0
  %5857 = vmatpush1.msra.mxu0 0.0
  %5858 = vmatprep.subr.mxu0 0.0
  %5859 = vmatpush1.msra.mxu0 0.0
  %5860 = vmatprep.subr.mxu0 0.0
  %5861 = vmatpush1.msra.mxu0 0.0
  %5862 = vmatprep.subr.mxu0 0.0
  %5863 = vmatpush1.msra.mxu0 0.0
  %5864 = vmatprep.subr.mxu0 0.0
  %5865 = vmatpush1.msra.mxu0 0.0
  %5866 = vmatprep.subr.mxu0 0.0
  %5867 = vmatpush1.msra.mxu0 0.0
  %5868 = vmatprep.subr.mxu0 0.0
  %5869 = vmatpush1.msra.mxu0 0.0
  %5870 = vmatprep.subr.mxu0 0.0
  %5871 = vmatpush1.msra.mxu0 0.0
  %5872 = vmatprep.subr.mxu0 0.0
  %5873 = vmatpush1.msra.mxu0 0.0
  %5874 = vmatprep.subr.mxu0 0.0
  %5875 = vmatpush1.msra.mxu0 0.0
  %5876 = vmatprep.mubr.f32.mxu0 0.0
  %5877 = vmatmul.mubr.f32.gmra.mrb[0].mxu0 %v5668
  %v5878 = vpop.f32.mrb[0].mxu0
  %v5879 = vadd.f32 0.0, %v5878
  %v5880 = vpop.f32.mrb[0].mxu0
  %v5881 = vadd.f32 0.0, %v5880
  %5882 = vdwg.mxu0
  %v5883 = vadd.f32 %v5641, %v5737
  %v5884 = vadd.f32 %v5642, %v5739
  %v5885 = vadd.f32 %v5643, %v5808
  %v5886 = vadd.f32 %v5644, %v5810
  %v5887 = vadd.f32 %v5645, %v5879
  %v5888 = vadd.f32 %v5646, %v5881
  %s5889 = scalar_lea.vmem %s2, 104
  %v5890 = vld [vmem:[%s5889] sm:$0xff]
  %v5892 = vsel %vm107, %v5890, 0
  %5894 = vmatprep.subr.mxu0 %v4928
  %5895 = vmatpush1.msra.mxu0 %v4927
  %5896 = vmatprep.subr.mxu0 0.0
  %5897 = vmatpush1.msra.mxu0 0.0
  %5898 = vmatprep.subr.mxu0 0.0
  %5899 = vmatpush1.msra.mxu0 0.0
  %5900 = vmatprep.subr.mxu0 0.0
  %5901 = vmatpush1.msra.mxu0 0.0
  %5902 = vmatprep.subr.mxu0 0.0
  %5903 = vmatpush1.msra.mxu0 0.0
  %5904 = vmatprep.subr.mxu0 0.0
  %5905 = vmatpush1.msra.mxu0 0.0
  %5906 = vmatprep.subr.mxu0 0.0
  %5907 = vmatpush1.msra.mxu0 0.0
  %5908 = vmatprep.subr.mxu0 0.0
  %5909 = vmatpush1.msra.mxu0 0.0
  %5910 = vmatprep.subr.mxu0 0.0
  %5911 = vmatpush1.msra.mxu0 0.0
  %5912 = vmatprep.subr.mxu0 0.0
  %5913 = vmatpush1.msra.mxu0 0.0
  %5914 = vmatprep.subr.mxu0 0.0
  %5915 = vmatpush1.msra.mxu0 0.0
  %5916 = vmatprep.subr.mxu0 0.0
  %5917 = vmatpush1.msra.mxu0 0.0
  %5918 = vmatprep.subr.mxu0 0.0
  %5919 = vmatpush1.msra.mxu0 0.0
  %5920 = vmatprep.subr.mxu0 0.0
  %5921 = vmatpush1.msra.mxu0 0.0
  %5922 = vmatprep.subr.mxu0 0.0
  %5923 = vmatpush1.msra.mxu0 0.0
  %5924 = vmatprep.subr.mxu0 0.0
  %5925 = vmatpush1.msra.mxu0 0.0
  %5926 = vmatprep.subr.mxu0 0.0
  %5927 = vmatpush1.msra.mxu0 0.0
  %5928 = vmatprep.subr.mxu0 0.0
  %5929 = vmatpush1.msra.mxu0 0.0
  %5930 = vmatprep.subr.mxu0 0.0
  %5931 = vmatpush1.msra.mxu0 0.0
  %5932 = vmatprep.subr.mxu0 0.0
  %5933 = vmatpush1.msra.mxu0 0.0
  %5934 = vmatprep.subr.mxu0 0.0
  %5935 = vmatpush1.msra.mxu0 0.0
  %5936 = vmatprep.subr.mxu0 0.0
  %5937 = vmatpush1.msra.mxu0 0.0
  %5938 = vmatprep.subr.mxu0 0.0
  %5939 = vmatpush1.msra.mxu0 0.0
  %5940 = vmatprep.subr.mxu0 0.0
  %5941 = vmatpush1.msra.mxu0 0.0
  %5942 = vmatprep.subr.mxu0 0.0
  %5943 = vmatpush1.msra.mxu0 0.0
  %5944 = vmatprep.subr.mxu0 0.0
  %5945 = vmatpush1.msra.mxu0 0.0
  %5946 = vmatprep.subr.mxu0 0.0
  %5947 = vmatpush1.msra.mxu0 0.0
  %5948 = vmatprep.subr.mxu0 0.0
  %5949 = vmatpush1.msra.mxu0 0.0
  %5950 = vmatprep.subr.mxu0 0.0
  %5951 = vmatpush1.msra.mxu0 0.0
  %5952 = vmatprep.subr.mxu0 0.0
  %5953 = vmatpush1.msra.mxu0 0.0
  %5954 = vmatprep.subr.mxu0 0.0
  %5955 = vmatpush1.msra.mxu0 0.0
  %5956 = vmatprep.subr.mxu0 0.0
  %5957 = vmatpush1.msra.mxu0 0.0
  %5958 = vmatprep.mubr.f32.mxu0 0.0
  %5959 = vmatmul.mubr.f32.gmra.mrb[0].mxu0 %v5892
  %v5960 = vpop.f32.mrb[0].mxu0
  %v5961 = vadd.f32 0.0, %v5960
  %v5962 = vpop.f32.mrb[0].mxu0
  %v5963 = vadd.f32 0.0, %v5962
  %5964 = vdwg.mxu0
  %5965 = vmatprep.subr.mxu0 %v4930
  %5966 = vmatpush1.msra.mxu0 %v4929
  %5967 = vmatprep.subr.mxu0 0.0
  %5968 = vmatpush1.msra.mxu0 0.0
  %5969 = vmatprep.subr.mxu0 0.0
  %5970 = vmatpush1.msra.mxu0 0.0
  %5971 = vmatprep.subr.mxu0 0.0
  %5972 = vmatpush1.msra.mxu0 0.0
  %5973 = vmatprep.subr.mxu0 0.0
  %5974 = vmatpush1.msra.mxu0 0.0
  %5975 = vmatprep.subr.mxu0 0.0
  %5976 = vmatpush1.msra.mxu0 0.0
  %5977 = vmatprep.subr.mxu0 0.0
  %5978 = vmatpush1.msra.mxu0 0.0
  %5979 = vmatprep.subr.mxu0 0.0
  %5980 = vmatpush1.msra.mxu0 0.0
  %5981 = vmatprep.subr.mxu0 0.0
  %5982 = vmatpush1.msra.mxu0 0.0
  %5983 = vmatprep.subr.mxu0 0.0
  %5984 = vmatpush1.msra.mxu0 0.0
  %5985 = vmatprep.subr.mxu0 0.0
  %5986 = vmatpush1.msra.mxu0 0.0
  %5987 = vmatprep.subr.mxu0 0.0
  %5988 = vmatpush1.msra.mxu0 0.0
  %5989 = vmatprep.subr.mxu0 0.0
  %5990 = vmatpush1.msra.mxu0 0.0
  %5991 = vmatprep.subr.mxu0 0.0
  %5992 = vmatpush1.msra.mxu0 0.0
  %5993 = vmatprep.subr.mxu0 0.0
  %5994 = vmatpush1.msra.mxu0 0.0
  %5995 = vmatprep.subr.mxu0 0.0
  %5996 = vmatpush1.msra.mxu0 0.0
  %5997 = vmatprep.subr.mxu0 0.0
  %5998 = vmatpush1.msra.mxu0 0.0
  %5999 = vmatprep.subr.mxu0 0.0
  %6000 = vmatpush1.msra.mxu0 0.0
  %6001 = vmatprep.subr.mxu0 0.0
  %6002 = vmatpush1.msra.mxu0 0.0
  %6003 = vmatprep.subr.mxu0 0.0
  %6004 = vmatpush1.msra.mxu0 0.0
  %6005 = vmatprep.subr.mxu0 0.0
  %6006 = vmatpush1.msra.mxu0 0.0
  %6007 = vmatprep.subr.mxu0 0.0
  %6008 = vmatpush1.msra.mxu0 0.0
  %6009 = vmatprep.subr.mxu0 0.0
  %6010 = vmatpush1.msra.mxu0 0.0
  %6011 = vmatprep.subr.mxu0 0.0
  %6012 = vmatpush1.msra.mxu0 0.0
  %6013 = vmatprep.subr.mxu0 0.0
  %6014 = vmatpush1.msra.mxu0 0.0
  %6015 = vmatprep.subr.mxu0 0.0
  %6016 = vmatpush1.msra.mxu0 0.0
  %6017 = vmatprep.subr.mxu0 0.0
  %6018 = vmatpush1.msra.mxu0 0.0
  %6019 = vmatprep.subr.mxu0 0.0
  %6020 = vmatpush1.msra.mxu0 0.0
  %6021 = vmatprep.subr.mxu0 0.0
  %6022 = vmatpush1.msra.mxu0 0.0
  %6023 = vmatprep.subr.mxu0 0.0
  %6024 = vmatpush1.msra.mxu0 0.0
  %6025 = vmatprep.subr.mxu0 0.0
  %6026 = vmatpush1.msra.mxu0 0.0
  %6027 = vmatprep.subr.mxu0 0.0
  %6028 = vmatpush1.msra.mxu0 0.0
  %6029 = vmatprep.mubr.f32.mxu0 0.0
  %6030 = vmatmul.mubr.f32.gmra.mrb[0].mxu0 %v5892
  %v6031 = vpop.f32.mrb[0].mxu0
  %v6032 = vadd.f32 0.0, %v6031
  %v6033 = vpop.f32.mrb[0].mxu0
  %v6034 = vadd.f32 0.0, %v6033
  %6035 = vdwg.mxu0
  %6036 = vmatprep.subr.mxu0 %v4932
  %6037 = vmatpush1.msra.mxu0 %v4931
  %6038 = vmatprep.subr.mxu0 0.0
  %6039 = vmatpush1.msra.mxu0 0.0
  %6040 = vmatprep.subr.mxu0 0.0
  %6041 = vmatpush1.msra.mxu0 0.0
  %6042 = vmatprep.subr.mxu0 0.0
  %6043 = vmatpush1.msra.mxu0 0.0
  %6044 = vmatprep.subr.mxu0 0.0
  %6045 = vmatpush1.msra.mxu0 0.0
  %6046 = vmatprep.subr.mxu0 0.0
  %6047 = vmatpush1.msra.mxu0 0.0
  %6048 = vmatprep.subr.mxu0 0.0
  %6049 = vmatpush1.msra.mxu0 0.0
  %6050 = vmatprep.subr.mxu0 0.0
  %6051 = vmatpush1.msra.mxu0 0.0
  %6052 = vmatprep.subr.mxu0 0.0
  %6053 = vmatpush1.msra.mxu0 0.0
  %6054 = vmatprep.subr.mxu0 0.0
  %6055 = vmatpush1.msra.mxu0 0.0
  %6056 = vmatprep.subr.mxu0 0.0
  %6057 = vmatpush1.msra.mxu0 0.0
  %6058 = vmatprep.subr.mxu0 0.0
  %6059 = vmatpush1.msra.mxu0 0.0
  %6060 = vmatprep.subr.mxu0 0.0
  %6061 = vmatpush1.msra.mxu0 0.0
  %6062 = vmatprep.subr.mxu0 0.0
  %6063 = vmatpush1.msra.mxu0 0.0
  %6064 = vmatprep.subr.mxu0 0.0
  %6065 = vmatpush1.msra.mxu0 0.0
  %6066 = vmatprep.subr.mxu0 0.0
  %6067 = vmatpush1.msra.mxu0 0.0
  %6068 = vmatprep.subr.mxu0 0.0
  %6069 = vmatpush1.msra.mxu0 0.0
  %6070 = vmatprep.subr.mxu0 0.0
  %6071 = vmatpush1.msra.mxu0 0.0
  %6072 = vmatprep.subr.mxu0 0.0
  %6073 = vmatpush1.msra.mxu0 0.0
  %6074 = vmatprep.subr.mxu0 0.0
  %6075 = vmatpush1.msra.mxu0 0.0
  %6076 = vmatprep.subr.mxu0 0.0
  %6077 = vmatpush1.msra.mxu0 0.0
  %6078 = vmatprep.subr.mxu0 0.0
  %6079 = vmatpush1.msra.mxu0 0.0
  %6080 = vmatprep.subr.mxu0 0.0
  %6081 = vmatpush1.msra.mxu0 0.0
  %6082 = vmatprep.subr.mxu0 0.0
  %6083 = vmatpush1.msra.mxu0 0.0
  %6084 = vmatprep.subr.mxu0 0.0
  %6085 = vmatpush1.msra.mxu0 0.0
  %6086 = vmatprep.subr.mxu0 0.0
  %6087 = vmatpush1.msra.mxu0 0.0
  %6088 = vmatprep.subr.mxu0 0.0
  %6089 = vmatpush1.msra.mxu0 0.0
  %6090 = vmatprep.subr.mxu0 0.0
  %6091 = vmatpush1.msra.mxu0 0.0
  %6092 = vmatprep.subr.mxu0 0.0
  %6093 = vmatpush1.msra.mxu0 0.0
  %6094 = vmatprep.subr.mxu0 0.0
  %6095 = vmatpush1.msra.mxu0 0.0
  %6096 = vmatprep.subr.mxu0 0.0
  %6097 = vmatpush1.msra.mxu0 0.0
  %6098 = vmatprep.subr.mxu0 0.0
  %6099 = vmatpush1.msra.mxu0 0.0
  %6100 = vmatprep.mubr.f32.mxu0 0.0
  %6101 = vmatmul.mubr.f32.gmra.mrb[0].mxu0 %v5892
  %v6102 = vpop.f32.mrb[0].mxu0
  %v6103 = vadd.f32 0.0, %v6102
  %v6104 = vpop.f32.mrb[0].mxu0
  %v6105 = vadd.f32 0.0, %v6104
  %6106 = vdwg.mxu0
  %v6107 = vadd.f32 %v5883, %v5961
  %v6108 = vadd.f32 %v5884, %v5963
  %v6109 = vadd.f32 %v5885, %v6032
  %v6110 = vadd.f32 %v5886, %v6034
  %v6111 = vadd.f32 %v5887, %v6103
  %v6112 = vadd.f32 %v5888, %v6105
  %s6113 = scalar_lea.vmem %s2, 112
  %v6114 = vld [vmem:[%s6113] sm:$0xff]
  %6115 = vrot.lane.b32.xlu0 %v4927, 127
  %v6116 = vpop.permute.xlu0 %6115
  %6117 = vrot.lane.b32.xlu0 %v4928, 127
  %v6118 = vpop.permute.xlu0 %6117
  %6119 = vrot.lane.b32.xlu0 %v4929, 127
  %v6120 = vpop.permute.xlu0 %6119
  %6121 = vrot.lane.b32.xlu0 %v4930, 127
  %v6122 = vpop.permute.xlu0 %6121
  %6123 = vrot.lane.b32.xlu0 %v4931, 127
  %v6124 = vpop.permute.xlu0 %6123
  %6125 = vrot.lane.b32.xlu0 %v4932, 127
  %v6126 = vpop.permute.xlu0 %6125
  %v6127 = vsel %vm1264, %v6124, %v6126
  %v6128 = vsel %vm1264, %v6122, %v6124
  %v6129 = vsel %vm1264, %v6120, %v6122
  %v6130 = vsel %vm1264, %v6118, %v6120
  %v6131 = vsel %vm1264, %v6116, %v6118
  %v6132 = vsel %vm1264, %v6126, %v6116
  %v6134 = vsel %vm107, %v6114, 0
  %6136 = vmatprep.subr.mxu0 %v6130
  %6137 = vmatpush1.msra.mxu0 %v6131
  %6138 = vmatprep.subr.mxu0 0.0
  %6139 = vmatpush1.msra.mxu0 0.0
  %6140 = vmatprep.subr.mxu0 0.0
  %6141 = vmatpush1.msra.mxu0 0.0
  %6142 = vmatprep.subr.mxu0 0.0
  %6143 = vmatpush1.msra.mxu0 0.0
  %6144 = vmatprep.subr.mxu0 0.0
  %6145 = vmatpush1.msra.mxu0 0.0
  %6146 = vmatprep.subr.mxu0 0.0
  %6147 = vmatpush1.msra.mxu0 0.0
  %6148 = vmatprep.subr.mxu0 0.0
  %6149 = vmatpush1.msra.mxu0 0.0
  %6150 = vmatprep.subr.mxu0 0.0
  %6151 = vmatpush1.msra.mxu0 0.0
  %6152 = vmatprep.subr.mxu0 0.0
  %6153 = vmatpush1.msra.mxu0 0.0
  %6154 = vmatprep.subr.mxu0 0.0
  %6155 = vmatpush1.msra.mxu0 0.0
  %6156 = vmatprep.subr.mxu0 0.0
  %6157 = vmatpush1.msra.mxu0 0.0
  %6158 = vmatprep.subr.mxu0 0.0
  %6159 = vmatpush1.msra.mxu0 0.0
  %6160 = vmatprep.subr.mxu0 0.0
  %6161 = vmatpush1.msra.mxu0 0.0
  %6162 = vmatprep.subr.mxu0 0.0
  %6163 = vmatpush1.msra.mxu0 0.0
  %6164 = vmatprep.subr.mxu0 0.0
  %6165 = vmatpush1.msra.mxu0 0.0
  %6166 = vmatprep.subr.mxu0 0.0
  %6167 = vmatpush1.msra.mxu0 0.0
  %6168 = vmatprep.subr.mxu0 0.0
  %6169 = vmatpush1.msra.mxu0 0.0
  %6170 = vmatprep.subr.mxu0 0.0
  %6171 = vmatpush1.msra.mxu0 0.0
  %6172 = vmatprep.subr.mxu0 0.0
  %6173 = vmatpush1.msra.mxu0 0.0
  %6174 = vmatprep.subr.mxu0 0.0
  %6175 = vmatpush1.msra.mxu0 0.0
  %6176 = vmatprep.subr.mxu0 0.0
  %6177 = vmatpush1.msra.mxu0 0.0
  %6178 = vmatprep.subr.mxu0 0.0
  %6179 = vmatpush1.msra.mxu0 0.0
  %6180 = vmatprep.subr.mxu0 0.0
  %6181 = vmatpush1.msra.mxu0 0.0
  %6182 = vmatprep.subr.mxu0 0.0
  %6183 = vmatpush1.msra.mxu0 0.0
  %6184 = vmatprep.subr.mxu0 0.0
  %6185 = vmatpush1.msra.mxu0 0.0
  %6186 = vmatprep.subr.mxu0 0.0
  %6187 = vmatpush1.msra.mxu0 0.0
  %6188 = vmatprep.subr.mxu0 0.0
  %6189 = vmatpush1.msra.mxu0 0.0
  %6190 = vmatprep.subr.mxu0 0.0
  %6191 = vmatpush1.msra.mxu0 0.0
  %6192 = vmatprep.subr.mxu0 0.0
  %6193 = vmatpush1.msra.mxu0 0.0
  %6194 = vmatprep.subr.mxu0 0.0
  %6195 = vmatpush1.msra.mxu0 0.0
  %6196 = vmatprep.subr.mxu0 0.0
  %6197 = vmatpush1.msra.mxu0 0.0
  %6198 = vmatprep.subr.mxu0 0.0
  %6199 = vmatpush1.msra.mxu0 0.0
  %6200 = vmatprep.mubr.f32.mxu0 0.0
  %6201 = vmatmul.mubr.f32.gmra.mrb[0].mxu0 %v6134
  %v6202 = vpop.f32.mrb[0].mxu0
  %v6203 = vadd.f32 0.0, %v6202
  %v6204 = vpop.f32.mrb[0].mxu0
  %v6205 = vadd.f32 0.0, %v6204
  %6206 = vdwg.mxu0
  %6207 = vmatprep.subr.mxu0 %v6128
  %6208 = vmatpush1.msra.mxu0 %v6129
  %6209 = vmatprep.subr.mxu0 0.0
  %6210 = vmatpush1.msra.mxu0 0.0
  %6211 = vmatprep.subr.mxu0 0.0
  %6212 = vmatpush1.msra.mxu0 0.0
  %6213 = vmatprep.subr.mxu0 0.0
  %6214 = vmatpush1.msra.mxu0 0.0
  %6215 = vmatprep.subr.mxu0 0.0
  %6216 = vmatpush1.msra.mxu0 0.0
  %6217 = vmatprep.subr.mxu0 0.0
  %6218 = vmatpush1.msra.mxu0 0.0
  %6219 = vmatprep.subr.mxu0 0.0
  %6220 = vmatpush1.msra.mxu0 0.0
  %6221 = vmatprep.subr.mxu0 0.0
  %6222 = vmatpush1.msra.mxu0 0.0
  %6223 = vmatprep.subr.mxu0 0.0
  %6224 = vmatpush1.msra.mxu0 0.0
  %6225 = vmatprep.subr.mxu0 0.0
  %6226 = vmatpush1.msra.mxu0 0.0
  %6227 = vmatprep.subr.mxu0 0.0
  %6228 = vmatpush1.msra.mxu0 0.0
  %6229 = vmatprep.subr.mxu0 0.0
  %6230 = vmatpush1.msra.mxu0 0.0
  %6231 = vmatprep.subr.mxu0 0.0
  %6232 = vmatpush1.msra.mxu0 0.0
  %6233 = vmatprep.subr.mxu0 0.0
  %6234 = vmatpush1.msra.mxu0 0.0
  %6235 = vmatprep.subr.mxu0 0.0
  %6236 = vmatpush1.msra.mxu0 0.0
  %6237 = vmatprep.subr.mxu0 0.0
  %6238 = vmatpush1.msra.mxu0 0.0
  %6239 = vmatprep.subr.mxu0 0.0
  %6240 = vmatpush1.msra.mxu0 0.0
  %6241 = vmatprep.subr.mxu0 0.0
  %6242 = vmatpush1.msra.mxu0 0.0
  %6243 = vmatprep.subr.mxu0 0.0
  %6244 = vmatpush1.msra.mxu0 0.0
  %6245 = vmatprep.subr.mxu0 0.0
  %6246 = vmatpush1.msra.mxu0 0.0
  %6247 = vmatprep.subr.mxu0 0.0
  %6248 = vmatpush1.msra.mxu0 0.0
  %6249 = vmatprep.subr.mxu0 0.0
  %6250 = vmatpush1.msra.mxu0 0.0
  %6251 = vmatprep.subr.mxu0 0.0
  %6252 = vmatpush1.msra.mxu0 0.0
  %6253 = vmatprep.subr.mxu0 0.0
  %6254 = vmatpush1.msra.mxu0 0.0
  %6255 = vmatprep.subr.mxu0 0.0
  %6256 = vmatpush1.msra.mxu0 0.0
  %6257 = vmatprep.subr.mxu0 0.0
  %6258 = vmatpush1.msra.mxu0 0.0
  %6259 = vmatprep.subr.mxu0 0.0
  %6260 = vmatpush1.msra.mxu0 0.0
  %6261 = vmatprep.subr.mxu0 0.0
  %6262 = vmatpush1.msra.mxu0 0.0
  %6263 = vmatprep.subr.mxu0 0.0
  %6264 = vmatpush1.msra.mxu0 0.0
  %6265 = vmatprep.subr.mxu0 0.0
  %6266 = vmatpush1.msra.mxu0 0.0
  %6267 = vmatprep.subr.mxu0 0.0
  %6268 = vmatpush1.msra.mxu0 0.0
  %6269 = vmatprep.subr.mxu0 0.0
  %6270 = vmatpush1.msra.mxu0 0.0
  %6271 = vmatprep.mubr.f32.mxu0 0.0
  %6272 = vmatmul.mubr.f32.gmra.mrb[0].mxu0 %v6134
  %v6273 = vpop.f32.mrb[0].mxu0
  %v6274 = vadd.f32 0.0, %v6273
  %v6275 = vpop.f32.mrb[0].mxu0
  %v6276 = vadd.f32 0.0, %v6275
  %6277 = vdwg.mxu0
  %6278 = vmatprep.subr.mxu0 %v6132
  %6279 = vmatpush1.msra.mxu0 %v6127
  %6280 = vmatprep.subr.mxu0 0.0
  %6281 = vmatpush1.msra.mxu0 0.0
  %6282 = vmatprep.subr.mxu0 0.0
  %6283 = vmatpush1.msra.mxu0 0.0
  %6284 = vmatprep.subr.mxu0 0.0
  %6285 = vmatpush1.msra.mxu0 0.0
  %6286 = vmatprep.subr.mxu0 0.0
  %6287 = vmatpush1.msra.mxu0 0.0
  %6288 = vmatprep.subr.mxu0 0.0
  %6289 = vmatpush1.msra.mxu0 0.0
  %6290 = vmatprep.subr.mxu0 0.0
  %6291 = vmatpush1.msra.mxu0 0.0
  %6292 = vmatprep.subr.mxu0 0.0
  %6293 = vmatpush1.msra.mxu0 0.0
  %6294 = vmatprep.subr.mxu0 0.0
  %6295 = vmatpush1.msra.mxu0 0.0
  %6296 = vmatprep.subr.mxu0 0.0
  %6297 = vmatpush1.msra.mxu0 0.0
  %6298 = vmatprep.subr.mxu0 0.0
  %6299 = vmatpush1.msra.mxu0 0.0
  %6300 = vmatprep.subr.mxu0 0.0
  %6301 = vmatpush1.msra.mxu0 0.0
  %6302 = vmatprep.subr.mxu0 0.0
  %6303 = vmatpush1.msra.mxu0 0.0
  %6304 = vmatprep.subr.mxu0 0.0
  %6305 = vmatpush1.msra.mxu0 0.0
  %6306 = vmatprep.subr.mxu0 0.0
  %6307 = vmatpush1.msra.mxu0 0.0
  %6308 = vmatprep.subr.mxu0 0.0
  %6309 = vmatpush1.msra.mxu0 0.0
  %6310 = vmatprep.subr.mxu0 0.0
  %6311 = vmatpush1.msra.mxu0 0.0
  %6312 = vmatprep.subr.mxu0 0.0
  %6313 = vmatpush1.msra.mxu0 0.0
  %6314 = vmatprep.subr.mxu0 0.0
  %6315 = vmatpush1.msra.mxu0 0.0
  %6316 = vmatprep.subr.mxu0 0.0
  %6317 = vmatpush1.msra.mxu0 0.0
  %6318 = vmatprep.subr.mxu0 0.0
  %6319 = vmatpush1.msra.mxu0 0.0
  %6320 = vmatprep.subr.mxu0 0.0
  %6321 = vmatpush1.msra.mxu0 0.0
  %6322 = vmatprep.subr.mxu0 0.0
  %6323 = vmatpush1.msra.mxu0 0.0
  %6324 = vmatprep.subr.mxu0 0.0
  %6325 = vmatpush1.msra.mxu0 0.0
  %6326 = vmatprep.subr.mxu0 0.0
  %6327 = vmatpush1.msra.mxu0 0.0
  %6328 = vmatprep.subr.mxu0 0.0
  %6329 = vmatpush1.msra.mxu0 0.0
  %6330 = vmatprep.subr.mxu0 0.0
  %6331 = vmatpush1.msra.mxu0 0.0
  %6332 = vmatprep.subr.mxu0 0.0
  %6333 = vmatpush1.msra.mxu0 0.0
  %6334 = vmatprep.subr.mxu0 0.0
  %6335 = vmatpush1.msra.mxu0 0.0
  %6336 = vmatprep.subr.mxu0 0.0
  %6337 = vmatpush1.msra.mxu0 0.0
  %6338 = vmatprep.subr.mxu0 0.0
  %6339 = vmatpush1.msra.mxu0 0.0
  %6340 = vmatprep.subr.mxu0 0.0
  %6341 = vmatpush1.msra.mxu0 0.0
  %6342 = vmatprep.mubr.f32.mxu0 0.0
  %6343 = vmatmul.mubr.f32.gmra.mrb[0].mxu0 %v6134
  %v6344 = vpop.f32.mrb[0].mxu0
  %v6345 = vadd.f32 0.0, %v6344
  %v6346 = vpop.f32.mrb[0].mxu0
  %v6347 = vadd.f32 0.0, %v6346
  %6348 = vdwg.mxu0
  %v6349 = vadd.f32 %v6107, %v6203
  %v6350 = vadd.f32 %v6108, %v6205
  %v6351 = vadd.f32 %v6109, %v6274
  %v6352 = vadd.f32 %v6110, %v6276
  %v6353 = vadd.f32 %v6111, %v6345
  %v6354 = vadd.f32 %v6112, %v6347
  %s6355 = scalar_lea.vmem %s2, 120
  %v6356 = vld [vmem:[%s6355] sm:$0xff]
  %6357 = vrot.lane.b32.xlu0 %v4927, 111
  %v6358 = vpop.permute.xlu0 %6357
  %6359 = vrot.lane.b32.xlu0 %v4928, 111
  %v6360 = vpop.permute.xlu0 %6359
  %6361 = vrot.lane.b32.xlu0 %v4929, 111
  %v6362 = vpop.permute.xlu0 %6361
  %6363 = vrot.lane.b32.xlu0 %v4930, 111
  %v6364 = vpop.permute.xlu0 %6363
  %6365 = vrot.lane.b32.xlu0 %v4931, 111
  %v6366 = vpop.permute.xlu0 %6365
  %6367 = vrot.lane.b32.xlu0 %v4932, 111
  %v6368 = vpop.permute.xlu0 %6367
  %v6369 = vsel %vm1507, %v6366, %v6368
  %v6370 = vsel %vm1507, %v6364, %v6366
  %v6371 = vsel %vm1507, %v6362, %v6364
  %v6372 = vsel %vm1507, %v6360, %v6362
  %v6373 = vsel %vm1507, %v6358, %v6360
  %v6374 = vsel %vm1507, %v6368, %v6358
  %v6376 = vsel %vm107, %v6356, 0
  %6378 = vmatprep.subr.mxu0 %v6372
  %6379 = vmatpush1.msra.mxu0 %v6373
  %6380 = vmatprep.subr.mxu0 0.0
  %6381 = vmatpush1.msra.mxu0 0.0
  %6382 = vmatprep.subr.mxu0 0.0
  %6383 = vmatpush1.msra.mxu0 0.0
  %6384 = vmatprep.subr.mxu0 0.0
  %6385 = vmatpush1.msra.mxu0 0.0
  %6386 = vmatprep.subr.mxu0 0.0
  %6387 = vmatpush1.msra.mxu0 0.0
  %6388 = vmatprep.subr.mxu0 0.0
  %6389 = vmatpush1.msra.mxu0 0.0
  %6390 = vmatprep.subr.mxu0 0.0
  %6391 = vmatpush1.msra.mxu0 0.0
  %6392 = vmatprep.subr.mxu0 0.0
  %6393 = vmatpush1.msra.mxu0 0.0
  %6394 = vmatprep.subr.mxu0 0.0
  %6395 = vmatpush1.msra.mxu0 0.0
  %6396 = vmatprep.subr.mxu0 0.0
  %6397 = vmatpush1.msra.mxu0 0.0
  %6398 = vmatprep.subr.mxu0 0.0
  %6399 = vmatpush1.msra.mxu0 0.0
  %6400 = vmatprep.subr.mxu0 0.0
  %6401 = vmatpush1.msra.mxu0 0.0
  %6402 = vmatprep.subr.mxu0 0.0
  %6403 = vmatpush1.msra.mxu0 0.0
  %6404 = vmatprep.subr.mxu0 0.0
  %6405 = vmatpush1.msra.mxu0 0.0
  %6406 = vmatprep.subr.mxu0 0.0
  %6407 = vmatpush1.msra.mxu0 0.0
  %6408 = vmatprep.subr.mxu0 0.0
  %6409 = vmatpush1.msra.mxu0 0.0
  %6410 = vmatprep.subr.mxu0 0.0
  %6411 = vmatpush1.msra.mxu0 0.0
  %6412 = vmatprep.subr.mxu0 0.0
  %6413 = vmatpush1.msra.mxu0 0.0
  %6414 = vmatprep.subr.mxu0 0.0
  %6415 = vmatpush1.msra.mxu0 0.0
  %6416 = vmatprep.subr.mxu0 0.0
  %6417 = vmatpush1.msra.mxu0 0.0
  %6418 = vmatprep.subr.mxu0 0.0
  %6419 = vmatpush1.msra.mxu0 0.0
  %6420 = vmatprep.subr.mxu0 0.0
  %6421 = vmatpush1.msra.mxu0 0.0
  %6422 = vmatprep.subr.mxu0 0.0
  %6423 = vmatpush1.msra.mxu0 0.0
  %6424 = vmatprep.subr.mxu0 0.0
  %6425 = vmatpush1.msra.mxu0 0.0
  %6426 = vmatprep.subr.mxu0 0.0
  %6427 = vmatpush1.msra.mxu0 0.0
  %6428 = vmatprep.subr.mxu0 0.0
  %6429 = vmatpush1.msra.mxu0 0.0
  %6430 = vmatprep.subr.mxu0 0.0
  %6431 = vmatpush1.msra.mxu0 0.0
  %6432 = vmatprep.subr.mxu0 0.0
  %6433 = vmatpush1.msra.mxu0 0.0
  %6434 = vmatprep.subr.mxu0 0.0
  %6435 = vmatpush1.msra.mxu0 0.0
  %6436 = vmatprep.subr.mxu0 0.0
  %6437 = vmatpush1.msra.mxu0 0.0
  %6438 = vmatprep.subr.mxu0 0.0
  %6439 = vmatpush1.msra.mxu0 0.0
  %6440 = vmatprep.subr.mxu0 0.0
  %6441 = vmatpush1.msra.mxu0 0.0
  %6442 = vmatprep.mubr.f32.mxu0 0.0
  %6443 = vmatmul.mubr.f32.gmra.mrb[0].mxu0 %v6376
  %v6444 = vpop.f32.mrb[0].mxu0
  %v6445 = vadd.f32 0.0, %v6444
  %v6446 = vpop.f32.mrb[0].mxu0
  %v6447 = vadd.f32 0.0, %v6446
  %6448 = vdwg.mxu0
  %6449 = vmatprep.subr.mxu0 %v6370
  %6450 = vmatpush1.msra.mxu0 %v6371
  %6451 = vmatprep.subr.mxu0 0.0
  %6452 = vmatpush1.msra.mxu0 0.0
  %6453 = vmatprep.subr.mxu0 0.0
  %6454 = vmatpush1.msra.mxu0 0.0
  %6455 = vmatprep.subr.mxu0 0.0
  %6456 = vmatpush1.msra.mxu0 0.0
  %6457 = vmatprep.subr.mxu0 0.0
  %6458 = vmatpush1.msra.mxu0 0.0
  %6459 = vmatprep.subr.mxu0 0.0
  %6460 = vmatpush1.msra.mxu0 0.0
  %6461 = vmatprep.subr.mxu0 0.0
  %6462 = vmatpush1.msra.mxu0 0.0
  %6463 = vmatprep.subr.mxu0 0.0
  %6464 = vmatpush1.msra.mxu0 0.0
  %6465 = vmatprep.subr.mxu0 0.0
  %6466 = vmatpush1.msra.mxu0 0.0
  %6467 = vmatprep.subr.mxu0 0.0
  %6468 = vmatpush1.msra.mxu0 0.0
  %6469 = vmatprep.subr.mxu0 0.0
  %6470 = vmatpush1.msra.mxu0 0.0
  %6471 = vmatprep.subr.mxu0 0.0
  %6472 = vmatpush1.msra.mxu0 0.0
  %6473 = vmatprep.subr.mxu0 0.0
  %6474 = vmatpush1.msra.mxu0 0.0
  %6475 = vmatprep.subr.mxu0 0.0
  %6476 = vmatpush1.msra.mxu0 0.0
  %6477 = vmatprep.subr.mxu0 0.0
  %6478 = vmatpush1.msra.mxu0 0.0
  %6479 = vmatprep.subr.mxu0 0.0
  %6480 = vmatpush1.msra.mxu0 0.0
  %6481 = vmatprep.subr.mxu0 0.0
  %6482 = vmatpush1.msra.mxu0 0.0
  %6483 = vmatprep.subr.mxu0 0.0
  %6484 = vmatpush1.msra.mxu0 0.0
  %6485 = vmatprep.subr.mxu0 0.0
  %6486 = vmatpush1.msra.mxu0 0.0
  %6487 = vmatprep.subr.mxu0 0.0
  %6488 = vmatpush1.msra.mxu0 0.0
  %6489 = vmatprep.subr.mxu0 0.0
  %6490 = vmatpush1.msra.mxu0 0.0
  %6491 = vmatprep.subr.mxu0 0.0
  %6492 = vmatpush1.msra.mxu0 0.0
  %6493 = vmatprep.subr.mxu0 0.0
  %6494 = vmatpush1.msra.mxu0 0.0
  %6495 = vmatprep.subr.mxu0 0.0
  %6496 = vmatpush1.msra.mxu0 0.0
  %6497 = vmatprep.subr.mxu0 0.0
  %6498 = vmatpush1.msra.mxu0 0.0
  %6499 = vmatprep.subr.mxu0 0.0
  %6500 = vmatpush1.msra.mxu0 0.0
  %6501 = vmatprep.subr.mxu0 0.0
  %6502 = vmatpush1.msra.mxu0 0.0
  %6503 = vmatprep.subr.mxu0 0.0
  %6504 = vmatpush1.msra.mxu0 0.0
  %6505 = vmatprep.subr.mxu0 0.0
  %6506 = vmatpush1.msra.mxu0 0.0
  %6507 = vmatprep.subr.mxu0 0.0
  %6508 = vmatpush1.msra.mxu0 0.0
  %6509 = vmatprep.subr.mxu0 0.0
  %6510 = vmatpush1.msra.mxu0 0.0
  %6511 = vmatprep.subr.mxu0 0.0
  %6512 = vmatpush1.msra.mxu0 0.0
  %6513 = vmatprep.mubr.f32.mxu0 0.0
  %6514 = vmatmul.mubr.f32.gmra.mrb[0].mxu0 %v6376
  %v6515 = vpop.f32.mrb[0].mxu0
  %v6516 = vadd.f32 0.0, %v6515
  %v6517 = vpop.f32.mrb[0].mxu0
  %v6518 = vadd.f32 0.0, %v6517
  %6519 = vdwg.mxu0
  %6520 = vmatprep.subr.mxu0 %v6374
  %6521 = vmatpush1.msra.mxu0 %v6369
  %6522 = vmatprep.subr.mxu0 0.0
  %6523 = vmatpush1.msra.mxu0 0.0
  %6524 = vmatprep.subr.mxu0 0.0
  %6525 = vmatpush1.msra.mxu0 0.0
  %6526 = vmatprep.subr.mxu0 0.0
  %6527 = vmatpush1.msra.mxu0 0.0
  %6528 = vmatprep.subr.mxu0 0.0
  %6529 = vmatpush1.msra.mxu0 0.0
  %6530 = vmatprep.subr.mxu0 0.0
  %6531 = vmatpush1.msra.mxu0 0.0
  %6532 = vmatprep.subr.mxu0 0.0
  %6533 = vmatpush1.msra.mxu0 0.0
  %6534 = vmatprep.subr.mxu0 0.0
  %6535 = vmatpush1.msra.mxu0 0.0
  %6536 = vmatprep.subr.mxu0 0.0
  %6537 = vmatpush1.msra.mxu0 0.0
  %6538 = vmatprep.subr.mxu0 0.0
  %6539 = vmatpush1.msra.mxu0 0.0
  %6540 = vmatprep.subr.mxu0 0.0
  %6541 = vmatpush1.msra.mxu0 0.0
  %6542 = vmatprep.subr.mxu0 0.0
  %6543 = vmatpush1.msra.mxu0 0.0
  %6544 = vmatprep.subr.mxu0 0.0
  %6545 = vmatpush1.msra.mxu0 0.0
  %6546 = vmatprep.subr.mxu0 0.0
  %6547 = vmatpush1.msra.mxu0 0.0
  %6548 = vmatprep.subr.mxu0 0.0
  %6549 = vmatpush1.msra.mxu0 0.0
  %6550 = vmatprep.subr.mxu0 0.0
  %6551 = vmatpush1.msra.mxu0 0.0
  %6552 = vmatprep.subr.mxu0 0.0
  %6553 = vmatpush1.msra.mxu0 0.0
  %6554 = vmatprep.subr.mxu0 0.0
  %6555 = vmatpush1.msra.mxu0 0.0
  %6556 = vmatprep.subr.mxu0 0.0
  %6557 = vmatpush1.msra.mxu0 0.0
  %6558 = vmatprep.subr.mxu0 0.0
  %6559 = vmatpush1.msra.mxu0 0.0
  %6560 = vmatprep.subr.mxu0 0.0
  %6561 = vmatpush1.msra.mxu0 0.0
  %6562 = vmatprep.subr.mxu0 0.0
  %6563 = vmatpush1.msra.mxu0 0.0
  %6564 = vmatprep.subr.mxu0 0.0
  %6565 = vmatpush1.msra.mxu0 0.0
  %6566 = vmatprep.subr.mxu0 0.0
  %6567 = vmatpush1.msra.mxu0 0.0
  %6568 = vmatprep.subr.mxu0 0.0
  %6569 = vmatpush1.msra.mxu0 0.0
  %6570 = vmatprep.subr.mxu0 0.0
  %6571 = vmatpush1.msra.mxu0 0.0
  %6572 = vmatprep.subr.mxu0 0.0
  %6573 = vmatpush1.msra.mxu0 0.0
  %6574 = vmatprep.subr.mxu0 0.0
  %6575 = vmatpush1.msra.mxu0 0.0
  %6576 = vmatprep.subr.mxu0 0.0
  %6577 = vmatpush1.msra.mxu0 0.0
  %6578 = vmatprep.subr.mxu0 0.0
  %6579 = vmatpush1.msra.mxu0 0.0
  %6580 = vmatprep.subr.mxu0 0.0
  %6581 = vmatpush1.msra.mxu0 0.0
  %6582 = vmatprep.subr.mxu0 0.0
  %6583 = vmatpush1.msra.mxu0 0.0
  %6584 = vmatprep.mubr.f32.mxu0 0.0
  %6585 = vmatmul.mubr.f32.gmra.mrb[0].mxu0 %v6376
  %v6586 = vpop.f32.mrb[0].mxu0
  %v6587 = vadd.f32 0.0, %v6586
  %v6588 = vpop.f32.mrb[0].mxu0
  %v6589 = vadd.f32 0.0, %v6588
  %6590 = vdwg.mxu0
  %v6591 = vadd.f32 %v6349, %v6445
  %v6592 = vadd.f32 %v6350, %v6447
  %v6593 = vadd.f32 %v6351, %v6516
  %v6594 = vadd.f32 %v6352, %v6518
  %v6595 = vadd.f32 %v6353, %v6587
  %v6596 = vadd.f32 %v6354, %v6589
  %s6597 = scalar_lea.vmem %s2, 128
  %v6598 = vld [vmem:[%s6597] sm:$0xff]
  %6599 = vrot.lane.b32.xlu0 %v4927, 110
  %v6600 = vpop.permute.xlu0 %6599
  %6601 = vrot.lane.b32.xlu0 %v4928, 110
  %v6602 = vpop.permute.xlu0 %6601
  %6603 = vrot.lane.b32.xlu0 %v4929, 110
  %v6604 = vpop.permute.xlu0 %6603
  %6605 = vrot.lane.b32.xlu0 %v4930, 110
  %v6606 = vpop.permute.xlu0 %6605
  %6607 = vrot.lane.b32.xlu0 %v4931, 110
  %v6608 = vpop.permute.xlu0 %6607
  %6609 = vrot.lane.b32.xlu0 %v4932, 110
  %v6610 = vpop.permute.xlu0 %6609
  %v6611 = vsel %vm1750, %v6608, %v6610
  %v6612 = vsel %vm1750, %v6606, %v6608
  %v6613 = vsel %vm1750, %v6604, %v6606
  %v6614 = vsel %vm1750, %v6602, %v6604
  %v6615 = vsel %vm1750, %v6600, %v6602
  %v6616 = vsel %vm1750, %v6610, %v6600
  %v6618 = vsel %vm107, %v6598, 0
  %6620 = vmatprep.subr.mxu0 %v6614
  %6621 = vmatpush1.msra.mxu0 %v6615
  %6622 = vmatprep.subr.mxu0 0.0
  %6623 = vmatpush1.msra.mxu0 0.0
  %6624 = vmatprep.subr.mxu0 0.0
  %6625 = vmatpush1.msra.mxu0 0.0
  %6626 = vmatprep.subr.mxu0 0.0
  %6627 = vmatpush1.msra.mxu0 0.0
  %6628 = vmatprep.subr.mxu0 0.0
  %6629 = vmatpush1.msra.mxu0 0.0
  %6630 = vmatprep.subr.mxu0 0.0
  %6631 = vmatpush1.msra.mxu0 0.0
  %6632 = vmatprep.subr.mxu0 0.0
  %6633 = vmatpush1.msra.mxu0 0.0
  %6634 = vmatprep.subr.mxu0 0.0
  %6635 = vmatpush1.msra.mxu0 0.0
  %6636 = vmatprep.subr.mxu0 0.0
  %6637 = vmatpush1.msra.mxu0 0.0
  %6638 = vmatprep.subr.mxu0 0.0
  %6639 = vmatpush1.msra.mxu0 0.0
  %6640 = vmatprep.subr.mxu0 0.0
  %6641 = vmatpush1.msra.mxu0 0.0
  %6642 = vmatprep.subr.mxu0 0.0
  %6643 = vmatpush1.msra.mxu0 0.0
  %6644 = vmatprep.subr.mxu0 0.0
  %6645 = vmatpush1.msra.mxu0 0.0
  %6646 = vmatprep.subr.mxu0 0.0
  %6647 = vmatpush1.msra.mxu0 0.0
  %6648 = vmatprep.subr.mxu0 0.0
  %6649 = vmatpush1.msra.mxu0 0.0
  %6650 = vmatprep.subr.mxu0 0.0
  %6651 = vmatpush1.msra.mxu0 0.0
  %6652 = vmatprep.subr.mxu0 0.0
  %6653 = vmatpush1.msra.mxu0 0.0
  %6654 = vmatprep.subr.mxu0 0.0
  %6655 = vmatpush1.msra.mxu0 0.0
  %6656 = vmatprep.subr.mxu0 0.0
  %6657 = vmatpush1.msra.mxu0 0.0
  %6658 = vmatprep.subr.mxu0 0.0
  %6659 = vmatpush1.msra.mxu0 0.0
  %6660 = vmatprep.subr.mxu0 0.0
  %6661 = vmatpush1.msra.mxu0 0.0
  %6662 = vmatprep.subr.mxu0 0.0
  %6663 = vmatpush1.msra.mxu0 0.0
  %6664 = vmatprep.subr.mxu0 0.0
  %6665 = vmatpush1.msra.mxu0 0.0
  %6666 = vmatprep.subr.mxu0 0.0
  %6667 = vmatpush1.msra.mxu0 0.0
  %6668 = vmatprep.subr.mxu0 0.0
  %6669 = vmatpush1.msra.mxu0 0.0
  %6670 = vmatprep.subr.mxu0 0.0
  %6671 = vmatpush1.msra.mxu0 0.0
  %6672 = vmatprep.subr.mxu0 0.0
  %6673 = vmatpush1.msra.mxu0 0.0
  %6674 = vmatprep.subr.mxu0 0.0
  %6675 = vmatpush1.msra.mxu0 0.0
  %6676 = vmatprep.subr.mxu0 0.0
  %6677 = vmatpush1.msra.mxu0 0.0
  %6678 = vmatprep.subr.mxu0 0.0
  %6679 = vmatpush1.msra.mxu0 0.0
  %6680 = vmatprep.subr.mxu0 0.0
  %6681 = vmatpush1.msra.mxu0 0.0
  %6682 = vmatprep.subr.mxu0 0.0
  %6683 = vmatpush1.msra.mxu0 0.0
  %6684 = vmatprep.mubr.f32.mxu0 0.0
  %6685 = vmatmul.mubr.f32.gmra.mrb[0].mxu0 %v6618
  %v6686 = vpop.f32.mrb[0].mxu0
  %v6687 = vadd.f32 0.0, %v6686
  %v6688 = vpop.f32.mrb[0].mxu0
  %v6689 = vadd.f32 0.0, %v6688
  %6690 = vdwg.mxu0
  %6691 = vmatprep.subr.mxu0 %v6612
  %6692 = vmatpush1.msra.mxu0 %v6613
  %6693 = vmatprep.subr.mxu0 0.0
  %6694 = vmatpush1.msra.mxu0 0.0
  %6695 = vmatprep.subr.mxu0 0.0
  %6696 = vmatpush1.msra.mxu0 0.0
  %6697 = vmatprep.subr.mxu0 0.0
  %6698 = vmatpush1.msra.mxu0 0.0
  %6699 = vmatprep.subr.mxu0 0.0
  %6700 = vmatpush1.msra.mxu0 0.0
  %6701 = vmatprep.subr.mxu0 0.0
  %6702 = vmatpush1.msra.mxu0 0.0
  %6703 = vmatprep.subr.mxu0 0.0
  %6704 = vmatpush1.msra.mxu0 0.0
  %6705 = vmatprep.subr.mxu0 0.0
  %6706 = vmatpush1.msra.mxu0 0.0
  %6707 = vmatprep.subr.mxu0 0.0
  %6708 = vmatpush1.msra.mxu0 0.0
  %6709 = vmatprep.subr.mxu0 0.0
  %6710 = vmatpush1.msra.mxu0 0.0
  %6711 = vmatprep.subr.mxu0 0.0
  %6712 = vmatpush1.msra.mxu0 0.0
  %6713 = vmatprep.subr.mxu0 0.0
  %6714 = vmatpush1.msra.mxu0 0.0
  %6715 = vmatprep.subr.mxu0 0.0
  %6716 = vmatpush1.msra.mxu0 0.0
  %6717 = vmatprep.subr.mxu0 0.0
  %6718 = vmatpush1.msra.mxu0 0.0
  %6719 = vmatprep.subr.mxu0 0.0
  %6720 = vmatpush1.msra.mxu0 0.0
  %6721 = vmatprep.subr.mxu0 0.0
  %6722 = vmatpush1.msra.mxu0 0.0
  %6723 = vmatprep.subr.mxu0 0.0
  %6724 = vmatpush1.msra.mxu0 0.0
  %6725 = vmatprep.subr.mxu0 0.0
  %6726 = vmatpush1.msra.mxu0 0.0
  %6727 = vmatprep.subr.mxu0 0.0
  %6728 = vmatpush1.msra.mxu0 0.0
  %6729 = vmatprep.subr.mxu0 0.0
  %6730 = vmatpush1.msra.mxu0 0.0
  %6731 = vmatprep.subr.mxu0 0.0
  %6732 = vmatpush1.msra.mxu0 0.0
  %6733 = vmatprep.subr.mxu0 0.0
  %6734 = vmatpush1.msra.mxu0 0.0
  %6735 = vmatprep.subr.mxu0 0.0
  %6736 = vmatpush1.msra.mxu0 0.0
  %6737 = vmatprep.subr.mxu0 0.0
  %6738 = vmatpush1.msra.mxu0 0.0
  %6739 = vmatprep.subr.mxu0 0.0
  %6740 = vmatpush1.msra.mxu0 0.0
  %6741 = vmatprep.subr.mxu0 0.0
  %6742 = vmatpush1.msra.mxu0 0.0
  %6743 = vmatprep.subr.mxu0 0.0
  %6744 = vmatpush1.msra.mxu0 0.0
  %6745 = vmatprep.subr.mxu0 0.0
  %6746 = vmatpush1.msra.mxu0 0.0
  %6747 = vmatprep.subr.mxu0 0.0
  %6748 = vmatpush1.msra.mxu0 0.0
  %6749 = vmatprep.subr.mxu0 0.0
  %6750 = vmatpush1.msra.mxu0 0.0
  %6751 = vmatprep.subr.mxu0 0.0
  %6752 = vmatpush1.msra.mxu0 0.0
  %6753 = vmatprep.subr.mxu0 0.0
  %6754 = vmatpush1.msra.mxu0 0.0
  %6755 = vmatprep.mubr.f32.mxu0 0.0
  %6756 = vmatmul.mubr.f32.gmra.mrb[0].mxu0 %v6618
  %v6757 = vpop.f32.mrb[0].mxu0
  %v6758 = vadd.f32 0.0, %v6757
  %v6759 = vpop.f32.mrb[0].mxu0
  %v6760 = vadd.f32 0.0, %v6759
  %6761 = vdwg.mxu0
  %6762 = vmatprep.subr.mxu0 %v6616
  %6763 = vmatpush1.msra.mxu0 %v6611
  %6764 = vmatprep.subr.mxu0 0.0
  %6765 = vmatpush1.msra.mxu0 0.0
  %6766 = vmatprep.subr.mxu0 0.0
  %6767 = vmatpush1.msra.mxu0 0.0
  %6768 = vmatprep.subr.mxu0 0.0
  %6769 = vmatpush1.msra.mxu0 0.0
  %6770 = vmatprep.subr.mxu0 0.0
  %6771 = vmatpush1.msra.mxu0 0.0
  %6772 = vmatprep.subr.mxu0 0.0
  %6773 = vmatpush1.msra.mxu0 0.0
  %6774 = vmatprep.subr.mxu0 0.0
  %6775 = vmatpush1.msra.mxu0 0.0
  %6776 = vmatprep.subr.mxu0 0.0
  %6777 = vmatpush1.msra.mxu0 0.0
  %6778 = vmatprep.subr.mxu0 0.0
  %6779 = vmatpush1.msra.mxu0 0.0
  %6780 = vmatprep.subr.mxu0 0.0
  %6781 = vmatpush1.msra.mxu0 0.0
  %6782 = vmatprep.subr.mxu0 0.0
  %6783 = vmatpush1.msra.mxu0 0.0
  %6784 = vmatprep.subr.mxu0 0.0
  %6785 = vmatpush1.msra.mxu0 0.0
  %6786 = vmatprep.subr.mxu0 0.0
  %6787 = vmatpush1.msra.mxu0 0.0
  %6788 = vmatprep.subr.mxu0 0.0
  %6789 = vmatpush1.msra.mxu0 0.0
  %6790 = vmatprep.subr.mxu0 0.0
  %6791 = vmatpush1.msra.mxu0 0.0
  %6792 = vmatprep.subr.mxu0 0.0
  %6793 = vmatpush1.msra.mxu0 0.0
  %6794 = vmatprep.subr.mxu0 0.0
  %6795 = vmatpush1.msra.mxu0 0.0
  %6796 = vmatprep.subr.mxu0 0.0
  %6797 = vmatpush1.msra.mxu0 0.0
  %6798 = vmatprep.subr.mxu0 0.0
  %6799 = vmatpush1.msra.mxu0 0.0
  %6800 = vmatprep.subr.mxu0 0.0
  %6801 = vmatpush1.msra.mxu0 0.0
  %6802 = vmatprep.subr.mxu0 0.0
  %6803 = vmatpush1.msra.mxu0 0.0
  %6804 = vmatprep.subr.mxu0 0.0
  %6805 = vmatpush1.msra.mxu0 0.0
  %6806 = vmatprep.subr.mxu0 0.0
  %6807 = vmatpush1.msra.mxu0 0.0
  %6808 = vmatprep.subr.mxu0 0.0
  %6809 = vmatpush1.msra.mxu0 0.0
  %6810 = vmatprep.subr.mxu0 0.0
  %6811 = vmatpush1.msra.mxu0 0.0
  %6812 = vmatprep.subr.mxu0 0.0
  %6813 = vmatpush1.msra.mxu0 0.0
  %6814 = vmatprep.subr.mxu0 0.0
  %6815 = vmatpush1.msra.mxu0 0.0
  %6816 = vmatprep.subr.mxu0 0.0
  %6817 = vmatpush1.msra.mxu0 0.0
  %6818 = vmatprep.subr.mxu0 0.0
  %6819 = vmatpush1.msra.mxu0 0.0
  %6820 = vmatprep.subr.mxu0 0.0
  %6821 = vmatpush1.msra.mxu0 0.0
  %6822 = vmatprep.subr.mxu0 0.0
  %6823 = vmatpush1.msra.mxu0 0.0
  %6824 = vmatprep.subr.mxu0 0.0
  %6825 = vmatpush1.msra.mxu0 0.0
  %6826 = vmatprep.mubr.f32.mxu0 0.0
  %6827 = vmatmul.mubr.f32.gmra.mrb[0].mxu0 %v6618
  %v6828 = vpop.f32.mrb[0].mxu0
  %v6829 = vadd.f32 0.0, %v6828
  %v6830 = vpop.f32.mrb[0].mxu0
  %v6831 = vadd.f32 0.0, %v6830
  %6832 = vdwg.mxu0
  %v6833 = vadd.f32 %v6591, %v6687
  %v6834 = vadd.f32 %v6592, %v6689
  %v6835 = vadd.f32 %v6593, %v6758
  %v6836 = vadd.f32 %v6594, %v6760
  %v6837 = vadd.f32 %v6595, %v6829
  %v6838 = vadd.f32 %v6596, %v6831
  %s6839 = scalar_lea.vmem %s2, 136
  %v6840 = vld [vmem:[%s6839] sm:$0xff]
  %6841 = vrot.lane.b32.xlu0 %v4927, 109
  %v6842 = vpop.permute.xlu0 %6841
  %6843 = vrot.lane.b32.xlu0 %v4928, 109
  %v6844 = vpop.permute.xlu0 %6843
  %6845 = vrot.lane.b32.xlu0 %v4929, 109
  %v6846 = vpop.permute.xlu0 %6845
  %6847 = vrot.lane.b32.xlu0 %v4930, 109
  %v6848 = vpop.permute.xlu0 %6847
  %6849 = vrot.lane.b32.xlu0 %v4931, 109
  %v6850 = vpop.permute.xlu0 %6849
  %6851 = vrot.lane.b32.xlu0 %v4932, 109
  %v6852 = vpop.permute.xlu0 %6851
  %v6853 = vsel %vm1993, %v6850, %v6852
  %v6854 = vsel %vm1993, %v6848, %v6850
  %v6855 = vsel %vm1993, %v6846, %v6848
  %v6856 = vsel %vm1993, %v6844, %v6846
  %v6857 = vsel %vm1993, %v6842, %v6844
  %v6858 = vsel %vm1993, %v6852, %v6842
  %v6860 = vsel %vm107, %v6840, 0
  %6862 = vmatprep.subr.mxu0 %v6856
  %6863 = vmatpush1.msra.mxu0 %v6857
  %6864 = vmatprep.subr.mxu0 0.0
  %6865 = vmatpush1.msra.mxu0 0.0
  %6866 = vmatprep.subr.mxu0 0.0
  %6867 = vmatpush1.msra.mxu0 0.0
  %6868 = vmatprep.subr.mxu0 0.0
  %6869 = vmatpush1.msra.mxu0 0.0
  %6870 = vmatprep.subr.mxu0 0.0
  %6871 = vmatpush1.msra.mxu0 0.0
  %6872 = vmatprep.subr.mxu0 0.0
  %6873 = vmatpush1.msra.mxu0 0.0
  %6874 = vmatprep.subr.mxu0 0.0
  %6875 = vmatpush1.msra.mxu0 0.0
  %6876 = vmatprep.subr.mxu0 0.0
  %6877 = vmatpush1.msra.mxu0 0.0
  %6878 = vmatprep.subr.mxu0 0.0
  %6879 = vmatpush1.msra.mxu0 0.0
  %6880 = vmatprep.subr.mxu0 0.0
  %6881 = vmatpush1.msra.mxu0 0.0
  %6882 = vmatprep.subr.mxu0 0.0
  %6883 = vmatpush1.msra.mxu0 0.0
  %6884 = vmatprep.subr.mxu0 0.0
  %6885 = vmatpush1.msra.mxu0 0.0
  %6886 = vmatprep.subr.mxu0 0.0
  %6887 = vmatpush1.msra.mxu0 0.0
  %6888 = vmatprep.subr.mxu0 0.0
  %6889 = vmatpush1.msra.mxu0 0.0
  %6890 = vmatprep.subr.mxu0 0.0
  %6891 = vmatpush1.msra.mxu0 0.0
  %6892 = vmatprep.subr.mxu0 0.0
  %6893 = vmatpush1.msra.mxu0 0.0
  %6894 = vmatprep.subr.mxu0 0.0
  %6895 = vmatpush1.msra.mxu0 0.0
  %6896 = vmatprep.subr.mxu0 0.0
  %6897 = vmatpush1.msra.mxu0 0.0
  %6898 = vmatprep.subr.mxu0 0.0
  %6899 = vmatpush1.msra.mxu0 0.0
  %6900 = vmatprep.subr.mxu0 0.0
  %6901 = vmatpush1.msra.mxu0 0.0
  %6902 = vmatprep.subr.mxu0 0.0
  %6903 = vmatpush1.msra.mxu0 0.0
  %6904 = vmatprep.subr.mxu0 0.0
  %6905 = vmatpush1.msra.mxu0 0.0
  %6906 = vmatprep.subr.mxu0 0.0
  %6907 = vmatpush1.msra.mxu0 0.0
  %6908 = vmatprep.subr.mxu0 0.0
  %6909 = vmatpush1.msra.mxu0 0.0
  %6910 = vmatprep.subr.mxu0 0.0
  %6911 = vmatpush1.msra.mxu0 0.0
  %6912 = vmatprep.subr.mxu0 0.0
  %6913 = vmatpush1.msra.mxu0 0.0
  %6914 = vmatprep.subr.mxu0 0.0
  %6915 = vmatpush1.msra.mxu0 0.0
  %6916 = vmatprep.subr.mxu0 0.0
  %6917 = vmatpush1.msra.mxu0 0.0
  %6918 = vmatprep.subr.mxu0 0.0
  %6919 = vmatpush1.msra.mxu0 0.0
  %6920 = vmatprep.subr.mxu0 0.0
  %6921 = vmatpush1.msra.mxu0 0.0
  %6922 = vmatprep.subr.mxu0 0.0
  %6923 = vmatpush1.msra.mxu0 0.0
  %6924 = vmatprep.subr.mxu0 0.0
  %6925 = vmatpush1.msra.mxu0 0.0
  %6926 = vmatprep.mubr.f32.mxu0 0.0
  %6927 = vmatmul.mubr.f32.gmra.mrb[0].mxu0 %v6860
  %v6928 = vpop.f32.mrb[0].mxu0
  %v6929 = vadd.f32 0.0, %v6928
  %v6930 = vpop.f32.mrb[0].mxu0
  %v6931 = vadd.f32 0.0, %v6930
  %6932 = vdwg.mxu0
  %6933 = vmatprep.subr.mxu0 %v6854
  %6934 = vmatpush1.msra.mxu0 %v6855
  %6935 = vmatprep.subr.mxu0 0.0
  %6936 = vmatpush1.msra.mxu0 0.0
  %6937 = vmatprep.subr.mxu0 0.0
  %6938 = vmatpush1.msra.mxu0 0.0
  %6939 = vmatprep.subr.mxu0 0.0
  %6940 = vmatpush1.msra.mxu0 0.0
  %6941 = vmatprep.subr.mxu0 0.0
  %6942 = vmatpush1.msra.mxu0 0.0
  %6943 = vmatprep.subr.mxu0 0.0
  %6944 = vmatpush1.msra.mxu0 0.0
  %6945 = vmatprep.subr.mxu0 0.0
  %6946 = vmatpush1.msra.mxu0 0.0
  %6947 = vmatprep.subr.mxu0 0.0
  %6948 = vmatpush1.msra.mxu0 0.0
  %6949 = vmatprep.subr.mxu0 0.0
  %6950 = vmatpush1.msra.mxu0 0.0
  %6951 = vmatprep.subr.mxu0 0.0
  %6952 = vmatpush1.msra.mxu0 0.0
  %6953 = vmatprep.subr.mxu0 0.0
  %6954 = vmatpush1.msra.mxu0 0.0
  %6955 = vmatprep.subr.mxu0 0.0
  %6956 = vmatpush1.msra.mxu0 0.0
  %6957 = vmatprep.subr.mxu0 0.0
  %6958 = vmatpush1.msra.mxu0 0.0
  %6959 = vmatprep.subr.mxu0 0.0
  %6960 = vmatpush1.msra.mxu0 0.0
  %6961 = vmatprep.subr.mxu0 0.0
  %6962 = vmatpush1.msra.mxu0 0.0
  %6963 = vmatprep.subr.mxu0 0.0
  %6964 = vmatpush1.msra.mxu0 0.0
  %6965 = vmatprep.subr.mxu0 0.0
  %6966 = vmatpush1.msra.mxu0 0.0
  %6967 = vmatprep.subr.mxu0 0.0
  %6968 = vmatpush1.msra.mxu0 0.0
  %6969 = vmatprep.subr.mxu0 0.0
  %6970 = vmatpush1.msra.mxu0 0.0
  %6971 = vmatprep.subr.mxu0 0.0
  %6972 = vmatpush1.msra.mxu0 0.0
  %6973 = vmatprep.subr.mxu0 0.0
  %6974 = vmatpush1.msra.mxu0 0.0
  %6975 = vmatprep.subr.mxu0 0.0
  %6976 = vmatpush1.msra.mxu0 0.0
  %6977 = vmatprep.subr.mxu0 0.0
  %6978 = vmatpush1.msra.mxu0 0.0
  %6979 = vmatprep.subr.mxu0 0.0
  %6980 = vmatpush1.msra.mxu0 0.0
  %6981 = vmatprep.subr.mxu0 0.0
  %6982 = vmatpush1.msra.mxu0 0.0
  %6983 = vmatprep.subr.mxu0 0.0
  %6984 = vmatpush1.msra.mxu0 0.0
  %6985 = vmatprep.subr.mxu0 0.0
  %6986 = vmatpush1.msra.mxu0 0.0
  %6987 = vmatprep.subr.mxu0 0.0
  %6988 = vmatpush1.msra.mxu0 0.0
  %6989 = vmatprep.subr.mxu0 0.0
  %6990 = vmatpush1.msra.mxu0 0.0
  %6991 = vmatprep.subr.mxu0 0.0
  %6992 = vmatpush1.msra.mxu0 0.0
  %6993 = vmatprep.subr.mxu0 0.0
  %6994 = vmatpush1.msra.mxu0 0.0
  %6995 = vmatprep.subr.mxu0 0.0
  %6996 = vmatpush1.msra.mxu0 0.0
  %6997 = vmatprep.mubr.f32.mxu0 0.0
  %6998 = vmatmul.mubr.f32.gmra.mrb[0].mxu0 %v6860
  %v6999 = vpop.f32.mrb[0].mxu0
  %v7000 = vadd.f32 0.0, %v6999
  %v7001 = vpop.f32.mrb[0].mxu0
  %v7002 = vadd.f32 0.0, %v7001
  %7003 = vdwg.mxu0
  %7004 = vmatprep.subr.mxu0 %v6858
  %7005 = vmatpush1.msra.mxu0 %v6853
  %7006 = vmatprep.subr.mxu0 0.0
  %7007 = vmatpush1.msra.mxu0 0.0
  %7008 = vmatprep.subr.mxu0 0.0
  %7009 = vmatpush1.msra.mxu0 0.0
  %7010 = vmatprep.subr.mxu0 0.0
  %7011 = vmatpush1.msra.mxu0 0.0
  %7012 = vmatprep.subr.mxu0 0.0
  %7013 = vmatpush1.msra.mxu0 0.0
  %7014 = vmatprep.subr.mxu0 0.0
  %7015 = vmatpush1.msra.mxu0 0.0
  %7016 = vmatprep.subr.mxu0 0.0
  %7017 = vmatpush1.msra.mxu0 0.0
  %7018 = vmatprep.subr.mxu0 0.0
  %7019 = vmatpush1.msra.mxu0 0.0
  %7020 = vmatprep.subr.mxu0 0.0
  %7021 = vmatpush1.msra.mxu0 0.0
  %7022 = vmatprep.subr.mxu0 0.0
  %7023 = vmatpush1.msra.mxu0 0.0
  %7024 = vmatprep.subr.mxu0 0.0
  %7025 = vmatpush1.msra.mxu0 0.0
  %7026 = vmatprep.subr.mxu0 0.0
  %7027 = vmatpush1.msra.mxu0 0.0
  %7028 = vmatprep.subr.mxu0 0.0
  %7029 = vmatpush1.msra.mxu0 0.0
  %7030 = vmatprep.subr.mxu0 0.0
  %7031 = vmatpush1.msra.mxu0 0.0
  %7032 = vmatprep.subr.mxu0 0.0
  %7033 = vmatpush1.msra.mxu0 0.0
  %7034 = vmatprep.subr.mxu0 0.0
  %7035 = vmatpush1.msra.mxu0 0.0
  %7036 = vmatprep.subr.mxu0 0.0
  %7037 = vmatpush1.msra.mxu0 0.0
  %7038 = vmatprep.subr.mxu0 0.0
  %7039 = vmatpush1.msra.mxu0 0.0
  %7040 = vmatprep.subr.mxu0 0.0
  %7041 = vmatpush1.msra.mxu0 0.0
  %7042 = vmatprep.subr.mxu0 0.0
  %7043 = vmatpush1.msra.mxu0 0.0
  %7044 = vmatprep.subr.mxu0 0.0
  %7045 = vmatpush1.msra.mxu0 0.0
  %7046 = vmatprep.subr.mxu0 0.0
  %7047 = vmatpush1.msra.mxu0 0.0
  %7048 = vmatprep.subr.mxu0 0.0
  %7049 = vmatpush1.msra.mxu0 0.0
  %7050 = vmatprep.subr.mxu0 0.0
  %7051 = vmatpush1.msra.mxu0 0.0
  %7052 = vmatprep.subr.mxu0 0.0
  %7053 = vmatpush1.msra.mxu0 0.0
  %7054 = vmatprep.subr.mxu0 0.0
  %7055 = vmatpush1.msra.mxu0 0.0
  %7056 = vmatprep.subr.mxu0 0.0
  %7057 = vmatpush1.msra.mxu0 0.0
  %7058 = vmatprep.subr.mxu0 0.0
  %7059 = vmatpush1.msra.mxu0 0.0
  %7060 = vmatprep.subr.mxu0 0.0
  %7061 = vmatpush1.msra.mxu0 0.0
  %7062 = vmatprep.subr.mxu0 0.0
  %7063 = vmatpush1.msra.mxu0 0.0
  %7064 = vmatprep.subr.mxu0 0.0
  %7065 = vmatpush1.msra.mxu0 0.0
  %7066 = vmatprep.subr.mxu0 0.0
  %7067 = vmatpush1.msra.mxu0 0.0
  %7068 = vmatprep.mubr.f32.mxu0 0.0
  %7069 = vmatmul.mubr.f32.gmra.mrb[0].mxu0 %v6860
  %v7070 = vpop.f32.mrb[0].mxu0
  %v7071 = vadd.f32 0.0, %v7070
  %v7072 = vpop.f32.mrb[0].mxu0
  %v7073 = vadd.f32 0.0, %v7072
  %7074 = vdwg.mxu0
  %v7075 = vadd.f32 %v6833, %v6929
  %v7076 = vadd.f32 %v6834, %v6931
  %v7077 = vadd.f32 %v6835, %v7000
  %v7078 = vadd.f32 %v6836, %v7002
  %v7079 = vadd.f32 %v6837, %v7071
  %v7080 = vadd.f32 %v6838, %v7073
  %s7081 = scalar_lea.vmem %s5, 24
  %v7082 = vld [vmem:[%s7081] sm:$0xff]
  %v7083 = vld [vmem:[%s7081 + $0x8] sm:$0xff]
  %v7084 = vld [vmem:[%s7081 + $0x10] sm:$0xff]
  %7086 = vset.pattern.permute.xlu0 0
  %7087 = vperm.xlu0 %7086, %v7082
  %v7088 = vpop.permute.xlu0 %7087
  %v7090 = vadd.f32 %v7075, %v7088
  %v7091 = vadd.f32 %v7076, %v7088
  %v7092 = vadd.f32 %v7077, %v7088
  %v7093 = vadd.f32 %v7078, %v7088
  %v7094 = vadd.f32 %v7079, %v7088
  %v7095 = vadd.f32 %v7080, %v7088
  %v7096 = vmax.f32 %v7090, 0.0
  %v7097 = vmax.f32 %v7091, 0.0
  %v7098 = vmax.f32 %v7092, 0.0
  %v7099 = vmax.f32 %v7093, 0.0
  %v7100 = vmax.f32 %v7094, 0.0
  %v7101 = vmax.f32 %v7095, 0.0
  %v7102 = vsel %vm2267, %v7096, 0.0
  %v7103 = vsel %vm2268, %v7097, 0.0
  %v7104 = vsel %vm2269, %v7098, 0.0
  %v7105 = vsel %vm2270, %v7099, 0.0
  %v7106 = vsel %vm2271, %v7100, 0.0
  %v7107 = vsel %vm2272, %v7101, 0.0
  %v7108 = vadd.f32 %v7102, %v7103
  %v7109 = vadd.f32 %v7108, %v7104
  %v7110 = vadd.f32 %v7109, %v7105
  %v7111 = vadd.f32 %v7110, %v7106
  %v7112 = vadd.f32 %v7111, %v7107
  %7113 = vadd.xlane.f32.xlu0 %v7112
  %v7114 = vpop.xlane.xlu0 %7113
  %v7115 = vmul.f32 %v7114, 0.001953125
  %v7116 = vsub.f32 %v7096, %v7115
  %v7117 = vsub.f32 %v7097, %v7115
  %v7118 = vsub.f32 %v7098, %v7115
  %v7119 = vsub.f32 %v7099, %v7115
  %v7120 = vsub.f32 %v7100, %v7115
  %v7121 = vsub.f32 %v7101, %v7115
  %v7122 = vsel %vm2267, %v7116, 0.0
  %v7123 = vsel %vm2268, %v7117, 0.0
  %v7124 = vsel %vm2269, %v7118, 0.0
  %v7125 = vsel %vm2270, %v7119, 0.0
  %v7126 = vsel %vm2271, %v7120, 0.0
  %v7127 = vsel %vm2272, %v7121, 0.0
  %v7128 = vmul.f32 %v7122, %v7122
  %v7129 = vmul.f32 %v7123, %v7123
  %v7130 = vmul.f32 %v7124, %v7124
  %v7131 = vmul.f32 %v7125, %v7125
  %v7132 = vmul.f32 %v7126, %v7126
  %v7133 = vmul.f32 %v7127, %v7127
  %v7134 = vadd.f32 %v7128, %v7129
  %v7135 = vadd.f32 %v7134, %v7130
  %v7136 = vadd.f32 %v7135, %v7131
  %v7137 = vadd.f32 %v7136, %v7132
  %v7138 = vadd.f32 %v7137, %v7133
  %7139 = vadd.xlane.f32.xlu0 %v7138
  %v7140 = vpop.xlane.xlu0 %7139
  %v7141 = vmul.f32 %v7140, 0.001953125
  %v7142 = vadd.f32 %v7141, 1e-05
  %v7143 = vrsqrt.pop %v7142
  %v7144 = vmul.f32 %v7143, %v7083
  %7146 = vset.pattern.permute.xlu0 0
  %7147 = vperm.xlu0 %7146, %v7144
  %v7148 = vpop.permute.xlu0 %7147
  %v7150 = vmul.f32 %v7116, %v7148
  %v7151 = vmul.f32 %v7117, %v7148
  %v7152 = vmul.f32 %v7118, %v7148
  %v7153 = vmul.f32 %v7119, %v7148
  %v7154 = vmul.f32 %v7120, %v7148
  %v7155 = vmul.f32 %v7121, %v7148
  %7157 = vset.pattern.permute.xlu0 0
  %7158 = vperm.xlu0 %7157, %v7084
  %v7159 = vpop.permute.xlu0 %7158
  %v7161 = vadd.f32 %v7150, %v7159
  %v7162 = vadd.f32 %v7151, %v7159
  %v7163 = vadd.f32 %v7152, %v7159
  %v7164 = vadd.f32 %v7153, %v7159
  %v7165 = vadd.f32 %v7154, %v7159
  %v7166 = vadd.f32 %v7155, %v7159
  %v7167 = vld [vmem:[%s3] sm:$0xff]
  %v7168 = vld [vmem:[%s6] sm:$0xff]
  %v7169 = vld [vmem:[%s6 + $0x8] sm:$0xff]
  %v7170 = vld [vmem:[%s6 + $0x10] sm:$0xff]
  %7172 = vset.pattern.permute.xlu0 0
  %7173 = vperm.xlu0 %7172, %v7168
  %v7174 = vpop.permute.xlu0 %7173
  %v7177 = vsel %vm107, %v7167, 0
  %7179 = vmatprep.subr.mxu0 %v7162
  %7180 = vmatpush1.msra.mxu0 %v7161
  %7181 = vmatprep.subr.mxu0 0.0
  %7182 = vmatpush1.msra.mxu0 0.0
  %7183 = vmatprep.subr.mxu0 0.0
  %7184 = vmatpush1.msra.mxu0 0.0
  %7185 = vmatprep.subr.mxu0 0.0
  %7186 = vmatpush1.msra.mxu0 0.0
  %7187 = vmatprep.subr.mxu0 0.0
  %7188 = vmatpush1.msra.mxu0 0.0
  %7189 = vmatprep.subr.mxu0 0.0
  %7190 = vmatpush1.msra.mxu0 0.0
  %7191 = vmatprep.subr.mxu0 0.0
  %7192 = vmatpush1.msra.mxu0 0.0
  %7193 = vmatprep.subr.mxu0 0.0
  %7194 = vmatpush1.msra.mxu0 0.0
  %7195 = vmatprep.subr.mxu0 0.0
  %7196 = vmatpush1.msra.mxu0 0.0
  %7197 = vmatprep.subr.mxu0 0.0
  %7198 = vmatpush1.msra.mxu0 0.0
  %7199 = vmatprep.subr.mxu0 0.0
  %7200 = vmatpush1.msra.mxu0 0.0
  %7201 = vmatprep.subr.mxu0 0.0
  %7202 = vmatpush1.msra.mxu0 0.0
  %7203 = vmatprep.subr.mxu0 0.0
  %7204 = vmatpush1.msra.mxu0 0.0
  %7205 = vmatprep.subr.mxu0 0.0
  %7206 = vmatpush1.msra.mxu0 0.0
  %7207 = vmatprep.subr.mxu0 0.0
  %7208 = vmatpush1.msra.mxu0 0.0
  %7209 = vmatprep.subr.mxu0 0.0
  %7210 = vmatpush1.msra.mxu0 0.0
  %7211 = vmatprep.subr.mxu0 0.0
  %7212 = vmatpush1.msra.mxu0 0.0
  %7213 = vmatprep.subr.mxu0 0.0
  %7214 = vmatpush1.msra.mxu0 0.0
  %7215 = vmatprep.subr.mxu0 0.0
  %7216 = vmatpush1.msra.mxu0 0.0
  %7217 = vmatprep.subr.mxu0 0.0
  %7218 = vmatpush1.msra.mxu0 0.0
  %7219 = vmatprep.subr.mxu0 0.0
  %7220 = vmatpush1.msra.mxu0 0.0
  %7221 = vmatprep.subr.mxu0 0.0
  %7222 = vmatpush1.msra.mxu0 0.0
  %7223 = vmatprep.subr.mxu0 0.0
  %7224 = vmatpush1.msra.mxu0 0.0
  %7225 = vmatprep.subr.mxu0 0.0
  %7226 = vmatpush1.msra.mxu0 0.0
  %7227 = vmatprep.subr.mxu0 0.0
  %7228 = vmatpush1.msra.mxu0 0.0
  %7229 = vmatprep.subr.mxu0 0.0
  %7230 = vmatpush1.msra.mxu0 0.0
  %7231 = vmatprep.subr.mxu0 0.0
  %7232 = vmatpush1.msra.mxu0 0.0
  %7233 = vmatprep.subr.mxu0 0.0
  %7234 = vmatpush1.msra.mxu0 0.0
  %7235 = vmatprep.subr.mxu0 0.0
  %7236 = vmatpush1.msra.mxu0 0.0
  %7237 = vmatprep.subr.mxu0 0.0
  %7238 = vmatpush1.msra.mxu0 0.0
  %7239 = vmatprep.subr.mxu0 0.0
  %7240 = vmatpush1.msra.mxu0 0.0
  %7241 = vmatprep.subr.mxu0 0.0
  %7242 = vmatpush1.msra.mxu0 0.0
  %7243 = vmatprep.mubr.f32.mxu0 0.0
  %7244 = vmatmul.mubr.f32.gmra.mrb[0].mxu0 %v7177
  %v7245 = vpop.f32.mrb[0].mxu0
  %v7246 = vadd.f32 %v7174, %v7245
  %v7247 = vpop.f32.mrb[0].mxu0
  %v7248 = vadd.f32 %v7174, %v7247
  %7249 = vdwg.mxu0
  %7250 = vmatprep.subr.mxu0 %v7164
  %7251 = vmatpush1.msra.mxu0 %v7163
  %7252 = vmatprep.subr.mxu0 0.0
  %7253 = vmatpush1.msra.mxu0 0.0
  %7254 = vmatprep.subr.mxu0 0.0
  %7255 = vmatpush1.msra.mxu0 0.0
  %7256 = vmatprep.subr.mxu0 0.0
  %7257 = vmatpush1.msra.mxu0 0.0
  %7258 = vmatprep.subr.mxu0 0.0
  %7259 = vmatpush1.msra.mxu0 0.0
  %7260 = vmatprep.subr.mxu0 0.0
  %7261 = vmatpush1.msra.mxu0 0.0
  %7262 = vmatprep.subr.mxu0 0.0
  %7263 = vmatpush1.msra.mxu0 0.0
  %7264 = vmatprep.subr.mxu0 0.0
  %7265 = vmatpush1.msra.mxu0 0.0
  %7266 = vmatprep.subr.mxu0 0.0
  %7267 = vmatpush1.msra.mxu0 0.0
  %7268 = vmatprep.subr.mxu0 0.0
  %7269 = vmatpush1.msra.mxu0 0.0
  %7270 = vmatprep.subr.mxu0 0.0
  %7271 = vmatpush1.msra.mxu0 0.0
  %7272 = vmatprep.subr.mxu0 0.0
  %7273 = vmatpush1.msra.mxu0 0.0
  %7274 = vmatprep.subr.mxu0 0.0
  %7275 = vmatpush1.msra.mxu0 0.0
  %7276 = vmatprep.subr.mxu0 0.0
  %7277 = vmatpush1.msra.mxu0 0.0
  %7278 = vmatprep.subr.mxu0 0.0
  %7279 = vmatpush1.msra.mxu0 0.0
  %7280 = vmatprep.subr.mxu0 0.0
  %7281 = vmatpush1.msra.mxu0 0.0
  %7282 = vmatprep.subr.mxu0 0.0
  %7283 = vmatpush1.msra.mxu0 0.0
  %7284 = vmatprep.subr.mxu0 0.0
  %7285 = vmatpush1.msra.mxu0 0.0
  %7286 = vmatprep.subr.mxu0 0.0
  %7287 = vmatpush1.msra.mxu0 0.0
  %7288 = vmatprep.subr.mxu0 0.0
  %7289 = vmatpush1.msra.mxu0 0.0
  %7290 = vmatprep.subr.mxu0 0.0
  %7291 = vmatpush1.msra.mxu0 0.0
  %7292 = vmatprep.subr.mxu0 0.0
  %7293 = vmatpush1.msra.mxu0 0.0
  %7294 = vmatprep.subr.mxu0 0.0
  %7295 = vmatpush1.msra.mxu0 0.0
  %7296 = vmatprep.subr.mxu0 0.0
  %7297 = vmatpush1.msra.mxu0 0.0
  %7298 = vmatprep.subr.mxu0 0.0
  %7299 = vmatpush1.msra.mxu0 0.0
  %7300 = vmatprep.subr.mxu0 0.0
  %7301 = vmatpush1.msra.mxu0 0.0
  %7302 = vmatprep.subr.mxu0 0.0
  %7303 = vmatpush1.msra.mxu0 0.0
  %7304 = vmatprep.subr.mxu0 0.0
  %7305 = vmatpush1.msra.mxu0 0.0
  %7306 = vmatprep.subr.mxu0 0.0
  %7307 = vmatpush1.msra.mxu0 0.0
  %7308 = vmatprep.subr.mxu0 0.0
  %7309 = vmatpush1.msra.mxu0 0.0
  %7310 = vmatprep.subr.mxu0 0.0
  %7311 = vmatpush1.msra.mxu0 0.0
  %7312 = vmatprep.subr.mxu0 0.0
  %7313 = vmatpush1.msra.mxu0 0.0
  %7314 = vmatprep.mubr.f32.mxu0 0.0
  %7315 = vmatmul.mubr.f32.gmra.mrb[0].mxu0 %v7177
  %v7316 = vpop.f32.mrb[0].mxu0
  %v7317 = vadd.f32 %v7174, %v7316
  %v7318 = vpop.f32.mrb[0].mxu0
  %v7319 = vadd.f32 %v7174, %v7318
  %7320 = vdwg.mxu0
  %7321 = vmatprep.subr.mxu0 %v7166
  %7322 = vmatpush1.msra.mxu0 %v7165
  %7323 = vmatprep.subr.mxu0 0.0
  %7324 = vmatpush1.msra.mxu0 0.0
  %7325 = vmatprep.subr.mxu0 0.0
  %7326 = vmatpush1.msra.mxu0 0.0
  %7327 = vmatprep.subr.mxu0 0.0
  %7328 = vmatpush1.msra.mxu0 0.0
  %7329 = vmatprep.subr.mxu0 0.0
  %7330 = vmatpush1.msra.mxu0 0.0
  %7331 = vmatprep.subr.mxu0 0.0
  %7332 = vmatpush1.msra.mxu0 0.0
  %7333 = vmatprep.subr.mxu0 0.0
  %7334 = vmatpush1.msra.mxu0 0.0
  %7335 = vmatprep.subr.mxu0 0.0
  %7336 = vmatpush1.msra.mxu0 0.0
  %7337 = vmatprep.subr.mxu0 0.0
  %7338 = vmatpush1.msra.mxu0 0.0
  %7339 = vmatprep.subr.mxu0 0.0
  %7340 = vmatpush1.msra.mxu0 0.0
  %7341 = vmatprep.subr.mxu0 0.0
  %7342 = vmatpush1.msra.mxu0 0.0
  %7343 = vmatprep.subr.mxu0 0.0
  %7344 = vmatpush1.msra.mxu0 0.0
  %7345 = vmatprep.subr.mxu0 0.0
  %7346 = vmatpush1.msra.mxu0 0.0
  %7347 = vmatprep.subr.mxu0 0.0
  %7348 = vmatpush1.msra.mxu0 0.0
  %7349 = vmatprep.subr.mxu0 0.0
  %7350 = vmatpush1.msra.mxu0 0.0
  %7351 = vmatprep.subr.mxu0 0.0
  %7352 = vmatpush1.msra.mxu0 0.0
  %7353 = vmatprep.subr.mxu0 0.0
  %7354 = vmatpush1.msra.mxu0 0.0
  %7355 = vmatprep.subr.mxu0 0.0
  %7356 = vmatpush1.msra.mxu0 0.0
  %7357 = vmatprep.subr.mxu0 0.0
  %7358 = vmatpush1.msra.mxu0 0.0
  %7359 = vmatprep.subr.mxu0 0.0
  %7360 = vmatpush1.msra.mxu0 0.0
  %7361 = vmatprep.subr.mxu0 0.0
  %7362 = vmatpush1.msra.mxu0 0.0
  %7363 = vmatprep.subr.mxu0 0.0
  %7364 = vmatpush1.msra.mxu0 0.0
  %7365 = vmatprep.subr.mxu0 0.0
  %7366 = vmatpush1.msra.mxu0 0.0
  %7367 = vmatprep.subr.mxu0 0.0
  %7368 = vmatpush1.msra.mxu0 0.0
  %7369 = vmatprep.subr.mxu0 0.0
  %7370 = vmatpush1.msra.mxu0 0.0
  %7371 = vmatprep.subr.mxu0 0.0
  %7372 = vmatpush1.msra.mxu0 0.0
  %7373 = vmatprep.subr.mxu0 0.0
  %7374 = vmatpush1.msra.mxu0 0.0
  %7375 = vmatprep.subr.mxu0 0.0
  %7376 = vmatpush1.msra.mxu0 0.0
  %7377 = vmatprep.subr.mxu0 0.0
  %7378 = vmatpush1.msra.mxu0 0.0
  %7379 = vmatprep.subr.mxu0 0.0
  %7380 = vmatpush1.msra.mxu0 0.0
  %7381 = vmatprep.subr.mxu0 0.0
  %7382 = vmatpush1.msra.mxu0 0.0
  %7383 = vmatprep.subr.mxu0 0.0
  %7384 = vmatpush1.msra.mxu0 0.0
  %7385 = vmatprep.mubr.f32.mxu0 0.0
  %7386 = vmatmul.mubr.f32.gmra.mrb[0].mxu0 %v7177
  %v7387 = vpop.f32.mrb[0].mxu0
  %v7388 = vadd.f32 %v7174, %v7387
  %v7389 = vpop.f32.mrb[0].mxu0
  %v7390 = vadd.f32 %v7174, %v7389
  %7391 = vdwg.mxu0
  %v7392 = vsel %vm2267, %v7246, 0.0
  %v7393 = vsel %vm2268, %v7248, 0.0
  %v7394 = vsel %vm2269, %v7317, 0.0
  %v7395 = vsel %vm2270, %v7319, 0.0
  %v7396 = vsel %vm2271, %v7388, 0.0
  %v7397 = vsel %vm2272, %v7390, 0.0
  %v7398 = vadd.f32 %v7392, %v7393
  %v7399 = vadd.f32 %v7398, %v7394
  %v7400 = vadd.f32 %v7399, %v7395
  %v7401 = vadd.f32 %v7400, %v7396
  %v7402 = vadd.f32 %v7401, %v7397
  %7403 = vadd.xlane.f32.xlu0 %v7402
  %v7404 = vpop.xlane.xlu0 %7403
  %v7405 = vmul.f32 %v7404, 0.001953125
  %v7406 = vsub.f32 %v7246, %v7405
  %v7407 = vsub.f32 %v7248, %v7405
  %v7408 = vsub.f32 %v7317, %v7405
  %v7409 = vsub.f32 %v7319, %v7405
  %v7410 = vsub.f32 %v7388, %v7405
  %v7411 = vsub.f32 %v7390, %v7405
  %v7412 = vsel %vm2267, %v7406, 0.0
  %v7413 = vsel %vm2268, %v7407, 0.0
  %v7414 = vsel %vm2269, %v7408, 0.0
  %v7415 = vsel %vm2270, %v7409, 0.0
  %v7416 = vsel %vm2271, %v7410, 0.0
  %v7417 = vsel %vm2272, %v7411, 0.0
  %v7418 = vmul.f32 %v7412, %v7412
  %v7419 = vmul.f32 %v7413, %v7413
  %v7420 = vmul.f32 %v7414, %v7414
  %v7421 = vmul.f32 %v7415, %v7415
  %v7422 = vmul.f32 %v7416, %v7416
  %v7423 = vmul.f32 %v7417, %v7417
  %v7424 = vadd.f32 %v7418, %v7419
  %v7425 = vadd.f32 %v7424, %v7420
  %v7426 = vadd.f32 %v7425, %v7421
  %v7427 = vadd.f32 %v7426, %v7422
  %v7428 = vadd.f32 %v7427, %v7423
  %7429 = vadd.xlane.f32.xlu0 %v7428
  %v7430 = vpop.xlane.xlu0 %7429
  %v7431 = vmul.f32 %v7430, 0.001953125
  %v7432 = vadd.f32 %v7431, 1e-05
  %v7433 = vrsqrt.pop %v7432
  %v7434 = vmul.f32 %v7433, %v7169
  %7436 = vset.pattern.permute.xlu0 0
  %7437 = vperm.xlu0 %7436, %v7434
  %v7438 = vpop.permute.xlu0 %7437
  %v7440 = vmul.f32 %v7406, %v7438
  %v7441 = vmul.f32 %v7407, %v7438
  %v7442 = vmul.f32 %v7408, %v7438
  %v7443 = vmul.f32 %v7409, %v7438
  %v7444 = vmul.f32 %v7410, %v7438
  %v7445 = vmul.f32 %v7411, %v7438
  %7447 = vset.pattern.permute.xlu0 0
  %7448 = vperm.xlu0 %7447, %v7170
  %v7449 = vpop.permute.xlu0 %7448
  %v7451 = vadd.f32 %v7440, %v7449
  %v7452 = vadd.f32 %v7441, %v7449
  %v7453 = vadd.f32 %v7442, %v7449
  %v7454 = vadd.f32 %v7443, %v7449
  %v7455 = vadd.f32 %v7444, %v7449
  %v7456 = vadd.f32 %v7445, %v7449
  %7457 = vst [vmem:[%s8] sm:$0xff] %v7451
  %7458 = vst [vmem:[%s8 + $0x8] sm:$0xff] %v7452
  %7459 = vst [vmem:[%s8 + $0x10] sm:$0xff] %v7453
  %7460 = vst [vmem:[%s8 + $0x18] sm:$0xff] %v7454
  %7461 = vst [vmem:[%s8 + $0x20] sm:$0xff] %v7455
  %7462 = vst [vmem:[%s8 + $0x28] sm:$0xff] %v7456
  // Predicated region
  $region34: #{net_forward.1} parent=0 // pred_check
    _
  $region35: #{net_forward.1} parent=0 // pred_check_branch
    %7464 = sbr.rel (0) target = $region37
  $region36: #{net_forward.1} parent=0 // pred_region
    _
  $region37: #{net_forward.1} parent=0 // pred_fallthru
    _
  // Predicated region
  $region38: #{net_forward.1} parent=0 // pred_check
    _
  $region39: #{net_forward.1} parent=0 // pred_check_branch
    %7466 = sbr.rel (0) target = $region41
  $region40: #{net_forward.1} parent=0 // pred_region
    _
  $region41: #{net_forward.1} parent=0 // pred_fallthru
    _

</llo_original>
